<compile_context>
chip_gen: v6e
topology: v6e:2x2x1
jax: 0.10.0
libtpu: 0.0.40
codegen_flags: <defaults>
</compile_context>

<pallas_src>
import numpy as np
import jax
import jax.numpy as jnp
from jax import lax
from jax.experimental import pallas as pl
from jax.experimental.pallas import tpu as pltpu  # noqa: F401  (kept for parity / future scratch use)


# -------------------- helpers (same math as the PyTorch module) --------------
def _padding(downsample, kernel_size):
    return max(0, int(np.floor((kernel_size - downsample + 1) / 2)))


def _downsample(n_samples_in, n_samples_out):
    downsample = int(n_samples_in // n_samples_out)
    if downsample < 1:
        raise ValueError("Number of samples should always decrease")
    if n_samples_in % n_samples_out != 0:
        raise ValueError("Samples must decrease by an integer factor.")
    return downsample


def _gather_stack(N, L_in, L_out, K, stride, pad):
    """Constant 0/1 matrices G[k] of shape (N*L_out, N*L_in):
    G[k, n*L_out+t, n*L_in + (t*stride + k - pad)] = 1 when the source index is
    in range (row stays all-zero for zero padding).  Turns conv tap extraction
    (incl. padding and stride) into plain matmuls inside the kernel."""
    G = np.zeros((K, N * L_out, N * L_in), np.float32)
    for k in range(K):
        for n in range(N):
            for t in range(L_out):
                src = t * stride + k - pad
                if 0 <= src < L_in:
                    G[k, n * L_out + t, n * L_in + src] = 1.0
    return jnp.asarray(G)


# ------------------------------- parameters ----------------------------------
def init_params(key, input_dim, blocks_dim, n_classes, kernel_size,
                meta_features_dim):
    keys = iter(jax.random.split(key, 128))

    def unif(shape, bound):
        return jax.random.uniform(next(keys), shape, jnp.float32, -bound, bound)

    def conv_w(cout, cin, k):
        return unif((cout, cin, k), 1.0 / np.sqrt(cin * k))

    def lin_wb(fout, fin):
        bound = 1.0 / np.sqrt(fin)
        return unif((fout, fin), bound), unif((fout,), bound)

    def bn_params(c):
        # eval-mode BatchNorm1d folded into per-channel affine scale/bias
        gamma = 1.0 + 0.5 * jax.random.uniform(next(keys), (c,), jnp.float32, -1.0, 1.0)
        beta = 0.1 * jax.random.uniform(next(keys), (c,), jnp.float32, -1.0, 1.0)
        mean = 0.1 * jax.random.uniform(next(keys), (c,), jnp.float32, -1.0, 1.0)
        var = 1.0 + 0.5 * jax.random.uniform(next(keys), (c,), jnp.float32, -1.0, 1.0)
        eps = 1e-5
        scale = gamma / jnp.sqrt(var + eps)
        bias = beta - mean * scale
        return scale, bias

    p = {}
    n_filters_in, n_filters_out = input_dim[0], blocks_dim[0][0]
    n_samples_in, n_samples_out = input_dim[1], blocks_dim[0][1]
    ds = _downsample(n_samples_in, n_samples_out)
    p['stem'] = dict(w=conv_w(n_filters_out, n_filters_in, kernel_size),
                     stride=ds, pad=_padding(ds, kernel_size))
    p['stem']['scale'], p['stem']['bias'] = bn_params(n_filters_out)

    blocks = []
    for n_filters, n_samples in blocks_dim:
        n_filters_in, n_filters_out = n_filters_out, n_filters
        n_samples_in, n_samples_out = n_samples_out, n_samples
        ds = _downsample(n_samples_in, n_samples_out)
        blk = dict(downsample=ds,
                   pad1=_padding(1, kernel_size),
                   pad2=_padding(ds, kernel_size),
                   conv1_w=conv_w(n_filters_out, n_filters_in, kernel_size),
                   conv2_w=conv_w(n_filters_out, n_filters_out, kernel_size))
        blk['bn1_scale'], blk['bn1_bias'] = bn_params(n_filters_out)
        blk['bn2_scale'], blk['bn2_bias'] = bn_params(n_filters_out)
        blk['conv1x1_w'] = (conv_w(n_filters_out, n_filters_in, 1)
                            if n_filters_in != n_filters_out else None)
        blocks.append(blk)
    p['blocks'] = blocks

    p['meta'] = [lin_wb(64, 2), lin_wb(128, 64), lin_wb(meta_features_dim, 128)]
    last_dim = blocks_dim[-1][0] * blocks_dim[-1][1] + meta_features_dim
    p['comb'] = [lin_wb(last_dim // 2, last_dim),
                 lin_wb(n_classes, last_dim // 2)]
    return p


# --------------------- fused trunk kernel (stem + all blocks) ----------------
def prepare_trunk(params, N, input_dim, kernel_size):
    """Static plan + constant operand list for the fused trunk kernel.
    All weight transposes / gather matrices are built exactly once here."""
    K = kernel_size
    L = input_dim[1]

    def conv_pack(w_torch, L_in, stride, pad):
        cout, cin, k = w_torch.shape
        L_out = (L_in + 2 * pad - k) // stride + 1
        g = _gather_stack(N, L_in, L_out, k, stride, pad)
        wt = jnp.transpose(w_torch, (2, 1, 0))            # (K, Cin, Cout)
        return g, wt, L_out

    consts = []
    stem = params['stem']
    g, wt, L = conv_pack(stem['w'], L, stem['stride'], stem['pad'])
    consts += [g, wt, stem['scale'].reshape(1, -1), stem['bias'].reshape(1, -1)]

    blocks_plan = []
    for blk in params['blocks']:
        ds = blk['downsample']
        has_1x1 = blk['conv1x1_w'] is not None
        if ds > 1:                                        # maxpool gather
            consts.append(_gather_stack(N, L, L // ds, ds, ds, 0))
        L_skip = L // ds if ds > 1 else L
        if has_1x1:                                       # 1x1 skip conv
            consts.append(jnp.transpose(blk['conv1x1_w'][:, :, 0]))  # (Cin, Cout)
        g1, w1t, L_mid = conv_pack(blk['conv1_w'], L, 1, blk['pad1'])
        consts += [g1, w1t, blk['bn1_scale'].reshape(1, -1),
                   blk['bn1_bias'].reshape(1, -1)]
        g2, w2t, L_out = conv_pack(blk['conv2_w'], L_mid, ds, blk['pad2'])
        consts += [g2, w2t, blk['bn2_scale'].reshape(1, -1),
                   blk['bn2_bias'].reshape(1, -1)]
        assert L_skip == L_out, "skip / conv2 length mismatch"
        blocks_plan.append(dict(ds=ds, has_1x1=has_1x1))
        L = L_out

    C_last = int(params['blocks'][-1]['conv1_w'].shape[0]) if params['blocks'] \
        else int(params['stem']['w'].shape[0])
    plan = dict(K=K, blocks=blocks_plan, L_last=int(L), C_last=C_last)
    return consts, plan


def make_trunk_kernel(plan):
    K = plan['K']

    def dot(a, b):
        return jnp.dot(a, b, preferred_element_type=jnp.float32)

    def conv_bn_act(x2d, g_ref, w_ref, s_ref, b_ref, relu, residual=None):
        # out = sum_k (G_k @ x) @ W_k   (K taps folded into MXU dots)
        acc = None
        for k in range(K):
            part = dot(dot(g_ref[k], x2d), w_ref[k])
            acc = part if acc is None else acc + part
        if residual is not None:
            acc = acc + residual                          # add BEFORE BN (torch)
        y = acc * s_ref[...] + b_ref[...]                 # folded BatchNorm
        if relu:
            y = jnp.maximum(y, 0.0)
        return acc, y                                     # (pre-BN linear, act)

    def kernel(*refs):
        out_ref = refs[-1]
        it = iter(refs[:-1])
        x = next(it)[...]                                 # (N*L0, Cin)
        g, w, s, b = next(it), next(it), next(it), next(it)
        _, x = conv_bn_act(x, g, w, s, b, relu=True)      # stem conv+bn+relu
        y = x
        for bp in plan['blocks']:
            if bp['ds'] > 1:                              # MaxPool1d skip
                gp = next(it)
                yp = None
                for r in range(bp['ds']):
                    sel = dot(gp[r], y)
                    yp = sel if yp is None else jnp.maximum(yp, sel)
                y = yp
            if bp['has_1x1']:                             # 1x1 conv skip
                y = dot(y, next(it)[...])
            g1, w1, s1, b1 = next(it), next(it), next(it), next(it)
            _, x = conv_bn_act(x, g1, w1, s1, b1, relu=True)        # conv1
            # dropout1: identity (eval mode)
            g2, w2, s2, b2 = next(it), next(it), next(it), next(it)
            lin, x = conv_bn_act(x, g2, w2, s2, b2, relu=True,
                                 residual=y)                        # conv2 (+y)
            # dropout2: identity (eval mode)
            y = lin                                       # next skip = pre-BN sum
        out_ref[...] = x

    return kernel


# ----------------------- fused meta-MLP + combined head ----------------------
def prepare_head(params):
    (w1, b1), (w2, b2), (w3, b3) = params['meta']
    (wc1, bc1), (wc2, bc2) = params['comb']
    mfd = w3.shape[0]
    F = wc1.shape[1] - mfd                    # trunk feature width
    wc1t = wc1.T                              # (F + mfd, H)
    return [w1.T, b1.reshape(1, -1), w2.T, b2.reshape(1, -1),
            w3.T, b3.reshape(1, -1),
            wc1t[:F], wc1t[F:], bc1.reshape(1, -1),
            wc2.T, bc2.reshape(1, -1)]


def head_kernel(f_ref, meta_ref, w1, b1, w2, b2, w3, b3,
                wc1_f, wc1_m, bc1, wc2, bc2, o_ref):
    def dot(a, b):
        return jnp.dot(a, b, preferred_element_type=jnp.float32)
    m = jnp.maximum(dot(meta_ref[...], w1[...]) + b1[...], 0.0)
    m = jnp.maximum(dot(m, w2[...]) + b2[...], 0.0)
    m = dot(m, w3[...]) + b3[...]
    # concat([feats, m]) @ Wc1.T  ==  feats @ Wc1[:, :F].T + m @ Wc1[:, F:].T
    h = dot(f_ref[...], wc1_f[...]) + dot(m, wc1_m[...]) + bc1[...]
    h = jnp.maximum(h, 0.0)
    o_ref[...] = dot(h, wc2[...]) + bc2[...]


# --------------------------------- forward -----------------------------------
def build_forward(params, N, input_dim, n_classes, kernel_size):
    trunk_consts, plan = prepare_trunk(params, N, input_dim, kernel_size)
    head_consts = prepare_head(params)
    trunk_kernel = make_trunk_kernel(plan)
    Cin, L0 = input_dim[0], input_dim[1]
    L_last, C_last = plan['L_last'], plan['C_last']

    trunk_call = pl.pallas_call(
        trunk_kernel,
        out_shape=jax.ShapeDtypeStruct((N * L_last, C_last), jnp.float32))
    head_call = pl.pallas_call(
        head_kernel,
        out_shape=jax.ShapeDtypeStruct((N, n_classes), jnp.float32))

    @jax.jit
    def fwd(traces, age, sex, trunk_c, head_c):
        # NCL -> channels-last, flattened to (N*L, C)  (XLA glue, fused by jit)
        x = jnp.transpose(traces, (0, 2, 1)).astype(jnp.float32)
        x = x.reshape(N * L0, Cin)
        xo = trunk_call(x, *trunk_c)                      # (N*L_last, C_last)
        # channel-major flatten matching torch .view(N, -1) on (N, C, L)
        feats = jnp.transpose(xo.reshape(N, L_last, C_last),
                              (0, 2, 1)).reshape(N, C_last * L_last)
        meta = jnp.concatenate([age, sex], axis=-1).astype(jnp.float32)
        return head_call(feats, meta, *head_c)

    return lambda traces, age, sex: fwd(traces, age, sex,
                                        trunk_consts, head_consts)


# --------------------------- pure-JAX reference -------------------------------
def _ref_forward(params, traces, age, sex):
    def conv1d(x, w, stride, pad):
        return lax.conv_general_dilated(
            x, w, (stride,), [(pad, pad)],
            dimension_numbers=('NCH', 'OIH', 'NCH'))

    def bn(x, scale, bias):
        return x * scale[None, :, None] + bias[None, :, None]

    stem = params['stem']
    x = conv1d(traces, stem['w'], stem['stride'], stem['pad'])
    x = jnp.maximum(bn(x, stem['scale'], stem['bias']), 0.0)
    y = x
    for blk in params['blocks']:
        ds = blk['downsample']
        if ds > 1:
            N_, C_, L_ = y.shape
            y = y[:, :, :(L_ // ds) * ds].reshape(N_, C_, L_ // ds, ds).max(-1)
        if blk['conv1x1_w'] is not None:
            y = conv1d(y, blk['conv1x1_w'], 1, 0)
        x = conv1d(x, blk['conv1_w'], 1, blk['pad1'])
        x = jnp.maximum(bn(x, blk['bn1_scale'], blk['bn1_bias']), 0.0)
        x = conv1d(x, blk['conv2_w'], ds, blk['pad2']) + y
        y = x
        x = jnp.maximum(bn(x, blk['bn2_scale'], blk['bn2_bias']), 0.0)
    feats = x.reshape(x.shape[0], -1)
    m = jnp.concatenate([age, sex], axis=-1)
    (w1, b1), (w2, b2), (w3, b3) = params['meta']
    m = jnp.maximum(m @ w1.T + b1, 0.0)
    m = jnp.maximum(m @ w2.T + b2, 0.0)
    m = m @ w3.T + b3
    c = jnp.concatenate([feats, m], axis=-1)
    (wc1, bc1), (wc2, bc2) = params['comb']
    h = jnp.maximum(c @ wc1.T + bc1, 0.0)
    return h @ wc2.T + bc2


# ----------------------------------- main -------------------------------------
if __name__ == "__main__":
    input_dim = (4, 64)               # (n_filters, n_samples)
    blocks_dim = [(8, 32), (16, 16)]  # downsample 1 then 2; channels 8 -> 16
    n_classes = 5
    kernel_size = 5                   # must be odd (as in the module)
    meta_features_dim = 32

    key = jax.random.PRNGKey(0)
    pkey, xkey, akey, skey = jax.random.split(key, 4)
    params = init_params(pkey, input_dim, blocks_dim, n_classes,
                         kernel_size, meta_features_dim)

    N = 2
    traces = jax.random.normal(xkey, (N, input_dim[0], input_dim[1]),
                               jnp.float32)
    age = jax.random.uniform(akey, (N, 1), jnp.float32, 0.2, 0.9)
    sex = (jax.random.uniform(skey, (N, 1), jnp.float32) > 0.5).astype(jnp.float32)

    forward = build_forward(params, N, input_dim, n_classes, kernel_size)
    out = jax.block_until_ready(forward(traces, age, sex))

    ref = _ref_forward(params, traces, age, sex)
    rel_err = float(jnp.max(jnp.abs(out - ref)) /
                    (float(jnp.max(jnp.abs(ref))) + 1e-6))
    assert out.shape == (N, n_classes), out.shape
    # tightened vs previous 5e-2; margin accounts for default (bf16-pass) MXU
    # precision differences between the Pallas dots and lax.conv reference.
    assert rel_err < 2e-2, f"mismatch vs reference: rel err {rel_err}"
    print("KERNEL_OK")
</pallas_src>

<mosaic_0001>
module attributes {stable_mosaic.version = 11 : i64} {
  func.func @kernel(%arg0: memref<128x4xf32, #tpu.memory_space<vmem>>, %arg1: memref<5x64x128xf32, #tpu.memory_space<vmem>>, %arg2: memref<5x4x8xf32, #tpu.memory_space<vmem>>, %arg3: memref<1x8xf32, #tpu.memory_space<vmem>>, %arg4: memref<1x8xf32, #tpu.memory_space<vmem>>, %arg5: memref<5x64x64xf32, #tpu.memory_space<vmem>>, %arg6: memref<5x8x8xf32, #tpu.memory_space<vmem>>, %arg7: memref<1x8xf32, #tpu.memory_space<vmem>>, %arg8: memref<1x8xf32, #tpu.memory_space<vmem>>, %arg9: memref<5x64x64xf32, #tpu.memory_space<vmem>>, %arg10: memref<5x8x8xf32, #tpu.memory_space<vmem>>, %arg11: memref<1x8xf32, #tpu.memory_space<vmem>>, %arg12: memref<1x8xf32, #tpu.memory_space<vmem>>, %arg13: memref<2x32x64xf32, #tpu.memory_space<vmem>>, %arg14: memref<8x16xf32, #tpu.memory_space<vmem>>, %arg15: memref<5x64x64xf32, #tpu.memory_space<vmem>>, %arg16: memref<5x8x16xf32, #tpu.memory_space<vmem>>, %arg17: memref<1x16xf32, #tpu.memory_space<vmem>>, %arg18: memref<1x16xf32, #tpu.memory_space<vmem>>, %arg19: memref<5x32x64xf32, #tpu.memory_space<vmem>>, %arg20: memref<5x16x16xf32, #tpu.memory_space<vmem>>, %arg21: memref<1x16xf32, #tpu.memory_space<vmem>>, %arg22: memref<1x16xf32, #tpu.memory_space<vmem>>, %arg23: memref<32x16xf32, #tpu.memory_space<vmem>>) attributes {dimension_semantics = [], scalar_prefetch = 0 : i64, scratch_operands = 0 : i64, tpu.core_type = #tpu.core_type<tc>} {
    %c0 = arith.constant 0 : index
    %c0_0 = arith.constant 0 : index
    %0 = vector.load %arg0[%c0, %c0_0] : memref<128x4xf32, #tpu.memory_space<vmem>>, vector<128x4xf32>
    %c0_1 = arith.constant 0 : index
    %c0_2 = arith.constant 0 : index
    %c0_3 = arith.constant 0 : index
    %1 = vector.load %arg1[%c0_1, %c0_2, %c0_3] : memref<5x64x128xf32, #tpu.memory_space<vmem>>, vector<1x64x128xf32>
    %2 = vector.shape_cast %1 : vector<1x64x128xf32> to vector<64x128xf32>
    %cst = arith.constant dense<0.000000e+00> : vector<64x4xf32>
    %3 = tpu.matmul %2, %0, %cst {dimension_numbers = #tpu.dot_dimension_numbers<[1], [0], [0], [1], [0, 0, 1, 1], [], []>} : vector<64x128xf32>, vector<128x4xf32>, vector<64x4xf32> -> vector<64x4xf32>
    %c0_4 = arith.constant 0 : index
    %c0_5 = arith.constant 0 : index
    %c0_6 = arith.constant 0 : index
    %4 = vector.load %arg2[%c0_4, %c0_5, %c0_6] : memref<5x4x8xf32, #tpu.memory_space<vmem>>, vector<1x4x8xf32>
    %5 = vector.shape_cast %4 : vector<1x4x8xf32> to vector<4x8xf32>
    %cst_7 = arith.constant dense<0.000000e+00> : vector<64x8xf32>
    %6 = tpu.matmul %3, %5, %cst_7 {dimension_numbers = #tpu.dot_dimension_numbers<[1], [0], [0], [1], [0, 0, 1, 1], [], []>} : vector<64x4xf32>, vector<4x8xf32>, vector<64x8xf32> -> vector<64x8xf32>
    %c1 = arith.constant 1 : index
    %c0_8 = arith.constant 0 : index
    %c0_9 = arith.constant 0 : index
    %7 = vector.load %arg1[%c1, %c0_8, %c0_9] : memref<5x64x128xf32, #tpu.memory_space<vmem>>, vector<1x64x128xf32>
    %8 = vector.shape_cast %7 : vector<1x64x128xf32> to vector<64x128xf32>
    %cst_10 = arith.constant dense<0.000000e+00> : vector<64x4xf32>
    %9 = tpu.matmul %8, %0, %cst_10 {dimension_numbers = #tpu.dot_dimension_numbers<[1], [0], [0], [1], [0, 0, 1, 1], [], []>} : vector<64x128xf32>, vector<128x4xf32>, vector<64x4xf32> -> vector<64x4xf32>
    %c1_11 = arith.constant 1 : index
    %c0_12 = arith.constant 0 : index
    %c0_13 = arith.constant 0 : index
    %10 = vector.load %arg2[%c1_11, %c0_12, %c0_13] : memref<5x4x8xf32, #tpu.memory_space<vmem>>, vector<1x4x8xf32>
    %11 = vector.shape_cast %10 : vector<1x4x8xf32> to vector<4x8xf32>
    %cst_14 = arith.constant dense<0.000000e+00> : vector<64x8xf32>
    %12 = tpu.matmul %9, %11, %cst_14 {dimension_numbers = #tpu.dot_dimension_numbers<[1], [0], [0], [1], [0, 0, 1, 1], [], []>} : vector<64x4xf32>, vector<4x8xf32>, vector<64x8xf32> -> vector<64x8xf32>
    %13 = arith.addf %6, %12 : vector<64x8xf32>
    %c2 = arith.constant 2 : index
    %c0_15 = arith.constant 0 : index
    %c0_16 = arith.constant 0 : index
    %14 = vector.load %arg1[%c2, %c0_15, %c0_16] : memref<5x64x128xf32, #tpu.memory_space<vmem>>, vector<1x64x128xf32>
    %15 = vector.shape_cast %14 : vector<1x64x128xf32> to vector<64x128xf32>
    %cst_17 = arith.constant dense<0.000000e+00> : vector<64x4xf32>
    %16 = tpu.matmul %15, %0, %cst_17 {dimension_numbers = #tpu.dot_dimension_numbers<[1], [0], [0], [1], [0, 0, 1, 1], [], []>} : vector<64x128xf32>, vector<128x4xf32>, vector<64x4xf32> -> vector<64x4xf32>
    %c2_18 = arith.constant 2 : index
    %c0_19 = arith.constant 0 : index
    %c0_20 = arith.constant 0 : index
    %17 = vector.load %arg2[%c2_18, %c0_19, %c0_20] : memref<5x4x8xf32, #tpu.memory_space<vmem>>, vector<1x4x8xf32>
    %18 = vector.shape_cast %17 : vector<1x4x8xf32> to vector<4x8xf32>
    %cst_21 = arith.constant dense<0.000000e+00> : vector<64x8xf32>
    %19 = tpu.matmul %16, %18, %cst_21 {dimension_numbers = #tpu.dot_dimension_numbers<[1], [0], [0], [1], [0, 0, 1, 1], [], []>} : vector<64x4xf32>, vector<4x8xf32>, vector<64x8xf32> -> vector<64x8xf32>
    %20 = arith.addf %13, %19 : vector<64x8xf32>
    %c3 = arith.constant 3 : index
    %c0_22 = arith.constant 0 : index
    %c0_23 = arith.constant 0 : index
    %21 = vector.load %arg1[%c3, %c0_22, %c0_23] : memref<5x64x128xf32, #tpu.memory_space<vmem>>, vector<1x64x128xf32>
    %22 = vector.shape_cast %21 : vector<1x64x128xf32> to vector<64x128xf32>
    %cst_24 = arith.constant dense<0.000000e+00> : vector<64x4xf32>
    %23 = tpu.matmul %22, %0, %cst_24 {dimension_numbers = #tpu.dot_dimension_numbers<[1], [0], [0], [1], [0, 0, 1, 1], [], []>} : vector<64x128xf32>, vector<128x4xf32>, vector<64x4xf32> -> vector<64x4xf32>
    %c3_25 = arith.constant 3 : index
    %c0_26 = arith.constant 0 : index
    %c0_27 = arith.constant 0 : index
    %24 = vector.load %arg2[%c3_25, %c0_26, %c0_27] : memref<5x4x8xf32, #tpu.memory_space<vmem>>, vector<1x4x8xf32>
    %25 = vector.shape_cast %24 : vector<1x4x8xf32> to vector<4x8xf32>
    %cst_28 = arith.constant dense<0.000000e+00> : vector<64x8xf32>
    %26 = tpu.matmul %23, %25, %cst_28 {dimension_numbers = #tpu.dot_dimension_numbers<[1], [0], [0], [1], [0, 0, 1, 1], [], []>} : vector<64x4xf32>, vector<4x8xf32>, vector<64x8xf32> -> vector<64x8xf32>
    %27 = arith.addf %20, %26 : vector<64x8xf32>
    %c4 = arith.constant 4 : index
    %c0_29 = arith.constant 0 : index
    %c0_30 = arith.constant 0 : index
    %28 = vector.load %arg1[%c4, %c0_29, %c0_30] : memref<5x64x128xf32, #tpu.memory_space<vmem>>, vector<1x64x128xf32>
    %29 = vector.shape_cast %28 : vector<1x64x128xf32> to vector<64x128xf32>
    %cst_31 = arith.constant dense<0.000000e+00> : vector<64x4xf32>
    %30 = tpu.matmul %29, %0, %cst_31 {dimension_numbers = #tpu.dot_dimension_numbers<[1], [0], [0], [1], [0, 0, 1, 1], [], []>} : vector<64x128xf32>, vector<128x4xf32>, vector<64x4xf32> -> vector<64x4xf32>
    %c4_32 = arith.constant 4 : index
    %c0_33 = arith.constant 0 : index
    %c0_34 = arith.constant 0 : index
    %31 = vector.load %arg2[%c4_32, %c0_33, %c0_34] : memref<5x4x8xf32, #tpu.memory_space<vmem>>, vector<1x4x8xf32>
    %32 = vector.shape_cast %31 : vector<1x4x8xf32> to vector<4x8xf32>
    %cst_35 = arith.constant dense<0.000000e+00> : vector<64x8xf32>
    %33 = tpu.matmul %30, %32, %cst_35 {dimension_numbers = #tpu.dot_dimension_numbers<[1], [0], [0], [1], [0, 0, 1, 1], [], []>} : vector<64x4xf32>, vector<4x8xf32>, vector<64x8xf32> -> vector<64x8xf32>
    %34 = arith.addf %27, %33 : vector<64x8xf32>
    %c0_36 = arith.constant 0 : index
    %c0_37 = arith.constant 0 : index
    %35 = vector.load %arg3[%c0_36, %c0_37] : memref<1x8xf32, #tpu.memory_space<vmem>>, vector<1x8xf32>
    %36 = vector.broadcast %35 : vector<1x8xf32> to vector<64x8xf32>
    %37 = arith.mulf %34, %36 : vector<64x8xf32>
    %c0_38 = arith.constant 0 : index
    %c0_39 = arith.constant 0 : index
    %38 = vector.load %arg4[%c0_38, %c0_39] : memref<1x8xf32, #tpu.memory_space<vmem>>, vector<1x8xf32>
    %39 = vector.broadcast %38 : vector<1x8xf32> to vector<64x8xf32>
    %40 = arith.addf %37, %39 : vector<64x8xf32>
    %cst_40 = arith.constant 0.000000e+00 : f32
    %41 = vector.broadcast %cst_40 : f32 to vector<64x8xf32>
    %42 = arith.maximumf %40, %41 : vector<64x8xf32>
    %c0_41 = arith.constant 0 : index
    %c0_42 = arith.constant 0 : index
    %c0_43 = arith.constant 0 : index
    %43 = vector.load %arg5[%c0_41, %c0_42, %c0_43] : memref<5x64x64xf32, #tpu.memory_space<vmem>>, vector<1x64x64xf32>
    %44 = vector.shape_cast %43 : vector<1x64x64xf32> to vector<64x64xf32>
    %cst_44 = arith.constant dense<0.000000e+00> : vector<64x8xf32>
    %45 = tpu.matmul %44, %42, %cst_44 {dimension_numbers = #tpu.dot_dimension_numbers<[1], [0], [0], [1], [0, 0, 1, 1], [], []>} : vector<64x64xf32>, vector<64x8xf32>, vector<64x8xf32> -> vector<64x8xf32>
    %c0_45 = arith.constant 0 : index
    %c0_46 = arith.constant 0 : index
    %c0_47 = arith.constant 0 : index
    %46 = vector.load %arg6[%c0_45, %c0_46, %c0_47] : memref<5x8x8xf32, #tpu.memory_space<vmem>>, vector<1x8x8xf32>
    %47 = vector.shape_cast %46 : vector<1x8x8xf32> to vector<8x8xf32>
    %cst_48 = arith.constant dense<0.000000e+00> : vector<64x8xf32>
    %48 = tpu.matmul %45, %47, %cst_48 {dimension_numbers = #tpu.dot_dimension_numbers<[1], [0], [0], [1], [0, 0, 1, 1], [], []>} : vector<64x8xf32>, vector<8x8xf32>, vector<64x8xf32> -> vector<64x8xf32>
    %c1_49 = arith.constant 1 : index
    %c0_50 = arith.constant 0 : index
    %c0_51 = arith.constant 0 : index
    %49 = vector.load %arg5[%c1_49, %c0_50, %c0_51] : memref<5x64x64xf32, #tpu.memory_space<vmem>>, vector<1x64x64xf32>
    %50 = vector.shape_cast %49 : vector<1x64x64xf32> to vector<64x64xf32>
    %cst_52 = arith.constant dense<0.000000e+00> : vector<64x8xf32>
    %51 = tpu.matmul %50, %42, %cst_52 {dimension_numbers = #tpu.dot_dimension_numbers<[1], [0], [0], [1], [0, 0, 1, 1], [], []>} : vector<64x64xf32>, vector<64x8xf32>, vector<64x8xf32> -> vector<64x8xf32>
    %c1_53 = arith.constant 1 : index
    %c0_54 = arith.constant 0 : index
    %c0_55 = arith.constant 0 : index
    %52 = vector.load %arg6[%c1_53, %c0_54, %c0_55] : memref<5x8x8xf32, #tpu.memory_space<vmem>>, vector<1x8x8xf32>
    %53 = vector.shape_cast %52 : vector<1x8x8xf32> to vector<8x8xf32>
    %cst_56 = arith.constant dense<0.000000e+00> : vector<64x8xf32>
    %54 = tpu.matmul %51, %53, %cst_56 {dimension_numbers = #tpu.dot_dimension_numbers<[1], [0], [0], [1], [0, 0, 1, 1], [], []>} : vector<64x8xf32>, vector<8x8xf32>, vector<64x8xf32> -> vector<64x8xf32>
    %55 = arith.addf %48, %54 : vector<64x8xf32>
    %c2_57 = arith.constant 2 : index
    %c0_58 = arith.constant 0 : index
    %c0_59 = arith.constant 0 : index
    %56 = vector.load %arg5[%c2_57, %c0_58, %c0_59] : memref<5x64x64xf32, #tpu.memory_space<vmem>>, vector<1x64x64xf32>
    %57 = vector.shape_cast %56 : vector<1x64x64xf32> to vector<64x64xf32>
    %cst_60 = arith.constant dense<0.000000e+00> : vector<64x8xf32>
    %58 = tpu.matmul %57, %42, %cst_60 {dimension_numbers = #tpu.dot_dimension_numbers<[1], [0], [0], [1], [0, 0, 1, 1], [], []>} : vector<64x64xf32>, vector<64x8xf32>, vector<64x8xf32> -> vector<64x8xf32>
    %c2_61 = arith.constant 2 : index
    %c0_62 = arith.constant 0 : index
    %c0_63 = arith.constant 0 : index
    %59 = vector.load %arg6[%c2_61, %c0_62, %c0_63] : memref<5x8x8xf32, #tpu.memory_space<vmem>>, vector<1x8x8xf32>
    %60 = vector.shape_cast %59 : vector<1x8x8xf32> to vector<8x8xf32>
    %cst_64 = arith.constant dense<0.000000e+00> : vector<64x8xf32>
    %61 = tpu.matmul %58, %60, %cst_64 {dimension_numbers = #tpu.dot_dimension_numbers<[1], [0], [0], [1], [0, 0, 1, 1], [], []>} : vector<64x8xf32>, vector<8x8xf32>, vector<64x8xf32> -> vector<64x8xf32>
    %62 = arith.addf %55, %61 : vector<64x8xf32>
    %c3_65 = arith.constant 3 : index
    %c0_66 = arith.constant 0 : index
    %c0_67 = arith.constant 0 : index
    %63 = vector.load %arg5[%c3_65, %c0_66, %c0_67] : memref<5x64x64xf32, #tpu.memory_space<vmem>>, vector<1x64x64xf32>
    %64 = vector.shape_cast %63 : vector<1x64x64xf32> to vector<64x64xf32>
    %cst_68 = arith.constant dense<0.000000e+00> : vector<64x8xf32>
    %65 = tpu.matmul %64, %42, %cst_68 {dimension_numbers = #tpu.dot_dimension_numbers<[1], [0], [0], [1], [0, 0, 1, 1], [], []>} : vector<64x64xf32>, vector<64x8xf32>, vector<64x8xf32> -> vector<64x8xf32>
    %c3_69 = arith.constant 3 : index
    %c0_70 = arith.constant 0 : index
    %c0_71 = arith.constant 0 : index
    %66 = vector.load %arg6[%c3_69, %c0_70, %c0_71] : memref<5x8x8xf32, #tpu.memory_space<vmem>>, vector<1x8x8xf32>
    %67 = vector.shape_cast %66 : vector<1x8x8xf32> to vector<8x8xf32>
    %cst_72 = arith.constant dense<0.000000e+00> : vector<64x8xf32>
    %68 = tpu.matmul %65, %67, %cst_72 {dimension_numbers = #tpu.dot_dimension_numbers<[1], [0], [0], [1], [0, 0, 1, 1], [], []>} : vector<64x8xf32>, vector<8x8xf32>, vector<64x8xf32> -> vector<64x8xf32>
    %69 = arith.addf %62, %68 : vector<64x8xf32>
    %c4_73 = arith.constant 4 : index
    %c0_74 = arith.constant 0 : index
    %c0_75 = arith.constant 0 : index
    %70 = vector.load %arg5[%c4_73, %c0_74, %c0_75] : memref<5x64x64xf32, #tpu.memory_space<vmem>>, vector<1x64x64xf32>
    %71 = vector.shape_cast %70 : vector<1x64x64xf32> to vector<64x64xf32>
    %cst_76 = arith.constant dense<0.000000e+00> : vector<64x8xf32>
    %72 = tpu.matmul %71, %42, %cst_76 {dimension_numbers = #tpu.dot_dimension_numbers<[1], [0], [0], [1], [0, 0, 1, 1], [], []>} : vector<64x64xf32>, vector<64x8xf32>, vector<64x8xf32> -> vector<64x8xf32>
    %c4_77 = arith.constant 4 : index
    %c0_78 = arith.constant 0 : index
    %c0_79 = arith.constant 0 : index
    %73 = vector.load %arg6[%c4_77, %c0_78, %c0_79] : memref<5x8x8xf32, #tpu.memory_space<vmem>>, vector<1x8x8xf32>
    %74 = vector.shape_cast %73 : vector<1x8x8xf32> to vector<8x8xf32>
    %cst_80 = arith.constant dense<0.000000e+00> : vector<64x8xf32>
    %75 = tpu.matmul %72, %74, %cst_80 {dimension_numbers = #tpu.dot_dimension_numbers<[1], [0], [0], [1], [0, 0, 1, 1], [], []>} : vector<64x8xf32>, vector<8x8xf32>, vector<64x8xf32> -> vector<64x8xf32>
    %76 = arith.addf %69, %75 : vector<64x8xf32>
    %c0_81 = arith.constant 0 : index
    %c0_82 = arith.constant 0 : index
    %77 = vector.load %arg7[%c0_81, %c0_82] : memref<1x8xf32, #tpu.memory_space<vmem>>, vector<1x8xf32>
    %78 = vector.broadcast %77 : vector<1x8xf32> to vector<64x8xf32>
    %79 = arith.mulf %76, %78 : vector<64x8xf32>
    %c0_83 = arith.constant 0 : index
    %c0_84 = arith.constant 0 : index
    %80 = vector.load %arg8[%c0_83, %c0_84] : memref<1x8xf32, #tpu.memory_space<vmem>>, vector<1x8xf32>
    %81 = vector.broadcast %80 : vector<1x8xf32> to vector<64x8xf32>
    %82 = arith.addf %79, %81 : vector<64x8xf32>
    %cst_85 = arith.constant 0.000000e+00 : f32
    %83 = vector.broadcast %cst_85 : f32 to vector<64x8xf32>
    %84 = arith.maximumf %82, %83 : vector<64x8xf32>
    %c0_86 = arith.constant 0 : index
    %c0_87 = arith.constant 0 : index
    %c0_88 = arith.constant 0 : index
    %85 = vector.load %arg9[%c0_86, %c0_87, %c0_88] : memref<5x64x64xf32, #tpu.memory_space<vmem>>, vector<1x64x64xf32>
    %86 = vector.shape_cast %85 : vector<1x64x64xf32> to vector<64x64xf32>
    %cst_89 = arith.constant dense<0.000000e+00> : vector<64x8xf32>
    %87 = tpu.matmul %86, %84, %cst_89 {dimension_numbers = #tpu.dot_dimension_numbers<[1], [0], [0], [1], [0, 0, 1, 1], [], []>} : vector<64x64xf32>, vector<64x8xf32>, vector<64x8xf32> -> vector<64x8xf32>
    %c0_90 = arith.constant 0 : index
    %c0_91 = arith.constant 0 : index
    %c0_92 = arith.constant 0 : index
    %88 = vector.load %arg10[%c0_90, %c0_91, %c0_92] : memref<5x8x8xf32, #tpu.memory_space<vmem>>, vector<1x8x8xf32>
    %89 = vector.shape_cast %88 : vector<1x8x8xf32> to vector<8x8xf32>
    %cst_93 = arith.constant dense<0.000000e+00> : vector<64x8xf32>
    %90 = tpu.matmul %87, %89, %cst_93 {dimension_numbers = #tpu.dot_dimension_numbers<[1], [0], [0], [1], [0, 0, 1, 1], [], []>} : vector<64x8xf32>, vector<8x8xf32>, vector<64x8xf32> -> vector<64x8xf32>
    %c1_94 = arith.constant 1 : index
    %c0_95 = arith.constant 0 : index
    %c0_96 = arith.constant 0 : index
    %91 = vector.load %arg9[%c1_94, %c0_95, %c0_96] : memref<5x64x64xf32, #tpu.memory_space<vmem>>, vector<1x64x64xf32>
    %92 = vector.shape_cast %91 : vector<1x64x64xf32> to vector<64x64xf32>
    %cst_97 = arith.constant dense<0.000000e+00> : vector<64x8xf32>
    %93 = tpu.matmul %92, %84, %cst_97 {dimension_numbers = #tpu.dot_dimension_numbers<[1], [0], [0], [1], [0, 0, 1, 1], [], []>} : vector<64x64xf32>, vector<64x8xf32>, vector<64x8xf32> -> vector<64x8xf32>
    %c1_98 = arith.constant 1 : index
    %c0_99 = arith.constant 0 : index
    %c0_100 = arith.constant 0 : index
    %94 = vector.load %arg10[%c1_98, %c0_99, %c0_100] : memref<5x8x8xf32, #tpu.memory_space<vmem>>, vector<1x8x8xf32>
    %95 = vector.shape_cast %94 : vector<1x8x8xf32> to vector<8x8xf32>
    %cst_101 = arith.constant dense<0.000000e+00> : vector<64x8xf32>
    %96 = tpu.matmul %93, %95, %cst_101 {dimension_numbers = #tpu.dot_dimension_numbers<[1], [0], [0], [1], [0, 0, 1, 1], [], []>} : vector<64x8xf32>, vector<8x8xf32>, vector<64x8xf32> -> vector<64x8xf32>
    %97 = arith.addf %90, %96 : vector<64x8xf32>
    %c2_102 = arith.constant 2 : index
    %c0_103 = arith.constant 0 : index
    %c0_104 = arith.constant 0 : index
    %98 = vector.load %arg9[%c2_102, %c0_103, %c0_104] : memref<5x64x64xf32, #tpu.memory_space<vmem>>, vector<1x64x64xf32>
    %99 = vector.shape_cast %98 : vector<1x64x64xf32> to vector<64x64xf32>
    %cst_105 = arith.constant dense<0.000000e+00> : vector<64x8xf32>
    %100 = tpu.matmul %99, %84, %cst_105 {dimension_numbers = #tpu.dot_dimension_numbers<[1], [0], [0], [1], [0, 0, 1, 1], [], []>} : vector<64x64xf32>, vector<64x8xf32>, vector<64x8xf32> -> vector<64x8xf32>
    %c2_106 = arith.constant 2 : index
    %c0_107 = arith.constant 0 : index
    %c0_108 = arith.constant 0 : index
    %101 = vector.load %arg10[%c2_106, %c0_107, %c0_108] : memref<5x8x8xf32, #tpu.memory_space<vmem>>, vector<1x8x8xf32>
    %102 = vector.shape_cast %101 : vector<1x8x8xf32> to vector<8x8xf32>
    %cst_109 = arith.constant dense<0.000000e+00> : vector<64x8xf32>
    %103 = tpu.matmul %100, %102, %cst_109 {dimension_numbers = #tpu.dot_dimension_numbers<[1], [0], [0], [1], [0, 0, 1, 1], [], []>} : vector<64x8xf32>, vector<8x8xf32>, vector<64x8xf32> -> vector<64x8xf32>
    %104 = arith.addf %97, %103 : vector<64x8xf32>
    %c3_110 = arith.constant 3 : index
    %c0_111 = arith.constant 0 : index
    %c0_112 = arith.constant 0 : index
    %105 = vector.load %arg9[%c3_110, %c0_111, %c0_112] : memref<5x64x64xf32, #tpu.memory_space<vmem>>, vector<1x64x64xf32>
    %106 = vector.shape_cast %105 : vector<1x64x64xf32> to vector<64x64xf32>
    %cst_113 = arith.constant dense<0.000000e+00> : vector<64x8xf32>
    %107 = tpu.matmul %106, %84, %cst_113 {dimension_numbers = #tpu.dot_dimension_numbers<[1], [0], [0], [1], [0, 0, 1, 1], [], []>} : vector<64x64xf32>, vector<64x8xf32>, vector<64x8xf32> -> vector<64x8xf32>
    %c3_114 = arith.constant 3 : index
    %c0_115 = arith.constant 0 : index
    %c0_116 = arith.constant 0 : index
    %108 = vector.load %arg10[%c3_114, %c0_115, %c0_116] : memref<5x8x8xf32, #tpu.memory_space<vmem>>, vector<1x8x8xf32>
    %109 = vector.shape_cast %108 : vector<1x8x8xf32> to vector<8x8xf32>
    %cst_117 = arith.constant dense<0.000000e+00> : vector<64x8xf32>
    %110 = tpu.matmul %107, %109, %cst_117 {dimension_numbers = #tpu.dot_dimension_numbers<[1], [0], [0], [1], [0, 0, 1, 1], [], []>} : vector<64x8xf32>, vector<8x8xf32>, vector<64x8xf32> -> vector<64x8xf32>
    %111 = arith.addf %104, %110 : vector<64x8xf32>
    %c4_118 = arith.constant 4 : index
    %c0_119 = arith.constant 0 : index
    %c0_120 = arith.constant 0 : index
    %112 = vector.load %arg9[%c4_118, %c0_119, %c0_120] : memref<5x64x64xf32, #tpu.memory_space<vmem>>, vector<1x64x64xf32>
    %113 = vector.shape_cast %112 : vector<1x64x64xf32> to vector<64x64xf32>
    %cst_121 = arith.constant dense<0.000000e+00> : vector<64x8xf32>
    %114 = tpu.matmul %113, %84, %cst_121 {dimension_numbers = #tpu.dot_dimension_numbers<[1], [0], [0], [1], [0, 0, 1, 1], [], []>} : vector<64x64xf32>, vector<64x8xf32>, vector<64x8xf32> -> vector<64x8xf32>
    %c4_122 = arith.constant 4 : index
    %c0_123 = arith.constant 0 : index
    %c0_124 = arith.constant 0 : index
    %115 = vector.load %arg10[%c4_122, %c0_123, %c0_124] : memref<5x8x8xf32, #tpu.memory_space<vmem>>, vector<1x8x8xf32>
    %116 = vector.shape_cast %115 : vector<1x8x8xf32> to vector<8x8xf32>
    %cst_125 = arith.constant dense<0.000000e+00> : vector<64x8xf32>
    %117 = tpu.matmul %114, %116, %cst_125 {dimension_numbers = #tpu.dot_dimension_numbers<[1], [0], [0], [1], [0, 0, 1, 1], [], []>} : vector<64x8xf32>, vector<8x8xf32>, vector<64x8xf32> -> vector<64x8xf32>
    %118 = arith.addf %111, %117 : vector<64x8xf32>
    %119 = arith.addf %118, %42 : vector<64x8xf32>
    %c0_126 = arith.constant 0 : index
    %c0_127 = arith.constant 0 : index
    %120 = vector.load %arg11[%c0_126, %c0_127] : memref<1x8xf32, #tpu.memory_space<vmem>>, vector<1x8xf32>
    %121 = vector.broadcast %120 : vector<1x8xf32> to vector<64x8xf32>
    %122 = arith.mulf %119, %121 : vector<64x8xf32>
    %c0_128 = arith.constant 0 : index
    %c0_129 = arith.constant 0 : index
    %123 = vector.load %arg12[%c0_128, %c0_129] : memref<1x8xf32, #tpu.memory_space<vmem>>, vector<1x8xf32>
    %124 = vector.broadcast %123 : vector<1x8xf32> to vector<64x8xf32>
    %125 = arith.addf %122, %124 : vector<64x8xf32>
    %cst_130 = arith.constant 0.000000e+00 : f32
    %126 = vector.broadcast %cst_130 : f32 to vector<64x8xf32>
    %127 = arith.maximumf %125, %126 : vector<64x8xf32>
    %c0_131 = arith.constant 0 : index
    %c0_132 = arith.constant 0 : index
    %c0_133 = arith.constant 0 : index
    %128 = vector.load %arg13[%c0_131, %c0_132, %c0_133] : memref<2x32x64xf32, #tpu.memory_space<vmem>>, vector<1x32x64xf32>
    %129 = vector.shape_cast %128 : vector<1x32x64xf32> to vector<32x64xf32>
    %cst_134 = arith.constant dense<0.000000e+00> : vector<32x8xf32>
    %130 = tpu.matmul %129, %119, %cst_134 {dimension_numbers = #tpu.dot_dimension_numbers<[1], [0], [0], [1], [0, 0, 1, 1], [], []>} : vector<32x64xf32>, vector<64x8xf32>, vector<32x8xf32> -> vector<32x8xf32>
    %c1_135 = arith.constant 1 : index
    %c0_136 = arith.constant 0 : index
    %c0_137 = arith.constant 0 : index
    %131 = vector.load %arg13[%c1_135, %c0_136, %c0_137] : memref<2x32x64xf32, #tpu.memory_space<vmem>>, vector<1x32x64xf32>
    %132 = vector.shape_cast %131 : vector<1x32x64xf32> to vector<32x64xf32>
    %cst_138 = arith.constant dense<0.000000e+00> : vector<32x8xf32>
    %133 = tpu.matmul %132, %119, %cst_138 {dimension_numbers = #tpu.dot_dimension_numbers<[1], [0], [0], [1], [0, 0, 1, 1], [], []>} : vector<32x64xf32>, vector<64x8xf32>, vector<32x8xf32> -> vector<32x8xf32>
    %134 = arith.maximumf %130, %133 : vector<32x8xf32>
    %c0_139 = arith.constant 0 : index
    %c0_140 = arith.constant 0 : index
    %135 = vector.load %arg14[%c0_139, %c0_140] : memref<8x16xf32, #tpu.memory_space<vmem>>, vector<8x16xf32>
    %cst_141 = arith.constant dense<0.000000e+00> : vector<32x16xf32>
    %136 = tpu.matmul %134, %135, %cst_141 {dimension_numbers = #tpu.dot_dimension_numbers<[1], [0], [0], [1], [0, 0, 1, 1], [], []>} : vector<32x8xf32>, vector<8x16xf32>, vector<32x16xf32> -> vector<32x16xf32>
    %c0_142 = arith.constant 0 : index
    %c0_143 = arith.constant 0 : index
    %c0_144 = arith.constant 0 : index
    %137 = vector.load %arg15[%c0_142, %c0_143, %c0_144] : memref<5x64x64xf32, #tpu.memory_space<vmem>>, vector<1x64x64xf32>
    %138 = vector.shape_cast %137 : vector<1x64x64xf32> to vector<64x64xf32>
    %cst_145 = arith.constant dense<0.000000e+00> : vector<64x8xf32>
    %139 = tpu.matmul %138, %127, %cst_145 {dimension_numbers = #tpu.dot_dimension_numbers<[1], [0], [0], [1], [0, 0, 1, 1], [], []>} : vector<64x64xf32>, vector<64x8xf32>, vector<64x8xf32> -> vector<64x8xf32>
    %c0_146 = arith.constant 0 : index
    %c0_147 = arith.constant 0 : index
    %c0_148 = arith.constant 0 : index
    %140 = vector.load %arg16[%c0_146, %c0_147, %c0_148] : memref<5x8x16xf32, #tpu.memory_space<vmem>>, vector<1x8x16xf32>
    %141 = vector.shape_cast %140 : vector<1x8x16xf32> to vector<8x16xf32>
    %cst_149 = arith.constant dense<0.000000e+00> : vector<64x16xf32>
    %142 = tpu.matmul %139, %141, %cst_149 {dimension_numbers = #tpu.dot_dimension_numbers<[1], [0], [0], [1], [0, 0, 1, 1], [], []>} : vector<64x8xf32>, vector<8x16xf32>, vector<64x16xf32> -> vector<64x16xf32>
    %c1_150 = arith.constant 1 : index
    %c0_151 = arith.constant 0 : index
    %c0_152 = arith.constant 0 : index
    %143 = vector.load %arg15[%c1_150, %c0_151, %c0_152] : memref<5x64x64xf32, #tpu.memory_space<vmem>>, vector<1x64x64xf32>
    %144 = vector.shape_cast %143 : vector<1x64x64xf32> to vector<64x64xf32>
    %cst_153 = arith.constant dense<0.000000e+00> : vector<64x8xf32>
    %145 = tpu.matmul %144, %127, %cst_153 {dimension_numbers = #tpu.dot_dimension_numbers<[1], [0], [0], [1], [0, 0, 1, 1], [], []>} : vector<64x64xf32>, vector<64x8xf32>, vector<64x8xf32> -> vector<64x8xf32>
    %c1_154 = arith.constant 1 : index
    %c0_155 = arith.constant 0 : index
    %c0_156 = arith.constant 0 : index
    %146 = vector.load %arg16[%c1_154, %c0_155, %c0_156] : memref<5x8x16xf32, #tpu.memory_space<vmem>>, vector<1x8x16xf32>
    %147 = vector.shape_cast %146 : vector<1x8x16xf32> to vector<8x16xf32>
    %cst_157 = arith.constant dense<0.000000e+00> : vector<64x16xf32>
    %148 = tpu.matmul %145, %147, %cst_157 {dimension_numbers = #tpu.dot_dimension_numbers<[1], [0], [0], [1], [0, 0, 1, 1], [], []>} : vector<64x8xf32>, vector<8x16xf32>, vector<64x16xf32> -> vector<64x16xf32>
    %149 = arith.addf %142, %148 : vector<64x16xf32>
    %c2_158 = arith.constant 2 : index
    %c0_159 = arith.constant 0 : index
    %c0_160 = arith.constant 0 : index
    %150 = vector.load %arg15[%c2_158, %c0_159, %c0_160] : memref<5x64x64xf32, #tpu.memory_space<vmem>>, vector<1x64x64xf32>
    %151 = vector.shape_cast %150 : vector<1x64x64xf32> to vector<64x64xf32>
    %cst_161 = arith.constant dense<0.000000e+00> : vector<64x8xf32>
    %152 = tpu.matmul %151, %127, %cst_161 {dimension_numbers = #tpu.dot_dimension_numbers<[1], [0], [0], [1], [0, 0, 1, 1], [], []>} : vector<64x64xf32>, vector<64x8xf32>, vector<64x8xf32> -> vector<64x8xf32>
    %c2_162 = arith.constant 2 : index
    %c0_163 = arith.constant 0 : index
    %c0_164 = arith.constant 0 : index
    %153 = vector.load %arg16[%c2_162, %c0_163, %c0_164] : memref<5x8x16xf32, #tpu.memory_space<vmem>>, vector<1x8x16xf32>
    %154 = vector.shape_cast %153 : vector<1x8x16xf32> to vector<8x16xf32>
    %cst_165 = arith.constant dense<0.000000e+00> : vector<64x16xf32>
    %155 = tpu.matmul %152, %154, %cst_165 {dimension_numbers = #tpu.dot_dimension_numbers<[1], [0], [0], [1], [0, 0, 1, 1], [], []>} : vector<64x8xf32>, vector<8x16xf32>, vector<64x16xf32> -> vector<64x16xf32>
    %156 = arith.addf %149, %155 : vector<64x16xf32>
    %c3_166 = arith.constant 3 : index
    %c0_167 = arith.constant 0 : index
    %c0_168 = arith.constant 0 : index
    %157 = vector.load %arg15[%c3_166, %c0_167, %c0_168] : memref<5x64x64xf32, #tpu.memory_space<vmem>>, vector<1x64x64xf32>
    %158 = vector.shape_cast %157 : vector<1x64x64xf32> to vector<64x64xf32>
    %cst_169 = arith.constant dense<0.000000e+00> : vector<64x8xf32>
    %159 = tpu.matmul %158, %127, %cst_169 {dimension_numbers = #tpu.dot_dimension_numbers<[1], [0], [0], [1], [0, 0, 1, 1], [], []>} : vector<64x64xf32>, vector<64x8xf32>, vector<64x8xf32> -> vector<64x8xf32>
    %c3_170 = arith.constant 3 : index
    %c0_171 = arith.constant 0 : index
    %c0_172 = arith.constant 0 : index
    %160 = vector.load %arg16[%c3_170, %c0_171, %c0_172] : memref<5x8x16xf32, #tpu.memory_space<vmem>>, vector<1x8x16xf32>
    %161 = vector.shape_cast %160 : vector<1x8x16xf32> to vector<8x16xf32>
    %cst_173 = arith.constant dense<0.000000e+00> : vector<64x16xf32>
    %162 = tpu.matmul %159, %161, %cst_173 {dimension_numbers = #tpu.dot_dimension_numbers<[1], [0], [0], [1], [0, 0, 1, 1], [], []>} : vector<64x8xf32>, vector<8x16xf32>, vector<64x16xf32> -> vector<64x16xf32>
    %163 = arith.addf %156, %162 : vector<64x16xf32>
    %c4_174 = arith.constant 4 : index
    %c0_175 = arith.constant 0 : index
    %c0_176 = arith.constant 0 : index
    %164 = vector.load %arg15[%c4_174, %c0_175, %c0_176] : memref<5x64x64xf32, #tpu.memory_space<vmem>>, vector<1x64x64xf32>
    %165 = vector.shape_cast %164 : vector<1x64x64xf32> to vector<64x64xf32>
    %cst_177 = arith.constant dense<0.000000e+00> : vector<64x8xf32>
    %166 = tpu.matmul %165, %127, %cst_177 {dimension_numbers = #tpu.dot_dimension_numbers<[1], [0], [0], [1], [0, 0, 1, 1], [], []>} : vector<64x64xf32>, vector<64x8xf32>, vector<64x8xf32> -> vector<64x8xf32>
    %c4_178 = arith.constant 4 : index
    %c0_179 = arith.constant 0 : index
    %c0_180 = arith.constant 0 : index
    %167 = vector.load %arg16[%c4_178, %c0_179, %c0_180] : memref<5x8x16xf32, #tpu.memory_space<vmem>>, vector<1x8x16xf32>
    %168 = vector.shape_cast %167 : vector<1x8x16xf32> to vector<8x16xf32>
    %cst_181 = arith.constant dense<0.000000e+00> : vector<64x16xf32>
    %169 = tpu.matmul %166, %168, %cst_181 {dimension_numbers = #tpu.dot_dimension_numbers<[1], [0], [0], [1], [0, 0, 1, 1], [], []>} : vector<64x8xf32>, vector<8x16xf32>, vector<64x16xf32> -> vector<64x16xf32>
    %170 = arith.addf %163, %169 : vector<64x16xf32>
    %c0_182 = arith.constant 0 : index
    %c0_183 = arith.constant 0 : index
    %171 = vector.load %arg17[%c0_182, %c0_183] : memref<1x16xf32, #tpu.memory_space<vmem>>, vector<1x16xf32>
    %172 = vector.broadcast %171 : vector<1x16xf32> to vector<64x16xf32>
    %173 = arith.mulf %170, %172 : vector<64x16xf32>
    %c0_184 = arith.constant 0 : index
    %c0_185 = arith.constant 0 : index
    %174 = vector.load %arg18[%c0_184, %c0_185] : memref<1x16xf32, #tpu.memory_space<vmem>>, vector<1x16xf32>
    %175 = vector.broadcast %174 : vector<1x16xf32> to vector<64x16xf32>
    %176 = arith.addf %173, %175 : vector<64x16xf32>
    %cst_186 = arith.constant 0.000000e+00 : f32
    %177 = vector.broadcast %cst_186 : f32 to vector<64x16xf32>
    %178 = arith.maximumf %176, %177 : vector<64x16xf32>
    %c0_187 = arith.constant 0 : index
    %c0_188 = arith.constant 0 : index
    %c0_189 = arith.constant 0 : index
    %179 = vector.load %arg19[%c0_187, %c0_188, %c0_189] : memref<5x32x64xf32, #tpu.memory_space<vmem>>, vector<1x32x64xf32>
    %180 = vector.shape_cast %179 : vector<1x32x64xf32> to vector<32x64xf32>
    %cst_190 = arith.constant dense<0.000000e+00> : vector<32x16xf32>
    %181 = tpu.matmul %180, %178, %cst_190 {dimension_numbers = #tpu.dot_dimension_numbers<[1], [0], [0], [1], [0, 0, 1, 1], [], []>} : vector<32x64xf32>, vector<64x16xf32>, vector<32x16xf32> -> vector<32x16xf32>
    %c0_191 = arith.constant 0 : index
    %c0_192 = arith.constant 0 : index
    %c0_193 = arith.constant 0 : index
    %182 = vector.load %arg20[%c0_191, %c0_192, %c0_193] : memref<5x16x16xf32, #tpu.memory_space<vmem>>, vector<1x16x16xf32>
    %183 = vector.shape_cast %182 : vector<1x16x16xf32> to vector<16x16xf32>
    %cst_194 = arith.constant dense<0.000000e+00> : vector<32x16xf32>
    %184 = tpu.matmul %181, %183, %cst_194 {dimension_numbers = #tpu.dot_dimension_numbers<[1], [0], [0], [1], [0, 0, 1, 1], [], []>} : vector<32x16xf32>, vector<16x16xf32>, vector<32x16xf32> -> vector<32x16xf32>
    %c1_195 = arith.constant 1 : index
    %c0_196 = arith.constant 0 : index
    %c0_197 = arith.constant 0 : index
    %185 = vector.load %arg19[%c1_195, %c0_196, %c0_197] : memref<5x32x64xf32, #tpu.memory_space<vmem>>, vector<1x32x64xf32>
    %186 = vector.shape_cast %185 : vector<1x32x64xf32> to vector<32x64xf32>
    %cst_198 = arith.constant dense<0.000000e+00> : vector<32x16xf32>
    %187 = tpu.matmul %186, %178, %cst_198 {dimension_numbers = #tpu.dot_dimension_numbers<[1], [0], [0], [1], [0, 0, 1, 1], [], []>} : vector<32x64xf32>, vector<64x16xf32>, vector<32x16xf32> -> vector<32x16xf32>
    %c1_199 = arith.constant 1 : index
    %c0_200 = arith.constant 0 : index
    %c0_201 = arith.constant 0 : index
    %188 = vector.load %arg20[%c1_199, %c0_200, %c0_201] : memref<5x16x16xf32, #tpu.memory_space<vmem>>, vector<1x16x16xf32>
    %189 = vector.shape_cast %188 : vector<1x16x16xf32> to vector<16x16xf32>
    %cst_202 = arith.constant dense<0.000000e+00> : vector<32x16xf32>
    %190 = tpu.matmul %187, %189, %cst_202 {dimension_numbers = #tpu.dot_dimension_numbers<[1], [0], [0], [1], [0, 0, 1, 1], [], []>} : vector<32x16xf32>, vector<16x16xf32>, vector<32x16xf32> -> vector<32x16xf32>
    %191 = arith.addf %184, %190 : vector<32x16xf32>
    %c2_203 = arith.constant 2 : index
    %c0_204 = arith.constant 0 : index
    %c0_205 = arith.constant 0 : index
    %192 = vector.load %arg19[%c2_203, %c0_204, %c0_205] : memref<5x32x64xf32, #tpu.memory_space<vmem>>, vector<1x32x64xf32>
    %193 = vector.shape_cast %192 : vector<1x32x64xf32> to vector<32x64xf32>
    %cst_206 = arith.constant dense<0.000000e+00> : vector<32x16xf32>
    %194 = tpu.matmul %193, %178, %cst_206 {dimension_numbers = #tpu.dot_dimension_numbers<[1], [0], [0], [1], [0, 0, 1, 1], [], []>} : vector<32x64xf32>, vector<64x16xf32>, vector<32x16xf32> -> vector<32x16xf32>
    %c2_207 = arith.constant 2 : index
    %c0_208 = arith.constant 0 : index
    %c0_209 = arith.constant 0 : index
    %195 = vector.load %arg20[%c2_207, %c0_208, %c0_209] : memref<5x16x16xf32, #tpu.memory_space<vmem>>, vector<1x16x16xf32>
    %196 = vector.shape_cast %195 : vector<1x16x16xf32> to vector<16x16xf32>
    %cst_210 = arith.constant dense<0.000000e+00> : vector<32x16xf32>
    %197 = tpu.matmul %194, %196, %cst_210 {dimension_numbers = #tpu.dot_dimension_numbers<[1], [0], [0], [1], [0, 0, 1, 1], [], []>} : vector<32x16xf32>, vector<16x16xf32>, vector<32x16xf32> -> vector<32x16xf32>
    %198 = arith.addf %191, %197 : vector<32x16xf32>
    %c3_211 = arith.constant 3 : index
    %c0_212 = arith.constant 0 : index
    %c0_213 = arith.constant 0 : index
    %199 = vector.load %arg19[%c3_211, %c0_212, %c0_213] : memref<5x32x64xf32, #tpu.memory_space<vmem>>, vector<1x32x64xf32>
    %200 = vector.shape_cast %199 : vector<1x32x64xf32> to vector<32x64xf32>
    %cst_214 = arith.constant dense<0.000000e+00> : vector<32x16xf32>
    %201 = tpu.matmul %200, %178, %cst_214 {dimension_numbers = #tpu.dot_dimension_numbers<[1], [0], [0], [1], [0, 0, 1, 1], [], []>} : vector<32x64xf32>, vector<64x16xf32>, vector<32x16xf32> -> vector<32x16xf32>
    %c3_215 = arith.constant 3 : index
    %c0_216 = arith.constant 0 : index
    %c0_217 = arith.constant 0 : index
    %202 = vector.load %arg20[%c3_215, %c0_216, %c0_217] : memref<5x16x16xf32, #tpu.memory_space<vmem>>, vector<1x16x16xf32>
    %203 = vector.shape_cast %202 : vector<1x16x16xf32> to vector<16x16xf32>
    %cst_218 = arith.constant dense<0.000000e+00> : vector<32x16xf32>
    %204 = tpu.matmul %201, %203, %cst_218 {dimension_numbers = #tpu.dot_dimension_numbers<[1], [0], [0], [1], [0, 0, 1, 1], [], []>} : vector<32x16xf32>, vector<16x16xf32>, vector<32x16xf32> -> vector<32x16xf32>
    %205 = arith.addf %198, %204 : vector<32x16xf32>
    %c4_219 = arith.constant 4 : index
    %c0_220 = arith.constant 0 : index
    %c0_221 = arith.constant 0 : index
    %206 = vector.load %arg19[%c4_219, %c0_220, %c0_221] : memref<5x32x64xf32, #tpu.memory_space<vmem>>, vector<1x32x64xf32>
    %207 = vector.shape_cast %206 : vector<1x32x64xf32> to vector<32x64xf32>
    %cst_222 = arith.constant dense<0.000000e+00> : vector<32x16xf32>
    %208 = tpu.matmul %207, %178, %cst_222 {dimension_numbers = #tpu.dot_dimension_numbers<[1], [0], [0], [1], [0, 0, 1, 1], [], []>} : vector<32x64xf32>, vector<64x16xf32>, vector<32x16xf32> -> vector<32x16xf32>
    %c4_223 = arith.constant 4 : index
    %c0_224 = arith.constant 0 : index
    %c0_225 = arith.constant 0 : index
    %209 = vector.load %arg20[%c4_223, %c0_224, %c0_225] : memref<5x16x16xf32, #tpu.memory_space<vmem>>, vector<1x16x16xf32>
    %210 = vector.shape_cast %209 : vector<1x16x16xf32> to vector<16x16xf32>
    %cst_226 = arith.constant dense<0.000000e+00> : vector<32x16xf32>
    %211 = tpu.matmul %208, %210, %cst_226 {dimension_numbers = #tpu.dot_dimension_numbers<[1], [0], [0], [1], [0, 0, 1, 1], [], []>} : vector<32x16xf32>, vector<16x16xf32>, vector<32x16xf32> -> vector<32x16xf32>
    %212 = arith.addf %205, %211 : vector<32x16xf32>
    %213 = arith.addf %212, %136 : vector<32x16xf32>
    %c0_227 = arith.constant 0 : index
    %c0_228 = arith.constant 0 : index
    %214 = vector.load %arg21[%c0_227, %c0_228] : memref<1x16xf32, #tpu.memory_space<vmem>>, vector<1x16xf32>
    %215 = vector.broadcast %214 : vector<1x16xf32> to vector<32x16xf32>
    %216 = arith.mulf %213, %215 : vector<32x16xf32>
    %c0_229 = arith.constant 0 : index
    %c0_230 = arith.constant 0 : index
    %217 = vector.load %arg22[%c0_229, %c0_230] : memref<1x16xf32, #tpu.memory_space<vmem>>, vector<1x16xf32>
    %218 = vector.broadcast %217 : vector<1x16xf32> to vector<32x16xf32>
    %219 = arith.addf %216, %218 : vector<32x16xf32>
    %cst_231 = arith.constant 0.000000e+00 : f32
    %220 = vector.broadcast %cst_231 : f32 to vector<32x16xf32>
    %221 = arith.maximumf %219, %220 : vector<32x16xf32>
    %c0_232 = arith.constant 0 : index
    %c0_233 = arith.constant 0 : index
    %222 = vector.load %arg23[%c0_232, %c0_233] : memref<32x16xf32, #tpu.memory_space<vmem>>, vector<32x16xf32>
    tpu.vector_store %arg23[%c0_232, %c0_233], %221 {strides = array<i32>} : memref<32x16xf32, #tpu.memory_space<vmem>>, vector<32x16xf32>,
    return
  }
}

module attributes {stable_mosaic.version = 11 : i64} {
  func.func @head_kernel(%arg0: memref<2x256xf32, #tpu.memory_space<vmem>>, %arg1: memref<2x2xf32, #tpu.memory_space<vmem>>, %arg2: memref<2x64xf32, #tpu.memory_space<vmem>>, %arg3: memref<1x64xf32, #tpu.memory_space<vmem>>, %arg4: memref<64x128xf32, #tpu.memory_space<vmem>>, %arg5: memref<1x128xf32, #tpu.memory_space<vmem>>, %arg6: memref<128x32xf32, #tpu.memory_space<vmem>>, %arg7: memref<1x32xf32, #tpu.memory_space<vmem>>, %arg8: memref<256x144xf32, #tpu.memory_space<vmem>>, %arg9: memref<32x144xf32, #tpu.memory_space<vmem>>, %arg10: memref<1x144xf32, #tpu.memory_space<vmem>>, %arg11: memref<144x5xf32, #tpu.memory_space<vmem>>, %arg12: memref<1x5xf32, #tpu.memory_space<vmem>>, %arg13: memref<2x5xf32, #tpu.memory_space<vmem>>) attributes {dimension_semantics = [], scalar_prefetch = 0 : i64, scratch_operands = 0 : i64, tpu.core_type = #tpu.core_type<tc>} {
    %c0 = arith.constant 0 : index
    %c0_0 = arith.constant 0 : index
    %0 = vector.load %arg1[%c0, %c0_0] : memref<2x2xf32, #tpu.memory_space<vmem>>, vector<2x2xf32>
    %c0_1 = arith.constant 0 : index
    %c0_2 = arith.constant 0 : index
    %1 = vector.load %arg2[%c0_1, %c0_2] : memref<2x64xf32, #tpu.memory_space<vmem>>, vector<2x64xf32>
    %cst = arith.constant dense<0.000000e+00> : vector<2x64xf32>
    %2 = tpu.matmul %0, %1, %cst {dimension_numbers = #tpu.dot_dimension_numbers<[1], [0], [0], [1], [0, 0, 1, 1], [], []>} : vector<2x2xf32>, vector<2x64xf32>, vector<2x64xf32> -> vector<2x64xf32>
    %c0_3 = arith.constant 0 : index
    %c0_4 = arith.constant 0 : index
    %3 = vector.load %arg3[%c0_3, %c0_4] : memref<1x64xf32, #tpu.memory_space<vmem>>, vector<1x64xf32>
    %4 = vector.broadcast %3 : vector<1x64xf32> to vector<2x64xf32>
    %5 = arith.addf %2, %4 : vector<2x64xf32>
    %cst_5 = arith.constant 0.000000e+00 : f32
    %6 = vector.broadcast %cst_5 : f32 to vector<2x64xf32>
    %7 = arith.maximumf %5, %6 : vector<2x64xf32>
    %c0_6 = arith.constant 0 : index
    %c0_7 = arith.constant 0 : index
    %8 = vector.load %arg4[%c0_6, %c0_7] : memref<64x128xf32, #tpu.memory_space<vmem>>, vector<64x128xf32>
    %cst_8 = arith.constant dense<0.000000e+00> : vector<2x128xf32>
    %9 = tpu.matmul %7, %8, %cst_8 {dimension_numbers = #tpu.dot_dimension_numbers<[1], [0], [0], [1], [0, 0, 1, 1], [], []>} : vector<2x64xf32>, vector<64x128xf32>, vector<2x128xf32> -> vector<2x128xf32>
    %c0_9 = arith.constant 0 : index
    %c0_10 = arith.constant 0 : index
    %10 = vector.load %arg5[%c0_9, %c0_10] : memref<1x128xf32, #tpu.memory_space<vmem>>, vector<1x128xf32>
    %11 = vector.broadcast %10 : vector<1x128xf32> to vector<2x128xf32>
    %12 = arith.addf %9, %11 : vector<2x128xf32>
    %cst_11 = arith.constant 0.000000e+00 : f32
    %13 = vector.broadcast %cst_11 : f32 to vector<2x128xf32>
    %14 = arith.maximumf %12, %13 : vector<2x128xf32>
    %c0_12 = arith.constant 0 : index
    %c0_13 = arith.constant 0 : index
    %15 = vector.load %arg6[%c0_12, %c0_13] : memref<128x32xf32, #tpu.memory_space<vmem>>, vector<128x32xf32>
    %cst_14 = arith.constant dense<0.000000e+00> : vector<2x32xf32>
    %16 = tpu.matmul %14, %15, %cst_14 {dimension_numbers = #tpu.dot_dimension_numbers<[1], [0], [0], [1], [0, 0, 1, 1], [], []>} : vector<2x128xf32>, vector<128x32xf32>, vector<2x32xf32> -> vector<2x32xf32>
    %c0_15 = arith.constant 0 : index
    %c0_16 = arith.constant 0 : index
    %17 = vector.load %arg7[%c0_15, %c0_16] : memref<1x32xf32, #tpu.memory_space<vmem>>, vector<1x32xf32>
    %18 = vector.broadcast %17 : vector<1x32xf32> to vector<2x32xf32>
    %19 = arith.addf %16, %18 : vector<2x32xf32>
    %c0_17 = arith.constant 0 : index
    %c0_18 = arith.constant 0 : index
    %20 = vector.load %arg0[%c0_17, %c0_18] : memref<2x256xf32, #tpu.memory_space<vmem>>, vector<2x256xf32>
    %c0_19 = arith.constant 0 : index
    %c0_20 = arith.constant 0 : index
    %21 = vector.load %arg8[%c0_19, %c0_20] : memref<256x144xf32, #tpu.memory_space<vmem>>, vector<256x144xf32>
    %cst_21 = arith.constant dense<0.000000e+00> : vector<2x144xf32>
    %22 = tpu.matmul %20, %21, %cst_21 {dimension_numbers = #tpu.dot_dimension_numbers<[1], [0], [0], [1], [0, 0, 1, 1], [], []>} : vector<2x256xf32>, vector<256x144xf32>, vector<2x144xf32> -> vector<2x144xf32>
    %c0_22 = arith.constant 0 : index
    %c0_23 = arith.constant 0 : index
    %23 = vector.load %arg9[%c0_22, %c0_23] : memref<32x144xf32, #tpu.memory_space<vmem>>, vector<32x144xf32>
    %cst_24 = arith.constant dense<0.000000e+00> : vector<2x144xf32>
    %24 = tpu.matmul %19, %23, %cst_24 {dimension_numbers = #tpu.dot_dimension_numbers<[1], [0], [0], [1], [0, 0, 1, 1], [], []>} : vector<2x32xf32>, vector<32x144xf32>, vector<2x144xf32> -> vector<2x144xf32>
    %25 = arith.addf %22, %24 : vector<2x144xf32>
    %c0_25 = arith.constant 0 : index
    %c0_26 = arith.constant 0 : index
    %26 = vector.load %arg10[%c0_25, %c0_26] : memref<1x144xf32, #tpu.memory_space<vmem>>, vector<1x144xf32>
    %27 = vector.broadcast %26 : vector<1x144xf32> to vector<2x144xf32>
    %28 = arith.addf %25, %27 : vector<2x144xf32>
    %cst_27 = arith.constant 0.000000e+00 : f32
    %29 = vector.broadcast %cst_27 : f32 to vector<2x144xf32>
    %30 = arith.maximumf %28, %29 : vector<2x144xf32>
    %c0_28 = arith.constant 0 : index
    %c0_29 = arith.constant 0 : index
    %31 = vector.load %arg11[%c0_28, %c0_29] : memref<144x5xf32, #tpu.memory_space<vmem>>, vector<144x5xf32>
    %cst_30 = arith.constant dense<0.000000e+00> : vector<2x5xf32>
    %32 = tpu.matmul %30, %31, %cst_30 {dimension_numbers = #tpu.dot_dimension_numbers<[1], [0], [0], [1], [0, 0, 1, 1], [], []>} : vector<2x144xf32>, vector<144x5xf32>, vector<2x5xf32> -> vector<2x5xf32>
    %c0_31 = arith.constant 0 : index
    %c0_32 = arith.constant 0 : index
    %33 = vector.load %arg12[%c0_31, %c0_32] : memref<1x5xf32, #tpu.memory_space<vmem>>, vector<1x5xf32>
    %34 = vector.broadcast %33 : vector<1x5xf32> to vector<2x5xf32>
    %35 = arith.addf %32, %34 : vector<2x5xf32>
    %c0_33 = arith.constant 0 : index
    %c0_34 = arith.constant 0 : index
    %36 = vector.load %arg13[%c0_33, %c0_34] : memref<2x5xf32, #tpu.memory_space<vmem>>, vector<2x5xf32>
    tpu.vector_store %arg13[%c0_33, %c0_34], %35 {strides = array<i32>} : memref<2x5xf32, #tpu.memory_space<vmem>>, vector<2x5xf32>,
    return
  }
}

</mosaic_0001>

<llo_original>
// kernel: fwd.3
$region0: #{fwd.3}
  #allocation0 [shape = 'u32[]', space=smem, size = 0x4, offset = 0x4, fixed_abs, tag = 'smem constant byte address 0x4 - core index']
  #allocation1 [shape = 'u32[144,128]{1,0:T(1,128)}', space=vmem, size = 0x12000, scoped, tag = 'internal scratch']
  %s0 = inlined_call_operand.vmem [shape: f32[2,256], index: 0, kind: input, shape index: {}]
  %s1 = inlined_call_operand.vmem [shape: f32[2,2], index: 1, kind: input, shape index: {}]
  %s2 = inlined_call_operand.vmem [shape: f32[2,64], index: 2, kind: input, shape index: {}]
  %s3 = inlined_call_operand.vmem [shape: f32[1,64], index: 3, kind: input, shape index: {}]
  %s4 = inlined_call_operand.vmem [shape: f32[64,128], index: 4, kind: input, shape index: {}]
  %s5 = inlined_call_operand.vmem [shape: f32[1,128], index: 5, kind: input, shape index: {}]
  %s6 = inlined_call_operand.vmem [shape: f32[128,32], index: 6, kind: input, shape index: {}]
  %s7 = inlined_call_operand.vmem [shape: f32[1,32], index: 7, kind: input, shape index: {}]
  %s8 = inlined_call_operand.vmem [shape: f32[256,144], index: 8, kind: input, shape index: {}]
  %s9 = inlined_call_operand.vmem [shape: f32[32,144], index: 9, kind: input, shape index: {}]
  %s10 = inlined_call_operand.vmem [shape: f32[1,144], index: 10, kind: input, shape index: {}]
  %s11 = inlined_call_operand.vmem [shape: f32[144,5], index: 11, kind: input, shape index: {}]
  %s12 = inlined_call_operand.vmem [shape: f32[1,5], index: 12, kind: input, shape index: {}]
  %s13 = inlined_call_operand.hbm [shape: f32[2,5], index: 13, kind: output, shape index: {}]
  %s14 = sld [smem:[#allocation0]]
  $region62: #{fwd.3} parent=0
    _
  %s16 = ssub.s32 1, %s14
  %s17 = scalar_select 0, %s16, %s14
  $region1: #{fwd.3} parent=0
    #allocation2 [shape = 'u8[1024]{0}', space=vmem, size = 0x400, scoped, tag = 'output window, operand 0, single buffered']
    #allocation3 [shape = 's32[1]{0}', space=sflag, size = 0x4, scoped, tag = 'scoped memory for fwd.3']
    %18 = vsyncpa [#allocation3], 0
    // Predicated region
    $region2: #{fwd.3} parent=1 // pred_check
      _
    $region3: #{fwd.3} parent=1 // pred_check_branch
      %20 = sbr.rel (0) target = $region5
    $region4: #{fwd.3} parent=1 // pred_region
      _
    $region5: #{fwd.3} parent=1 // pred_fallthru
      _
    // Predicated region
    $region6: #{fwd.3} parent=1 // pred_check
      _
    $region7: #{fwd.3} parent=1 // pred_check_branch
      %22 = sbr.rel (0) target = $region9
    $region8: #{fwd.3} parent=1 // pred_region
      _
    $region9: #{fwd.3} parent=1 // pred_fallthru
      _
    // Predicated region
    $region10: #{fwd.3} parent=1 // pred_check
      _
    $region11: #{fwd.3} parent=1 // pred_check_branch
      %24 = sbr.rel (0) target = $region13
    $region12: #{fwd.3} parent=1 // pred_region
      _
    $region13: #{fwd.3} parent=1 // pred_fallthru
      _
    // Predicated region
    $region14: #{fwd.3} parent=1 // pred_check
      _
    $region15: #{fwd.3} parent=1 // pred_check_branch
      %26 = sbr.rel (0) target = $region17
    $region16: #{fwd.3} parent=1 // pred_region
      _
    $region17: #{fwd.3} parent=1 // pred_fallthru
      _
    // Predicated region
    $region18: #{fwd.3} parent=1 // pred_check
      _
    $region19: #{fwd.3} parent=1 // pred_check_branch
      %28 = sbr.rel (0) target = $region21
    $region20: #{fwd.3} parent=1 // pred_region
      _
    $region21: #{fwd.3} parent=1 // pred_fallthru
      _
    // Predicated region
    $region22: #{fwd.3} parent=1 // pred_check
      _
    $region23: #{fwd.3} parent=1 // pred_check_branch
      %30 = sbr.rel (0) target = $region25
    $region24: #{fwd.3} parent=1 // pred_region
      _
    $region25: #{fwd.3} parent=1 // pred_fallthru
      _
    // Predicated region
    $region26: #{fwd.3} parent=1 // pred_check
      _
    $region27: #{fwd.3} parent=1 // pred_check_branch
      %32 = sbr.rel (0) target = $region29
    $region28: #{fwd.3} parent=1 // pred_region
      _
    $region29: #{fwd.3} parent=1 // pred_fallthru
      _
    // Predicated region
    $region30: #{fwd.3} parent=1 // pred_check
      _
    $region31: #{fwd.3} parent=1 // pred_check_branch
      %34 = sbr.rel (0) target = $region33
    $region32: #{fwd.3} parent=1 // pred_region
      _
    $region33: #{fwd.3} parent=1 // pred_fallthru
      _
    // Predicated region
    $region34: #{fwd.3} parent=1 // pred_check
      _
    $region35: #{fwd.3} parent=1 // pred_check_branch
      %36 = sbr.rel (0) target = $region37
    $region36: #{fwd.3} parent=1 // pred_region
      _
    $region37: #{fwd.3} parent=1 // pred_fallthru
      _
    // Predicated region
    $region38: #{fwd.3} parent=1 // pred_check
      _
    $region39: #{fwd.3} parent=1 // pred_check_branch
      %38 = sbr.rel (0) target = $region41
    $region40: #{fwd.3} parent=1 // pred_region
      _
    $region41: #{fwd.3} parent=1 // pred_fallthru
      _
    // Predicated region
    $region42: #{fwd.3} parent=1 // pred_check
      _
    $region43: #{fwd.3} parent=1 // pred_check_branch
      %40 = sbr.rel (0) target = $region45
    $region44: #{fwd.3} parent=1 // pred_region
      _
    $region45: #{fwd.3} parent=1 // pred_fallthru
      _
    // Predicated region
    $region46: #{fwd.3} parent=1 // pred_check
      _
    $region47: #{fwd.3} parent=1 // pred_check_branch
      %42 = sbr.rel (0) target = $region49
    $region48: #{fwd.3} parent=1 // pred_region
      _
    $region49: #{fwd.3} parent=1 // pred_fallthru
      _
    // Predicated region
    $region50: #{fwd.3} parent=1 // pred_check
      _
    $region51: #{fwd.3} parent=1 // pred_check_branch
      %44 = sbr.rel (0) target = $region53
    $region52: #{fwd.3} parent=1 // pred_region
      _
    $region53: #{fwd.3} parent=1 // pred_fallthru
      _
    %v45 = vld [vmem:[%s1] sm:$0x3]
    %v46 = vld [vmem:[%s2] sm:$0x3]
    %v47 = vld [vmem:[%s3] sm:$0x1]
    %v49 = vlaneseq
    %v50 = vshrl.u32 %v49, 7
    %v51 = vsub.s32 0, %v50
    %v52 = vrot.slane %v47, %v51
    %vm54 = vcmask 15360
    %v56 = vsel %vm54, %v45, 0
    %vm58 = vcmask 1041408
    %v60 = vsel %vm58, %v46, 0
    %62 = vmatprep.subr.mxu0 0.0
    %63 = vmatpush1.msra.mxu0 0.0
    %64 = vmatprep.subr.mxu0 0.0
    %65 = vmatpush1.msra.mxu0 0.0
    %66 = vmatprep.subr.mxu0 0.0
    %67 = vmatpush1.msra.mxu0 0.0
    %68 = vmatprep.subr.mxu0 0.0
    %69 = vmatpush1.msra.mxu0 0.0
    %70 = vmatprep.subr.mxu0 0.0
    %71 = vmatpush1.msra.mxu0 0.0
    %72 = vmatprep.subr.mxu0 0.0
    %73 = vmatpush1.msra.mxu0 0.0
    %74 = vmatprep.subr.mxu0 0.0
    %75 = vmatpush1.msra.mxu0 0.0
    %76 = vmatprep.subr.mxu0 0.0
    %77 = vmatpush1.msra.mxu0 0.0
    %78 = vmatprep.subr.mxu0 0.0
    %79 = vmatpush1.msra.mxu0 0.0
    %80 = vmatprep.subr.mxu0 0.0
    %81 = vmatpush1.msra.mxu0 0.0
    %82 = vmatprep.subr.mxu0 0.0
    %83 = vmatpush1.msra.mxu0 0.0
    %84 = vmatprep.subr.mxu0 0.0
    %85 = vmatpush1.msra.mxu0 0.0
    %86 = vmatprep.subr.mxu0 0.0
    %87 = vmatpush1.msra.mxu0 0.0
    %88 = vmatprep.subr.mxu0 0.0
    %89 = vmatpush1.msra.mxu0 0.0
    %90 = vmatprep.subr.mxu0 0.0
    %91 = vmatpush1.msra.mxu0 0.0
    %92 = vmatprep.subr.mxu0 0.0
    %93 = vmatpush1.msra.mxu0 %v60
    %94 = vmatprep.subr.mxu0 0.0
    %95 = vmatpush2.msra.mxu0 0.0
    %96 = vmatprep.subr.mxu0 0.0
    %97 = vmatpush2.msra.mxu0 0.0
    %98 = vmatprep.subr.mxu0 0.0
    %99 = vmatpush2.msra.mxu0 0.0
    %100 = vmatprep.subr.mxu0 0.0
    %101 = vmatpush2.msra.mxu0 0.0
    %102 = vmatprep.subr.mxu0 0.0
    %103 = vmatpush2.msra.mxu0 0.0
    %104 = vmatprep.subr.mxu0 0.0
    %105 = vmatpush2.msra.mxu0 0.0
    %106 = vmatprep.subr.mxu0 0.0
    %107 = vmatpush2.msra.mxu0 0.0
    %108 = vmatprep.subr.mxu0 0.0
    %109 = vmatpush2.msra.mxu0 0.0
    %110 = vmatprep.subr.mxu0 0.0
    %111 = vmatpush2.msra.mxu0 0.0
    %112 = vmatprep.subr.mxu0 0.0
    %113 = vmatpush2.msra.mxu0 0.0
    %114 = vmatprep.subr.mxu0 0.0
    %115 = vmatpush2.msra.mxu0 0.0
    %116 = vmatprep.subr.mxu0 0.0
    %117 = vmatpush2.msra.mxu0 0.0
    %118 = vmatprep.subr.mxu0 0.0
    %119 = vmatpush2.msra.mxu0 0.0
    %120 = vmatprep.subr.mxu0 0.0
    %121 = vmatpush2.msra.mxu0 0.0
    %122 = vmatprep.subr.mxu0 0.0
    %123 = vmatpush2.msra.mxu0 0.0
    %124 = vmatprep.subr.mxu0 0.0
    %125 = vmatpush2.msra.mxu0 0.0
    %126 = vmatprep.mubr.f32.mxu0 0.0
    %127 = vmatmul.mubr.f32.gmra.mxu0 %v56
    %v128 = vpop.f32.mrf.mxu0
    %v129 = vadd.f32 %v52, %v128
    %v130 = vpop.f32.mrf.mxu0
    %131 = vdwg.mxu0
    %v132 = vmax.f32 %v129, 0.0
    %v133 = vld [vmem:[%s4] sm:$0xff]
    %v134 = vld [vmem:[%s4 + $0x8] sm:$0xff]
    %v135 = vld [vmem:[%s4 + $0x10] sm:$0xff]
    %v136 = vld [vmem:[%s4 + $0x18] sm:$0xff]
    %v137 = vld [vmem:[%s4 + $0x20] sm:$0xff]
    %v138 = vld [vmem:[%s4 + $0x28] sm:$0xff]
    %v139 = vld [vmem:[%s4 + $0x30] sm:$0xff]
    %v140 = vld [vmem:[%s4 + $0x38] sm:$0xff]
    %v141 = vld [vmem:[%s5] sm:$0x1]
    %v143 = vlaneseq
    %v144 = vshrl.u32 %v143, 7
    %v145 = vsub.s32 0, %v144
    %v146 = vrot.slane %v141, %v145
    %vm148 = vcmask 523264
    %v150 = vsel %vm148, %v132, 0
    %152 = vmatprep.subr.mxu0 0.0
    %153 = vmatpush1.msra.mxu0 0.0
    %154 = vmatprep.subr.mxu0 0.0
    %155 = vmatpush1.msra.mxu0 0.0
    %156 = vmatprep.subr.mxu0 0.0
    %157 = vmatpush1.msra.mxu0 0.0
    %158 = vmatprep.subr.mxu0 0.0
    %159 = vmatpush1.msra.mxu0 0.0
    %160 = vmatprep.subr.mxu0 0.0
    %161 = vmatpush1.msra.mxu0 0.0
    %162 = vmatprep.subr.mxu0 0.0
    %163 = vmatpush1.msra.mxu0 0.0
    %164 = vmatprep.subr.mxu0 0.0
    %165 = vmatpush1.msra.mxu0 0.0
    %166 = vmatprep.subr.mxu0 0.0
    %167 = vmatpush1.msra.mxu0 0.0
    %168 = vmatprep.subr.mxu0 0.0
    %169 = vmatpush1.msra.mxu0 %v140
    %170 = vmatprep.subr.mxu0 0.0
    %171 = vmatpush1.msra.mxu0 %v139
    %172 = vmatprep.subr.mxu0 0.0
    %173 = vmatpush1.msra.mxu0 %v138
    %174 = vmatprep.subr.mxu0 0.0
    %175 = vmatpush1.msra.mxu0 %v137
    %176 = vmatprep.subr.mxu0 0.0
    %177 = vmatpush1.msra.mxu0 %v136
    %178 = vmatprep.subr.mxu0 0.0
    %179 = vmatpush1.msra.mxu0 %v135
    %180 = vmatprep.subr.mxu0 0.0
    %181 = vmatpush1.msra.mxu0 %v134
    %182 = vmatprep.subr.mxu0 0.0
    %183 = vmatpush1.msra.mxu0 %v133
    %184 = vmatprep.subr.mxu0 0.0
    %185 = vmatpush2.msra.mxu0 0.0
    %186 = vmatprep.subr.mxu0 0.0
    %187 = vmatpush2.msra.mxu0 0.0
    %188 = vmatprep.subr.mxu0 0.0
    %189 = vmatpush2.msra.mxu0 0.0
    %190 = vmatprep.subr.mxu0 0.0
    %191 = vmatpush2.msra.mxu0 0.0
    %192 = vmatprep.subr.mxu0 0.0
    %193 = vmatpush2.msra.mxu0 0.0
    %194 = vmatprep.subr.mxu0 0.0
    %195 = vmatpush2.msra.mxu0 0.0
    %196 = vmatprep.subr.mxu0 0.0
    %197 = vmatpush2.msra.mxu0 0.0
    %198 = vmatprep.subr.mxu0 0.0
    %199 = vmatpush2.msra.mxu0 0.0
    %200 = vmatprep.subr.mxu0 0.0
    %201 = vmatpush2.msra.mxu0 0.0
    %202 = vmatprep.subr.mxu0 0.0
    %203 = vmatpush2.msra.mxu0 0.0
    %204 = vmatprep.subr.mxu0 0.0
    %205 = vmatpush2.msra.mxu0 0.0
    %206 = vmatprep.subr.mxu0 0.0
    %207 = vmatpush2.msra.mxu0 0.0
    %208 = vmatprep.subr.mxu0 0.0
    %209 = vmatpush2.msra.mxu0 0.0
    %210 = vmatprep.subr.mxu0 0.0
    %211 = vmatpush2.msra.mxu0 0.0
    %212 = vmatprep.subr.mxu0 0.0
    %213 = vmatpush2.msra.mxu0 0.0
    %214 = vmatprep.subr.mxu0 0.0
    %215 = vmatpush2.msra.mxu0 0.0
    %216 = vmatprep.mubr.f32.mxu0 0.0
    %217 = vmatmul.mubr.f32.gmra.mxu0 %v150
    %v218 = vpop.f32.mrf.mxu0
    %v219 = vadd.f32 %v146, %v218
    %v220 = vpop.f32.mrf.mxu0
    %221 = vdwg.mxu0
    %v222 = vmax.f32 %v219, 0.0
    %v223 = vld [vmem:[%s6] sm:$0xff]
    %v224 = vld [vmem:[%s6 + $0x8] sm:$0xff]
    %v225 = vld [vmem:[%s6 + $0x10] sm:$0xff]
    %v226 = vld [vmem:[%s6 + $0x18] sm:$0xff]
    %v227 = vld [vmem:[%s6 + $0x20] sm:$0xff]
    %v228 = vld [vmem:[%s6 + $0x28] sm:$0xff]
    %v229 = vld [vmem:[%s6 + $0x30] sm:$0xff]
    %v230 = vld [vmem:[%s6 + $0x38] sm:$0xff]
    %v231 = vld [vmem:[%s6 + $0x40] sm:$0xff]
    %v232 = vld [vmem:[%s6 + $0x48] sm:$0xff]
    %v233 = vld [vmem:[%s6 + $0x50] sm:$0xff]
    %v234 = vld [vmem:[%s6 + $0x58] sm:$0xff]
    %v235 = vld [vmem:[%s6 + $0x60] sm:$0xff]
    %v236 = vld [vmem:[%s6 + $0x68] sm:$0xff]
    %v237 = vld [vmem:[%s6 + $0x70] sm:$0xff]
    %v238 = vld [vmem:[%s6 + $0x78] sm:$0xff]
    %v239 = vld [vmem:[%s7] sm:$0x1]
    %v241 = vlaneseq
    %v242 = vshrl.u32 %v241, 7
    %v243 = vsub.s32 0, %v242
    %v244 = vrot.slane %v239, %v243
    %246 = vmatprep.subr.mxu0 0.0
    %247 = vmatpush1.msra.mxu0 %v238
    %248 = vmatprep.subr.mxu0 0.0
    %249 = vmatpush1.msra.mxu0 %v237
    %250 = vmatprep.subr.mxu0 0.0
    %251 = vmatpush1.msra.mxu0 %v236
    %252 = vmatprep.subr.mxu0 0.0
    %253 = vmatpush1.msra.mxu0 %v235
    %254 = vmatprep.subr.mxu0 0.0
    %255 = vmatpush1.msra.mxu0 %v234
    %256 = vmatprep.subr.mxu0 0.0
    %257 = vmatpush1.msra.mxu0 %v233
    %258 = vmatprep.subr.mxu0 0.0
    %259 = vmatpush1.msra.mxu0 %v232
    %260 = vmatprep.subr.mxu0 0.0
    %261 = vmatpush1.msra.mxu0 %v231
    %262 = vmatprep.subr.mxu0 0.0
    %263 = vmatpush1.msra.mxu0 %v230
    %264 = vmatprep.subr.mxu0 0.0
    %265 = vmatpush1.msra.mxu0 %v229
    %266 = vmatprep.subr.mxu0 0.0
    %267 = vmatpush1.msra.mxu0 %v228
    %268 = vmatprep.subr.mxu0 0.0
    %269 = vmatpush1.msra.mxu0 %v227
    %270 = vmatprep.subr.mxu0 0.0
    %271 = vmatpush1.msra.mxu0 %v226
    %272 = vmatprep.subr.mxu0 0.0
    %273 = vmatpush1.msra.mxu0 %v225
    %274 = vmatprep.subr.mxu0 0.0
    %275 = vmatpush1.msra.mxu0 %v224
    %276 = vmatprep.subr.mxu0 0.0
    %277 = vmatpush1.msra.mxu0 %v223
    %278 = vmatprep.subr.mxu0 0.0
    %279 = vmatpush2.msra.mxu0 0.0
    %280 = vmatprep.subr.mxu0 0.0
    %281 = vmatpush2.msra.mxu0 0.0
    %282 = vmatprep.subr.mxu0 0.0
    %283 = vmatpush2.msra.mxu0 0.0
    %284 = vmatprep.subr.mxu0 0.0
    %285 = vmatpush2.msra.mxu0 0.0
    %286 = vmatprep.subr.mxu0 0.0
    %287 = vmatpush2.msra.mxu0 0.0
    %288 = vmatprep.subr.mxu0 0.0
    %289 = vmatpush2.msra.mxu0 0.0
    %290 = vmatprep.subr.mxu0 0.0
    %291 = vmatpush2.msra.mxu0 0.0
    %292 = vmatprep.subr.mxu0 0.0
    %293 = vmatpush2.msra.mxu0 0.0
    %294 = vmatprep.subr.mxu0 0.0
    %295 = vmatpush2.msra.mxu0 0.0
    %296 = vmatprep.subr.mxu0 0.0
    %297 = vmatpush2.msra.mxu0 0.0
    %298 = vmatprep.subr.mxu0 0.0
    %299 = vmatpush2.msra.mxu0 0.0
    %300 = vmatprep.subr.mxu0 0.0
    %301 = vmatpush2.msra.mxu0 0.0
    %302 = vmatprep.subr.mxu0 0.0
    %303 = vmatpush2.msra.mxu0 0.0
    %304 = vmatprep.subr.mxu0 0.0
    %305 = vmatpush2.msra.mxu0 0.0
    %306 = vmatprep.subr.mxu0 0.0
    %307 = vmatpush2.msra.mxu0 0.0
    %308 = vmatprep.subr.mxu0 0.0
    %309 = vmatpush2.msra.mxu0 0.0
    %310 = vmatprep.mubr.f32.mxu0 0.0
    %311 = vmatmul.mubr.f32.gmra.mxu0 %v222
    %v312 = vpop.f32.mrf.mxu0
    %v313 = vadd.f32 %v244, %v312
    %v314 = vpop.f32.mrf.mxu0
    %315 = vdwg.mxu0
    %v316 = vld [vmem:[%s0] sm:$0xf]
    %v317 = vld [vmem:[%s8] sm:$0xff]
    %v318 = vld [vmem:[%s8 + $0x8] sm:$0xff]
    %v319 = vld [vmem:[%s8 + $0x10] sm:$0xff]
    %v320 = vld [vmem:[%s8 + $0x18] sm:$0xff]
    %v321 = vld [vmem:[%s8 + $0x20] sm:$0xff]
    %v322 = vld [vmem:[%s8 + $0x28] sm:$0xff]
    %v323 = vld [vmem:[%s8 + $0x30] sm:$0xff]
    %v324 = vld [vmem:[%s8 + $0x38] sm:$0xff]
    %v325 = vld [vmem:[%s8 + $0x40] sm:$0xff]
    %v326 = vld [vmem:[%s8 + $0x48] sm:$0xff]
    %v327 = vld [vmem:[%s8 + $0x50] sm:$0xff]
    %v328 = vld [vmem:[%s8 + $0x58] sm:$0xff]
    %v329 = vld [vmem:[%s8 + $0x60] sm:$0xff]
    %v330 = vld [vmem:[%s8 + $0x68] sm:$0xff]
    %v331 = vld [vmem:[%s8 + $0x70] sm:$0xff]
    %v332 = vld [vmem:[%s8 + $0x78] sm:$0xff]
    %v333 = vld [vmem:[%s8 + $0x80] sm:$0xff]
    %v334 = vld [vmem:[%s8 + $0x88] sm:$0xff]
    %v335 = vld [vmem:[%s8 + $0x90] sm:$0xff]
    %v336 = vld [vmem:[%s8 + $0x98] sm:$0xff]
    %v337 = vld [vmem:[%s8 + $0xa0] sm:$0xff]
    %v338 = vld [vmem:[%s8 + $0xa8] sm:$0xff]
    %v339 = vld [vmem:[%s8 + $0xb0] sm:$0xff]
    %v340 = vld [vmem:[%s8 + $0xb8] sm:$0xff]
    %v341 = vld [vmem:[%s8 + $0xc0] sm:$0xff]
    %v342 = vld [vmem:[%s8 + $0xc8] sm:$0xff]
    %v343 = vld [vmem:[%s8 + $0xd0] sm:$0xff]
    %v344 = vld [vmem:[%s8 + $0xd8] sm:$0xff]
    %v345 = vld [vmem:[%s8 + $0xe0] sm:$0xff]
    %v346 = vld [vmem:[%s8 + $0xe8] sm:$0xff]
    %v347 = vld [vmem:[%s8 + $0xf0] sm:$0xff]
    %v348 = vld [vmem:[%s8 + $0xf8] sm:$0xff]
    %v349 = vld [vmem:[%s8 + $0x100] sm:$0xff]
    %v350 = vld [vmem:[%s8 + $0x108] sm:$0xff]
    %v351 = vld [vmem:[%s8 + $0x110] sm:$0xff]
    %v352 = vld [vmem:[%s8 + $0x118] sm:$0xff]
    %v353 = vld [vmem:[%s8 + $0x120] sm:$0xff]
    %v354 = vld [vmem:[%s8 + $0x128] sm:$0xff]
    %v355 = vld [vmem:[%s8 + $0x130] sm:$0xff]
    %v356 = vld [vmem:[%s8 + $0x138] sm:$0xff]
    %v357 = vld [vmem:[%s8 + $0x140] sm:$0xff]
    %v358 = vld [vmem:[%s8 + $0x148] sm:$0xff]
    %v359 = vld [vmem:[%s8 + $0x150] sm:$0xff]
    %v360 = vld [vmem:[%s8 + $0x158] sm:$0xff]
    %v361 = vld [vmem:[%s8 + $0x160] sm:$0xff]
    %v362 = vld [vmem:[%s8 + $0x168] sm:$0xff]
    %v363 = vld [vmem:[%s8 + $0x170] sm:$0xff]
    %v364 = vld [vmem:[%s8 + $0x178] sm:$0xff]
    %v365 = vld [vmem:[%s8 + $0x180] sm:$0xff]
    %v366 = vld [vmem:[%s8 + $0x188] sm:$0xff]
    %v367 = vld [vmem:[%s8 + $0x190] sm:$0xff]
    %v368 = vld [vmem:[%s8 + $0x198] sm:$0xff]
    %v369 = vld [vmem:[%s8 + $0x1a0] sm:$0xff]
    %v370 = vld [vmem:[%s8 + $0x1a8] sm:$0xff]
    %v371 = vld [vmem:[%s8 + $0x1b0] sm:$0xff]
    %v372 = vld [vmem:[%s8 + $0x1b8] sm:$0xff]
    %v373 = vld [vmem:[%s8 + $0x1c0] sm:$0xff]
    %v374 = vld [vmem:[%s8 + $0x1c8] sm:$0xff]
    %v375 = vld [vmem:[%s8 + $0x1d0] sm:$0xff]
    %v376 = vld [vmem:[%s8 + $0x1d8] sm:$0xff]
    %v377 = vld [vmem:[%s8 + $0x1e0] sm:$0xff]
    %v378 = vld [vmem:[%s8 + $0x1e8] sm:$0xff]
    %v379 = vld [vmem:[%s8 + $0x1f0] sm:$0xff]
    %v380 = vld [vmem:[%s8 + $0x1f8] sm:$0xff]
    %v381 = vld [vmem:[%s9] sm:$0xff]
    %v382 = vld [vmem:[%s9 + $0x8] sm:$0xff]
    %v383 = vld [vmem:[%s9 + $0x10] sm:$0xff]
    %v384 = vld [vmem:[%s9 + $0x18] sm:$0xff]
    %v385 = vld [vmem:[%s9 + $0x20] sm:$0xff]
    %v386 = vld [vmem:[%s9 + $0x28] sm:$0xff]
    %v387 = vld [vmem:[%s9 + $0x30] sm:$0xff]
    %v388 = vld [vmem:[%s9 + $0x38] sm:$0xff]
    %vm389 = vcmask 261120
    %v391 = vsel %vm389, %v313, 0
    %393 = vmatprep.subr.mxu0 0.0
    %394 = vmatpush1.msra.mxu0 0.0
    %395 = vmatprep.subr.mxu0 0.0
    %396 = vmatpush1.msra.mxu0 0.0
    %397 = vmatprep.subr.mxu0 0.0
    %398 = vmatpush1.msra.mxu0 0.0
    %399 = vmatprep.subr.mxu0 0.0
    %400 = vmatpush1.msra.mxu0 0.0
    %401 = vmatprep.subr.mxu0 0.0
    %402 = vmatpush1.msra.mxu0 0.0
    %403 = vmatprep.subr.mxu0 0.0
    %404 = vmatpush1.msra.mxu0 0.0
    %405 = vmatprep.subr.mxu0 0.0
    %406 = vmatpush1.msra.mxu0 0.0
    %407 = vmatprep.subr.mxu0 0.0
    %408 = vmatpush1.msra.mxu0 0.0
    %409 = vmatprep.subr.mxu0 0.0
    %410 = vmatpush1.msra.mxu0 0.0
    %411 = vmatprep.subr.mxu0 0.0
    %412 = vmatpush1.msra.mxu0 0.0
    %413 = vmatprep.subr.mxu0 0.0
    %414 = vmatpush1.msra.mxu0 0.0
    %415 = vmatprep.subr.mxu0 0.0
    %416 = vmatpush1.msra.mxu0 0.0
    %417 = vmatprep.subr.mxu0 %v388
    %418 = vmatpush1.msra.mxu0 %v387
    %419 = vmatprep.subr.mxu0 %v386
    %420 = vmatpush1.msra.mxu0 %v385
    %421 = vmatprep.subr.mxu0 %v384
    %422 = vmatpush1.msra.mxu0 %v383
    %423 = vmatprep.subr.mxu0 %v382
    %424 = vmatpush1.msra.mxu0 %v381
    %425 = vmatprep.subr.mxu0 0.0
    %426 = vmatpush2.msra.mxu0 0.0
    %427 = vmatprep.subr.mxu0 0.0
    %428 = vmatpush2.msra.mxu0 0.0
    %429 = vmatprep.subr.mxu0 0.0
    %430 = vmatpush2.msra.mxu0 0.0
    %431 = vmatprep.subr.mxu0 0.0
    %432 = vmatpush2.msra.mxu0 0.0
    %433 = vmatprep.subr.mxu0 0.0
    %434 = vmatpush2.msra.mxu0 0.0
    %435 = vmatprep.subr.mxu0 0.0
    %436 = vmatpush2.msra.mxu0 0.0
    %437 = vmatprep.subr.mxu0 0.0
    %438 = vmatpush2.msra.mxu0 0.0
    %439 = vmatprep.subr.mxu0 0.0
    %440 = vmatpush2.msra.mxu0 0.0
    %441 = vmatprep.subr.mxu0 0.0
    %442 = vmatpush2.msra.mxu0 0.0
    %443 = vmatprep.subr.mxu0 0.0
    %444 = vmatpush2.msra.mxu0 0.0
    %445 = vmatprep.subr.mxu0 0.0
    %446 = vmatpush2.msra.mxu0 0.0
    %447 = vmatprep.subr.mxu0 0.0
    %448 = vmatpush2.msra.mxu0 0.0
    %449 = vmatprep.subr.mxu0 0.0
    %450 = vmatpush2.msra.mxu0 0.0
    %451 = vmatprep.subr.mxu0 0.0
    %452 = vmatpush2.msra.mxu0 0.0
    %453 = vmatprep.subr.mxu0 0.0
    %454 = vmatpush2.msra.mxu0 0.0
    %455 = vmatprep.subr.mxu0 0.0
    %456 = vmatpush2.msra.mxu0 0.0
    %457 = vmatprep.mubr.f32.mxu0 0.0
    %458 = vmatmul.mubr.f32.gmra.mxu0 %v391
    %v459 = vpop.f32.mrf.mxu0
    %v460 = vadd.f32 0.0, %v459
    %v461 = vpop.f32.mrf.mxu0
    %v462 = vadd.f32 0.0, %v461
    %463 = vdwg.mxu0
    %v466 = vunpack.c.l.s4 1983009808
    %v467 = vunpack.c.0.s8 %v466
    %v468 = vlaneseq
    %v469 = vshrl.u32 %v468, 7
    %v470 = vsub.s32 %v467, %v469
    %v471 = vrot.slane %v316, %v470
    %v472 = vcombine.high %v471, %v471
    %475 = vmatprep.subr.mxu0 %v348
    %476 = vmatpush1.msra.mxu0 %v347
    %477 = vmatprep.subr.mxu0 %v346
    %478 = vmatpush1.msra.mxu0 %v345
    %479 = vmatprep.subr.mxu0 %v344
    %480 = vmatpush1.msra.mxu0 %v343
    %481 = vmatprep.subr.mxu0 %v342
    %482 = vmatpush1.msra.mxu0 %v341
    %483 = vmatprep.subr.mxu0 %v340
    %484 = vmatpush1.msra.mxu0 %v339
    %485 = vmatprep.subr.mxu0 %v338
    %486 = vmatpush1.msra.mxu0 %v337
    %487 = vmatprep.subr.mxu0 %v336
    %488 = vmatpush1.msra.mxu0 %v335
    %489 = vmatprep.subr.mxu0 %v334
    %490 = vmatpush1.msra.mxu0 %v333
    %491 = vmatprep.subr.mxu0 %v332
    %492 = vmatpush1.msra.mxu0 %v331
    %493 = vmatprep.subr.mxu0 %v330
    %494 = vmatpush1.msra.mxu0 %v329
    %495 = vmatprep.subr.mxu0 %v328
    %496 = vmatpush1.msra.mxu0 %v327
    %497 = vmatprep.subr.mxu0 %v326
    %498 = vmatpush1.msra.mxu0 %v325
    %499 = vmatprep.subr.mxu0 %v324
    %500 = vmatpush1.msra.mxu0 %v323
    %501 = vmatprep.subr.mxu0 %v322
    %502 = vmatpush1.msra.mxu0 %v321
    %503 = vmatprep.subr.mxu0 %v320
    %504 = vmatpush1.msra.mxu0 %v319
    %505 = vmatprep.subr.mxu0 %v318
    %506 = vmatpush1.msra.mxu0 %v317
    %507 = vmatprep.subr.mxu0 %v380
    %508 = vmatpush2.msra.mxu0 %v379
    %509 = vmatprep.subr.mxu0 %v378
    %510 = vmatpush2.msra.mxu0 %v377
    %511 = vmatprep.subr.mxu0 %v376
    %512 = vmatpush2.msra.mxu0 %v375
    %513 = vmatprep.subr.mxu0 %v374
    %514 = vmatpush2.msra.mxu0 %v373
    %515 = vmatprep.subr.mxu0 %v372
    %516 = vmatpush2.msra.mxu0 %v371
    %517 = vmatprep.subr.mxu0 %v370
    %518 = vmatpush2.msra.mxu0 %v369
    %519 = vmatprep.subr.mxu0 %v368
    %520 = vmatpush2.msra.mxu0 %v367
    %521 = vmatprep.subr.mxu0 %v366
    %522 = vmatpush2.msra.mxu0 %v365
    %523 = vmatprep.subr.mxu0 %v364
    %524 = vmatpush2.msra.mxu0 %v363
    %525 = vmatprep.subr.mxu0 %v362
    %526 = vmatpush2.msra.mxu0 %v361
    %527 = vmatprep.subr.mxu0 %v360
    %528 = vmatpush2.msra.mxu0 %v359
    %529 = vmatprep.subr.mxu0 %v358
    %530 = vmatpush2.msra.mxu0 %v357
    %531 = vmatprep.subr.mxu0 %v356
    %532 = vmatpush2.msra.mxu0 %v355
    %533 = vmatprep.subr.mxu0 %v354
    %534 = vmatpush2.msra.mxu0 %v353
    %535 = vmatprep.subr.mxu0 %v352
    %536 = vmatpush2.msra.mxu0 %v351
    %537 = vmatprep.subr.mxu0 %v350
    %538 = vmatpush2.msra.mxu0 %v349
    %539 = vmatprep.mubr.f32.mxu0 %v472
    %540 = vmatmul.mubr.f32.gmra.mxu0 %v471
    %v541 = vpop.f32.mrf.mxu0
    %v542 = vadd.f32 %v460, %v541
    %v543 = vpop.f32.mrf.mxu0
    %v544 = vadd.f32 %v462, %v543
    %545 = vdwg.mxu0
    %v546 = vld [vmem:[%s10] sm:$0x3]
    %v548 = vlaneseq
    %v549 = vshrl.u32 %v548, 7
    %v550 = vsub.s32 0, %v549
    %v551 = vrot.slane %v546, %v550
    %v552 = vlaneseq
    %v553 = vshrl.u32 %v552, 7
    %v554 = vsub.s32 1, %v553
    %v555 = vrot.slane %v546, %v554
    %v558 = vadd.f32 %v542, %v551
    %v559 = vadd.f32 %v544, %v555
    %v560 = vmax.f32 %v558, 0.0
    %v561 = vmax.f32 %v559, 0.0
    %v562 = vld [vmem:[%s11] sm:$0xff]
    %v563 = vld [vmem:[%s11 + $0x8] sm:$0xff]
    %v564 = vld [vmem:[%s11 + $0x10] sm:$0xff]
    %v565 = vld [vmem:[%s11 + $0x18] sm:$0xff]
    %v566 = vld [vmem:[%s11 + $0x20] sm:$0xff]
    %v567 = vld [vmem:[%s11 + $0x28] sm:$0xff]
    %v568 = vld [vmem:[%s11 + $0x30] sm:$0xff]
    %v569 = vld [vmem:[%s11 + $0x38] sm:$0xff]
    %v570 = vld [vmem:[%s11 + $0x40] sm:$0xff]
    %v571 = vld [vmem:[%s11 + $0x48] sm:$0xff]
    %v572 = vld [vmem:[%s11 + $0x50] sm:$0xff]
    %v573 = vld [vmem:[%s11 + $0x58] sm:$0xff]
    %v574 = vld [vmem:[%s11 + $0x60] sm:$0xff]
    %v575 = vld [vmem:[%s11 + $0x68] sm:$0xff]
    %v576 = vld [vmem:[%s11 + $0x70] sm:$0xff]
    %v577 = vld [vmem:[%s11 + $0x78] sm:$0xff]
    %v578 = vld [vmem:[%s11 + $0x80] sm:$0xff]
    %v579 = vld [vmem:[%s11 + $0x88] sm:$0xff]
    %v580 = vld [vmem:[%s12] sm:$0x1]
    %v582 = vlaneseq
    %v583 = vshrl.u32 %v582, 7
    %v584 = vsub.s32 0, %v583
    %v585 = vrot.slane %v580, %v584
    %vm587 = vcmask 130048
    %v589 = vsel %vm587, %v561, 0
    %591 = vmatprep.subr.mxu0 0.0
    %592 = vmatpush1.msra.mxu0 %v577
    %593 = vmatprep.subr.mxu0 0.0
    %594 = vmatpush1.msra.mxu0 %v576
    %595 = vmatprep.subr.mxu0 0.0
    %596 = vmatpush1.msra.mxu0 %v575
    %597 = vmatprep.subr.mxu0 0.0
    %598 = vmatpush1.msra.mxu0 %v574
    %599 = vmatprep.subr.mxu0 0.0
    %600 = vmatpush1.msra.mxu0 %v573
    %601 = vmatprep.subr.mxu0 0.0
    %602 = vmatpush1.msra.mxu0 %v572
    %603 = vmatprep.subr.mxu0 0.0
    %604 = vmatpush1.msra.mxu0 %v571
    %605 = vmatprep.subr.mxu0 0.0
    %606 = vmatpush1.msra.mxu0 %v570
    %607 = vmatprep.subr.mxu0 0.0
    %608 = vmatpush1.msra.mxu0 %v569
    %609 = vmatprep.subr.mxu0 0.0
    %610 = vmatpush1.msra.mxu0 %v568
    %611 = vmatprep.subr.mxu0 0.0
    %612 = vmatpush1.msra.mxu0 %v567
    %613 = vmatprep.subr.mxu0 0.0
    %614 = vmatpush1.msra.mxu0 %v566
    %615 = vmatprep.subr.mxu0 0.0
    %616 = vmatpush1.msra.mxu0 %v565
    %617 = vmatprep.subr.mxu0 0.0
    %618 = vmatpush1.msra.mxu0 %v564
    %619 = vmatprep.subr.mxu0 0.0
    %620 = vmatpush1.msra.mxu0 %v563
    %621 = vmatprep.subr.mxu0 0.0
    %622 = vmatpush1.msra.mxu0 %v562
    %623 = vmatprep.subr.mxu0 0.0
    %624 = vmatpush2.msra.mxu0 0.0
    %625 = vmatprep.subr.mxu0 0.0
    %626 = vmatpush2.msra.mxu0 0.0
    %627 = vmatprep.subr.mxu0 0.0
    %628 = vmatpush2.msra.mxu0 0.0
    %629 = vmatprep.subr.mxu0 0.0
    %630 = vmatpush2.msra.mxu0 0.0
    %631 = vmatprep.subr.mxu0 0.0
    %632 = vmatpush2.msra.mxu0 0.0
    %633 = vmatprep.subr.mxu0 0.0
    %634 = vmatpush2.msra.mxu0 0.0
    %635 = vmatprep.subr.mxu0 0.0
    %636 = vmatpush2.msra.mxu0 0.0
    %637 = vmatprep.subr.mxu0 0.0
    %638 = vmatpush2.msra.mxu0 0.0
    %639 = vmatprep.subr.mxu0 0.0
    %640 = vmatpush2.msra.mxu0 0.0
    %641 = vmatprep.subr.mxu0 0.0
    %642 = vmatpush2.msra.mxu0 0.0
    %643 = vmatprep.subr.mxu0 0.0
    %644 = vmatpush2.msra.mxu0 0.0
    %645 = vmatprep.subr.mxu0 0.0
    %646 = vmatpush2.msra.mxu0 0.0
    %647 = vmatprep.subr.mxu0 0.0
    %648 = vmatpush2.msra.mxu0 0.0
    %649 = vmatprep.subr.mxu0 0.0
    %650 = vmatpush2.msra.mxu0 0.0
    %651 = vmatprep.subr.mxu0 0.0
    %652 = vmatpush2.msra.mxu0 %v579
    %653 = vmatprep.subr.mxu0 0.0
    %654 = vmatpush2.msra.mxu0 %v578
    %655 = vmatprep.mubr.f32.mxu0 %v589
    %656 = vmatmul.mubr.f32.gmra.mxu0 %v560
    %v657 = vpop.f32.mrf.mxu0
    %v658 = vadd.f32 %v585, %v657
    %v659 = vpop.f32.mrf.mxu0
    %660 = vdwg.mxu0
    %vm661 = vcmask 33792
    %662 = vst.msk [vmem:[#allocation2] sm:$0x3] %vm661, %v658
    // Predicated region
    $region54: #{fwd.3} parent=1 // pred_check
      _
    $region55: #{fwd.3} parent=1 // pred_check_branch
      %664 = sbr.rel (0) target = $region57
    $region56: #{fwd.3} parent=1 // pred_region
      %s666 = ssub.s32 32, 32
      %667 = vsyncadd [#allocation3], %s666
      %s669 = sshll.u32 [#allocation2], 4
      %s670 = int_to_ptr.vmem [resolvable:$true] %s669
      %672 = dma.vmem_to_hbm [thread:$0]  %s670, 32, %s13, [#allocation3]
    $region57: #{fwd.3} parent=1 // pred_fallthru
      _
    // Predicated region
    $region58: #{fwd.3} parent=1 // pred_check
      _
    $region59: #{fwd.3} parent=1 // pred_check_branch
      %674 = sbr.rel (0) target = $region61
    $region60: #{fwd.3} parent=1 // pred_region
      %675 = dma.done [#allocation3], 32
    $region61: #{fwd.3} parent=1 // pred_fallthru
      _
    %676 = vsyncpa [#allocation3], 1

// kernel: fwd.2
$region0: #{fwd.2}
  #allocation0 [shape = 'u32[]', space=smem, size = 0x4, offset = 0x4, fixed_abs, tag = 'smem constant byte address 0x4 - core index']
  #allocation1 [shape = 'u32[144,128]{1,0:T(1,128)}', space=vmem, size = 0x12000, scoped, tag = 'internal scratch']
  %s0 = inlined_call_operand.vmem [shape: f32[128,4], index: 0, kind: input, shape index: {}]
  %s1 = inlined_call_operand.hbm [shape: f32[5,64,128], index: 1, kind: input, shape index: {}]
  %s2 = inlined_call_operand.vmem [shape: f32[5,4,8], index: 2, kind: input, shape index: {}]
  %s3 = inlined_call_operand.vmem [shape: f32[1,8], index: 3, kind: input, shape index: {}]
  %s4 = inlined_call_operand.vmem [shape: f32[1,8], index: 4, kind: input, shape index: {}]
  %s5 = inlined_call_operand.hbm [shape: f32[5,64,64], index: 5, kind: input, shape index: {}]
  %s6 = inlined_call_operand.hbm [shape: f32[5,8,8], index: 6, kind: input, shape index: {}]
  %s7 = inlined_call_operand.hbm [shape: f32[1,8], index: 7, kind: input, shape index: {}]
  %s8 = inlined_call_operand.hbm [shape: f32[1,8], index: 8, kind: input, shape index: {}]
  %s9 = inlined_call_operand.hbm [shape: f32[5,64,64], index: 9, kind: input, shape index: {}]
  %s10 = inlined_call_operand.hbm [shape: f32[5,8,8], index: 10, kind: input, shape index: {}]
  %s11 = inlined_call_operand.hbm [shape: f32[1,8], index: 11, kind: input, shape index: {}]
  %s12 = inlined_call_operand.hbm [shape: f32[1,8], index: 12, kind: input, shape index: {}]
  %s13 = inlined_call_operand.hbm [shape: f32[2,32,64], index: 13, kind: input, shape index: {}]
  %s14 = inlined_call_operand.vmem [shape: f32[8,16], index: 14, kind: input, shape index: {}]
  %s15 = inlined_call_operand.hbm [shape: f32[5,64,64], index: 15, kind: input, shape index: {}]
  %s16 = inlined_call_operand.hbm [shape: f32[5,8,16], index: 16, kind: input, shape index: {}]
  %s17 = inlined_call_operand.hbm [shape: f32[1,16], index: 17, kind: input, shape index: {}]
  %s18 = inlined_call_operand.hbm [shape: f32[1,16], index: 18, kind: input, shape index: {}]
  %s19 = inlined_call_operand.vmem [shape: f32[5,32,64], index: 19, kind: input, shape index: {}]
  %s20 = inlined_call_operand.hbm [shape: f32[5,16,16], index: 20, kind: input, shape index: {}]
  %s21 = inlined_call_operand.vmem [shape: f32[1,16], index: 21, kind: input, shape index: {}]
  %s22 = inlined_call_operand.vmem [shape: f32[1,16], index: 22, kind: input, shape index: {}]
  %s23 = inlined_call_operand.vmem [shape: f32[32,16], index: 23, kind: output, shape index: {}]
  %s24 = sld [smem:[#allocation0]]
  $region162: #{fwd.2} parent=0
    _
  %s26 = ssub.s32 1, %s24
  %s27 = scalar_select 0, %s26, %s24
  $region1: #{fwd.2} parent=0
    #allocation2 [shape = 'u8[163840]{0}', space=vmem, size = 0x28000, scoped, tag = 'input window, operand 1, single buffered']
    #allocation3 [shape = 's32[1]{0}', space=sflag, size = 0x4, scoped, tag = 'scoped memory for fwd.2']
    #allocation4 [shape = 'u8[163840]{0}', space=vmem, size = 0x28000, scoped, tag = 'input window, operand 5, single buffered']
    #allocation5 [shape = 's32[1]{0}', space=sflag, size = 0x4, scoped, tag = 'scoped memory for fwd.2']
    #allocation6 [shape = 'u8[20480]{0}', space=vmem, size = 0x5000, scoped, tag = 'input window, operand 6, single buffered']
    #allocation7 [shape = 'u8[512]{0}', space=vmem, size = 0x400, scoped, tag = 'input window, operand 7, single buffered']
    #allocation8 [shape = 's32[1]{0}', space=sflag, size = 0x4, scoped, tag = 'scoped memory for fwd.2']
    #allocation9 [shape = 'u8[512]{0}', space=vmem, size = 0x400, scoped, tag = 'input window, operand 8, single buffered']
    #allocation10 [shape = 'u8[163840]{0}', space=vmem, size = 0x28000, scoped, tag = 'input window, operand 9, single buffered']
    #allocation11 [shape = 's32[1]{0}', space=sflag, size = 0x4, scoped, tag = 'scoped memory for fwd.2']
    #allocation12 [shape = 'u8[20480]{0}', space=vmem, size = 0x5000, scoped, tag = 'input window, operand 10, single buffered']
    #allocation13 [shape = 'u8[512]{0}', space=vmem, size = 0x400, scoped, tag = 'input window, operand 11, single buffered']
    #allocation14 [shape = 's32[1]{0}', space=sflag, size = 0x4, scoped, tag = 'scoped memory for fwd.2']
    #allocation15 [shape = 'u8[512]{0}', space=vmem, size = 0x400, scoped, tag = 'input window, operand 12, single buffered']
    #allocation16 [shape = 'u8[32768]{0}', space=vmem, size = 0x8000, scoped, tag = 'input window, operand 13, single buffered']
    #allocation17 [shape = 's32[1]{0}', space=sflag, size = 0x4, scoped, tag = 'scoped memory for fwd.2']
    #allocation18 [shape = 'u8[163840]{0}', space=vmem, size = 0x28000, scoped, tag = 'input window, operand 15, single buffered']
    #allocation19 [shape = 'u8[20480]{0}', space=vmem, size = 0x5000, scoped, tag = 'input window, operand 16, single buffered']
    #allocation20 [shape = 's32[1]{0}', space=sflag, size = 0x4, scoped, tag = 'scoped memory for fwd.2']
    #allocation21 [shape = 'u8[512]{0}', space=vmem, size = 0x400, scoped, tag = 'input window, operand 17, single buffered']
    #allocation22 [shape = 'u8[512]{0}', space=vmem, size = 0x400, scoped, tag = 'input window, operand 18, single buffered']
    #allocation23 [shape = 's32[1]{0}', space=sflag, size = 0x4, scoped, tag = 'scoped memory for fwd.2']
    #allocation24 [shape = 'u8[40960]{0}', space=vmem, size = 0xa000, scoped, tag = 'input window, operand 20, single buffered']
    %28 = vsyncpa [#allocation3], 0
    %29 = vsyncpa [#allocation5], 0
    %30 = vsyncpa [#allocation8], 0
    %31 = vsyncpa [#allocation11], 0
    %32 = vsyncpa [#allocation14], 0
    %33 = vsyncpa [#allocation17], 0
    %34 = vsyncpa [#allocation20], 0
    %35 = vsyncpa [#allocation23], 0
    // Predicated region
    $region2: #{fwd.2} parent=1 // pred_check
      _
    $region3: #{fwd.2} parent=1 // pred_check_branch
      %37 = sbr.rel (0) target = $region5
    $region4: #{fwd.2} parent=1 // pred_region
      _
    $region5: #{fwd.2} parent=1 // pred_fallthru
      _
    // Predicated region
    $region6: #{fwd.2} parent=1 // pred_check
      _
    $region7: #{fwd.2} parent=1 // pred_check_branch
      %39 = sbr.rel (0) target = $region9
    $region8: #{fwd.2} parent=1 // pred_region
      %s41 = ssub.s32 5120, 5120
      %42 = vsyncadd [#allocation3], %s41
      %s43 = sshll.u32 [#allocation2], 4
      %s44 = int_to_ptr.vmem [resolvable:$true] %s43
      %49 = dma.hbm_to_vmem [thread:$0]  %s1, 5120, %s44, [#allocation3], 128, 128, 8
    $region9: #{fwd.2} parent=1 // pred_fallthru
      _
    // Predicated region
    $region10: #{fwd.2} parent=1 // pred_check
      _
    $region11: #{fwd.2} parent=1 // pred_check_branch
      %51 = sbr.rel (0) target = $region13
    $region12: #{fwd.2} parent=1 // pred_region
      _
    $region13: #{fwd.2} parent=1 // pred_fallthru
      _
    // Predicated region
    $region14: #{fwd.2} parent=1 // pred_check
      _
    $region15: #{fwd.2} parent=1 // pred_check_branch
      %53 = sbr.rel (0) target = $region17
    $region16: #{fwd.2} parent=1 // pred_region
      _
    $region17: #{fwd.2} parent=1 // pred_fallthru
      _
    // Predicated region
    $region18: #{fwd.2} parent=1 // pred_check
      _
    $region19: #{fwd.2} parent=1 // pred_check_branch
      %55 = sbr.rel (0) target = $region21
    $region20: #{fwd.2} parent=1 // pred_region
      _
    $region21: #{fwd.2} parent=1 // pred_fallthru
      _
    // Predicated region
    $region22: #{fwd.2} parent=1 // pred_check
      _
    $region23: #{fwd.2} parent=1 // pred_check_branch
      %57 = sbr.rel (0) target = $region25
    $region24: #{fwd.2} parent=1 // pred_region
      %s59 = ssub.s32 5120, 5120
      %60 = vsyncadd [#allocation5], %s59
      %s61 = sshll.u32 [#allocation4], 4
      %s62 = int_to_ptr.vmem [resolvable:$true] %s61
      %67 = dma.hbm_to_vmem [thread:$0]  %s5, 5120, %s62, [#allocation5], 128, 128, 8
    $region25: #{fwd.2} parent=1 // pred_fallthru
      _
    // Predicated region
    $region26: #{fwd.2} parent=1 // pred_check
      _
    $region27: #{fwd.2} parent=1 // pred_check_branch
      %69 = sbr.rel (0) target = $region29
    $region28: #{fwd.2} parent=1 // pred_region
      %s71 = ssub.s32 640, 640
      %72 = vsyncadd [#allocation5], %s71
      %s73 = sshll.u32 [#allocation6], 4
      %s74 = int_to_ptr.vmem [resolvable:$true] %s73
      %79 = dma.hbm_to_vmem [thread:$0]  %s6, 640, %s74, [#allocation5], 128, 128, 8
    $region29: #{fwd.2} parent=1 // pred_fallthru
      _
    // Predicated region
    $region30: #{fwd.2} parent=1 // pred_check
      _
    $region31: #{fwd.2} parent=1 // pred_check_branch
      %81 = sbr.rel (0) target = $region33
    $region32: #{fwd.2} parent=1 // pred_region
      %s83 = ssub.s32 16, 16
      %84 = vsyncadd [#allocation8], %s83
      %s86 = sshll.u32 [#allocation7], 4
      %s87 = int_to_ptr.vmem [resolvable:$true] %s86
      %89 = dma.hbm_to_vmem [thread:$0]  %s7, 16, %s87, [#allocation8]
    $region33: #{fwd.2} parent=1 // pred_fallthru
      _
    // Predicated region
    $region34: #{fwd.2} parent=1 // pred_check
      _
    $region35: #{fwd.2} parent=1 // pred_check_branch
      %91 = sbr.rel (0) target = $region37
    $region36: #{fwd.2} parent=1 // pred_region
      %s93 = ssub.s32 16, 16
      %94 = vsyncadd [#allocation8], %s93
      %s96 = sshll.u32 [#allocation9], 4
      %s97 = int_to_ptr.vmem [resolvable:$true] %s96
      %99 = dma.hbm_to_vmem [thread:$0]  %s8, 16, %s97, [#allocation8]
    $region37: #{fwd.2} parent=1 // pred_fallthru
      _
    // Predicated region
    $region38: #{fwd.2} parent=1 // pred_check
      _
    $region39: #{fwd.2} parent=1 // pred_check_branch
      %101 = sbr.rel (0) target = $region41
    $region40: #{fwd.2} parent=1 // pred_region
      %s103 = ssub.s32 5120, 5120
      %104 = vsyncadd [#allocation11], %s103
      %s105 = sshll.u32 [#allocation10], 4
      %s106 = int_to_ptr.vmem [resolvable:$true] %s105
      %111 = dma.hbm_to_vmem [thread:$0]  %s9, 5120, %s106, [#allocation11], 128, 128, 8
    $region41: #{fwd.2} parent=1 // pred_fallthru
      _
    // Predicated region
    $region42: #{fwd.2} parent=1 // pred_check
      _
    $region43: #{fwd.2} parent=1 // pred_check_branch
      %113 = sbr.rel (0) target = $region45
    $region44: #{fwd.2} parent=1 // pred_region
      %s115 = ssub.s32 640, 640
      %116 = vsyncadd [#allocation11], %s115
      %s117 = sshll.u32 [#allocation12], 4
      %s118 = int_to_ptr.vmem [resolvable:$true] %s117
      %123 = dma.hbm_to_vmem [thread:$0]  %s10, 640, %s118, [#allocation11], 128, 128, 8
    $region45: #{fwd.2} parent=1 // pred_fallthru
      _
    // Predicated region
    $region46: #{fwd.2} parent=1 // pred_check
      _
    $region47: #{fwd.2} parent=1 // pred_check_branch
      %125 = sbr.rel (0) target = $region49
    $region48: #{fwd.2} parent=1 // pred_region
      %s127 = ssub.s32 16, 16
      %128 = vsyncadd [#allocation14], %s127
      %s130 = sshll.u32 [#allocation13], 4
      %s131 = int_to_ptr.vmem [resolvable:$true] %s130
      %133 = dma.hbm_to_vmem [thread:$0]  %s11, 16, %s131, [#allocation14]
    $region49: #{fwd.2} parent=1 // pred_fallthru
      _
    // Predicated region
    $region50: #{fwd.2} parent=1 // pred_check
      _
    $region51: #{fwd.2} parent=1 // pred_check_branch
      %135 = sbr.rel (0) target = $region53
    $region52: #{fwd.2} parent=1 // pred_region
      %s137 = ssub.s32 16, 16
      %138 = vsyncadd [#allocation14], %s137
      %s140 = sshll.u32 [#allocation15], 4
      %s141 = int_to_ptr.vmem [resolvable:$true] %s140
      %143 = dma.hbm_to_vmem [thread:$0]  %s12, 16, %s141, [#allocation14]
    $region53: #{fwd.2} parent=1 // pred_fallthru
      _
    // Predicated region
    $region54: #{fwd.2} parent=1 // pred_check
      _
    $region55: #{fwd.2} parent=1 // pred_check_branch
      %145 = sbr.rel (0) target = $region57
    $region56: #{fwd.2} parent=1 // pred_region
      %s147 = ssub.s32 1024, 1024
      %148 = vsyncadd [#allocation17], %s147
      %s149 = sshll.u32 [#allocation16], 4
      %s150 = int_to_ptr.vmem [resolvable:$true] %s149
      %155 = dma.hbm_to_vmem [thread:$0]  %s13, 1024, %s150, [#allocation17], 128, 128, 8
    $region57: #{fwd.2} parent=1 // pred_fallthru
      _
    // Predicated region
    $region58: #{fwd.2} parent=1 // pred_check
      _
    $region59: #{fwd.2} parent=1 // pred_check_branch
      %157 = sbr.rel (0) target = $region61
    $region60: #{fwd.2} parent=1 // pred_region
      _
    $region61: #{fwd.2} parent=1 // pred_fallthru
      _
    // Predicated region
    $region62: #{fwd.2} parent=1 // pred_check
      _
    $region63: #{fwd.2} parent=1 // pred_check_branch
      %159 = sbr.rel (0) target = $region65
    $region64: #{fwd.2} parent=1 // pred_region
      %s161 = ssub.s32 5120, 5120
      %162 = vsyncadd [#allocation17], %s161
      %s163 = sshll.u32 [#allocation18], 4
      %s164 = int_to_ptr.vmem [resolvable:$true] %s163
      %169 = dma.hbm_to_vmem [thread:$0]  %s15, 5120, %s164, [#allocation17], 128, 128, 8
    $region65: #{fwd.2} parent=1 // pred_fallthru
      _
    // Predicated region
    $region66: #{fwd.2} parent=1 // pred_check
      _
    $region67: #{fwd.2} parent=1 // pred_check_branch
      %171 = sbr.rel (0) target = $region69
    $region68: #{fwd.2} parent=1 // pred_region
      %s173 = ssub.s32 640, 640
      %174 = vsyncadd [#allocation20], %s173
      %s175 = sshll.u32 [#allocation19], 4
      %s176 = int_to_ptr.vmem [resolvable:$true] %s175
      %181 = dma.hbm_to_vmem [thread:$0]  %s16, 640, %s176, [#allocation20], 128, 128, 8
    $region69: #{fwd.2} parent=1 // pred_fallthru
      _
    // Predicated region
    $region70: #{fwd.2} parent=1 // pred_check
      _
    $region71: #{fwd.2} parent=1 // pred_check_branch
      %183 = sbr.rel (0) target = $region73
    $region72: #{fwd.2} parent=1 // pred_region
      %s185 = ssub.s32 16, 16
      %186 = vsyncadd [#allocation20], %s185
      %s188 = sshll.u32 [#allocation21], 4
      %s189 = int_to_ptr.vmem [resolvable:$true] %s188
      %191 = dma.hbm_to_vmem [thread:$0]  %s17, 16, %s189, [#allocation20]
    $region73: #{fwd.2} parent=1 // pred_fallthru
      _
    // Predicated region
    $region74: #{fwd.2} parent=1 // pred_check
      _
    $region75: #{fwd.2} parent=1 // pred_check_branch
      %193 = sbr.rel (0) target = $region77
    $region76: #{fwd.2} parent=1 // pred_region
      %s195 = ssub.s32 16, 16
      %196 = vsyncadd [#allocation23], %s195
      %s198 = sshll.u32 [#allocation22], 4
      %s199 = int_to_ptr.vmem [resolvable:$true] %s198
      %201 = dma.hbm_to_vmem [thread:$0]  %s18, 16, %s199, [#allocation23]
    $region77: #{fwd.2} parent=1 // pred_fallthru
      _
    // Predicated region
    $region78: #{fwd.2} parent=1 // pred_check
      _
    $region79: #{fwd.2} parent=1 // pred_check_branch
      %203 = sbr.rel (0) target = $region81
    $region80: #{fwd.2} parent=1 // pred_region
      _
    $region81: #{fwd.2} parent=1 // pred_fallthru
      _
    // Predicated region
    $region82: #{fwd.2} parent=1 // pred_check
      _
    $region83: #{fwd.2} parent=1 // pred_check_branch
      %205 = sbr.rel (0) target = $region85
    $region84: #{fwd.2} parent=1 // pred_region
      %s207 = ssub.s32 1280, 1280
      %208 = vsyncadd [#allocation23], %s207
      %s209 = sshll.u32 [#allocation24], 4
      %s210 = int_to_ptr.vmem [resolvable:$true] %s209
      %215 = dma.hbm_to_vmem [thread:$0]  %s20, 1280, %s210, [#allocation23], 128, 128, 8
    $region85: #{fwd.2} parent=1 // pred_fallthru
      _
    // Predicated region
    $region86: #{fwd.2} parent=1 // pred_check
      _
    $region87: #{fwd.2} parent=1 // pred_check_branch
      %217 = sbr.rel (0) target = $region89
    $region88: #{fwd.2} parent=1 // pred_region
      _
    $region89: #{fwd.2} parent=1 // pred_fallthru
      _
    // Predicated region
    $region90: #{fwd.2} parent=1 // pred_check
      _
    $region91: #{fwd.2} parent=1 // pred_check_branch
      %219 = sbr.rel (0) target = $region93
    $region92: #{fwd.2} parent=1 // pred_region
      _
    $region93: #{fwd.2} parent=1 // pred_fallthru
      _
    // Predicated region
    $region94: #{fwd.2} parent=1 // pred_check
      _
    $region95: #{fwd.2} parent=1 // pred_check_branch
      %221 = sbr.rel (0) target = $region97
    $region96: #{fwd.2} parent=1 // pred_region
      %222 = dma.done [#allocation3], 5120
    $region97: #{fwd.2} parent=1 // pred_fallthru
      _
    // Predicated region
    $region98: #{fwd.2} parent=1 // pred_check
      _
    $region99: #{fwd.2} parent=1 // pred_check_branch
      %224 = sbr.rel (0) target = $region101
    $region100: #{fwd.2} parent=1 // pred_region
      %225 = dma.done [#allocation5], 5120
    $region101: #{fwd.2} parent=1 // pred_fallthru
      _
    // Predicated region
    $region102: #{fwd.2} parent=1 // pred_check
      _
    $region103: #{fwd.2} parent=1 // pred_check_branch
      %227 = sbr.rel (0) target = $region105
    $region104: #{fwd.2} parent=1 // pred_region
      %228 = dma.done [#allocation5], 640
    $region105: #{fwd.2} parent=1 // pred_fallthru
      _
    // Predicated region
    $region106: #{fwd.2} parent=1 // pred_check
      _
    $region107: #{fwd.2} parent=1 // pred_check_branch
      %230 = sbr.rel (0) target = $region109
    $region108: #{fwd.2} parent=1 // pred_region
      %231 = dma.done [#allocation8], 16
    $region109: #{fwd.2} parent=1 // pred_fallthru
      _
    // Predicated region
    $region110: #{fwd.2} parent=1 // pred_check
      _
    $region111: #{fwd.2} parent=1 // pred_check_branch
      %233 = sbr.rel (0) target = $region113
    $region112: #{fwd.2} parent=1 // pred_region
      %234 = dma.done [#allocation8], 16
    $region113: #{fwd.2} parent=1 // pred_fallthru
      _
    // Predicated region
    $region114: #{fwd.2} parent=1 // pred_check
      _
    $region115: #{fwd.2} parent=1 // pred_check_branch
      %236 = sbr.rel (0) target = $region117
    $region116: #{fwd.2} parent=1 // pred_region
      %237 = dma.done [#allocation11], 5120
    $region117: #{fwd.2} parent=1 // pred_fallthru
      _
    // Predicated region
    $region118: #{fwd.2} parent=1 // pred_check
      _
    $region119: #{fwd.2} parent=1 // pred_check_branch
      %239 = sbr.rel (0) target = $region121
    $region120: #{fwd.2} parent=1 // pred_region
      %240 = dma.done [#allocation11], 640
    $region121: #{fwd.2} parent=1 // pred_fallthru
      _
    // Predicated region
    $region122: #{fwd.2} parent=1 // pred_check
      _
    $region123: #{fwd.2} parent=1 // pred_check_branch
      %242 = sbr.rel (0) target = $region125
    $region124: #{fwd.2} parent=1 // pred_region
      %243 = dma.done [#allocation14], 16
    $region125: #{fwd.2} parent=1 // pred_fallthru
      _
    // Predicated region
    $region126: #{fwd.2} parent=1 // pred_check
      _
    $region127: #{fwd.2} parent=1 // pred_check_branch
      %245 = sbr.rel (0) target = $region129
    $region128: #{fwd.2} parent=1 // pred_region
      %246 = dma.done [#allocation14], 16
    $region129: #{fwd.2} parent=1 // pred_fallthru
      _
    // Predicated region
    $region130: #{fwd.2} parent=1 // pred_check
      _
    $region131: #{fwd.2} parent=1 // pred_check_branch
      %248 = sbr.rel (0) target = $region133
    $region132: #{fwd.2} parent=1 // pred_region
      %249 = dma.done [#allocation17], 1024
    $region133: #{fwd.2} parent=1 // pred_fallthru
      _
    // Predicated region
    $region134: #{fwd.2} parent=1 // pred_check
      _
    $region135: #{fwd.2} parent=1 // pred_check_branch
      %251 = sbr.rel (0) target = $region137
    $region136: #{fwd.2} parent=1 // pred_region
      %252 = dma.done [#allocation17], 5120
    $region137: #{fwd.2} parent=1 // pred_fallthru
      _
    // Predicated region
    $region138: #{fwd.2} parent=1 // pred_check
      _
    $region139: #{fwd.2} parent=1 // pred_check_branch
      %254 = sbr.rel (0) target = $region141
    $region140: #{fwd.2} parent=1 // pred_region
      %255 = dma.done [#allocation20], 640
    $region141: #{fwd.2} parent=1 // pred_fallthru
      _
    // Predicated region
    $region142: #{fwd.2} parent=1 // pred_check
      _
    $region143: #{fwd.2} parent=1 // pred_check_branch
      %257 = sbr.rel (0) target = $region145
    $region144: #{fwd.2} parent=1 // pred_region
      %258 = dma.done [#allocation20], 16
    $region145: #{fwd.2} parent=1 // pred_fallthru
      _
    // Predicated region
    $region146: #{fwd.2} parent=1 // pred_check
      _
    $region147: #{fwd.2} parent=1 // pred_check_branch
      %260 = sbr.rel (0) target = $region149
    $region148: #{fwd.2} parent=1 // pred_region
      %261 = dma.done [#allocation23], 16
    $region149: #{fwd.2} parent=1 // pred_fallthru
      _
    // Predicated region
    $region150: #{fwd.2} parent=1 // pred_check
      _
    $region151: #{fwd.2} parent=1 // pred_check_branch
      %263 = sbr.rel (0) target = $region153
    $region152: #{fwd.2} parent=1 // pred_region
      %264 = dma.done [#allocation23], 1280
    $region153: #{fwd.2} parent=1 // pred_fallthru
      _
    %v265 = vld [vmem:[%s0] sm:$0xff]
    %v266 = vld [vmem:[%s0 + $0x8] sm:$0xff]
    %v267 = vld [vmem:[%s0 + $0x10] sm:$0xff]
    %v268 = vld [vmem:[%s0 + $0x18] sm:$0xff]
    %v269 = vld [vmem:[%s0 + $0x20] sm:$0xff]
    %v270 = vld [vmem:[%s0 + $0x28] sm:$0xff]
    %v271 = vld [vmem:[%s0 + $0x30] sm:$0xff]
    %v272 = vld [vmem:[%s0 + $0x38] sm:$0xff]
    %v273 = vld [vmem:[%s0 + $0x40] sm:$0xff]
    %v274 = vld [vmem:[%s0 + $0x48] sm:$0xff]
    %v275 = vld [vmem:[%s0 + $0x50] sm:$0xff]
    %v276 = vld [vmem:[%s0 + $0x58] sm:$0xff]
    %v277 = vld [vmem:[%s0 + $0x60] sm:$0xff]
    %v278 = vld [vmem:[%s0 + $0x68] sm:$0xff]
    %v279 = vld [vmem:[%s0 + $0x70] sm:$0xff]
    %v280 = vld [vmem:[%s0 + $0x78] sm:$0xff]
    %v281 = vld [vmem:[#allocation2] sm:$0xff]
    %v282 = vld [vmem:[#allocation2 + $0x8] sm:$0xff]
    %v283 = vld [vmem:[#allocation2 + $0x10] sm:$0xff]
    %v284 = vld [vmem:[#allocation2 + $0x18] sm:$0xff]
    %v285 = vld [vmem:[#allocation2 + $0x20] sm:$0xff]
    %v286 = vld [vmem:[#allocation2 + $0x28] sm:$0xff]
    %v287 = vld [vmem:[#allocation2 + $0x30] sm:$0xff]
    %v288 = vld [vmem:[#allocation2 + $0x38] sm:$0xff]
    %289 = vmatprep.subr.mxu0 0.0
    %290 = vmatpush1.msra.mxu0 %v280
    %291 = vmatprep.subr.mxu0 0.0
    %292 = vmatpush1.msra.mxu0 %v279
    %293 = vmatprep.subr.mxu0 0.0
    %294 = vmatpush1.msra.mxu0 %v278
    %295 = vmatprep.subr.mxu0 0.0
    %296 = vmatpush1.msra.mxu0 %v277
    %297 = vmatprep.subr.mxu0 0.0
    %298 = vmatpush1.msra.mxu0 %v276
    %299 = vmatprep.subr.mxu0 0.0
    %300 = vmatpush1.msra.mxu0 %v275
    %301 = vmatprep.subr.mxu0 0.0
    %302 = vmatpush1.msra.mxu0 %v274
    %303 = vmatprep.subr.mxu0 0.0
    %304 = vmatpush1.msra.mxu0 %v273
    %305 = vmatprep.subr.mxu0 0.0
    %306 = vmatpush1.msra.mxu0 %v272
    %307 = vmatprep.subr.mxu0 0.0
    %308 = vmatpush1.msra.mxu0 %v271
    %309 = vmatprep.subr.mxu0 0.0
    %310 = vmatpush1.msra.mxu0 %v270
    %311 = vmatprep.subr.mxu0 0.0
    %312 = vmatpush1.msra.mxu0 %v269
    %313 = vmatprep.subr.mxu0 0.0
    %314 = vmatpush1.msra.mxu0 %v268
    %315 = vmatprep.subr.mxu0 0.0
    %316 = vmatpush1.msra.mxu0 %v267
    %317 = vmatprep.subr.mxu0 0.0
    %318 = vmatpush1.msra.mxu0 %v266
    %319 = vmatprep.subr.mxu0 0.0
    %320 = vmatpush1.msra.mxu0 %v265
    %321 = vmatprep.subr.mxu0 0.0
    %322 = vmatpush2.msra.mxu0 0.0
    %323 = vmatprep.subr.mxu0 0.0
    %324 = vmatpush2.msra.mxu0 0.0
    %325 = vmatprep.subr.mxu0 0.0
    %326 = vmatpush2.msra.mxu0 0.0
    %327 = vmatprep.subr.mxu0 0.0
    %328 = vmatpush2.msra.mxu0 0.0
    %329 = vmatprep.subr.mxu0 0.0
    %330 = vmatpush2.msra.mxu0 0.0
    %331 = vmatprep.subr.mxu0 0.0
    %332 = vmatpush2.msra.mxu0 0.0
    %333 = vmatprep.subr.mxu0 0.0
    %334 = vmatpush2.msra.mxu0 0.0
    %335 = vmatprep.subr.mxu0 0.0
    %336 = vmatpush2.msra.mxu0 0.0
    %337 = vmatprep.subr.mxu0 0.0
    %338 = vmatpush2.msra.mxu0 0.0
    %339 = vmatprep.subr.mxu0 0.0
    %340 = vmatpush2.msra.mxu0 0.0
    %341 = vmatprep.subr.mxu0 0.0
    %342 = vmatpush2.msra.mxu0 0.0
    %343 = vmatprep.subr.mxu0 0.0
    %344 = vmatpush2.msra.mxu0 0.0
    %345 = vmatprep.subr.mxu0 0.0
    %346 = vmatpush2.msra.mxu0 0.0
    %347 = vmatprep.subr.mxu0 0.0
    %348 = vmatpush2.msra.mxu0 0.0
    %349 = vmatprep.subr.mxu0 0.0
    %350 = vmatpush2.msra.mxu0 0.0
    %351 = vmatprep.subr.mxu0 0.0
    %352 = vmatpush2.msra.mxu0 0.0
    %353 = vmatprep.mubr.f32.mxu0 0.0
    %354 = vmatmul.mubr.f32.gmra.mxu0 %v281
    %v355 = vpop.f32.mrf.mxu0
    %v356 = vadd.f32 0.0, %v355
    %v357 = vpop.f32.mrf.mxu0
    %358 = vmatprep.mubr.f32.mxu0 0.0
    %359 = vmatmul.mubr.f32.gmra.mxu0 %v282
    %v360 = vpop.f32.mrf.mxu0
    %v361 = vadd.f32 0.0, %v360
    %v362 = vpop.f32.mrf.mxu0
    %363 = vmatprep.mubr.f32.mxu0 0.0
    %364 = vmatmul.mubr.f32.gmra.mxu0 %v283
    %v365 = vpop.f32.mrf.mxu0
    %v366 = vadd.f32 0.0, %v365
    %v367 = vpop.f32.mrf.mxu0
    %368 = vmatprep.mubr.f32.mxu0 0.0
    %369 = vmatmul.mubr.f32.gmra.mxu0 %v284
    %v370 = vpop.f32.mrf.mxu0
    %v371 = vadd.f32 0.0, %v370
    %v372 = vpop.f32.mrf.mxu0
    %373 = vmatprep.mubr.f32.mxu0 0.0
    %374 = vmatmul.mubr.f32.gmra.mxu0 %v285
    %v375 = vpop.f32.mrf.mxu0
    %v376 = vadd.f32 0.0, %v375
    %v377 = vpop.f32.mrf.mxu0
    %378 = vmatprep.mubr.f32.mxu0 0.0
    %379 = vmatmul.mubr.f32.gmra.mxu0 %v286
    %v380 = vpop.f32.mrf.mxu0
    %v381 = vadd.f32 0.0, %v380
    %v382 = vpop.f32.mrf.mxu0
    %383 = vmatprep.mubr.f32.mxu0 0.0
    %384 = vmatmul.mubr.f32.gmra.mxu0 %v287
    %v385 = vpop.f32.mrf.mxu0
    %v386 = vadd.f32 0.0, %v385
    %v387 = vpop.f32.mrf.mxu0
    %388 = vmatprep.mubr.f32.mxu0 0.0
    %389 = vmatmul.mubr.f32.gmra.mxu0 %v288
    %v390 = vpop.f32.mrf.mxu0
    %v391 = vadd.f32 0.0, %v390
    %v392 = vpop.f32.mrf.mxu0
    %393 = vdwg.mxu0
    %v394 = vld [vmem:[%s2] sm:$0xf]
    %s395 = scalar_lea.vmem [#allocation2], 64
    %v396 = vld [vmem:[%s395] sm:$0xff]
    %v397 = vld [vmem:[%s395 + $0x8] sm:$0xff]
    %v398 = vld [vmem:[%s395 + $0x10] sm:$0xff]
    %v399 = vld [vmem:[%s395 + $0x18] sm:$0xff]
    %v400 = vld [vmem:[%s395 + $0x20] sm:$0xff]
    %v401 = vld [vmem:[%s395 + $0x28] sm:$0xff]
    %v402 = vld [vmem:[%s395 + $0x30] sm:$0xff]
    %v403 = vld [vmem:[%s395 + $0x38] sm:$0xff]
    %404 = vmatprep.subr.mxu0 0.0
    %405 = vmatpush1.msra.mxu0 %v280
    %406 = vmatprep.subr.mxu0 0.0
    %407 = vmatpush1.msra.mxu0 %v279
    %408 = vmatprep.subr.mxu0 0.0
    %409 = vmatpush1.msra.mxu0 %v278
    %410 = vmatprep.subr.mxu0 0.0
    %411 = vmatpush1.msra.mxu0 %v277
    %412 = vmatprep.subr.mxu0 0.0
    %413 = vmatpush1.msra.mxu0 %v276
    %414 = vmatprep.subr.mxu0 0.0
    %415 = vmatpush1.msra.mxu0 %v275
    %416 = vmatprep.subr.mxu0 0.0
    %417 = vmatpush1.msra.mxu0 %v274
    %418 = vmatprep.subr.mxu0 0.0
    %419 = vmatpush1.msra.mxu0 %v273
    %420 = vmatprep.subr.mxu0 0.0
    %421 = vmatpush1.msra.mxu0 %v272
    %422 = vmatprep.subr.mxu0 0.0
    %423 = vmatpush1.msra.mxu0 %v271
    %424 = vmatprep.subr.mxu0 0.0
    %425 = vmatpush1.msra.mxu0 %v270
    %426 = vmatprep.subr.mxu0 0.0
    %427 = vmatpush1.msra.mxu0 %v269
    %428 = vmatprep.subr.mxu0 0.0
    %429 = vmatpush1.msra.mxu0 %v268
    %430 = vmatprep.subr.mxu0 0.0
    %431 = vmatpush1.msra.mxu0 %v267
    %432 = vmatprep.subr.mxu0 0.0
    %433 = vmatpush1.msra.mxu0 %v266
    %434 = vmatprep.subr.mxu0 0.0
    %435 = vmatpush1.msra.mxu0 %v265
    %436 = vmatprep.subr.mxu0 0.0
    %437 = vmatpush2.msra.mxu0 0.0
    %438 = vmatprep.subr.mxu0 0.0
    %439 = vmatpush2.msra.mxu0 0.0
    %440 = vmatprep.subr.mxu0 0.0
    %441 = vmatpush2.msra.mxu0 0.0
    %442 = vmatprep.subr.mxu0 0.0
    %443 = vmatpush2.msra.mxu0 0.0
    %444 = vmatprep.subr.mxu0 0.0
    %445 = vmatpush2.msra.mxu0 0.0
    %446 = vmatprep.subr.mxu0 0.0
    %447 = vmatpush2.msra.mxu0 0.0
    %448 = vmatprep.subr.mxu0 0.0
    %449 = vmatpush2.msra.mxu0 0.0
    %450 = vmatprep.subr.mxu0 0.0
    %451 = vmatpush2.msra.mxu0 0.0
    %452 = vmatprep.subr.mxu0 0.0
    %453 = vmatpush2.msra.mxu0 0.0
    %454 = vmatprep.subr.mxu0 0.0
    %455 = vmatpush2.msra.mxu0 0.0
    %456 = vmatprep.subr.mxu0 0.0
    %457 = vmatpush2.msra.mxu0 0.0
    %458 = vmatprep.subr.mxu0 0.0
    %459 = vmatpush2.msra.mxu0 0.0
    %460 = vmatprep.subr.mxu0 0.0
    %461 = vmatpush2.msra.mxu0 0.0
    %462 = vmatprep.subr.mxu0 0.0
    %463 = vmatpush2.msra.mxu0 0.0
    %464 = vmatprep.subr.mxu0 0.0
    %465 = vmatpush2.msra.mxu0 0.0
    %466 = vmatprep.subr.mxu0 0.0
    %467 = vmatpush2.msra.mxu0 0.0
    %468 = vmatprep.mubr.f32.mxu0 0.0
    %469 = vmatmul.mubr.f32.gmra.mxu0 %v396
    %v470 = vpop.f32.mrf.mxu0
    %v471 = vadd.f32 0.0, %v470
    %v472 = vpop.f32.mrf.mxu0
    %473 = vmatprep.mubr.f32.mxu0 0.0
    %474 = vmatmul.mubr.f32.gmra.mxu0 %v397
    %v475 = vpop.f32.mrf.mxu0
    %v476 = vadd.f32 0.0, %v475
    %v477 = vpop.f32.mrf.mxu0
    %478 = vmatprep.mubr.f32.mxu0 0.0
    %479 = vmatmul.mubr.f32.gmra.mxu0 %v398
    %v480 = vpop.f32.mrf.mxu0
    %v481 = vadd.f32 0.0, %v480
    %v482 = vpop.f32.mrf.mxu0
    %483 = vmatprep.mubr.f32.mxu0 0.0
    %484 = vmatmul.mubr.f32.gmra.mxu0 %v399
    %v485 = vpop.f32.mrf.mxu0
    %v486 = vadd.f32 0.0, %v485
    %v487 = vpop.f32.mrf.mxu0
    %488 = vmatprep.mubr.f32.mxu0 0.0
    %489 = vmatmul.mubr.f32.gmra.mxu0 %v400
    %v490 = vpop.f32.mrf.mxu0
    %v491 = vadd.f32 0.0, %v490
    %v492 = vpop.f32.mrf.mxu0
    %493 = vmatprep.mubr.f32.mxu0 0.0
    %494 = vmatmul.mubr.f32.gmra.mxu0 %v401
    %v495 = vpop.f32.mrf.mxu0
    %v496 = vadd.f32 0.0, %v495
    %v497 = vpop.f32.mrf.mxu0
    %498 = vmatprep.mubr.f32.mxu0 0.0
    %499 = vmatmul.mubr.f32.gmra.mxu0 %v402
    %v500 = vpop.f32.mrf.mxu0
    %v501 = vadd.f32 0.0, %v500
    %v502 = vpop.f32.mrf.mxu0
    %503 = vmatprep.mubr.f32.mxu0 0.0
    %504 = vmatmul.mubr.f32.gmra.mxu0 %v403
    %v505 = vpop.f32.mrf.mxu0
    %v506 = vadd.f32 0.0, %v505
    %v507 = vpop.f32.mrf.mxu0
    %508 = vdwg.mxu0
    %s509 = scalar_lea.vmem %s2, 4
    %v510 = vld [vmem:[%s509] sm:$0xf]
    %vm511 = vcmask 31744
    %v513 = vsel %vm511, %v471, 0
    %v516 = vsel %vm511, %v476, 0
    %v519 = vsel %vm511, %v481, 0
    %v522 = vsel %vm511, %v486, 0
    %v525 = vsel %vm511, %v491, 0
    %v528 = vsel %vm511, %v496, 0
    %v531 = vsel %vm511, %v501, 0
    %v534 = vsel %vm511, %v506, 0
    %vm536 = vcmask 1043456
    %v538 = vsel %vm536, %v510, 0
    %540 = vmatprep.subr.mxu0 0.0
    %541 = vmatpush1.msra.mxu0 0.0
    %542 = vmatprep.subr.mxu0 0.0
    %543 = vmatpush1.msra.mxu0 0.0
    %544 = vmatprep.subr.mxu0 0.0
    %545 = vmatpush1.msra.mxu0 0.0
    %546 = vmatprep.subr.mxu0 0.0
    %547 = vmatpush1.msra.mxu0 0.0
    %548 = vmatprep.subr.mxu0 0.0
    %549 = vmatpush1.msra.mxu0 0.0
    %550 = vmatprep.subr.mxu0 0.0
    %551 = vmatpush1.msra.mxu0 0.0
    %552 = vmatprep.subr.mxu0 0.0
    %553 = vmatpush1.msra.mxu0 0.0
    %554 = vmatprep.subr.mxu0 0.0
    %555 = vmatpush1.msra.mxu0 0.0
    %556 = vmatprep.subr.mxu0 0.0
    %557 = vmatpush1.msra.mxu0 0.0
    %558 = vmatprep.subr.mxu0 0.0
    %559 = vmatpush1.msra.mxu0 0.0
    %560 = vmatprep.subr.mxu0 0.0
    %561 = vmatpush1.msra.mxu0 0.0
    %562 = vmatprep.subr.mxu0 0.0
    %563 = vmatpush1.msra.mxu0 0.0
    %564 = vmatprep.subr.mxu0 0.0
    %565 = vmatpush1.msra.mxu0 0.0
    %566 = vmatprep.subr.mxu0 0.0
    %567 = vmatpush1.msra.mxu0 0.0
    %568 = vmatprep.subr.mxu0 0.0
    %569 = vmatpush1.msra.mxu0 0.0
    %570 = vmatprep.subr.mxu0 0.0
    %571 = vmatpush1.msra.mxu0 %v538
    %572 = vmatprep.subr.mxu0 0.0
    %573 = vmatpush2.msra.mxu0 0.0
    %574 = vmatprep.subr.mxu0 0.0
    %575 = vmatpush2.msra.mxu0 0.0
    %576 = vmatprep.subr.mxu0 0.0
    %577 = vmatpush2.msra.mxu0 0.0
    %578 = vmatprep.subr.mxu0 0.0
    %579 = vmatpush2.msra.mxu0 0.0
    %580 = vmatprep.subr.mxu0 0.0
    %581 = vmatpush2.msra.mxu0 0.0
    %582 = vmatprep.subr.mxu0 0.0
    %583 = vmatpush2.msra.mxu0 0.0
    %584 = vmatprep.subr.mxu0 0.0
    %585 = vmatpush2.msra.mxu0 0.0
    %586 = vmatprep.subr.mxu0 0.0
    %587 = vmatpush2.msra.mxu0 0.0
    %588 = vmatprep.subr.mxu0 0.0
    %589 = vmatpush2.msra.mxu0 0.0
    %590 = vmatprep.subr.mxu0 0.0
    %591 = vmatpush2.msra.mxu0 0.0
    %592 = vmatprep.subr.mxu0 0.0
    %593 = vmatpush2.msra.mxu0 0.0
    %594 = vmatprep.subr.mxu0 0.0
    %595 = vmatpush2.msra.mxu0 0.0
    %596 = vmatprep.subr.mxu0 0.0
    %597 = vmatpush2.msra.mxu0 0.0
    %598 = vmatprep.subr.mxu0 0.0
    %599 = vmatpush2.msra.mxu0 0.0
    %600 = vmatprep.subr.mxu0 0.0
    %601 = vmatpush2.msra.mxu0 0.0
    %602 = vmatprep.subr.mxu0 0.0
    %603 = vmatpush2.msra.mxu0 0.0
    %604 = vmatprep.mubr.f32.mxu0 0.0
    %605 = vmatmul.mubr.f32.gmra.mxu0 %v513
    %v606 = vpop.f32.mrf.mxu0
    %v607 = vadd.f32 0.0, %v606
    %v608 = vpop.f32.mrf.mxu0
    %609 = vmatprep.mubr.f32.mxu0 0.0
    %610 = vmatmul.mubr.f32.gmra.mxu0 %v516
    %v611 = vpop.f32.mrf.mxu0
    %v612 = vadd.f32 0.0, %v611
    %v613 = vpop.f32.mrf.mxu0
    %614 = vmatprep.mubr.f32.mxu0 0.0
    %615 = vmatmul.mubr.f32.gmra.mxu0 %v519
    %v616 = vpop.f32.mrf.mxu0
    %v617 = vadd.f32 0.0, %v616
    %v618 = vpop.f32.mrf.mxu0
    %619 = vmatprep.mubr.f32.mxu0 0.0
    %620 = vmatmul.mubr.f32.gmra.mxu0 %v522
    %v621 = vpop.f32.mrf.mxu0
    %v622 = vadd.f32 0.0, %v621
    %v623 = vpop.f32.mrf.mxu0
    %624 = vmatprep.mubr.f32.mxu0 0.0
    %625 = vmatmul.mubr.f32.gmra.mxu0 %v525
    %v626 = vpop.f32.mrf.mxu0
    %v627 = vadd.f32 0.0, %v626
    %v628 = vpop.f32.mrf.mxu0
    %629 = vmatprep.mubr.f32.mxu0 0.0
    %630 = vmatmul.mubr.f32.gmra.mxu0 %v528
    %v631 = vpop.f32.mrf.mxu0
    %v632 = vadd.f32 0.0, %v631
    %v633 = vpop.f32.mrf.mxu0
    %634 = vmatprep.mubr.f32.mxu0 0.0
    %635 = vmatmul.mubr.f32.gmra.mxu0 %v531
    %v636 = vpop.f32.mrf.mxu0
    %v637 = vadd.f32 0.0, %v636
    %v638 = vpop.f32.mrf.mxu0
    %639 = vmatprep.mubr.f32.mxu0 0.0
    %640 = vmatmul.mubr.f32.gmra.mxu0 %v534
    %v641 = vpop.f32.mrf.mxu0
    %v642 = vadd.f32 0.0, %v641
    %v643 = vpop.f32.mrf.mxu0
    %644 = vdwg.mxu0
    %v646 = vsel %vm511, %v356, 0
    %v649 = vsel %vm511, %v361, 0
    %v652 = vsel %vm511, %v366, 0
    %v655 = vsel %vm511, %v371, 0
    %v658 = vsel %vm511, %v376, 0
    %v661 = vsel %vm511, %v381, 0
    %v664 = vsel %vm511, %v386, 0
    %v667 = vsel %vm511, %v391, 0
    %v670 = vsel %vm536, %v394, 0
    %672 = vmatprep.subr.mxu0 0.0
    %673 = vmatpush1.msra.mxu0 0.0
    %674 = vmatprep.subr.mxu0 0.0
    %675 = vmatpush1.msra.mxu0 0.0
    %676 = vmatprep.subr.mxu0 0.0
    %677 = vmatpush1.msra.mxu0 0.0
    %678 = vmatprep.subr.mxu0 0.0
    %679 = vmatpush1.msra.mxu0 0.0
    %680 = vmatprep.subr.mxu0 0.0
    %681 = vmatpush1.msra.mxu0 0.0
    %682 = vmatprep.subr.mxu0 0.0
    %683 = vmatpush1.msra.mxu0 0.0
    %684 = vmatprep.subr.mxu0 0.0
    %685 = vmatpush1.msra.mxu0 0.0
    %686 = vmatprep.subr.mxu0 0.0
    %687 = vmatpush1.msra.mxu0 0.0
    %688 = vmatprep.subr.mxu0 0.0
    %689 = vmatpush1.msra.mxu0 0.0
    %690 = vmatprep.subr.mxu0 0.0
    %691 = vmatpush1.msra.mxu0 0.0
    %692 = vmatprep.subr.mxu0 0.0
    %693 = vmatpush1.msra.mxu0 0.0
    %694 = vmatprep.subr.mxu0 0.0
    %695 = vmatpush1.msra.mxu0 0.0
    %696 = vmatprep.subr.mxu0 0.0
    %697 = vmatpush1.msra.mxu0 0.0
    %698 = vmatprep.subr.mxu0 0.0
    %699 = vmatpush1.msra.mxu0 0.0
    %700 = vmatprep.subr.mxu0 0.0
    %701 = vmatpush1.msra.mxu0 0.0
    %702 = vmatprep.subr.mxu0 0.0
    %703 = vmatpush1.msra.mxu0 %v670
    %704 = vmatprep.subr.mxu0 0.0
    %705 = vmatpush2.msra.mxu0 0.0
    %706 = vmatprep.subr.mxu0 0.0
    %707 = vmatpush2.msra.mxu0 0.0
    %708 = vmatprep.subr.mxu0 0.0
    %709 = vmatpush2.msra.mxu0 0.0
    %710 = vmatprep.subr.mxu0 0.0
    %711 = vmatpush2.msra.mxu0 0.0
    %712 = vmatprep.subr.mxu0 0.0
    %713 = vmatpush2.msra.mxu0 0.0
    %714 = vmatprep.subr.mxu0 0.0
    %715 = vmatpush2.msra.mxu0 0.0
    %716 = vmatprep.subr.mxu0 0.0
    %717 = vmatpush2.msra.mxu0 0.0
    %718 = vmatprep.subr.mxu0 0.0
    %719 = vmatpush2.msra.mxu0 0.0
    %720 = vmatprep.subr.mxu0 0.0
    %721 = vmatpush2.msra.mxu0 0.0
    %722 = vmatprep.subr.mxu0 0.0
    %723 = vmatpush2.msra.mxu0 0.0
    %724 = vmatprep.subr.mxu0 0.0
    %725 = vmatpush2.msra.mxu0 0.0
    %726 = vmatprep.subr.mxu0 0.0
    %727 = vmatpush2.msra.mxu0 0.0
    %728 = vmatprep.subr.mxu0 0.0
    %729 = vmatpush2.msra.mxu0 0.0
    %730 = vmatprep.subr.mxu0 0.0
    %731 = vmatpush2.msra.mxu0 0.0
    %732 = vmatprep.subr.mxu0 0.0
    %733 = vmatpush2.msra.mxu0 0.0
    %734 = vmatprep.subr.mxu0 0.0
    %735 = vmatpush2.msra.mxu0 0.0
    %736 = vmatprep.mubr.f32.mxu0 0.0
    %737 = vmatmul.mubr.f32.gmra.mxu0 %v646
    %v738 = vpop.f32.mrf.mxu0
    %v739 = vadd.f32 %v607, %v738
    %v740 = vpop.f32.mrf.mxu0
    %741 = vmatprep.mubr.f32.mxu0 0.0
    %742 = vmatmul.mubr.f32.gmra.mxu0 %v649
    %v743 = vpop.f32.mrf.mxu0
    %v744 = vadd.f32 %v612, %v743
    %v745 = vpop.f32.mrf.mxu0
    %746 = vmatprep.mubr.f32.mxu0 0.0
    %747 = vmatmul.mubr.f32.gmra.mxu0 %v652
    %v748 = vpop.f32.mrf.mxu0
    %v749 = vadd.f32 %v617, %v748
    %v750 = vpop.f32.mrf.mxu0
    %751 = vmatprep.mubr.f32.mxu0 0.0
    %752 = vmatmul.mubr.f32.gmra.mxu0 %v655
    %v753 = vpop.f32.mrf.mxu0
    %v754 = vadd.f32 %v622, %v753
    %v755 = vpop.f32.mrf.mxu0
    %756 = vmatprep.mubr.f32.mxu0 0.0
    %757 = vmatmul.mubr.f32.gmra.mxu0 %v658
    %v758 = vpop.f32.mrf.mxu0
    %v759 = vadd.f32 %v627, %v758
    %v760 = vpop.f32.mrf.mxu0
    %761 = vmatprep.mubr.f32.mxu0 0.0
    %762 = vmatmul.mubr.f32.gmra.mxu0 %v661
    %v763 = vpop.f32.mrf.mxu0
    %v764 = vadd.f32 %v632, %v763
    %v765 = vpop.f32.mrf.mxu0
    %766 = vmatprep.mubr.f32.mxu0 0.0
    %767 = vmatmul.mubr.f32.gmra.mxu0 %v664
    %v768 = vpop.f32.mrf.mxu0
    %v769 = vadd.f32 %v637, %v768
    %v770 = vpop.f32.mrf.mxu0
    %771 = vmatprep.mubr.f32.mxu0 0.0
    %772 = vmatmul.mubr.f32.gmra.mxu0 %v667
    %v773 = vpop.f32.mrf.mxu0
    %v774 = vadd.f32 %v642, %v773
    %v775 = vpop.f32.mrf.mxu0
    %776 = vdwg.mxu0
    %s777 = scalar_lea.vmem [#allocation2], 128
    %v778 = vld [vmem:[%s777] sm:$0xff]
    %v779 = vld [vmem:[%s777 + $0x8] sm:$0xff]
    %v780 = vld [vmem:[%s777 + $0x10] sm:$0xff]
    %v781 = vld [vmem:[%s777 + $0x18] sm:$0xff]
    %v782 = vld [vmem:[%s777 + $0x20] sm:$0xff]
    %v783 = vld [vmem:[%s777 + $0x28] sm:$0xff]
    %v784 = vld [vmem:[%s777 + $0x30] sm:$0xff]
    %v785 = vld [vmem:[%s777 + $0x38] sm:$0xff]
    %786 = vmatprep.subr.mxu0 0.0
    %787 = vmatpush1.msra.mxu0 %v280
    %788 = vmatprep.subr.mxu0 0.0
    %789 = vmatpush1.msra.mxu0 %v279
    %790 = vmatprep.subr.mxu0 0.0
    %791 = vmatpush1.msra.mxu0 %v278
    %792 = vmatprep.subr.mxu0 0.0
    %793 = vmatpush1.msra.mxu0 %v277
    %794 = vmatprep.subr.mxu0 0.0
    %795 = vmatpush1.msra.mxu0 %v276
    %796 = vmatprep.subr.mxu0 0.0
    %797 = vmatpush1.msra.mxu0 %v275
    %798 = vmatprep.subr.mxu0 0.0
    %799 = vmatpush1.msra.mxu0 %v274
    %800 = vmatprep.subr.mxu0 0.0
    %801 = vmatpush1.msra.mxu0 %v273
    %802 = vmatprep.subr.mxu0 0.0
    %803 = vmatpush1.msra.mxu0 %v272
    %804 = vmatprep.subr.mxu0 0.0
    %805 = vmatpush1.msra.mxu0 %v271
    %806 = vmatprep.subr.mxu0 0.0
    %807 = vmatpush1.msra.mxu0 %v270
    %808 = vmatprep.subr.mxu0 0.0
    %809 = vmatpush1.msra.mxu0 %v269
    %810 = vmatprep.subr.mxu0 0.0
    %811 = vmatpush1.msra.mxu0 %v268
    %812 = vmatprep.subr.mxu0 0.0
    %813 = vmatpush1.msra.mxu0 %v267
    %814 = vmatprep.subr.mxu0 0.0
    %815 = vmatpush1.msra.mxu0 %v266
    %816 = vmatprep.subr.mxu0 0.0
    %817 = vmatpush1.msra.mxu0 %v265
    %818 = vmatprep.subr.mxu0 0.0
    %819 = vmatpush2.msra.mxu0 0.0
    %820 = vmatprep.subr.mxu0 0.0
    %821 = vmatpush2.msra.mxu0 0.0
    %822 = vmatprep.subr.mxu0 0.0
    %823 = vmatpush2.msra.mxu0 0.0
    %824 = vmatprep.subr.mxu0 0.0
    %825 = vmatpush2.msra.mxu0 0.0
    %826 = vmatprep.subr.mxu0 0.0
    %827 = vmatpush2.msra.mxu0 0.0
    %828 = vmatprep.subr.mxu0 0.0
    %829 = vmatpush2.msra.mxu0 0.0
    %830 = vmatprep.subr.mxu0 0.0
    %831 = vmatpush2.msra.mxu0 0.0
    %832 = vmatprep.subr.mxu0 0.0
    %833 = vmatpush2.msra.mxu0 0.0
    %834 = vmatprep.subr.mxu0 0.0
    %835 = vmatpush2.msra.mxu0 0.0
    %836 = vmatprep.subr.mxu0 0.0
    %837 = vmatpush2.msra.mxu0 0.0
    %838 = vmatprep.subr.mxu0 0.0
    %839 = vmatpush2.msra.mxu0 0.0
    %840 = vmatprep.subr.mxu0 0.0
    %841 = vmatpush2.msra.mxu0 0.0
    %842 = vmatprep.subr.mxu0 0.0
    %843 = vmatpush2.msra.mxu0 0.0
    %844 = vmatprep.subr.mxu0 0.0
    %845 = vmatpush2.msra.mxu0 0.0
    %846 = vmatprep.subr.mxu0 0.0
    %847 = vmatpush2.msra.mxu0 0.0
    %848 = vmatprep.subr.mxu0 0.0
    %849 = vmatpush2.msra.mxu0 0.0
    %850 = vmatprep.mubr.f32.mxu0 0.0
    %851 = vmatmul.mubr.f32.gmra.mxu0 %v778
    %v852 = vpop.f32.mrf.mxu0
    %v853 = vadd.f32 0.0, %v852
    %v854 = vpop.f32.mrf.mxu0
    %855 = vmatprep.mubr.f32.mxu0 0.0
    %856 = vmatmul.mubr.f32.gmra.mxu0 %v779
    %v857 = vpop.f32.mrf.mxu0
    %v858 = vadd.f32 0.0, %v857
    %v859 = vpop.f32.mrf.mxu0
    %860 = vmatprep.mubr.f32.mxu0 0.0
    %861 = vmatmul.mubr.f32.gmra.mxu0 %v780
    %v862 = vpop.f32.mrf.mxu0
    %v863 = vadd.f32 0.0, %v862
    %v864 = vpop.f32.mrf.mxu0
    %865 = vmatprep.mubr.f32.mxu0 0.0
    %866 = vmatmul.mubr.f32.gmra.mxu0 %v781
    %v867 = vpop.f32.mrf.mxu0
    %v868 = vadd.f32 0.0, %v867
    %v869 = vpop.f32.mrf.mxu0
    %870 = vmatprep.mubr.f32.mxu0 0.0
    %871 = vmatmul.mubr.f32.gmra.mxu0 %v782
    %v872 = vpop.f32.mrf.mxu0
    %v873 = vadd.f32 0.0, %v872
    %v874 = vpop.f32.mrf.mxu0
    %875 = vmatprep.mubr.f32.mxu0 0.0
    %876 = vmatmul.mubr.f32.gmra.mxu0 %v783
    %v877 = vpop.f32.mrf.mxu0
    %v878 = vadd.f32 0.0, %v877
    %v879 = vpop.f32.mrf.mxu0
    %880 = vmatprep.mubr.f32.mxu0 0.0
    %881 = vmatmul.mubr.f32.gmra.mxu0 %v784
    %v882 = vpop.f32.mrf.mxu0
    %v883 = vadd.f32 0.0, %v882
    %v884 = vpop.f32.mrf.mxu0
    %885 = vmatprep.mubr.f32.mxu0 0.0
    %886 = vmatmul.mubr.f32.gmra.mxu0 %v785
    %v887 = vpop.f32.mrf.mxu0
    %v888 = vadd.f32 0.0, %v887
    %v889 = vpop.f32.mrf.mxu0
    %890 = vdwg.mxu0
    %s891 = scalar_lea.vmem %s2, 8
    %v892 = vld [vmem:[%s891] sm:$0xf]
    %v894 = vsel %vm511, %v853, 0
    %v897 = vsel %vm511, %v858, 0
    %v900 = vsel %vm511, %v863, 0
    %v903 = vsel %vm511, %v868, 0
    %v906 = vsel %vm511, %v873, 0
    %v909 = vsel %vm511, %v878, 0
    %v912 = vsel %vm511, %v883, 0
    %v915 = vsel %vm511, %v888, 0
    %v918 = vsel %vm536, %v892, 0
    %920 = vmatprep.subr.mxu0 0.0
    %921 = vmatpush1.msra.mxu0 0.0
    %922 = vmatprep.subr.mxu0 0.0
    %923 = vmatpush1.msra.mxu0 0.0
    %924 = vmatprep.subr.mxu0 0.0
    %925 = vmatpush1.msra.mxu0 0.0
    %926 = vmatprep.subr.mxu0 0.0
    %927 = vmatpush1.msra.mxu0 0.0
    %928 = vmatprep.subr.mxu0 0.0
    %929 = vmatpush1.msra.mxu0 0.0
    %930 = vmatprep.subr.mxu0 0.0
    %931 = vmatpush1.msra.mxu0 0.0
    %932 = vmatprep.subr.mxu0 0.0
    %933 = vmatpush1.msra.mxu0 0.0
    %934 = vmatprep.subr.mxu0 0.0
    %935 = vmatpush1.msra.mxu0 0.0
    %936 = vmatprep.subr.mxu0 0.0
    %937 = vmatpush1.msra.mxu0 0.0
    %938 = vmatprep.subr.mxu0 0.0
    %939 = vmatpush1.msra.mxu0 0.0
    %940 = vmatprep.subr.mxu0 0.0
    %941 = vmatpush1.msra.mxu0 0.0
    %942 = vmatprep.subr.mxu0 0.0
    %943 = vmatpush1.msra.mxu0 0.0
    %944 = vmatprep.subr.mxu0 0.0
    %945 = vmatpush1.msra.mxu0 0.0
    %946 = vmatprep.subr.mxu0 0.0
    %947 = vmatpush1.msra.mxu0 0.0
    %948 = vmatprep.subr.mxu0 0.0
    %949 = vmatpush1.msra.mxu0 0.0
    %950 = vmatprep.subr.mxu0 0.0
    %951 = vmatpush1.msra.mxu0 %v918
    %952 = vmatprep.subr.mxu0 0.0
    %953 = vmatpush2.msra.mxu0 0.0
    %954 = vmatprep.subr.mxu0 0.0
    %955 = vmatpush2.msra.mxu0 0.0
    %956 = vmatprep.subr.mxu0 0.0
    %957 = vmatpush2.msra.mxu0 0.0
    %958 = vmatprep.subr.mxu0 0.0
    %959 = vmatpush2.msra.mxu0 0.0
    %960 = vmatprep.subr.mxu0 0.0
    %961 = vmatpush2.msra.mxu0 0.0
    %962 = vmatprep.subr.mxu0 0.0
    %963 = vmatpush2.msra.mxu0 0.0
    %964 = vmatprep.subr.mxu0 0.0
    %965 = vmatpush2.msra.mxu0 0.0
    %966 = vmatprep.subr.mxu0 0.0
    %967 = vmatpush2.msra.mxu0 0.0
    %968 = vmatprep.subr.mxu0 0.0
    %969 = vmatpush2.msra.mxu0 0.0
    %970 = vmatprep.subr.mxu0 0.0
    %971 = vmatpush2.msra.mxu0 0.0
    %972 = vmatprep.subr.mxu0 0.0
    %973 = vmatpush2.msra.mxu0 0.0
    %974 = vmatprep.subr.mxu0 0.0
    %975 = vmatpush2.msra.mxu0 0.0
    %976 = vmatprep.subr.mxu0 0.0
    %977 = vmatpush2.msra.mxu0 0.0
    %978 = vmatprep.subr.mxu0 0.0
    %979 = vmatpush2.msra.mxu0 0.0
    %980 = vmatprep.subr.mxu0 0.0
    %981 = vmatpush2.msra.mxu0 0.0
    %982 = vmatprep.subr.mxu0 0.0
    %983 = vmatpush2.msra.mxu0 0.0
    %984 = vmatprep.mubr.f32.mxu0 0.0
    %985 = vmatmul.mubr.f32.gmra.mxu0 %v894
    %v986 = vpop.f32.mrf.mxu0
    %v987 = vadd.f32 0.0, %v986
    %v988 = vpop.f32.mrf.mxu0
    %989 = vmatprep.mubr.f32.mxu0 0.0
    %990 = vmatmul.mubr.f32.gmra.mxu0 %v897
    %v991 = vpop.f32.mrf.mxu0
    %v992 = vadd.f32 0.0, %v991
    %v993 = vpop.f32.mrf.mxu0
    %994 = vmatprep.mubr.f32.mxu0 0.0
    %995 = vmatmul.mubr.f32.gmra.mxu0 %v900
    %v996 = vpop.f32.mrf.mxu0
    %v997 = vadd.f32 0.0, %v996
    %v998 = vpop.f32.mrf.mxu0
    %999 = vmatprep.mubr.f32.mxu0 0.0
    %1000 = vmatmul.mubr.f32.gmra.mxu0 %v903
    %v1001 = vpop.f32.mrf.mxu0
    %v1002 = vadd.f32 0.0, %v1001
    %v1003 = vpop.f32.mrf.mxu0
    %1004 = vmatprep.mubr.f32.mxu0 0.0
    %1005 = vmatmul.mubr.f32.gmra.mxu0 %v906
    %v1006 = vpop.f32.mrf.mxu0
    %v1007 = vadd.f32 0.0, %v1006
    %v1008 = vpop.f32.mrf.mxu0
    %1009 = vmatprep.mubr.f32.mxu0 0.0
    %1010 = vmatmul.mubr.f32.gmra.mxu0 %v909
    %v1011 = vpop.f32.mrf.mxu0
    %v1012 = vadd.f32 0.0, %v1011
    %v1013 = vpop.f32.mrf.mxu0
    %1014 = vmatprep.mubr.f32.mxu0 0.0
    %1015 = vmatmul.mubr.f32.gmra.mxu0 %v912
    %v1016 = vpop.f32.mrf.mxu0
    %v1017 = vadd.f32 0.0, %v1016
    %v1018 = vpop.f32.mrf.mxu0
    %1019 = vmatprep.mubr.f32.mxu0 0.0
    %1020 = vmatmul.mubr.f32.gmra.mxu0 %v915
    %v1021 = vpop.f32.mrf.mxu0
    %v1022 = vadd.f32 0.0, %v1021
    %v1023 = vpop.f32.mrf.mxu0
    %1024 = vdwg.mxu0
    %v1025 = vadd.f32 %v739, %v987
    %v1026 = vadd.f32 %v744, %v992
    %v1027 = vadd.f32 %v749, %v997
    %v1028 = vadd.f32 %v754, %v1002
    %v1029 = vadd.f32 %v759, %v1007
    %v1030 = vadd.f32 %v764, %v1012
    %v1031 = vadd.f32 %v769, %v1017
    %v1032 = vadd.f32 %v774, %v1022
    %s1033 = scalar_lea.vmem [#allocation2], 192
    %v1034 = vld [vmem:[%s1033] sm:$0xff]
    %v1035 = vld [vmem:[%s1033 + $0x8] sm:$0xff]
    %v1036 = vld [vmem:[%s1033 + $0x10] sm:$0xff]
    %v1037 = vld [vmem:[%s1033 + $0x18] sm:$0xff]
    %v1038 = vld [vmem:[%s1033 + $0x20] sm:$0xff]
    %v1039 = vld [vmem:[%s1033 + $0x28] sm:$0xff]
    %v1040 = vld [vmem:[%s1033 + $0x30] sm:$0xff]
    %v1041 = vld [vmem:[%s1033 + $0x38] sm:$0xff]
    %1042 = vmatprep.subr.mxu0 0.0
    %1043 = vmatpush1.msra.mxu0 %v280
    %1044 = vmatprep.subr.mxu0 0.0
    %1045 = vmatpush1.msra.mxu0 %v279
    %1046 = vmatprep.subr.mxu0 0.0
    %1047 = vmatpush1.msra.mxu0 %v278
    %1048 = vmatprep.subr.mxu0 0.0
    %1049 = vmatpush1.msra.mxu0 %v277
    %1050 = vmatprep.subr.mxu0 0.0
    %1051 = vmatpush1.msra.mxu0 %v276
    %1052 = vmatprep.subr.mxu0 0.0
    %1053 = vmatpush1.msra.mxu0 %v275
    %1054 = vmatprep.subr.mxu0 0.0
    %1055 = vmatpush1.msra.mxu0 %v274
    %1056 = vmatprep.subr.mxu0 0.0
    %1057 = vmatpush1.msra.mxu0 %v273
    %1058 = vmatprep.subr.mxu0 0.0
    %1059 = vmatpush1.msra.mxu0 %v272
    %1060 = vmatprep.subr.mxu0 0.0
    %1061 = vmatpush1.msra.mxu0 %v271
    %1062 = vmatprep.subr.mxu0 0.0
    %1063 = vmatpush1.msra.mxu0 %v270
    %1064 = vmatprep.subr.mxu0 0.0
    %1065 = vmatpush1.msra.mxu0 %v269
    %1066 = vmatprep.subr.mxu0 0.0
    %1067 = vmatpush1.msra.mxu0 %v268
    %1068 = vmatprep.subr.mxu0 0.0
    %1069 = vmatpush1.msra.mxu0 %v267
    %1070 = vmatprep.subr.mxu0 0.0
    %1071 = vmatpush1.msra.mxu0 %v266
    %1072 = vmatprep.subr.mxu0 0.0
    %1073 = vmatpush1.msra.mxu0 %v265
    %1074 = vmatprep.subr.mxu0 0.0
    %1075 = vmatpush2.msra.mxu0 0.0
    %1076 = vmatprep.subr.mxu0 0.0
    %1077 = vmatpush2.msra.mxu0 0.0
    %1078 = vmatprep.subr.mxu0 0.0
    %1079 = vmatpush2.msra.mxu0 0.0
    %1080 = vmatprep.subr.mxu0 0.0
    %1081 = vmatpush2.msra.mxu0 0.0
    %1082 = vmatprep.subr.mxu0 0.0
    %1083 = vmatpush2.msra.mxu0 0.0
    %1084 = vmatprep.subr.mxu0 0.0
    %1085 = vmatpush2.msra.mxu0 0.0
    %1086 = vmatprep.subr.mxu0 0.0
    %1087 = vmatpush2.msra.mxu0 0.0
    %1088 = vmatprep.subr.mxu0 0.0
    %1089 = vmatpush2.msra.mxu0 0.0
    %1090 = vmatprep.subr.mxu0 0.0
    %1091 = vmatpush2.msra.mxu0 0.0
    %1092 = vmatprep.subr.mxu0 0.0
    %1093 = vmatpush2.msra.mxu0 0.0
    %1094 = vmatprep.subr.mxu0 0.0
    %1095 = vmatpush2.msra.mxu0 0.0
    %1096 = vmatprep.subr.mxu0 0.0
    %1097 = vmatpush2.msra.mxu0 0.0
    %1098 = vmatprep.subr.mxu0 0.0
    %1099 = vmatpush2.msra.mxu0 0.0
    %1100 = vmatprep.subr.mxu0 0.0
    %1101 = vmatpush2.msra.mxu0 0.0
    %1102 = vmatprep.subr.mxu0 0.0
    %1103 = vmatpush2.msra.mxu0 0.0
    %1104 = vmatprep.subr.mxu0 0.0
    %1105 = vmatpush2.msra.mxu0 0.0
    %1106 = vmatprep.mubr.f32.mxu0 0.0
    %1107 = vmatmul.mubr.f32.gmra.mxu0 %v1034
    %v1108 = vpop.f32.mrf.mxu0
    %v1109 = vadd.f32 0.0, %v1108
    %v1110 = vpop.f32.mrf.mxu0
    %1111 = vmatprep.mubr.f32.mxu0 0.0
    %1112 = vmatmul.mubr.f32.gmra.mxu0 %v1035
    %v1113 = vpop.f32.mrf.mxu0
    %v1114 = vadd.f32 0.0, %v1113
    %v1115 = vpop.f32.mrf.mxu0
    %1116 = vmatprep.mubr.f32.mxu0 0.0
    %1117 = vmatmul.mubr.f32.gmra.mxu0 %v1036
    %v1118 = vpop.f32.mrf.mxu0
    %v1119 = vadd.f32 0.0, %v1118
    %v1120 = vpop.f32.mrf.mxu0
    %1121 = vmatprep.mubr.f32.mxu0 0.0
    %1122 = vmatmul.mubr.f32.gmra.mxu0 %v1037
    %v1123 = vpop.f32.mrf.mxu0
    %v1124 = vadd.f32 0.0, %v1123
    %v1125 = vpop.f32.mrf.mxu0
    %1126 = vmatprep.mubr.f32.mxu0 0.0
    %1127 = vmatmul.mubr.f32.gmra.mxu0 %v1038
    %v1128 = vpop.f32.mrf.mxu0
    %v1129 = vadd.f32 0.0, %v1128
    %v1130 = vpop.f32.mrf.mxu0
    %1131 = vmatprep.mubr.f32.mxu0 0.0
    %1132 = vmatmul.mubr.f32.gmra.mxu0 %v1039
    %v1133 = vpop.f32.mrf.mxu0
    %v1134 = vadd.f32 0.0, %v1133
    %v1135 = vpop.f32.mrf.mxu0
    %1136 = vmatprep.mubr.f32.mxu0 0.0
    %1137 = vmatmul.mubr.f32.gmra.mxu0 %v1040
    %v1138 = vpop.f32.mrf.mxu0
    %v1139 = vadd.f32 0.0, %v1138
    %v1140 = vpop.f32.mrf.mxu0
    %1141 = vmatprep.mubr.f32.mxu0 0.0
    %1142 = vmatmul.mubr.f32.gmra.mxu0 %v1041
    %v1143 = vpop.f32.mrf.mxu0
    %v1144 = vadd.f32 0.0, %v1143
    %v1145 = vpop.f32.mrf.mxu0
    %1146 = vdwg.mxu0
    %s1147 = scalar_lea.vmem %s2, 12
    %v1148 = vld [vmem:[%s1147] sm:$0xf]
    %v1150 = vsel %vm511, %v1109, 0
    %v1153 = vsel %vm511, %v1114, 0
    %v1156 = vsel %vm511, %v1119, 0
    %v1159 = vsel %vm511, %v1124, 0
    %v1162 = vsel %vm511, %v1129, 0
    %v1165 = vsel %vm511, %v1134, 0
    %v1168 = vsel %vm511, %v1139, 0
    %v1171 = vsel %vm511, %v1144, 0
    %v1174 = vsel %vm536, %v1148, 0
    %1176 = vmatprep.subr.mxu0 0.0
    %1177 = vmatpush1.msra.mxu0 0.0
    %1178 = vmatprep.subr.mxu0 0.0
    %1179 = vmatpush1.msra.mxu0 0.0
    %1180 = vmatprep.subr.mxu0 0.0
    %1181 = vmatpush1.msra.mxu0 0.0
    %1182 = vmatprep.subr.mxu0 0.0
    %1183 = vmatpush1.msra.mxu0 0.0
    %1184 = vmatprep.subr.mxu0 0.0
    %1185 = vmatpush1.msra.mxu0 0.0
    %1186 = vmatprep.subr.mxu0 0.0
    %1187 = vmatpush1.msra.mxu0 0.0
    %1188 = vmatprep.subr.mxu0 0.0
    %1189 = vmatpush1.msra.mxu0 0.0
    %1190 = vmatprep.subr.mxu0 0.0
    %1191 = vmatpush1.msra.mxu0 0.0
    %1192 = vmatprep.subr.mxu0 0.0
    %1193 = vmatpush1.msra.mxu0 0.0
    %1194 = vmatprep.subr.mxu0 0.0
    %1195 = vmatpush1.msra.mxu0 0.0
    %1196 = vmatprep.subr.mxu0 0.0
    %1197 = vmatpush1.msra.mxu0 0.0
    %1198 = vmatprep.subr.mxu0 0.0
    %1199 = vmatpush1.msra.mxu0 0.0
    %1200 = vmatprep.subr.mxu0 0.0
    %1201 = vmatpush1.msra.mxu0 0.0
    %1202 = vmatprep.subr.mxu0 0.0
    %1203 = vmatpush1.msra.mxu0 0.0
    %1204 = vmatprep.subr.mxu0 0.0
    %1205 = vmatpush1.msra.mxu0 0.0
    %1206 = vmatprep.subr.mxu0 0.0
    %1207 = vmatpush1.msra.mxu0 %v1174
    %1208 = vmatprep.subr.mxu0 0.0
    %1209 = vmatpush2.msra.mxu0 0.0
    %1210 = vmatprep.subr.mxu0 0.0
    %1211 = vmatpush2.msra.mxu0 0.0
    %1212 = vmatprep.subr.mxu0 0.0
    %1213 = vmatpush2.msra.mxu0 0.0
    %1214 = vmatprep.subr.mxu0 0.0
    %1215 = vmatpush2.msra.mxu0 0.0
    %1216 = vmatprep.subr.mxu0 0.0
    %1217 = vmatpush2.msra.mxu0 0.0
    %1218 = vmatprep.subr.mxu0 0.0
    %1219 = vmatpush2.msra.mxu0 0.0
    %1220 = vmatprep.subr.mxu0 0.0
    %1221 = vmatpush2.msra.mxu0 0.0
    %1222 = vmatprep.subr.mxu0 0.0
    %1223 = vmatpush2.msra.mxu0 0.0
    %1224 = vmatprep.subr.mxu0 0.0
    %1225 = vmatpush2.msra.mxu0 0.0
    %1226 = vmatprep.subr.mxu0 0.0
    %1227 = vmatpush2.msra.mxu0 0.0
    %1228 = vmatprep.subr.mxu0 0.0
    %1229 = vmatpush2.msra.mxu0 0.0
    %1230 = vmatprep.subr.mxu0 0.0
    %1231 = vmatpush2.msra.mxu0 0.0
    %1232 = vmatprep.subr.mxu0 0.0
    %1233 = vmatpush2.msra.mxu0 0.0
    %1234 = vmatprep.subr.mxu0 0.0
    %1235 = vmatpush2.msra.mxu0 0.0
    %1236 = vmatprep.subr.mxu0 0.0
    %1237 = vmatpush2.msra.mxu0 0.0
    %1238 = vmatprep.subr.mxu0 0.0
    %1239 = vmatpush2.msra.mxu0 0.0
    %1240 = vmatprep.mubr.f32.mxu0 0.0
    %1241 = vmatmul.mubr.f32.gmra.mxu0 %v1150
    %v1242 = vpop.f32.mrf.mxu0
    %v1243 = vadd.f32 0.0, %v1242
    %v1244 = vpop.f32.mrf.mxu0
    %1245 = vmatprep.mubr.f32.mxu0 0.0
    %1246 = vmatmul.mubr.f32.gmra.mxu0 %v1153
    %v1247 = vpop.f32.mrf.mxu0
    %v1248 = vadd.f32 0.0, %v1247
    %v1249 = vpop.f32.mrf.mxu0
    %1250 = vmatprep.mubr.f32.mxu0 0.0
    %1251 = vmatmul.mubr.f32.gmra.mxu0 %v1156
    %v1252 = vpop.f32.mrf.mxu0
    %v1253 = vadd.f32 0.0, %v1252
    %v1254 = vpop.f32.mrf.mxu0
    %1255 = vmatprep.mubr.f32.mxu0 0.0
    %1256 = vmatmul.mubr.f32.gmra.mxu0 %v1159
    %v1257 = vpop.f32.mrf.mxu0
    %v1258 = vadd.f32 0.0, %v1257
    %v1259 = vpop.f32.mrf.mxu0
    %1260 = vmatprep.mubr.f32.mxu0 0.0
    %1261 = vmatmul.mubr.f32.gmra.mxu0 %v1162
    %v1262 = vpop.f32.mrf.mxu0
    %v1263 = vadd.f32 0.0, %v1262
    %v1264 = vpop.f32.mrf.mxu0
    %1265 = vmatprep.mubr.f32.mxu0 0.0
    %1266 = vmatmul.mubr.f32.gmra.mxu0 %v1165
    %v1267 = vpop.f32.mrf.mxu0
    %v1268 = vadd.f32 0.0, %v1267
    %v1269 = vpop.f32.mrf.mxu0
    %1270 = vmatprep.mubr.f32.mxu0 0.0
    %1271 = vmatmul.mubr.f32.gmra.mxu0 %v1168
    %v1272 = vpop.f32.mrf.mxu0
    %v1273 = vadd.f32 0.0, %v1272
    %v1274 = vpop.f32.mrf.mxu0
    %1275 = vmatprep.mubr.f32.mxu0 0.0
    %1276 = vmatmul.mubr.f32.gmra.mxu0 %v1171
    %v1277 = vpop.f32.mrf.mxu0
    %v1278 = vadd.f32 0.0, %v1277
    %v1279 = vpop.f32.mrf.mxu0
    %1280 = vdwg.mxu0
    %v1281 = vadd.f32 %v1025, %v1243
    %v1282 = vadd.f32 %v1026, %v1248
    %v1283 = vadd.f32 %v1027, %v1253
    %v1284 = vadd.f32 %v1028, %v1258
    %v1285 = vadd.f32 %v1029, %v1263
    %v1286 = vadd.f32 %v1030, %v1268
    %v1287 = vadd.f32 %v1031, %v1273
    %v1288 = vadd.f32 %v1032, %v1278
    %s1289 = scalar_lea.vmem [#allocation2], 256
    %v1290 = vld [vmem:[%s1289] sm:$0xff]
    %v1291 = vld [vmem:[%s1289 + $0x8] sm:$0xff]
    %v1292 = vld [vmem:[%s1289 + $0x10] sm:$0xff]
    %v1293 = vld [vmem:[%s1289 + $0x18] sm:$0xff]
    %v1294 = vld [vmem:[%s1289 + $0x20] sm:$0xff]
    %v1295 = vld [vmem:[%s1289 + $0x28] sm:$0xff]
    %v1296 = vld [vmem:[%s1289 + $0x30] sm:$0xff]
    %v1297 = vld [vmem:[%s1289 + $0x38] sm:$0xff]
    %1298 = vmatprep.subr.mxu0 0.0
    %1299 = vmatpush1.msra.mxu0 %v280
    %1300 = vmatprep.subr.mxu0 0.0
    %1301 = vmatpush1.msra.mxu0 %v279
    %1302 = vmatprep.subr.mxu0 0.0
    %1303 = vmatpush1.msra.mxu0 %v278
    %1304 = vmatprep.subr.mxu0 0.0
    %1305 = vmatpush1.msra.mxu0 %v277
    %1306 = vmatprep.subr.mxu0 0.0
    %1307 = vmatpush1.msra.mxu0 %v276
    %1308 = vmatprep.subr.mxu0 0.0
    %1309 = vmatpush1.msra.mxu0 %v275
    %1310 = vmatprep.subr.mxu0 0.0
    %1311 = vmatpush1.msra.mxu0 %v274
    %1312 = vmatprep.subr.mxu0 0.0
    %1313 = vmatpush1.msra.mxu0 %v273
    %1314 = vmatprep.subr.mxu0 0.0
    %1315 = vmatpush1.msra.mxu0 %v272
    %1316 = vmatprep.subr.mxu0 0.0
    %1317 = vmatpush1.msra.mxu0 %v271
    %1318 = vmatprep.subr.mxu0 0.0
    %1319 = vmatpush1.msra.mxu0 %v270
    %1320 = vmatprep.subr.mxu0 0.0
    %1321 = vmatpush1.msra.mxu0 %v269
    %1322 = vmatprep.subr.mxu0 0.0
    %1323 = vmatpush1.msra.mxu0 %v268
    %1324 = vmatprep.subr.mxu0 0.0
    %1325 = vmatpush1.msra.mxu0 %v267
    %1326 = vmatprep.subr.mxu0 0.0
    %1327 = vmatpush1.msra.mxu0 %v266
    %1328 = vmatprep.subr.mxu0 0.0
    %1329 = vmatpush1.msra.mxu0 %v265
    %1330 = vmatprep.subr.mxu0 0.0
    %1331 = vmatpush2.msra.mxu0 0.0
    %1332 = vmatprep.subr.mxu0 0.0
    %1333 = vmatpush2.msra.mxu0 0.0
    %1334 = vmatprep.subr.mxu0 0.0
    %1335 = vmatpush2.msra.mxu0 0.0
    %1336 = vmatprep.subr.mxu0 0.0
    %1337 = vmatpush2.msra.mxu0 0.0
    %1338 = vmatprep.subr.mxu0 0.0
    %1339 = vmatpush2.msra.mxu0 0.0
    %1340 = vmatprep.subr.mxu0 0.0
    %1341 = vmatpush2.msra.mxu0 0.0
    %1342 = vmatprep.subr.mxu0 0.0
    %1343 = vmatpush2.msra.mxu0 0.0
    %1344 = vmatprep.subr.mxu0 0.0
    %1345 = vmatpush2.msra.mxu0 0.0
    %1346 = vmatprep.subr.mxu0 0.0
    %1347 = vmatpush2.msra.mxu0 0.0
    %1348 = vmatprep.subr.mxu0 0.0
    %1349 = vmatpush2.msra.mxu0 0.0
    %1350 = vmatprep.subr.mxu0 0.0
    %1351 = vmatpush2.msra.mxu0 0.0
    %1352 = vmatprep.subr.mxu0 0.0
    %1353 = vmatpush2.msra.mxu0 0.0
    %1354 = vmatprep.subr.mxu0 0.0
    %1355 = vmatpush2.msra.mxu0 0.0
    %1356 = vmatprep.subr.mxu0 0.0
    %1357 = vmatpush2.msra.mxu0 0.0
    %1358 = vmatprep.subr.mxu0 0.0
    %1359 = vmatpush2.msra.mxu0 0.0
    %1360 = vmatprep.subr.mxu0 0.0
    %1361 = vmatpush2.msra.mxu0 0.0
    %1362 = vmatprep.mubr.f32.mxu0 0.0
    %1363 = vmatmul.mubr.f32.gmra.mxu0 %v1290
    %v1364 = vpop.f32.mrf.mxu0
    %v1365 = vadd.f32 0.0, %v1364
    %v1366 = vpop.f32.mrf.mxu0
    %1367 = vmatprep.mubr.f32.mxu0 0.0
    %1368 = vmatmul.mubr.f32.gmra.mxu0 %v1291
    %v1369 = vpop.f32.mrf.mxu0
    %v1370 = vadd.f32 0.0, %v1369
    %v1371 = vpop.f32.mrf.mxu0
    %1372 = vmatprep.mubr.f32.mxu0 0.0
    %1373 = vmatmul.mubr.f32.gmra.mxu0 %v1292
    %v1374 = vpop.f32.mrf.mxu0
    %v1375 = vadd.f32 0.0, %v1374
    %v1376 = vpop.f32.mrf.mxu0
    %1377 = vmatprep.mubr.f32.mxu0 0.0
    %1378 = vmatmul.mubr.f32.gmra.mxu0 %v1293
    %v1379 = vpop.f32.mrf.mxu0
    %v1380 = vadd.f32 0.0, %v1379
    %v1381 = vpop.f32.mrf.mxu0
    %1382 = vmatprep.mubr.f32.mxu0 0.0
    %1383 = vmatmul.mubr.f32.gmra.mxu0 %v1294
    %v1384 = vpop.f32.mrf.mxu0
    %v1385 = vadd.f32 0.0, %v1384
    %v1386 = vpop.f32.mrf.mxu0
    %1387 = vmatprep.mubr.f32.mxu0 0.0
    %1388 = vmatmul.mubr.f32.gmra.mxu0 %v1295
    %v1389 = vpop.f32.mrf.mxu0
    %v1390 = vadd.f32 0.0, %v1389
    %v1391 = vpop.f32.mrf.mxu0
    %1392 = vmatprep.mubr.f32.mxu0 0.0
    %1393 = vmatmul.mubr.f32.gmra.mxu0 %v1296
    %v1394 = vpop.f32.mrf.mxu0
    %v1395 = vadd.f32 0.0, %v1394
    %v1396 = vpop.f32.mrf.mxu0
    %1397 = vmatprep.mubr.f32.mxu0 0.0
    %1398 = vmatmul.mubr.f32.gmra.mxu0 %v1297
    %v1399 = vpop.f32.mrf.mxu0
    %v1400 = vadd.f32 0.0, %v1399
    %v1401 = vpop.f32.mrf.mxu0
    %1402 = vdwg.mxu0
    %s1403 = scalar_lea.vmem %s2, 16
    %v1404 = vld [vmem:[%s1403] sm:$0xf]
    %v1406 = vsel %vm511, %v1365, 0
    %v1409 = vsel %vm511, %v1370, 0
    %v1412 = vsel %vm511, %v1375, 0
    %v1415 = vsel %vm511, %v1380, 0
    %v1418 = vsel %vm511, %v1385, 0
    %v1421 = vsel %vm511, %v1390, 0
    %v1424 = vsel %vm511, %v1395, 0
    %v1427 = vsel %vm511, %v1400, 0
    %v1430 = vsel %vm536, %v1404, 0
    %1432 = vmatprep.subr.mxu0 0.0
    %1433 = vmatpush1.msra.mxu0 0.0
    %1434 = vmatprep.subr.mxu0 0.0
    %1435 = vmatpush1.msra.mxu0 0.0
    %1436 = vmatprep.subr.mxu0 0.0
    %1437 = vmatpush1.msra.mxu0 0.0
    %1438 = vmatprep.subr.mxu0 0.0
    %1439 = vmatpush1.msra.mxu0 0.0
    %1440 = vmatprep.subr.mxu0 0.0
    %1441 = vmatpush1.msra.mxu0 0.0
    %1442 = vmatprep.subr.mxu0 0.0
    %1443 = vmatpush1.msra.mxu0 0.0
    %1444 = vmatprep.subr.mxu0 0.0
    %1445 = vmatpush1.msra.mxu0 0.0
    %1446 = vmatprep.subr.mxu0 0.0
    %1447 = vmatpush1.msra.mxu0 0.0
    %1448 = vmatprep.subr.mxu0 0.0
    %1449 = vmatpush1.msra.mxu0 0.0
    %1450 = vmatprep.subr.mxu0 0.0
    %1451 = vmatpush1.msra.mxu0 0.0
    %1452 = vmatprep.subr.mxu0 0.0
    %1453 = vmatpush1.msra.mxu0 0.0
    %1454 = vmatprep.subr.mxu0 0.0
    %1455 = vmatpush1.msra.mxu0 0.0
    %1456 = vmatprep.subr.mxu0 0.0
    %1457 = vmatpush1.msra.mxu0 0.0
    %1458 = vmatprep.subr.mxu0 0.0
    %1459 = vmatpush1.msra.mxu0 0.0
    %1460 = vmatprep.subr.mxu0 0.0
    %1461 = vmatpush1.msra.mxu0 0.0
    %1462 = vmatprep.subr.mxu0 0.0
    %1463 = vmatpush1.msra.mxu0 %v1430
    %1464 = vmatprep.subr.mxu0 0.0
    %1465 = vmatpush2.msra.mxu0 0.0
    %1466 = vmatprep.subr.mxu0 0.0
    %1467 = vmatpush2.msra.mxu0 0.0
    %1468 = vmatprep.subr.mxu0 0.0
    %1469 = vmatpush2.msra.mxu0 0.0
    %1470 = vmatprep.subr.mxu0 0.0
    %1471 = vmatpush2.msra.mxu0 0.0
    %1472 = vmatprep.subr.mxu0 0.0
    %1473 = vmatpush2.msra.mxu0 0.0
    %1474 = vmatprep.subr.mxu0 0.0
    %1475 = vmatpush2.msra.mxu0 0.0
    %1476 = vmatprep.subr.mxu0 0.0
    %1477 = vmatpush2.msra.mxu0 0.0
    %1478 = vmatprep.subr.mxu0 0.0
    %1479 = vmatpush2.msra.mxu0 0.0
    %1480 = vmatprep.subr.mxu0 0.0
    %1481 = vmatpush2.msra.mxu0 0.0
    %1482 = vmatprep.subr.mxu0 0.0
    %1483 = vmatpush2.msra.mxu0 0.0
    %1484 = vmatprep.subr.mxu0 0.0
    %1485 = vmatpush2.msra.mxu0 0.0
    %1486 = vmatprep.subr.mxu0 0.0
    %1487 = vmatpush2.msra.mxu0 0.0
    %1488 = vmatprep.subr.mxu0 0.0
    %1489 = vmatpush2.msra.mxu0 0.0
    %1490 = vmatprep.subr.mxu0 0.0
    %1491 = vmatpush2.msra.mxu0 0.0
    %1492 = vmatprep.subr.mxu0 0.0
    %1493 = vmatpush2.msra.mxu0 0.0
    %1494 = vmatprep.subr.mxu0 0.0
    %1495 = vmatpush2.msra.mxu0 0.0
    %1496 = vmatprep.mubr.f32.mxu0 0.0
    %1497 = vmatmul.mubr.f32.gmra.mxu0 %v1406
    %v1498 = vpop.f32.mrf.mxu0
    %v1499 = vadd.f32 0.0, %v1498
    %v1500 = vpop.f32.mrf.mxu0
    %1501 = vmatprep.mubr.f32.mxu0 0.0
    %1502 = vmatmul.mubr.f32.gmra.mxu0 %v1409
    %v1503 = vpop.f32.mrf.mxu0
    %v1504 = vadd.f32 0.0, %v1503
    %v1505 = vpop.f32.mrf.mxu0
    %1506 = vmatprep.mubr.f32.mxu0 0.0
    %1507 = vmatmul.mubr.f32.gmra.mxu0 %v1412
    %v1508 = vpop.f32.mrf.mxu0
    %v1509 = vadd.f32 0.0, %v1508
    %v1510 = vpop.f32.mrf.mxu0
    %1511 = vmatprep.mubr.f32.mxu0 0.0
    %1512 = vmatmul.mubr.f32.gmra.mxu0 %v1415
    %v1513 = vpop.f32.mrf.mxu0
    %v1514 = vadd.f32 0.0, %v1513
    %v1515 = vpop.f32.mrf.mxu0
    %1516 = vmatprep.mubr.f32.mxu0 0.0
    %1517 = vmatmul.mubr.f32.gmra.mxu0 %v1418
    %v1518 = vpop.f32.mrf.mxu0
    %v1519 = vadd.f32 0.0, %v1518
    %v1520 = vpop.f32.mrf.mxu0
    %1521 = vmatprep.mubr.f32.mxu0 0.0
    %1522 = vmatmul.mubr.f32.gmra.mxu0 %v1421
    %v1523 = vpop.f32.mrf.mxu0
    %v1524 = vadd.f32 0.0, %v1523
    %v1525 = vpop.f32.mrf.mxu0
    %1526 = vmatprep.mubr.f32.mxu0 0.0
    %1527 = vmatmul.mubr.f32.gmra.mxu0 %v1424
    %v1528 = vpop.f32.mrf.mxu0
    %v1529 = vadd.f32 0.0, %v1528
    %v1530 = vpop.f32.mrf.mxu0
    %1531 = vmatprep.mubr.f32.mxu0 0.0
    %1532 = vmatmul.mubr.f32.gmra.mxu0 %v1427
    %v1533 = vpop.f32.mrf.mxu0
    %v1534 = vadd.f32 0.0, %v1533
    %v1535 = vpop.f32.mrf.mxu0
    %1536 = vdwg.mxu0
    %v1537 = vadd.f32 %v1281, %v1499
    %v1538 = vadd.f32 %v1282, %v1504
    %v1539 = vadd.f32 %v1283, %v1509
    %v1540 = vadd.f32 %v1284, %v1514
    %v1541 = vadd.f32 %v1285, %v1519
    %v1542 = vadd.f32 %v1286, %v1524
    %v1543 = vadd.f32 %v1287, %v1529
    %v1544 = vadd.f32 %v1288, %v1534
    %v1545 = vld [vmem:[%s3] sm:$0x1]
    %v1547 = vlaneseq
    %v1548 = vshrl.u32 %v1547, 7
    %v1549 = vsub.s32 0, %v1548
    %v1550 = vrot.slane %v1545, %v1549
    %v1552 = vmul.f32 %v1537, %v1550
    %v1553 = vmul.f32 %v1538, %v1550
    %v1554 = vmul.f32 %v1539, %v1550
    %v1555 = vmul.f32 %v1540, %v1550
    %v1556 = vmul.f32 %v1541, %v1550
    %v1557 = vmul.f32 %v1542, %v1550
    %v1558 = vmul.f32 %v1543, %v1550
    %v1559 = vmul.f32 %v1544, %v1550
    %v1560 = vld [vmem:[%s4] sm:$0x1]
    %v1562 = vlaneseq
    %v1563 = vshrl.u32 %v1562, 7
    %v1564 = vsub.s32 0, %v1563
    %v1565 = vrot.slane %v1560, %v1564
    %v1567 = vadd.f32 %v1552, %v1565
    %v1568 = vadd.f32 %v1553, %v1565
    %v1569 = vadd.f32 %v1554, %v1565
    %v1570 = vadd.f32 %v1555, %v1565
    %v1571 = vadd.f32 %v1556, %v1565
    %v1572 = vadd.f32 %v1557, %v1565
    %v1573 = vadd.f32 %v1558, %v1565
    %v1574 = vadd.f32 %v1559, %v1565
    %v1575 = vmax.f32 %v1567, 0.0
    %v1576 = vmax.f32 %v1568, 0.0
    %v1577 = vmax.f32 %v1569, 0.0
    %v1578 = vmax.f32 %v1570, 0.0
    %v1579 = vmax.f32 %v1571, 0.0
    %v1580 = vmax.f32 %v1572, 0.0
    %v1581 = vmax.f32 %v1573, 0.0
    %v1582 = vmax.f32 %v1574, 0.0
    %v1583 = vld [vmem:[#allocation4] sm:$0xff]
    %v1584 = vld [vmem:[#allocation4 + $0x8] sm:$0xff]
    %v1585 = vld [vmem:[#allocation4 + $0x10] sm:$0xff]
    %v1586 = vld [vmem:[#allocation4 + $0x18] sm:$0xff]
    %v1587 = vld [vmem:[#allocation4 + $0x20] sm:$0xff]
    %v1588 = vld [vmem:[#allocation4 + $0x28] sm:$0xff]
    %v1589 = vld [vmem:[#allocation4 + $0x30] sm:$0xff]
    %v1590 = vld [vmem:[#allocation4 + $0x38] sm:$0xff]
    %vm1591 = vcmask 523264
    %v1593 = vsel %vm1591, %v1583, 0
    %v1596 = vsel %vm1591, %v1584, 0
    %v1599 = vsel %vm1591, %v1585, 0
    %v1602 = vsel %vm1591, %v1586, 0
    %v1605 = vsel %vm1591, %v1587, 0
    %v1608 = vsel %vm1591, %v1588, 0
    %v1611 = vsel %vm1591, %v1589, 0
    %v1614 = vsel %vm1591, %v1590, 0
    %1616 = vmatprep.subr.mxu0 0.0
    %1617 = vmatpush1.msra.mxu0 0.0
    %1618 = vmatprep.subr.mxu0 0.0
    %1619 = vmatpush1.msra.mxu0 0.0
    %1620 = vmatprep.subr.mxu0 0.0
    %1621 = vmatpush1.msra.mxu0 0.0
    %1622 = vmatprep.subr.mxu0 0.0
    %1623 = vmatpush1.msra.mxu0 0.0
    %1624 = vmatprep.subr.mxu0 0.0
    %1625 = vmatpush1.msra.mxu0 0.0
    %1626 = vmatprep.subr.mxu0 0.0
    %1627 = vmatpush1.msra.mxu0 0.0
    %1628 = vmatprep.subr.mxu0 0.0
    %1629 = vmatpush1.msra.mxu0 0.0
    %1630 = vmatprep.subr.mxu0 0.0
    %1631 = vmatpush1.msra.mxu0 0.0
    %1632 = vmatprep.subr.mxu0 0.0
    %1633 = vmatpush1.msra.mxu0 %v1582
    %1634 = vmatprep.subr.mxu0 0.0
    %1635 = vmatpush1.msra.mxu0 %v1581
    %1636 = vmatprep.subr.mxu0 0.0
    %1637 = vmatpush1.msra.mxu0 %v1580
    %1638 = vmatprep.subr.mxu0 0.0
    %1639 = vmatpush1.msra.mxu0 %v1579
    %1640 = vmatprep.subr.mxu0 0.0
    %1641 = vmatpush1.msra.mxu0 %v1578
    %1642 = vmatprep.subr.mxu0 0.0
    %1643 = vmatpush1.msra.mxu0 %v1577
    %1644 = vmatprep.subr.mxu0 0.0
    %1645 = vmatpush1.msra.mxu0 %v1576
    %1646 = vmatprep.subr.mxu0 0.0
    %1647 = vmatpush1.msra.mxu0 %v1575
    %1648 = vmatprep.subr.mxu0 0.0
    %1649 = vmatpush2.msra.mxu0 0.0
    %1650 = vmatprep.subr.mxu0 0.0
    %1651 = vmatpush2.msra.mxu0 0.0
    %1652 = vmatprep.subr.mxu0 0.0
    %1653 = vmatpush2.msra.mxu0 0.0
    %1654 = vmatprep.subr.mxu0 0.0
    %1655 = vmatpush2.msra.mxu0 0.0
    %1656 = vmatprep.subr.mxu0 0.0
    %1657 = vmatpush2.msra.mxu0 0.0
    %1658 = vmatprep.subr.mxu0 0.0
    %1659 = vmatpush2.msra.mxu0 0.0
    %1660 = vmatprep.subr.mxu0 0.0
    %1661 = vmatpush2.msra.mxu0 0.0
    %1662 = vmatprep.subr.mxu0 0.0
    %1663 = vmatpush2.msra.mxu0 0.0
    %1664 = vmatprep.subr.mxu0 0.0
    %1665 = vmatpush2.msra.mxu0 0.0
    %1666 = vmatprep.subr.mxu0 0.0
    %1667 = vmatpush2.msra.mxu0 0.0
    %1668 = vmatprep.subr.mxu0 0.0
    %1669 = vmatpush2.msra.mxu0 0.0
    %1670 = vmatprep.subr.mxu0 0.0
    %1671 = vmatpush2.msra.mxu0 0.0
    %1672 = vmatprep.subr.mxu0 0.0
    %1673 = vmatpush2.msra.mxu0 0.0
    %1674 = vmatprep.subr.mxu0 0.0
    %1675 = vmatpush2.msra.mxu0 0.0
    %1676 = vmatprep.subr.mxu0 0.0
    %1677 = vmatpush2.msra.mxu0 0.0
    %1678 = vmatprep.subr.mxu0 0.0
    %1679 = vmatpush2.msra.mxu0 0.0
    %1680 = vmatprep.mubr.f32.mxu0 0.0
    %1681 = vmatmul.mubr.f32.gmra.mxu0 %v1593
    %v1682 = vpop.f32.mrf.mxu0
    %v1683 = vadd.f32 0.0, %v1682
    %v1684 = vpop.f32.mrf.mxu0
    %1685 = vmatprep.mubr.f32.mxu0 0.0
    %1686 = vmatmul.mubr.f32.gmra.mxu0 %v1596
    %v1687 = vpop.f32.mrf.mxu0
    %v1688 = vadd.f32 0.0, %v1687
    %v1689 = vpop.f32.mrf.mxu0
    %1690 = vmatprep.mubr.f32.mxu0 0.0
    %1691 = vmatmul.mubr.f32.gmra.mxu0 %v1599
    %v1692 = vpop.f32.mrf.mxu0
    %v1693 = vadd.f32 0.0, %v1692
    %v1694 = vpop.f32.mrf.mxu0
    %1695 = vmatprep.mubr.f32.mxu0 0.0
    %1696 = vmatmul.mubr.f32.gmra.mxu0 %v1602
    %v1697 = vpop.f32.mrf.mxu0
    %v1698 = vadd.f32 0.0, %v1697
    %v1699 = vpop.f32.mrf.mxu0
    %1700 = vmatprep.mubr.f32.mxu0 0.0
    %1701 = vmatmul.mubr.f32.gmra.mxu0 %v1605
    %v1702 = vpop.f32.mrf.mxu0
    %v1703 = vadd.f32 0.0, %v1702
    %v1704 = vpop.f32.mrf.mxu0
    %1705 = vmatprep.mubr.f32.mxu0 0.0
    %1706 = vmatmul.mubr.f32.gmra.mxu0 %v1608
    %v1707 = vpop.f32.mrf.mxu0
    %v1708 = vadd.f32 0.0, %v1707
    %v1709 = vpop.f32.mrf.mxu0
    %1710 = vmatprep.mubr.f32.mxu0 0.0
    %1711 = vmatmul.mubr.f32.gmra.mxu0 %v1611
    %v1712 = vpop.f32.mrf.mxu0
    %v1713 = vadd.f32 0.0, %v1712
    %v1714 = vpop.f32.mrf.mxu0
    %1715 = vmatprep.mubr.f32.mxu0 0.0
    %1716 = vmatmul.mubr.f32.gmra.mxu0 %v1614
    %v1717 = vpop.f32.mrf.mxu0
    %v1718 = vadd.f32 0.0, %v1717
    %v1719 = vpop.f32.mrf.mxu0
    %1720 = vdwg.mxu0
    %v1721 = vld [vmem:[#allocation6] sm:$0xff]
    %s1722 = scalar_lea.vmem [#allocation4], 64
    %v1723 = vld [vmem:[%s1722] sm:$0xff]
    %v1724 = vld [vmem:[%s1722 + $0x8] sm:$0xff]
    %v1725 = vld [vmem:[%s1722 + $0x10] sm:$0xff]
    %v1726 = vld [vmem:[%s1722 + $0x18] sm:$0xff]
    %v1727 = vld [vmem:[%s1722 + $0x20] sm:$0xff]
    %v1728 = vld [vmem:[%s1722 + $0x28] sm:$0xff]
    %v1729 = vld [vmem:[%s1722 + $0x30] sm:$0xff]
    %v1730 = vld [vmem:[%s1722 + $0x38] sm:$0xff]
    %v1732 = vsel %vm1591, %v1723, 0
    %v1735 = vsel %vm1591, %v1724, 0
    %v1738 = vsel %vm1591, %v1725, 0
    %v1741 = vsel %vm1591, %v1726, 0
    %v1744 = vsel %vm1591, %v1727, 0
    %v1747 = vsel %vm1591, %v1728, 0
    %v1750 = vsel %vm1591, %v1729, 0
    %v1753 = vsel %vm1591, %v1730, 0
    %1755 = vmatprep.subr.mxu0 0.0
    %1756 = vmatpush1.msra.mxu0 0.0
    %1757 = vmatprep.subr.mxu0 0.0
    %1758 = vmatpush1.msra.mxu0 0.0
    %1759 = vmatprep.subr.mxu0 0.0
    %1760 = vmatpush1.msra.mxu0 0.0
    %1761 = vmatprep.subr.mxu0 0.0
    %1762 = vmatpush1.msra.mxu0 0.0
    %1763 = vmatprep.subr.mxu0 0.0
    %1764 = vmatpush1.msra.mxu0 0.0
    %1765 = vmatprep.subr.mxu0 0.0
    %1766 = vmatpush1.msra.mxu0 0.0
    %1767 = vmatprep.subr.mxu0 0.0
    %1768 = vmatpush1.msra.mxu0 0.0
    %1769 = vmatprep.subr.mxu0 0.0
    %1770 = vmatpush1.msra.mxu0 0.0
    %1771 = vmatprep.subr.mxu0 0.0
    %1772 = vmatpush1.msra.mxu0 %v1582
    %1773 = vmatprep.subr.mxu0 0.0
    %1774 = vmatpush1.msra.mxu0 %v1581
    %1775 = vmatprep.subr.mxu0 0.0
    %1776 = vmatpush1.msra.mxu0 %v1580
    %1777 = vmatprep.subr.mxu0 0.0
    %1778 = vmatpush1.msra.mxu0 %v1579
    %1779 = vmatprep.subr.mxu0 0.0
    %1780 = vmatpush1.msra.mxu0 %v1578
    %1781 = vmatprep.subr.mxu0 0.0
    %1782 = vmatpush1.msra.mxu0 %v1577
    %1783 = vmatprep.subr.mxu0 0.0
    %1784 = vmatpush1.msra.mxu0 %v1576
    %1785 = vmatprep.subr.mxu0 0.0
    %1786 = vmatpush1.msra.mxu0 %v1575
    %1787 = vmatprep.subr.mxu0 0.0
    %1788 = vmatpush2.msra.mxu0 0.0
    %1789 = vmatprep.subr.mxu0 0.0
    %1790 = vmatpush2.msra.mxu0 0.0
    %1791 = vmatprep.subr.mxu0 0.0
    %1792 = vmatpush2.msra.mxu0 0.0
    %1793 = vmatprep.subr.mxu0 0.0
    %1794 = vmatpush2.msra.mxu0 0.0
    %1795 = vmatprep.subr.mxu0 0.0
    %1796 = vmatpush2.msra.mxu0 0.0
    %1797 = vmatprep.subr.mxu0 0.0
    %1798 = vmatpush2.msra.mxu0 0.0
    %1799 = vmatprep.subr.mxu0 0.0
    %1800 = vmatpush2.msra.mxu0 0.0
    %1801 = vmatprep.subr.mxu0 0.0
    %1802 = vmatpush2.msra.mxu0 0.0
    %1803 = vmatprep.subr.mxu0 0.0
    %1804 = vmatpush2.msra.mxu0 0.0
    %1805 = vmatprep.subr.mxu0 0.0
    %1806 = vmatpush2.msra.mxu0 0.0
    %1807 = vmatprep.subr.mxu0 0.0
    %1808 = vmatpush2.msra.mxu0 0.0
    %1809 = vmatprep.subr.mxu0 0.0
    %1810 = vmatpush2.msra.mxu0 0.0
    %1811 = vmatprep.subr.mxu0 0.0
    %1812 = vmatpush2.msra.mxu0 0.0
    %1813 = vmatprep.subr.mxu0 0.0
    %1814 = vmatpush2.msra.mxu0 0.0
    %1815 = vmatprep.subr.mxu0 0.0
    %1816 = vmatpush2.msra.mxu0 0.0
    %1817 = vmatprep.subr.mxu0 0.0
    %1818 = vmatpush2.msra.mxu0 0.0
    %1819 = vmatprep.mubr.f32.mxu0 0.0
    %1820 = vmatmul.mubr.f32.gmra.mxu0 %v1732
    %v1821 = vpop.f32.mrf.mxu0
    %v1822 = vadd.f32 0.0, %v1821
    %v1823 = vpop.f32.mrf.mxu0
    %1824 = vmatprep.mubr.f32.mxu0 0.0
    %1825 = vmatmul.mubr.f32.gmra.mxu0 %v1735
    %v1826 = vpop.f32.mrf.mxu0
    %v1827 = vadd.f32 0.0, %v1826
    %v1828 = vpop.f32.mrf.mxu0
    %1829 = vmatprep.mubr.f32.mxu0 0.0
    %1830 = vmatmul.mubr.f32.gmra.mxu0 %v1738
    %v1831 = vpop.f32.mrf.mxu0
    %v1832 = vadd.f32 0.0, %v1831
    %v1833 = vpop.f32.mrf.mxu0
    %1834 = vmatprep.mubr.f32.mxu0 0.0
    %1835 = vmatmul.mubr.f32.gmra.mxu0 %v1741
    %v1836 = vpop.f32.mrf.mxu0
    %v1837 = vadd.f32 0.0, %v1836
    %v1838 = vpop.f32.mrf.mxu0
    %1839 = vmatprep.mubr.f32.mxu0 0.0
    %1840 = vmatmul.mubr.f32.gmra.mxu0 %v1744
    %v1841 = vpop.f32.mrf.mxu0
    %v1842 = vadd.f32 0.0, %v1841
    %v1843 = vpop.f32.mrf.mxu0
    %1844 = vmatprep.mubr.f32.mxu0 0.0
    %1845 = vmatmul.mubr.f32.gmra.mxu0 %v1747
    %v1846 = vpop.f32.mrf.mxu0
    %v1847 = vadd.f32 0.0, %v1846
    %v1848 = vpop.f32.mrf.mxu0
    %1849 = vmatprep.mubr.f32.mxu0 0.0
    %1850 = vmatmul.mubr.f32.gmra.mxu0 %v1750
    %v1851 = vpop.f32.mrf.mxu0
    %v1852 = vadd.f32 0.0, %v1851
    %v1853 = vpop.f32.mrf.mxu0
    %1854 = vmatprep.mubr.f32.mxu0 0.0
    %1855 = vmatmul.mubr.f32.gmra.mxu0 %v1753
    %v1856 = vpop.f32.mrf.mxu0
    %v1857 = vadd.f32 0.0, %v1856
    %v1858 = vpop.f32.mrf.mxu0
    %1859 = vdwg.mxu0
    %s1860 = scalar_lea.vmem [#allocation6], 8
    %v1861 = vld [vmem:[%s1860] sm:$0xff]
    %vm1862 = vcmask 64512
    %v1864 = vsel %vm1862, %v1822, 0
    %v1867 = vsel %vm1862, %v1827, 0
    %v1870 = vsel %vm1862, %v1832, 0
    %v1873 = vsel %vm1862, %v1837, 0
    %v1876 = vsel %vm1862, %v1842, 0
    %v1879 = vsel %vm1862, %v1847, 0
    %v1882 = vsel %vm1862, %v1852, 0
    %v1885 = vsel %vm1862, %v1857, 0
    %1887 = vmatprep.subr.mxu0 0.0
    %1888 = vmatpush1.msra.mxu0 0.0
    %1889 = vmatprep.subr.mxu0 0.0
    %1890 = vmatpush1.msra.mxu0 0.0
    %1891 = vmatprep.subr.mxu0 0.0
    %1892 = vmatpush1.msra.mxu0 0.0
    %1893 = vmatprep.subr.mxu0 0.0
    %1894 = vmatpush1.msra.mxu0 0.0
    %1895 = vmatprep.subr.mxu0 0.0
    %1896 = vmatpush1.msra.mxu0 0.0
    %1897 = vmatprep.subr.mxu0 0.0
    %1898 = vmatpush1.msra.mxu0 0.0
    %1899 = vmatprep.subr.mxu0 0.0
    %1900 = vmatpush1.msra.mxu0 0.0
    %1901 = vmatprep.subr.mxu0 0.0
    %1902 = vmatpush1.msra.mxu0 0.0
    %1903 = vmatprep.subr.mxu0 0.0
    %1904 = vmatpush1.msra.mxu0 0.0
    %1905 = vmatprep.subr.mxu0 0.0
    %1906 = vmatpush1.msra.mxu0 0.0
    %1907 = vmatprep.subr.mxu0 0.0
    %1908 = vmatpush1.msra.mxu0 0.0
    %1909 = vmatprep.subr.mxu0 0.0
    %1910 = vmatpush1.msra.mxu0 0.0
    %1911 = vmatprep.subr.mxu0 0.0
    %1912 = vmatpush1.msra.mxu0 0.0
    %1913 = vmatprep.subr.mxu0 0.0
    %1914 = vmatpush1.msra.mxu0 0.0
    %1915 = vmatprep.subr.mxu0 0.0
    %1916 = vmatpush1.msra.mxu0 0.0
    %1917 = vmatprep.subr.mxu0 0.0
    %1918 = vmatpush1.msra.mxu0 %v1861
    %1919 = vmatprep.subr.mxu0 0.0
    %1920 = vmatpush2.msra.mxu0 0.0
    %1921 = vmatprep.subr.mxu0 0.0
    %1922 = vmatpush2.msra.mxu0 0.0
    %1923 = vmatprep.subr.mxu0 0.0
    %1924 = vmatpush2.msra.mxu0 0.0
    %1925 = vmatprep.subr.mxu0 0.0
    %1926 = vmatpush2.msra.mxu0 0.0
    %1927 = vmatprep.subr.mxu0 0.0
    %1928 = vmatpush2.msra.mxu0 0.0
    %1929 = vmatprep.subr.mxu0 0.0
    %1930 = vmatpush2.msra.mxu0 0.0
    %1931 = vmatprep.subr.mxu0 0.0
    %1932 = vmatpush2.msra.mxu0 0.0
    %1933 = vmatprep.subr.mxu0 0.0
    %1934 = vmatpush2.msra.mxu0 0.0
    %1935 = vmatprep.subr.mxu0 0.0
    %1936 = vmatpush2.msra.mxu0 0.0
    %1937 = vmatprep.subr.mxu0 0.0
    %1938 = vmatpush2.msra.mxu0 0.0
    %1939 = vmatprep.subr.mxu0 0.0
    %1940 = vmatpush2.msra.mxu0 0.0
    %1941 = vmatprep.subr.mxu0 0.0
    %1942 = vmatpush2.msra.mxu0 0.0
    %1943 = vmatprep.subr.mxu0 0.0
    %1944 = vmatpush2.msra.mxu0 0.0
    %1945 = vmatprep.subr.mxu0 0.0
    %1946 = vmatpush2.msra.mxu0 0.0
    %1947 = vmatprep.subr.mxu0 0.0
    %1948 = vmatpush2.msra.mxu0 0.0
    %1949 = vmatprep.subr.mxu0 0.0
    %1950 = vmatpush2.msra.mxu0 0.0
    %1951 = vmatprep.mubr.f32.mxu0 0.0
    %1952 = vmatmul.mubr.f32.gmra.mxu0 %v1864
    %v1953 = vpop.f32.mrf.mxu0
    %v1954 = vadd.f32 0.0, %v1953
    %v1955 = vpop.f32.mrf.mxu0
    %1956 = vmatprep.mubr.f32.mxu0 0.0
    %1957 = vmatmul.mubr.f32.gmra.mxu0 %v1867
    %v1958 = vpop.f32.mrf.mxu0
    %v1959 = vadd.f32 0.0, %v1958
    %v1960 = vpop.f32.mrf.mxu0
    %1961 = vmatprep.mubr.f32.mxu0 0.0
    %1962 = vmatmul.mubr.f32.gmra.mxu0 %v1870
    %v1963 = vpop.f32.mrf.mxu0
    %v1964 = vadd.f32 0.0, %v1963
    %v1965 = vpop.f32.mrf.mxu0
    %1966 = vmatprep.mubr.f32.mxu0 0.0
    %1967 = vmatmul.mubr.f32.gmra.mxu0 %v1873
    %v1968 = vpop.f32.mrf.mxu0
    %v1969 = vadd.f32 0.0, %v1968
    %v1970 = vpop.f32.mrf.mxu0
    %1971 = vmatprep.mubr.f32.mxu0 0.0
    %1972 = vmatmul.mubr.f32.gmra.mxu0 %v1876
    %v1973 = vpop.f32.mrf.mxu0
    %v1974 = vadd.f32 0.0, %v1973
    %v1975 = vpop.f32.mrf.mxu0
    %1976 = vmatprep.mubr.f32.mxu0 0.0
    %1977 = vmatmul.mubr.f32.gmra.mxu0 %v1879
    %v1978 = vpop.f32.mrf.mxu0
    %v1979 = vadd.f32 0.0, %v1978
    %v1980 = vpop.f32.mrf.mxu0
    %1981 = vmatprep.mubr.f32.mxu0 0.0
    %1982 = vmatmul.mubr.f32.gmra.mxu0 %v1882
    %v1983 = vpop.f32.mrf.mxu0
    %v1984 = vadd.f32 0.0, %v1983
    %v1985 = vpop.f32.mrf.mxu0
    %1986 = vmatprep.mubr.f32.mxu0 0.0
    %1987 = vmatmul.mubr.f32.gmra.mxu0 %v1885
    %v1988 = vpop.f32.mrf.mxu0
    %v1989 = vadd.f32 0.0, %v1988
    %v1990 = vpop.f32.mrf.mxu0
    %1991 = vdwg.mxu0
    %v1993 = vsel %vm1862, %v1683, 0
    %v1996 = vsel %vm1862, %v1688, 0
    %v1999 = vsel %vm1862, %v1693, 0
    %v2002 = vsel %vm1862, %v1698, 0
    %v2005 = vsel %vm1862, %v1703, 0
    %v2008 = vsel %vm1862, %v1708, 0
    %v2011 = vsel %vm1862, %v1713, 0
    %v2014 = vsel %vm1862, %v1718, 0
    %2016 = vmatprep.subr.mxu0 0.0
    %2017 = vmatpush1.msra.mxu0 0.0
    %2018 = vmatprep.subr.mxu0 0.0
    %2019 = vmatpush1.msra.mxu0 0.0
    %2020 = vmatprep.subr.mxu0 0.0
    %2021 = vmatpush1.msra.mxu0 0.0
    %2022 = vmatprep.subr.mxu0 0.0
    %2023 = vmatpush1.msra.mxu0 0.0
    %2024 = vmatprep.subr.mxu0 0.0
    %2025 = vmatpush1.msra.mxu0 0.0
    %2026 = vmatprep.subr.mxu0 0.0
    %2027 = vmatpush1.msra.mxu0 0.0
    %2028 = vmatprep.subr.mxu0 0.0
    %2029 = vmatpush1.msra.mxu0 0.0
    %2030 = vmatprep.subr.mxu0 0.0
    %2031 = vmatpush1.msra.mxu0 0.0
    %2032 = vmatprep.subr.mxu0 0.0
    %2033 = vmatpush1.msra.mxu0 0.0
    %2034 = vmatprep.subr.mxu0 0.0
    %2035 = vmatpush1.msra.mxu0 0.0
    %2036 = vmatprep.subr.mxu0 0.0
    %2037 = vmatpush1.msra.mxu0 0.0
    %2038 = vmatprep.subr.mxu0 0.0
    %2039 = vmatpush1.msra.mxu0 0.0
    %2040 = vmatprep.subr.mxu0 0.0
    %2041 = vmatpush1.msra.mxu0 0.0
    %2042 = vmatprep.subr.mxu0 0.0
    %2043 = vmatpush1.msra.mxu0 0.0
    %2044 = vmatprep.subr.mxu0 0.0
    %2045 = vmatpush1.msra.mxu0 0.0
    %2046 = vmatprep.subr.mxu0 0.0
    %2047 = vmatpush1.msra.mxu0 %v1721
    %2048 = vmatprep.subr.mxu0 0.0
    %2049 = vmatpush2.msra.mxu0 0.0
    %2050 = vmatprep.subr.mxu0 0.0
    %2051 = vmatpush2.msra.mxu0 0.0
    %2052 = vmatprep.subr.mxu0 0.0
    %2053 = vmatpush2.msra.mxu0 0.0
    %2054 = vmatprep.subr.mxu0 0.0
    %2055 = vmatpush2.msra.mxu0 0.0
    %2056 = vmatprep.subr.mxu0 0.0
    %2057 = vmatpush2.msra.mxu0 0.0
    %2058 = vmatprep.subr.mxu0 0.0
    %2059 = vmatpush2.msra.mxu0 0.0
    %2060 = vmatprep.subr.mxu0 0.0
    %2061 = vmatpush2.msra.mxu0 0.0
    %2062 = vmatprep.subr.mxu0 0.0
    %2063 = vmatpush2.msra.mxu0 0.0
    %2064 = vmatprep.subr.mxu0 0.0
    %2065 = vmatpush2.msra.mxu0 0.0
    %2066 = vmatprep.subr.mxu0 0.0
    %2067 = vmatpush2.msra.mxu0 0.0
    %2068 = vmatprep.subr.mxu0 0.0
    %2069 = vmatpush2.msra.mxu0 0.0
    %2070 = vmatprep.subr.mxu0 0.0
    %2071 = vmatpush2.msra.mxu0 0.0
    %2072 = vmatprep.subr.mxu0 0.0
    %2073 = vmatpush2.msra.mxu0 0.0
    %2074 = vmatprep.subr.mxu0 0.0
    %2075 = vmatpush2.msra.mxu0 0.0
    %2076 = vmatprep.subr.mxu0 0.0
    %2077 = vmatpush2.msra.mxu0 0.0
    %2078 = vmatprep.subr.mxu0 0.0
    %2079 = vmatpush2.msra.mxu0 0.0
    %2080 = vmatprep.mubr.f32.mxu0 0.0
    %2081 = vmatmul.mubr.f32.gmra.mxu0 %v1993
    %v2082 = vpop.f32.mrf.mxu0
    %v2083 = vadd.f32 %v1954, %v2082
    %v2084 = vpop.f32.mrf.mxu0
    %2085 = vmatprep.mubr.f32.mxu0 0.0
    %2086 = vmatmul.mubr.f32.gmra.mxu0 %v1996
    %v2087 = vpop.f32.mrf.mxu0
    %v2088 = vadd.f32 %v1959, %v2087
    %v2089 = vpop.f32.mrf.mxu0
    %2090 = vmatprep.mubr.f32.mxu0 0.0
    %2091 = vmatmul.mubr.f32.gmra.mxu0 %v1999
    %v2092 = vpop.f32.mrf.mxu0
    %v2093 = vadd.f32 %v1964, %v2092
    %v2094 = vpop.f32.mrf.mxu0
    %2095 = vmatprep.mubr.f32.mxu0 0.0
    %2096 = vmatmul.mubr.f32.gmra.mxu0 %v2002
    %v2097 = vpop.f32.mrf.mxu0
    %v2098 = vadd.f32 %v1969, %v2097
    %v2099 = vpop.f32.mrf.mxu0
    %2100 = vmatprep.mubr.f32.mxu0 0.0
    %2101 = vmatmul.mubr.f32.gmra.mxu0 %v2005
    %v2102 = vpop.f32.mrf.mxu0
    %v2103 = vadd.f32 %v1974, %v2102
    %v2104 = vpop.f32.mrf.mxu0
    %2105 = vmatprep.mubr.f32.mxu0 0.0
    %2106 = vmatmul.mubr.f32.gmra.mxu0 %v2008
    %v2107 = vpop.f32.mrf.mxu0
    %v2108 = vadd.f32 %v1979, %v2107
    %v2109 = vpop.f32.mrf.mxu0
    %2110 = vmatprep.mubr.f32.mxu0 0.0
    %2111 = vmatmul.mubr.f32.gmra.mxu0 %v2011
    %v2112 = vpop.f32.mrf.mxu0
    %v2113 = vadd.f32 %v1984, %v2112
    %v2114 = vpop.f32.mrf.mxu0
    %2115 = vmatprep.mubr.f32.mxu0 0.0
    %2116 = vmatmul.mubr.f32.gmra.mxu0 %v2014
    %v2117 = vpop.f32.mrf.mxu0
    %v2118 = vadd.f32 %v1989, %v2117
    %v2119 = vpop.f32.mrf.mxu0
    %2120 = vdwg.mxu0
    %s2121 = scalar_lea.vmem [#allocation4], 128
    %v2122 = vld [vmem:[%s2121] sm:$0xff]
    %v2123 = vld [vmem:[%s2121 + $0x8] sm:$0xff]
    %v2124 = vld [vmem:[%s2121 + $0x10] sm:$0xff]
    %v2125 = vld [vmem:[%s2121 + $0x18] sm:$0xff]
    %v2126 = vld [vmem:[%s2121 + $0x20] sm:$0xff]
    %v2127 = vld [vmem:[%s2121 + $0x28] sm:$0xff]
    %v2128 = vld [vmem:[%s2121 + $0x30] sm:$0xff]
    %v2129 = vld [vmem:[%s2121 + $0x38] sm:$0xff]
    %v2131 = vsel %vm1591, %v2122, 0
    %v2134 = vsel %vm1591, %v2123, 0
    %v2137 = vsel %vm1591, %v2124, 0
    %v2140 = vsel %vm1591, %v2125, 0
    %v2143 = vsel %vm1591, %v2126, 0
    %v2146 = vsel %vm1591, %v2127, 0
    %v2149 = vsel %vm1591, %v2128, 0
    %v2152 = vsel %vm1591, %v2129, 0
    %2154 = vmatprep.subr.mxu0 0.0
    %2155 = vmatpush1.msra.mxu0 0.0
    %2156 = vmatprep.subr.mxu0 0.0
    %2157 = vmatpush1.msra.mxu0 0.0
    %2158 = vmatprep.subr.mxu0 0.0
    %2159 = vmatpush1.msra.mxu0 0.0
    %2160 = vmatprep.subr.mxu0 0.0
    %2161 = vmatpush1.msra.mxu0 0.0
    %2162 = vmatprep.subr.mxu0 0.0
    %2163 = vmatpush1.msra.mxu0 0.0
    %2164 = vmatprep.subr.mxu0 0.0
    %2165 = vmatpush1.msra.mxu0 0.0
    %2166 = vmatprep.subr.mxu0 0.0
    %2167 = vmatpush1.msra.mxu0 0.0
    %2168 = vmatprep.subr.mxu0 0.0
    %2169 = vmatpush1.msra.mxu0 0.0
    %2170 = vmatprep.subr.mxu0 0.0
    %2171 = vmatpush1.msra.mxu0 %v1582
    %2172 = vmatprep.subr.mxu0 0.0
    %2173 = vmatpush1.msra.mxu0 %v1581
    %2174 = vmatprep.subr.mxu0 0.0
    %2175 = vmatpush1.msra.mxu0 %v1580
    %2176 = vmatprep.subr.mxu0 0.0
    %2177 = vmatpush1.msra.mxu0 %v1579
    %2178 = vmatprep.subr.mxu0 0.0
    %2179 = vmatpush1.msra.mxu0 %v1578
    %2180 = vmatprep.subr.mxu0 0.0
    %2181 = vmatpush1.msra.mxu0 %v1577
    %2182 = vmatprep.subr.mxu0 0.0
    %2183 = vmatpush1.msra.mxu0 %v1576
    %2184 = vmatprep.subr.mxu0 0.0
    %2185 = vmatpush1.msra.mxu0 %v1575
    %2186 = vmatprep.subr.mxu0 0.0
    %2187 = vmatpush2.msra.mxu0 0.0
    %2188 = vmatprep.subr.mxu0 0.0
    %2189 = vmatpush2.msra.mxu0 0.0
    %2190 = vmatprep.subr.mxu0 0.0
    %2191 = vmatpush2.msra.mxu0 0.0
    %2192 = vmatprep.subr.mxu0 0.0
    %2193 = vmatpush2.msra.mxu0 0.0
    %2194 = vmatprep.subr.mxu0 0.0
    %2195 = vmatpush2.msra.mxu0 0.0
    %2196 = vmatprep.subr.mxu0 0.0
    %2197 = vmatpush2.msra.mxu0 0.0
    %2198 = vmatprep.subr.mxu0 0.0
    %2199 = vmatpush2.msra.mxu0 0.0
    %2200 = vmatprep.subr.mxu0 0.0
    %2201 = vmatpush2.msra.mxu0 0.0
    %2202 = vmatprep.subr.mxu0 0.0
    %2203 = vmatpush2.msra.mxu0 0.0
    %2204 = vmatprep.subr.mxu0 0.0
    %2205 = vmatpush2.msra.mxu0 0.0
    %2206 = vmatprep.subr.mxu0 0.0
    %2207 = vmatpush2.msra.mxu0 0.0
    %2208 = vmatprep.subr.mxu0 0.0
    %2209 = vmatpush2.msra.mxu0 0.0
    %2210 = vmatprep.subr.mxu0 0.0
    %2211 = vmatpush2.msra.mxu0 0.0
    %2212 = vmatprep.subr.mxu0 0.0
    %2213 = vmatpush2.msra.mxu0 0.0
    %2214 = vmatprep.subr.mxu0 0.0
    %2215 = vmatpush2.msra.mxu0 0.0
    %2216 = vmatprep.subr.mxu0 0.0
    %2217 = vmatpush2.msra.mxu0 0.0
    %2218 = vmatprep.mubr.f32.mxu0 0.0
    %2219 = vmatmul.mubr.f32.gmra.mxu0 %v2131
    %v2220 = vpop.f32.mrf.mxu0
    %v2221 = vadd.f32 0.0, %v2220
    %v2222 = vpop.f32.mrf.mxu0
    %2223 = vmatprep.mubr.f32.mxu0 0.0
    %2224 = vmatmul.mubr.f32.gmra.mxu0 %v2134
    %v2225 = vpop.f32.mrf.mxu0
    %v2226 = vadd.f32 0.0, %v2225
    %v2227 = vpop.f32.mrf.mxu0
    %2228 = vmatprep.mubr.f32.mxu0 0.0
    %2229 = vmatmul.mubr.f32.gmra.mxu0 %v2137
    %v2230 = vpop.f32.mrf.mxu0
    %v2231 = vadd.f32 0.0, %v2230
    %v2232 = vpop.f32.mrf.mxu0
    %2233 = vmatprep.mubr.f32.mxu0 0.0
    %2234 = vmatmul.mubr.f32.gmra.mxu0 %v2140
    %v2235 = vpop.f32.mrf.mxu0
    %v2236 = vadd.f32 0.0, %v2235
    %v2237 = vpop.f32.mrf.mxu0
    %2238 = vmatprep.mubr.f32.mxu0 0.0
    %2239 = vmatmul.mubr.f32.gmra.mxu0 %v2143
    %v2240 = vpop.f32.mrf.mxu0
    %v2241 = vadd.f32 0.0, %v2240
    %v2242 = vpop.f32.mrf.mxu0
    %2243 = vmatprep.mubr.f32.mxu0 0.0
    %2244 = vmatmul.mubr.f32.gmra.mxu0 %v2146
    %v2245 = vpop.f32.mrf.mxu0
    %v2246 = vadd.f32 0.0, %v2245
    %v2247 = vpop.f32.mrf.mxu0
    %2248 = vmatprep.mubr.f32.mxu0 0.0
    %2249 = vmatmul.mubr.f32.gmra.mxu0 %v2149
    %v2250 = vpop.f32.mrf.mxu0
    %v2251 = vadd.f32 0.0, %v2250
    %v2252 = vpop.f32.mrf.mxu0
    %2253 = vmatprep.mubr.f32.mxu0 0.0
    %2254 = vmatmul.mubr.f32.gmra.mxu0 %v2152
    %v2255 = vpop.f32.mrf.mxu0
    %v2256 = vadd.f32 0.0, %v2255
    %v2257 = vpop.f32.mrf.mxu0
    %2258 = vdwg.mxu0
    %s2259 = scalar_lea.vmem [#allocation6], 16
    %v2260 = vld [vmem:[%s2259] sm:$0xff]
    %v2262 = vsel %vm1862, %v2221, 0
    %v2265 = vsel %vm1862, %v2226, 0
    %v2268 = vsel %vm1862, %v2231, 0
    %v2271 = vsel %vm1862, %v2236, 0
    %v2274 = vsel %vm1862, %v2241, 0
    %v2277 = vsel %vm1862, %v2246, 0
    %v2280 = vsel %vm1862, %v2251, 0
    %v2283 = vsel %vm1862, %v2256, 0
    %2285 = vmatprep.subr.mxu0 0.0
    %2286 = vmatpush1.msra.mxu0 0.0
    %2287 = vmatprep.subr.mxu0 0.0
    %2288 = vmatpush1.msra.mxu0 0.0
    %2289 = vmatprep.subr.mxu0 0.0
    %2290 = vmatpush1.msra.mxu0 0.0
    %2291 = vmatprep.subr.mxu0 0.0
    %2292 = vmatpush1.msra.mxu0 0.0
    %2293 = vmatprep.subr.mxu0 0.0
    %2294 = vmatpush1.msra.mxu0 0.0
    %2295 = vmatprep.subr.mxu0 0.0
    %2296 = vmatpush1.msra.mxu0 0.0
    %2297 = vmatprep.subr.mxu0 0.0
    %2298 = vmatpush1.msra.mxu0 0.0
    %2299 = vmatprep.subr.mxu0 0.0
    %2300 = vmatpush1.msra.mxu0 0.0
    %2301 = vmatprep.subr.mxu0 0.0
    %2302 = vmatpush1.msra.mxu0 0.0
    %2303 = vmatprep.subr.mxu0 0.0
    %2304 = vmatpush1.msra.mxu0 0.0
    %2305 = vmatprep.subr.mxu0 0.0
    %2306 = vmatpush1.msra.mxu0 0.0
    %2307 = vmatprep.subr.mxu0 0.0
    %2308 = vmatpush1.msra.mxu0 0.0
    %2309 = vmatprep.subr.mxu0 0.0
    %2310 = vmatpush1.msra.mxu0 0.0
    %2311 = vmatprep.subr.mxu0 0.0
    %2312 = vmatpush1.msra.mxu0 0.0
    %2313 = vmatprep.subr.mxu0 0.0
    %2314 = vmatpush1.msra.mxu0 0.0
    %2315 = vmatprep.subr.mxu0 0.0
    %2316 = vmatpush1.msra.mxu0 %v2260
    %2317 = vmatprep.subr.mxu0 0.0
    %2318 = vmatpush2.msra.mxu0 0.0
    %2319 = vmatprep.subr.mxu0 0.0
    %2320 = vmatpush2.msra.mxu0 0.0
    %2321 = vmatprep.subr.mxu0 0.0
    %2322 = vmatpush2.msra.mxu0 0.0
    %2323 = vmatprep.subr.mxu0 0.0
    %2324 = vmatpush2.msra.mxu0 0.0
    %2325 = vmatprep.subr.mxu0 0.0
    %2326 = vmatpush2.msra.mxu0 0.0
    %2327 = vmatprep.subr.mxu0 0.0
    %2328 = vmatpush2.msra.mxu0 0.0
    %2329 = vmatprep.subr.mxu0 0.0
    %2330 = vmatpush2.msra.mxu0 0.0
    %2331 = vmatprep.subr.mxu0 0.0
    %2332 = vmatpush2.msra.mxu0 0.0
    %2333 = vmatprep.subr.mxu0 0.0
    %2334 = vmatpush2.msra.mxu0 0.0
    %2335 = vmatprep.subr.mxu0 0.0
    %2336 = vmatpush2.msra.mxu0 0.0
    %2337 = vmatprep.subr.mxu0 0.0
    %2338 = vmatpush2.msra.mxu0 0.0
    %2339 = vmatprep.subr.mxu0 0.0
    %2340 = vmatpush2.msra.mxu0 0.0
    %2341 = vmatprep.subr.mxu0 0.0
    %2342 = vmatpush2.msra.mxu0 0.0
    %2343 = vmatprep.subr.mxu0 0.0
    %2344 = vmatpush2.msra.mxu0 0.0
    %2345 = vmatprep.subr.mxu0 0.0
    %2346 = vmatpush2.msra.mxu0 0.0
    %2347 = vmatprep.subr.mxu0 0.0
    %2348 = vmatpush2.msra.mxu0 0.0
    %2349 = vmatprep.mubr.f32.mxu0 0.0
    %2350 = vmatmul.mubr.f32.gmra.mxu0 %v2262
    %v2351 = vpop.f32.mrf.mxu0
    %v2352 = vadd.f32 0.0, %v2351
    %v2353 = vpop.f32.mrf.mxu0
    %2354 = vmatprep.mubr.f32.mxu0 0.0
    %2355 = vmatmul.mubr.f32.gmra.mxu0 %v2265
    %v2356 = vpop.f32.mrf.mxu0
    %v2357 = vadd.f32 0.0, %v2356
    %v2358 = vpop.f32.mrf.mxu0
    %2359 = vmatprep.mubr.f32.mxu0 0.0
    %2360 = vmatmul.mubr.f32.gmra.mxu0 %v2268
    %v2361 = vpop.f32.mrf.mxu0
    %v2362 = vadd.f32 0.0, %v2361
    %v2363 = vpop.f32.mrf.mxu0
    %2364 = vmatprep.mubr.f32.mxu0 0.0
    %2365 = vmatmul.mubr.f32.gmra.mxu0 %v2271
    %v2366 = vpop.f32.mrf.mxu0
    %v2367 = vadd.f32 0.0, %v2366
    %v2368 = vpop.f32.mrf.mxu0
    %2369 = vmatprep.mubr.f32.mxu0 0.0
    %2370 = vmatmul.mubr.f32.gmra.mxu0 %v2274
    %v2371 = vpop.f32.mrf.mxu0
    %v2372 = vadd.f32 0.0, %v2371
    %v2373 = vpop.f32.mrf.mxu0
    %2374 = vmatprep.mubr.f32.mxu0 0.0
    %2375 = vmatmul.mubr.f32.gmra.mxu0 %v2277
    %v2376 = vpop.f32.mrf.mxu0
    %v2377 = vadd.f32 0.0, %v2376
    %v2378 = vpop.f32.mrf.mxu0
    %2379 = vmatprep.mubr.f32.mxu0 0.0
    %2380 = vmatmul.mubr.f32.gmra.mxu0 %v2280
    %v2381 = vpop.f32.mrf.mxu0
    %v2382 = vadd.f32 0.0, %v2381
    %v2383 = vpop.f32.mrf.mxu0
    %2384 = vmatprep.mubr.f32.mxu0 0.0
    %2385 = vmatmul.mubr.f32.gmra.mxu0 %v2283
    %v2386 = vpop.f32.mrf.mxu0
    %v2387 = vadd.f32 0.0, %v2386
    %v2388 = vpop.f32.mrf.mxu0
    %2389 = vdwg.mxu0
    %v2390 = vadd.f32 %v2083, %v2352
    %v2391 = vadd.f32 %v2088, %v2357
    %v2392 = vadd.f32 %v2093, %v2362
    %v2393 = vadd.f32 %v2098, %v2367
    %v2394 = vadd.f32 %v2103, %v2372
    %v2395 = vadd.f32 %v2108, %v2377
    %v2396 = vadd.f32 %v2113, %v2382
    %v2397 = vadd.f32 %v2118, %v2387
    %s2398 = scalar_lea.vmem [#allocation4], 192
    %v2399 = vld [vmem:[%s2398] sm:$0xff]
    %v2400 = vld [vmem:[%s2398 + $0x8] sm:$0xff]
    %v2401 = vld [vmem:[%s2398 + $0x10] sm:$0xff]
    %v2402 = vld [vmem:[%s2398 + $0x18] sm:$0xff]
    %v2403 = vld [vmem:[%s2398 + $0x20] sm:$0xff]
    %v2404 = vld [vmem:[%s2398 + $0x28] sm:$0xff]
    %v2405 = vld [vmem:[%s2398 + $0x30] sm:$0xff]
    %v2406 = vld [vmem:[%s2398 + $0x38] sm:$0xff]
    %v2408 = vsel %vm1591, %v2399, 0
    %v2411 = vsel %vm1591, %v2400, 0
    %v2414 = vsel %vm1591, %v2401, 0
    %v2417 = vsel %vm1591, %v2402, 0
    %v2420 = vsel %vm1591, %v2403, 0
    %v2423 = vsel %vm1591, %v2404, 0
    %v2426 = vsel %vm1591, %v2405, 0
    %v2429 = vsel %vm1591, %v2406, 0
    %2431 = vmatprep.subr.mxu0 0.0
    %2432 = vmatpush1.msra.mxu0 0.0
    %2433 = vmatprep.subr.mxu0 0.0
    %2434 = vmatpush1.msra.mxu0 0.0
    %2435 = vmatprep.subr.mxu0 0.0
    %2436 = vmatpush1.msra.mxu0 0.0
    %2437 = vmatprep.subr.mxu0 0.0
    %2438 = vmatpush1.msra.mxu0 0.0
    %2439 = vmatprep.subr.mxu0 0.0
    %2440 = vmatpush1.msra.mxu0 0.0
    %2441 = vmatprep.subr.mxu0 0.0
    %2442 = vmatpush1.msra.mxu0 0.0
    %2443 = vmatprep.subr.mxu0 0.0
    %2444 = vmatpush1.msra.mxu0 0.0
    %2445 = vmatprep.subr.mxu0 0.0
    %2446 = vmatpush1.msra.mxu0 0.0
    %2447 = vmatprep.subr.mxu0 0.0
    %2448 = vmatpush1.msra.mxu0 %v1582
    %2449 = vmatprep.subr.mxu0 0.0
    %2450 = vmatpush1.msra.mxu0 %v1581
    %2451 = vmatprep.subr.mxu0 0.0
    %2452 = vmatpush1.msra.mxu0 %v1580
    %2453 = vmatprep.subr.mxu0 0.0
    %2454 = vmatpush1.msra.mxu0 %v1579
    %2455 = vmatprep.subr.mxu0 0.0
    %2456 = vmatpush1.msra.mxu0 %v1578
    %2457 = vmatprep.subr.mxu0 0.0
    %2458 = vmatpush1.msra.mxu0 %v1577
    %2459 = vmatprep.subr.mxu0 0.0
    %2460 = vmatpush1.msra.mxu0 %v1576
    %2461 = vmatprep.subr.mxu0 0.0
    %2462 = vmatpush1.msra.mxu0 %v1575
    %2463 = vmatprep.subr.mxu0 0.0
    %2464 = vmatpush2.msra.mxu0 0.0
    %2465 = vmatprep.subr.mxu0 0.0
    %2466 = vmatpush2.msra.mxu0 0.0
    %2467 = vmatprep.subr.mxu0 0.0
    %2468 = vmatpush2.msra.mxu0 0.0
    %2469 = vmatprep.subr.mxu0 0.0
    %2470 = vmatpush2.msra.mxu0 0.0
    %2471 = vmatprep.subr.mxu0 0.0
    %2472 = vmatpush2.msra.mxu0 0.0
    %2473 = vmatprep.subr.mxu0 0.0
    %2474 = vmatpush2.msra.mxu0 0.0
    %2475 = vmatprep.subr.mxu0 0.0
    %2476 = vmatpush2.msra.mxu0 0.0
    %2477 = vmatprep.subr.mxu0 0.0
    %2478 = vmatpush2.msra.mxu0 0.0
    %2479 = vmatprep.subr.mxu0 0.0
    %2480 = vmatpush2.msra.mxu0 0.0
    %2481 = vmatprep.subr.mxu0 0.0
    %2482 = vmatpush2.msra.mxu0 0.0
    %2483 = vmatprep.subr.mxu0 0.0
    %2484 = vmatpush2.msra.mxu0 0.0
    %2485 = vmatprep.subr.mxu0 0.0
    %2486 = vmatpush2.msra.mxu0 0.0
    %2487 = vmatprep.subr.mxu0 0.0
    %2488 = vmatpush2.msra.mxu0 0.0
    %2489 = vmatprep.subr.mxu0 0.0
    %2490 = vmatpush2.msra.mxu0 0.0
    %2491 = vmatprep.subr.mxu0 0.0
    %2492 = vmatpush2.msra.mxu0 0.0
    %2493 = vmatprep.subr.mxu0 0.0
    %2494 = vmatpush2.msra.mxu0 0.0
    %2495 = vmatprep.mubr.f32.mxu0 0.0
    %2496 = vmatmul.mubr.f32.gmra.mxu0 %v2408
    %v2497 = vpop.f32.mrf.mxu0
    %v2498 = vadd.f32 0.0, %v2497
    %v2499 = vpop.f32.mrf.mxu0
    %2500 = vmatprep.mubr.f32.mxu0 0.0
    %2501 = vmatmul.mubr.f32.gmra.mxu0 %v2411
    %v2502 = vpop.f32.mrf.mxu0
    %v2503 = vadd.f32 0.0, %v2502
    %v2504 = vpop.f32.mrf.mxu0
    %2505 = vmatprep.mubr.f32.mxu0 0.0
    %2506 = vmatmul.mubr.f32.gmra.mxu0 %v2414
    %v2507 = vpop.f32.mrf.mxu0
    %v2508 = vadd.f32 0.0, %v2507
    %v2509 = vpop.f32.mrf.mxu0
    %2510 = vmatprep.mubr.f32.mxu0 0.0
    %2511 = vmatmul.mubr.f32.gmra.mxu0 %v2417
    %v2512 = vpop.f32.mrf.mxu0
    %v2513 = vadd.f32 0.0, %v2512
    %v2514 = vpop.f32.mrf.mxu0
    %2515 = vmatprep.mubr.f32.mxu0 0.0
    %2516 = vmatmul.mubr.f32.gmra.mxu0 %v2420
    %v2517 = vpop.f32.mrf.mxu0
    %v2518 = vadd.f32 0.0, %v2517
    %v2519 = vpop.f32.mrf.mxu0
    %2520 = vmatprep.mubr.f32.mxu0 0.0
    %2521 = vmatmul.mubr.f32.gmra.mxu0 %v2423
    %v2522 = vpop.f32.mrf.mxu0
    %v2523 = vadd.f32 0.0, %v2522
    %v2524 = vpop.f32.mrf.mxu0
    %2525 = vmatprep.mubr.f32.mxu0 0.0
    %2526 = vmatmul.mubr.f32.gmra.mxu0 %v2426
    %v2527 = vpop.f32.mrf.mxu0
    %v2528 = vadd.f32 0.0, %v2527
    %v2529 = vpop.f32.mrf.mxu0
    %2530 = vmatprep.mubr.f32.mxu0 0.0
    %2531 = vmatmul.mubr.f32.gmra.mxu0 %v2429
    %v2532 = vpop.f32.mrf.mxu0
    %v2533 = vadd.f32 0.0, %v2532
    %v2534 = vpop.f32.mrf.mxu0
    %2535 = vdwg.mxu0
    %s2536 = scalar_lea.vmem [#allocation6], 24
    %v2537 = vld [vmem:[%s2536] sm:$0xff]
    %v2539 = vsel %vm1862, %v2498, 0
    %v2542 = vsel %vm1862, %v2503, 0
    %v2545 = vsel %vm1862, %v2508, 0
    %v2548 = vsel %vm1862, %v2513, 0
    %v2551 = vsel %vm1862, %v2518, 0
    %v2554 = vsel %vm1862, %v2523, 0
    %v2557 = vsel %vm1862, %v2528, 0
    %v2560 = vsel %vm1862, %v2533, 0
    %2562 = vmatprep.subr.mxu0 0.0
    %2563 = vmatpush1.msra.mxu0 0.0
    %2564 = vmatprep.subr.mxu0 0.0
    %2565 = vmatpush1.msra.mxu0 0.0
    %2566 = vmatprep.subr.mxu0 0.0
    %2567 = vmatpush1.msra.mxu0 0.0
    %2568 = vmatprep.subr.mxu0 0.0
    %2569 = vmatpush1.msra.mxu0 0.0
    %2570 = vmatprep.subr.mxu0 0.0
    %2571 = vmatpush1.msra.mxu0 0.0
    %2572 = vmatprep.subr.mxu0 0.0
    %2573 = vmatpush1.msra.mxu0 0.0
    %2574 = vmatprep.subr.mxu0 0.0
    %2575 = vmatpush1.msra.mxu0 0.0
    %2576 = vmatprep.subr.mxu0 0.0
    %2577 = vmatpush1.msra.mxu0 0.0
    %2578 = vmatprep.subr.mxu0 0.0
    %2579 = vmatpush1.msra.mxu0 0.0
    %2580 = vmatprep.subr.mxu0 0.0
    %2581 = vmatpush1.msra.mxu0 0.0
    %2582 = vmatprep.subr.mxu0 0.0
    %2583 = vmatpush1.msra.mxu0 0.0
    %2584 = vmatprep.subr.mxu0 0.0
    %2585 = vmatpush1.msra.mxu0 0.0
    %2586 = vmatprep.subr.mxu0 0.0
    %2587 = vmatpush1.msra.mxu0 0.0
    %2588 = vmatprep.subr.mxu0 0.0
    %2589 = vmatpush1.msra.mxu0 0.0
    %2590 = vmatprep.subr.mxu0 0.0
    %2591 = vmatpush1.msra.mxu0 0.0
    %2592 = vmatprep.subr.mxu0 0.0
    %2593 = vmatpush1.msra.mxu0 %v2537
    %2594 = vmatprep.subr.mxu0 0.0
    %2595 = vmatpush2.msra.mxu0 0.0
    %2596 = vmatprep.subr.mxu0 0.0
    %2597 = vmatpush2.msra.mxu0 0.0
    %2598 = vmatprep.subr.mxu0 0.0
    %2599 = vmatpush2.msra.mxu0 0.0
    %2600 = vmatprep.subr.mxu0 0.0
    %2601 = vmatpush2.msra.mxu0 0.0
    %2602 = vmatprep.subr.mxu0 0.0
    %2603 = vmatpush2.msra.mxu0 0.0
    %2604 = vmatprep.subr.mxu0 0.0
    %2605 = vmatpush2.msra.mxu0 0.0
    %2606 = vmatprep.subr.mxu0 0.0
    %2607 = vmatpush2.msra.mxu0 0.0
    %2608 = vmatprep.subr.mxu0 0.0
    %2609 = vmatpush2.msra.mxu0 0.0
    %2610 = vmatprep.subr.mxu0 0.0
    %2611 = vmatpush2.msra.mxu0 0.0
    %2612 = vmatprep.subr.mxu0 0.0
    %2613 = vmatpush2.msra.mxu0 0.0
    %2614 = vmatprep.subr.mxu0 0.0
    %2615 = vmatpush2.msra.mxu0 0.0
    %2616 = vmatprep.subr.mxu0 0.0
    %2617 = vmatpush2.msra.mxu0 0.0
    %2618 = vmatprep.subr.mxu0 0.0
    %2619 = vmatpush2.msra.mxu0 0.0
    %2620 = vmatprep.subr.mxu0 0.0
    %2621 = vmatpush2.msra.mxu0 0.0
    %2622 = vmatprep.subr.mxu0 0.0
    %2623 = vmatpush2.msra.mxu0 0.0
    %2624 = vmatprep.subr.mxu0 0.0
    %2625 = vmatpush2.msra.mxu0 0.0
    %2626 = vmatprep.mubr.f32.mxu0 0.0
    %2627 = vmatmul.mubr.f32.gmra.mxu0 %v2539
    %v2628 = vpop.f32.mrf.mxu0
    %v2629 = vadd.f32 0.0, %v2628
    %v2630 = vpop.f32.mrf.mxu0
    %2631 = vmatprep.mubr.f32.mxu0 0.0
    %2632 = vmatmul.mubr.f32.gmra.mxu0 %v2542
    %v2633 = vpop.f32.mrf.mxu0
    %v2634 = vadd.f32 0.0, %v2633
    %v2635 = vpop.f32.mrf.mxu0
    %2636 = vmatprep.mubr.f32.mxu0 0.0
    %2637 = vmatmul.mubr.f32.gmra.mxu0 %v2545
    %v2638 = vpop.f32.mrf.mxu0
    %v2639 = vadd.f32 0.0, %v2638
    %v2640 = vpop.f32.mrf.mxu0
    %2641 = vmatprep.mubr.f32.mxu0 0.0
    %2642 = vmatmul.mubr.f32.gmra.mxu0 %v2548
    %v2643 = vpop.f32.mrf.mxu0
    %v2644 = vadd.f32 0.0, %v2643
    %v2645 = vpop.f32.mrf.mxu0
    %2646 = vmatprep.mubr.f32.mxu0 0.0
    %2647 = vmatmul.mubr.f32.gmra.mxu0 %v2551
    %v2648 = vpop.f32.mrf.mxu0
    %v2649 = vadd.f32 0.0, %v2648
    %v2650 = vpop.f32.mrf.mxu0
    %2651 = vmatprep.mubr.f32.mxu0 0.0
    %2652 = vmatmul.mubr.f32.gmra.mxu0 %v2554
    %v2653 = vpop.f32.mrf.mxu0
    %v2654 = vadd.f32 0.0, %v2653
    %v2655 = vpop.f32.mrf.mxu0
    %2656 = vmatprep.mubr.f32.mxu0 0.0
    %2657 = vmatmul.mubr.f32.gmra.mxu0 %v2557
    %v2658 = vpop.f32.mrf.mxu0
    %v2659 = vadd.f32 0.0, %v2658
    %v2660 = vpop.f32.mrf.mxu0
    %2661 = vmatprep.mubr.f32.mxu0 0.0
    %2662 = vmatmul.mubr.f32.gmra.mxu0 %v2560
    %v2663 = vpop.f32.mrf.mxu0
    %v2664 = vadd.f32 0.0, %v2663
    %v2665 = vpop.f32.mrf.mxu0
    %2666 = vdwg.mxu0
    %v2667 = vadd.f32 %v2390, %v2629
    %v2668 = vadd.f32 %v2391, %v2634
    %v2669 = vadd.f32 %v2392, %v2639
    %v2670 = vadd.f32 %v2393, %v2644
    %v2671 = vadd.f32 %v2394, %v2649
    %v2672 = vadd.f32 %v2395, %v2654
    %v2673 = vadd.f32 %v2396, %v2659
    %v2674 = vadd.f32 %v2397, %v2664
    %s2675 = scalar_lea.vmem [#allocation4], 256
    %v2676 = vld [vmem:[%s2675] sm:$0xff]
    %v2677 = vld [vmem:[%s2675 + $0x8] sm:$0xff]
    %v2678 = vld [vmem:[%s2675 + $0x10] sm:$0xff]
    %v2679 = vld [vmem:[%s2675 + $0x18] sm:$0xff]
    %v2680 = vld [vmem:[%s2675 + $0x20] sm:$0xff]
    %v2681 = vld [vmem:[%s2675 + $0x28] sm:$0xff]
    %v2682 = vld [vmem:[%s2675 + $0x30] sm:$0xff]
    %v2683 = vld [vmem:[%s2675 + $0x38] sm:$0xff]
    %v2685 = vsel %vm1591, %v2676, 0
    %v2688 = vsel %vm1591, %v2677, 0
    %v2691 = vsel %vm1591, %v2678, 0
    %v2694 = vsel %vm1591, %v2679, 0
    %v2697 = vsel %vm1591, %v2680, 0
    %v2700 = vsel %vm1591, %v2681, 0
    %v2703 = vsel %vm1591, %v2682, 0
    %v2706 = vsel %vm1591, %v2683, 0
    %2708 = vmatprep.subr.mxu0 0.0
    %2709 = vmatpush1.msra.mxu0 0.0
    %2710 = vmatprep.subr.mxu0 0.0
    %2711 = vmatpush1.msra.mxu0 0.0
    %2712 = vmatprep.subr.mxu0 0.0
    %2713 = vmatpush1.msra.mxu0 0.0
    %2714 = vmatprep.subr.mxu0 0.0
    %2715 = vmatpush1.msra.mxu0 0.0
    %2716 = vmatprep.subr.mxu0 0.0
    %2717 = vmatpush1.msra.mxu0 0.0
    %2718 = vmatprep.subr.mxu0 0.0
    %2719 = vmatpush1.msra.mxu0 0.0
    %2720 = vmatprep.subr.mxu0 0.0
    %2721 = vmatpush1.msra.mxu0 0.0
    %2722 = vmatprep.subr.mxu0 0.0
    %2723 = vmatpush1.msra.mxu0 0.0
    %2724 = vmatprep.subr.mxu0 0.0
    %2725 = vmatpush1.msra.mxu0 %v1582
    %2726 = vmatprep.subr.mxu0 0.0
    %2727 = vmatpush1.msra.mxu0 %v1581
    %2728 = vmatprep.subr.mxu0 0.0
    %2729 = vmatpush1.msra.mxu0 %v1580
    %2730 = vmatprep.subr.mxu0 0.0
    %2731 = vmatpush1.msra.mxu0 %v1579
    %2732 = vmatprep.subr.mxu0 0.0
    %2733 = vmatpush1.msra.mxu0 %v1578
    %2734 = vmatprep.subr.mxu0 0.0
    %2735 = vmatpush1.msra.mxu0 %v1577
    %2736 = vmatprep.subr.mxu0 0.0
    %2737 = vmatpush1.msra.mxu0 %v1576
    %2738 = vmatprep.subr.mxu0 0.0
    %2739 = vmatpush1.msra.mxu0 %v1575
    %2740 = vmatprep.subr.mxu0 0.0
    %2741 = vmatpush2.msra.mxu0 0.0
    %2742 = vmatprep.subr.mxu0 0.0
    %2743 = vmatpush2.msra.mxu0 0.0
    %2744 = vmatprep.subr.mxu0 0.0
    %2745 = vmatpush2.msra.mxu0 0.0
    %2746 = vmatprep.subr.mxu0 0.0
    %2747 = vmatpush2.msra.mxu0 0.0
    %2748 = vmatprep.subr.mxu0 0.0
    %2749 = vmatpush2.msra.mxu0 0.0
    %2750 = vmatprep.subr.mxu0 0.0
    %2751 = vmatpush2.msra.mxu0 0.0
    %2752 = vmatprep.subr.mxu0 0.0
    %2753 = vmatpush2.msra.mxu0 0.0
    %2754 = vmatprep.subr.mxu0 0.0
    %2755 = vmatpush2.msra.mxu0 0.0
    %2756 = vmatprep.subr.mxu0 0.0
    %2757 = vmatpush2.msra.mxu0 0.0
    %2758 = vmatprep.subr.mxu0 0.0
    %2759 = vmatpush2.msra.mxu0 0.0
    %2760 = vmatprep.subr.mxu0 0.0
    %2761 = vmatpush2.msra.mxu0 0.0
    %2762 = vmatprep.subr.mxu0 0.0
    %2763 = vmatpush2.msra.mxu0 0.0
    %2764 = vmatprep.subr.mxu0 0.0
    %2765 = vmatpush2.msra.mxu0 0.0
    %2766 = vmatprep.subr.mxu0 0.0
    %2767 = vmatpush2.msra.mxu0 0.0
    %2768 = vmatprep.subr.mxu0 0.0
    %2769 = vmatpush2.msra.mxu0 0.0
    %2770 = vmatprep.subr.mxu0 0.0
    %2771 = vmatpush2.msra.mxu0 0.0
    %2772 = vmatprep.mubr.f32.mxu0 0.0
    %2773 = vmatmul.mubr.f32.gmra.mxu0 %v2685
    %v2774 = vpop.f32.mrf.mxu0
    %v2775 = vadd.f32 0.0, %v2774
    %v2776 = vpop.f32.mrf.mxu0
    %2777 = vmatprep.mubr.f32.mxu0 0.0
    %2778 = vmatmul.mubr.f32.gmra.mxu0 %v2688
    %v2779 = vpop.f32.mrf.mxu0
    %v2780 = vadd.f32 0.0, %v2779
    %v2781 = vpop.f32.mrf.mxu0
    %2782 = vmatprep.mubr.f32.mxu0 0.0
    %2783 = vmatmul.mubr.f32.gmra.mxu0 %v2691
    %v2784 = vpop.f32.mrf.mxu0
    %v2785 = vadd.f32 0.0, %v2784
    %v2786 = vpop.f32.mrf.mxu0
    %2787 = vmatprep.mubr.f32.mxu0 0.0
    %2788 = vmatmul.mubr.f32.gmra.mxu0 %v2694
    %v2789 = vpop.f32.mrf.mxu0
    %v2790 = vadd.f32 0.0, %v2789
    %v2791 = vpop.f32.mrf.mxu0
    %2792 = vmatprep.mubr.f32.mxu0 0.0
    %2793 = vmatmul.mubr.f32.gmra.mxu0 %v2697
    %v2794 = vpop.f32.mrf.mxu0
    %v2795 = vadd.f32 0.0, %v2794
    %v2796 = vpop.f32.mrf.mxu0
    %2797 = vmatprep.mubr.f32.mxu0 0.0
    %2798 = vmatmul.mubr.f32.gmra.mxu0 %v2700
    %v2799 = vpop.f32.mrf.mxu0
    %v2800 = vadd.f32 0.0, %v2799
    %v2801 = vpop.f32.mrf.mxu0
    %2802 = vmatprep.mubr.f32.mxu0 0.0
    %2803 = vmatmul.mubr.f32.gmra.mxu0 %v2703
    %v2804 = vpop.f32.mrf.mxu0
    %v2805 = vadd.f32 0.0, %v2804
    %v2806 = vpop.f32.mrf.mxu0
    %2807 = vmatprep.mubr.f32.mxu0 0.0
    %2808 = vmatmul.mubr.f32.gmra.mxu0 %v2706
    %v2809 = vpop.f32.mrf.mxu0
    %v2810 = vadd.f32 0.0, %v2809
    %v2811 = vpop.f32.mrf.mxu0
    %2812 = vdwg.mxu0
    %s2813 = scalar_lea.vmem [#allocation6], 32
    %v2814 = vld [vmem:[%s2813] sm:$0xff]
    %v2816 = vsel %vm1862, %v2775, 0
    %v2819 = vsel %vm1862, %v2780, 0
    %v2822 = vsel %vm1862, %v2785, 0
    %v2825 = vsel %vm1862, %v2790, 0
    %v2828 = vsel %vm1862, %v2795, 0
    %v2831 = vsel %vm1862, %v2800, 0
    %v2834 = vsel %vm1862, %v2805, 0
    %v2837 = vsel %vm1862, %v2810, 0
    %2839 = vmatprep.subr.mxu0 0.0
    %2840 = vmatpush1.msra.mxu0 0.0
    %2841 = vmatprep.subr.mxu0 0.0
    %2842 = vmatpush1.msra.mxu0 0.0
    %2843 = vmatprep.subr.mxu0 0.0
    %2844 = vmatpush1.msra.mxu0 0.0
    %2845 = vmatprep.subr.mxu0 0.0
    %2846 = vmatpush1.msra.mxu0 0.0
    %2847 = vmatprep.subr.mxu0 0.0
    %2848 = vmatpush1.msra.mxu0 0.0
    %2849 = vmatprep.subr.mxu0 0.0
    %2850 = vmatpush1.msra.mxu0 0.0
    %2851 = vmatprep.subr.mxu0 0.0
    %2852 = vmatpush1.msra.mxu0 0.0
    %2853 = vmatprep.subr.mxu0 0.0
    %2854 = vmatpush1.msra.mxu0 0.0
    %2855 = vmatprep.subr.mxu0 0.0
    %2856 = vmatpush1.msra.mxu0 0.0
    %2857 = vmatprep.subr.mxu0 0.0
    %2858 = vmatpush1.msra.mxu0 0.0
    %2859 = vmatprep.subr.mxu0 0.0
    %2860 = vmatpush1.msra.mxu0 0.0
    %2861 = vmatprep.subr.mxu0 0.0
    %2862 = vmatpush1.msra.mxu0 0.0
    %2863 = vmatprep.subr.mxu0 0.0
    %2864 = vmatpush1.msra.mxu0 0.0
    %2865 = vmatprep.subr.mxu0 0.0
    %2866 = vmatpush1.msra.mxu0 0.0
    %2867 = vmatprep.subr.mxu0 0.0
    %2868 = vmatpush1.msra.mxu0 0.0
    %2869 = vmatprep.subr.mxu0 0.0
    %2870 = vmatpush1.msra.mxu0 %v2814
    %2871 = vmatprep.subr.mxu0 0.0
    %2872 = vmatpush2.msra.mxu0 0.0
    %2873 = vmatprep.subr.mxu0 0.0
    %2874 = vmatpush2.msra.mxu0 0.0
    %2875 = vmatprep.subr.mxu0 0.0
    %2876 = vmatpush2.msra.mxu0 0.0
    %2877 = vmatprep.subr.mxu0 0.0
    %2878 = vmatpush2.msra.mxu0 0.0
    %2879 = vmatprep.subr.mxu0 0.0
    %2880 = vmatpush2.msra.mxu0 0.0
    %2881 = vmatprep.subr.mxu0 0.0
    %2882 = vmatpush2.msra.mxu0 0.0
    %2883 = vmatprep.subr.mxu0 0.0
    %2884 = vmatpush2.msra.mxu0 0.0
    %2885 = vmatprep.subr.mxu0 0.0
    %2886 = vmatpush2.msra.mxu0 0.0
    %2887 = vmatprep.subr.mxu0 0.0
    %2888 = vmatpush2.msra.mxu0 0.0
    %2889 = vmatprep.subr.mxu0 0.0
    %2890 = vmatpush2.msra.mxu0 0.0
    %2891 = vmatprep.subr.mxu0 0.0
    %2892 = vmatpush2.msra.mxu0 0.0
    %2893 = vmatprep.subr.mxu0 0.0
    %2894 = vmatpush2.msra.mxu0 0.0
    %2895 = vmatprep.subr.mxu0 0.0
    %2896 = vmatpush2.msra.mxu0 0.0
    %2897 = vmatprep.subr.mxu0 0.0
    %2898 = vmatpush2.msra.mxu0 0.0
    %2899 = vmatprep.subr.mxu0 0.0
    %2900 = vmatpush2.msra.mxu0 0.0
    %2901 = vmatprep.subr.mxu0 0.0
    %2902 = vmatpush2.msra.mxu0 0.0
    %2903 = vmatprep.mubr.f32.mxu0 0.0
    %2904 = vmatmul.mubr.f32.gmra.mxu0 %v2816
    %v2905 = vpop.f32.mrf.mxu0
    %v2906 = vadd.f32 0.0, %v2905
    %v2907 = vpop.f32.mrf.mxu0
    %2908 = vmatprep.mubr.f32.mxu0 0.0
    %2909 = vmatmul.mubr.f32.gmra.mxu0 %v2819
    %v2910 = vpop.f32.mrf.mxu0
    %v2911 = vadd.f32 0.0, %v2910
    %v2912 = vpop.f32.mrf.mxu0
    %2913 = vmatprep.mubr.f32.mxu0 0.0
    %2914 = vmatmul.mubr.f32.gmra.mxu0 %v2822
    %v2915 = vpop.f32.mrf.mxu0
    %v2916 = vadd.f32 0.0, %v2915
    %v2917 = vpop.f32.mrf.mxu0
    %2918 = vmatprep.mubr.f32.mxu0 0.0
    %2919 = vmatmul.mubr.f32.gmra.mxu0 %v2825
    %v2920 = vpop.f32.mrf.mxu0
    %v2921 = vadd.f32 0.0, %v2920
    %v2922 = vpop.f32.mrf.mxu0
    %2923 = vmatprep.mubr.f32.mxu0 0.0
    %2924 = vmatmul.mubr.f32.gmra.mxu0 %v2828
    %v2925 = vpop.f32.mrf.mxu0
    %v2926 = vadd.f32 0.0, %v2925
    %v2927 = vpop.f32.mrf.mxu0
    %2928 = vmatprep.mubr.f32.mxu0 0.0
    %2929 = vmatmul.mubr.f32.gmra.mxu0 %v2831
    %v2930 = vpop.f32.mrf.mxu0
    %v2931 = vadd.f32 0.0, %v2930
    %v2932 = vpop.f32.mrf.mxu0
    %2933 = vmatprep.mubr.f32.mxu0 0.0
    %2934 = vmatmul.mubr.f32.gmra.mxu0 %v2834
    %v2935 = vpop.f32.mrf.mxu0
    %v2936 = vadd.f32 0.0, %v2935
    %v2937 = vpop.f32.mrf.mxu0
    %2938 = vmatprep.mubr.f32.mxu0 0.0
    %2939 = vmatmul.mubr.f32.gmra.mxu0 %v2837
    %v2940 = vpop.f32.mrf.mxu0
    %v2941 = vadd.f32 0.0, %v2940
    %v2942 = vpop.f32.mrf.mxu0
    %2943 = vdwg.mxu0
    %v2944 = vadd.f32 %v2667, %v2906
    %v2945 = vadd.f32 %v2668, %v2911
    %v2946 = vadd.f32 %v2669, %v2916
    %v2947 = vadd.f32 %v2670, %v2921
    %v2948 = vadd.f32 %v2671, %v2926
    %v2949 = vadd.f32 %v2672, %v2931
    %v2950 = vadd.f32 %v2673, %v2936
    %v2951 = vadd.f32 %v2674, %v2941
    %v2952 = vld [vmem:[#allocation7] sm:$0x1]
    %v2954 = vlaneseq
    %v2955 = vshrl.u32 %v2954, 7
    %v2956 = vsub.s32 0, %v2955
    %v2957 = vrot.slane %v2952, %v2956
    %v2959 = vmul.f32 %v2944, %v2957
    %v2960 = vmul.f32 %v2945, %v2957
    %v2961 = vmul.f32 %v2946, %v2957
    %v2962 = vmul.f32 %v2947, %v2957
    %v2963 = vmul.f32 %v2948, %v2957
    %v2964 = vmul.f32 %v2949, %v2957
    %v2965 = vmul.f32 %v2950, %v2957
    %v2966 = vmul.f32 %v2951, %v2957
    %v2967 = vld [vmem:[#allocation9] sm:$0x1]
    %v2969 = vlaneseq
    %v2970 = vshrl.u32 %v2969, 7
    %v2971 = vsub.s32 0, %v2970
    %v2972 = vrot.slane %v2967, %v2971
    %v2974 = vadd.f32 %v2959, %v2972
    %v2975 = vadd.f32 %v2960, %v2972
    %v2976 = vadd.f32 %v2961, %v2972
    %v2977 = vadd.f32 %v2962, %v2972
    %v2978 = vadd.f32 %v2963, %v2972
    %v2979 = vadd.f32 %v2964, %v2972
    %v2980 = vadd.f32 %v2965, %v2972
    %v2981 = vadd.f32 %v2966, %v2972
    %v2982 = vmax.f32 %v2974, 0.0
    %v2983 = vmax.f32 %v2975, 0.0
    %v2984 = vmax.f32 %v2976, 0.0
    %v2985 = vmax.f32 %v2977, 0.0
    %v2986 = vmax.f32 %v2978, 0.0
    %v2987 = vmax.f32 %v2979, 0.0
    %v2988 = vmax.f32 %v2980, 0.0
    %v2989 = vmax.f32 %v2981, 0.0
    %v2990 = vld [vmem:[#allocation10] sm:$0xff]
    %v2991 = vld [vmem:[#allocation10 + $0x8] sm:$0xff]
    %v2992 = vld [vmem:[#allocation10 + $0x10] sm:$0xff]
    %v2993 = vld [vmem:[#allocation10 + $0x18] sm:$0xff]
    %v2994 = vld [vmem:[#allocation10 + $0x20] sm:$0xff]
    %v2995 = vld [vmem:[#allocation10 + $0x28] sm:$0xff]
    %v2996 = vld [vmem:[#allocation10 + $0x30] sm:$0xff]
    %v2997 = vld [vmem:[#allocation10 + $0x38] sm:$0xff]
    %v2999 = vsel %vm1591, %v2990, 0
    %v3002 = vsel %vm1591, %v2991, 0
    %v3005 = vsel %vm1591, %v2992, 0
    %v3008 = vsel %vm1591, %v2993, 0
    %v3011 = vsel %vm1591, %v2994, 0
    %v3014 = vsel %vm1591, %v2995, 0
    %v3017 = vsel %vm1591, %v2996, 0
    %v3020 = vsel %vm1591, %v2997, 0
    %3022 = vmatprep.subr.mxu0 0.0
    %3023 = vmatpush1.msra.mxu0 0.0
    %3024 = vmatprep.subr.mxu0 0.0
    %3025 = vmatpush1.msra.mxu0 0.0
    %3026 = vmatprep.subr.mxu0 0.0
    %3027 = vmatpush1.msra.mxu0 0.0
    %3028 = vmatprep.subr.mxu0 0.0
    %3029 = vmatpush1.msra.mxu0 0.0
    %3030 = vmatprep.subr.mxu0 0.0
    %3031 = vmatpush1.msra.mxu0 0.0
    %3032 = vmatprep.subr.mxu0 0.0
    %3033 = vmatpush1.msra.mxu0 0.0
    %3034 = vmatprep.subr.mxu0 0.0
    %3035 = vmatpush1.msra.mxu0 0.0
    %3036 = vmatprep.subr.mxu0 0.0
    %3037 = vmatpush1.msra.mxu0 0.0
    %3038 = vmatprep.subr.mxu0 0.0
    %3039 = vmatpush1.msra.mxu0 %v2989
    %3040 = vmatprep.subr.mxu0 0.0
    %3041 = vmatpush1.msra.mxu0 %v2988
    %3042 = vmatprep.subr.mxu0 0.0
    %3043 = vmatpush1.msra.mxu0 %v2987
    %3044 = vmatprep.subr.mxu0 0.0
    %3045 = vmatpush1.msra.mxu0 %v2986
    %3046 = vmatprep.subr.mxu0 0.0
    %3047 = vmatpush1.msra.mxu0 %v2985
    %3048 = vmatprep.subr.mxu0 0.0
    %3049 = vmatpush1.msra.mxu0 %v2984
    %3050 = vmatprep.subr.mxu0 0.0
    %3051 = vmatpush1.msra.mxu0 %v2983
    %3052 = vmatprep.subr.mxu0 0.0
    %3053 = vmatpush1.msra.mxu0 %v2982
    %3054 = vmatprep.subr.mxu0 0.0
    %3055 = vmatpush2.msra.mxu0 0.0
    %3056 = vmatprep.subr.mxu0 0.0
    %3057 = vmatpush2.msra.mxu0 0.0
    %3058 = vmatprep.subr.mxu0 0.0
    %3059 = vmatpush2.msra.mxu0 0.0
    %3060 = vmatprep.subr.mxu0 0.0
    %3061 = vmatpush2.msra.mxu0 0.0
    %3062 = vmatprep.subr.mxu0 0.0
    %3063 = vmatpush2.msra.mxu0 0.0
    %3064 = vmatprep.subr.mxu0 0.0
    %3065 = vmatpush2.msra.mxu0 0.0
    %3066 = vmatprep.subr.mxu0 0.0
    %3067 = vmatpush2.msra.mxu0 0.0
    %3068 = vmatprep.subr.mxu0 0.0
    %3069 = vmatpush2.msra.mxu0 0.0
    %3070 = vmatprep.subr.mxu0 0.0
    %3071 = vmatpush2.msra.mxu0 0.0
    %3072 = vmatprep.subr.mxu0 0.0
    %3073 = vmatpush2.msra.mxu0 0.0
    %3074 = vmatprep.subr.mxu0 0.0
    %3075 = vmatpush2.msra.mxu0 0.0
    %3076 = vmatprep.subr.mxu0 0.0
    %3077 = vmatpush2.msra.mxu0 0.0
    %3078 = vmatprep.subr.mxu0 0.0
    %3079 = vmatpush2.msra.mxu0 0.0
    %3080 = vmatprep.subr.mxu0 0.0
    %3081 = vmatpush2.msra.mxu0 0.0
    %3082 = vmatprep.subr.mxu0 0.0
    %3083 = vmatpush2.msra.mxu0 0.0
    %3084 = vmatprep.subr.mxu0 0.0
    %3085 = vmatpush2.msra.mxu0 0.0
    %3086 = vmatprep.mubr.f32.mxu0 0.0
    %3087 = vmatmul.mubr.f32.gmra.mxu0 %v2999
    %v3088 = vpop.f32.mrf.mxu0
    %v3089 = vadd.f32 0.0, %v3088
    %v3090 = vpop.f32.mrf.mxu0
    %3091 = vmatprep.mubr.f32.mxu0 0.0
    %3092 = vmatmul.mubr.f32.gmra.mxu0 %v3002
    %v3093 = vpop.f32.mrf.mxu0
    %v3094 = vadd.f32 0.0, %v3093
    %v3095 = vpop.f32.mrf.mxu0
    %3096 = vmatprep.mubr.f32.mxu0 0.0
    %3097 = vmatmul.mubr.f32.gmra.mxu0 %v3005
    %v3098 = vpop.f32.mrf.mxu0
    %v3099 = vadd.f32 0.0, %v3098
    %v3100 = vpop.f32.mrf.mxu0
    %3101 = vmatprep.mubr.f32.mxu0 0.0
    %3102 = vmatmul.mubr.f32.gmra.mxu0 %v3008
    %v3103 = vpop.f32.mrf.mxu0
    %v3104 = vadd.f32 0.0, %v3103
    %v3105 = vpop.f32.mrf.mxu0
    %3106 = vmatprep.mubr.f32.mxu0 0.0
    %3107 = vmatmul.mubr.f32.gmra.mxu0 %v3011
    %v3108 = vpop.f32.mrf.mxu0
    %v3109 = vadd.f32 0.0, %v3108
    %v3110 = vpop.f32.mrf.mxu0
    %3111 = vmatprep.mubr.f32.mxu0 0.0
    %3112 = vmatmul.mubr.f32.gmra.mxu0 %v3014
    %v3113 = vpop.f32.mrf.mxu0
    %v3114 = vadd.f32 0.0, %v3113
    %v3115 = vpop.f32.mrf.mxu0
    %3116 = vmatprep.mubr.f32.mxu0 0.0
    %3117 = vmatmul.mubr.f32.gmra.mxu0 %v3017
    %v3118 = vpop.f32.mrf.mxu0
    %v3119 = vadd.f32 0.0, %v3118
    %v3120 = vpop.f32.mrf.mxu0
    %3121 = vmatprep.mubr.f32.mxu0 0.0
    %3122 = vmatmul.mubr.f32.gmra.mxu0 %v3020
    %v3123 = vpop.f32.mrf.mxu0
    %v3124 = vadd.f32 0.0, %v3123
    %v3125 = vpop.f32.mrf.mxu0
    %3126 = vdwg.mxu0
    %v3127 = vld [vmem:[#allocation12] sm:$0xff]
    %s3128 = scalar_lea.vmem [#allocation10], 64
    %v3129 = vld [vmem:[%s3128] sm:$0xff]
    %v3130 = vld [vmem:[%s3128 + $0x8] sm:$0xff]
    %v3131 = vld [vmem:[%s3128 + $0x10] sm:$0xff]
    %v3132 = vld [vmem:[%s3128 + $0x18] sm:$0xff]
    %v3133 = vld [vmem:[%s3128 + $0x20] sm:$0xff]
    %v3134 = vld [vmem:[%s3128 + $0x28] sm:$0xff]
    %v3135 = vld [vmem:[%s3128 + $0x30] sm:$0xff]
    %v3136 = vld [vmem:[%s3128 + $0x38] sm:$0xff]
    %v3138 = vsel %vm1591, %v3129, 0
    %v3141 = vsel %vm1591, %v3130, 0
    %v3144 = vsel %vm1591, %v3131, 0
    %v3147 = vsel %vm1591, %v3132, 0
    %v3150 = vsel %vm1591, %v3133, 0
    %v3153 = vsel %vm1591, %v3134, 0
    %v3156 = vsel %vm1591, %v3135, 0
    %v3159 = vsel %vm1591, %v3136, 0
    %3161 = vmatprep.subr.mxu0 0.0
    %3162 = vmatpush1.msra.mxu0 0.0
    %3163 = vmatprep.subr.mxu0 0.0
    %3164 = vmatpush1.msra.mxu0 0.0
    %3165 = vmatprep.subr.mxu0 0.0
    %3166 = vmatpush1.msra.mxu0 0.0
    %3167 = vmatprep.subr.mxu0 0.0
    %3168 = vmatpush1.msra.mxu0 0.0
    %3169 = vmatprep.subr.mxu0 0.0
    %3170 = vmatpush1.msra.mxu0 0.0
    %3171 = vmatprep.subr.mxu0 0.0
    %3172 = vmatpush1.msra.mxu0 0.0
    %3173 = vmatprep.subr.mxu0 0.0
    %3174 = vmatpush1.msra.mxu0 0.0
    %3175 = vmatprep.subr.mxu0 0.0
    %3176 = vmatpush1.msra.mxu0 0.0
    %3177 = vmatprep.subr.mxu0 0.0
    %3178 = vmatpush1.msra.mxu0 %v2989
    %3179 = vmatprep.subr.mxu0 0.0
    %3180 = vmatpush1.msra.mxu0 %v2988
    %3181 = vmatprep.subr.mxu0 0.0
    %3182 = vmatpush1.msra.mxu0 %v2987
    %3183 = vmatprep.subr.mxu0 0.0
    %3184 = vmatpush1.msra.mxu0 %v2986
    %3185 = vmatprep.subr.mxu0 0.0
    %3186 = vmatpush1.msra.mxu0 %v2985
    %3187 = vmatprep.subr.mxu0 0.0
    %3188 = vmatpush1.msra.mxu0 %v2984
    %3189 = vmatprep.subr.mxu0 0.0
    %3190 = vmatpush1.msra.mxu0 %v2983
    %3191 = vmatprep.subr.mxu0 0.0
    %3192 = vmatpush1.msra.mxu0 %v2982
    %3193 = vmatprep.subr.mxu0 0.0
    %3194 = vmatpush2.msra.mxu0 0.0
    %3195 = vmatprep.subr.mxu0 0.0
    %3196 = vmatpush2.msra.mxu0 0.0
    %3197 = vmatprep.subr.mxu0 0.0
    %3198 = vmatpush2.msra.mxu0 0.0
    %3199 = vmatprep.subr.mxu0 0.0
    %3200 = vmatpush2.msra.mxu0 0.0
    %3201 = vmatprep.subr.mxu0 0.0
    %3202 = vmatpush2.msra.mxu0 0.0
    %3203 = vmatprep.subr.mxu0 0.0
    %3204 = vmatpush2.msra.mxu0 0.0
    %3205 = vmatprep.subr.mxu0 0.0
    %3206 = vmatpush2.msra.mxu0 0.0
    %3207 = vmatprep.subr.mxu0 0.0
    %3208 = vmatpush2.msra.mxu0 0.0
    %3209 = vmatprep.subr.mxu0 0.0
    %3210 = vmatpush2.msra.mxu0 0.0
    %3211 = vmatprep.subr.mxu0 0.0
    %3212 = vmatpush2.msra.mxu0 0.0
    %3213 = vmatprep.subr.mxu0 0.0
    %3214 = vmatpush2.msra.mxu0 0.0
    %3215 = vmatprep.subr.mxu0 0.0
    %3216 = vmatpush2.msra.mxu0 0.0
    %3217 = vmatprep.subr.mxu0 0.0
    %3218 = vmatpush2.msra.mxu0 0.0
    %3219 = vmatprep.subr.mxu0 0.0
    %3220 = vmatpush2.msra.mxu0 0.0
    %3221 = vmatprep.subr.mxu0 0.0
    %3222 = vmatpush2.msra.mxu0 0.0
    %3223 = vmatprep.subr.mxu0 0.0
    %3224 = vmatpush2.msra.mxu0 0.0
    %3225 = vmatprep.mubr.f32.mxu0 0.0
    %3226 = vmatmul.mubr.f32.gmra.mxu0 %v3138
    %v3227 = vpop.f32.mrf.mxu0
    %v3228 = vadd.f32 0.0, %v3227
    %v3229 = vpop.f32.mrf.mxu0
    %3230 = vmatprep.mubr.f32.mxu0 0.0
    %3231 = vmatmul.mubr.f32.gmra.mxu0 %v3141
    %v3232 = vpop.f32.mrf.mxu0
    %v3233 = vadd.f32 0.0, %v3232
    %v3234 = vpop.f32.mrf.mxu0
    %3235 = vmatprep.mubr.f32.mxu0 0.0
    %3236 = vmatmul.mubr.f32.gmra.mxu0 %v3144
    %v3237 = vpop.f32.mrf.mxu0
    %v3238 = vadd.f32 0.0, %v3237
    %v3239 = vpop.f32.mrf.mxu0
    %3240 = vmatprep.mubr.f32.mxu0 0.0
    %3241 = vmatmul.mubr.f32.gmra.mxu0 %v3147
    %v3242 = vpop.f32.mrf.mxu0
    %v3243 = vadd.f32 0.0, %v3242
    %v3244 = vpop.f32.mrf.mxu0
    %3245 = vmatprep.mubr.f32.mxu0 0.0
    %3246 = vmatmul.mubr.f32.gmra.mxu0 %v3150
    %v3247 = vpop.f32.mrf.mxu0
    %v3248 = vadd.f32 0.0, %v3247
    %v3249 = vpop.f32.mrf.mxu0
    %3250 = vmatprep.mubr.f32.mxu0 0.0
    %3251 = vmatmul.mubr.f32.gmra.mxu0 %v3153
    %v3252 = vpop.f32.mrf.mxu0
    %v3253 = vadd.f32 0.0, %v3252
    %v3254 = vpop.f32.mrf.mxu0
    %3255 = vmatprep.mubr.f32.mxu0 0.0
    %3256 = vmatmul.mubr.f32.gmra.mxu0 %v3156
    %v3257 = vpop.f32.mrf.mxu0
    %v3258 = vadd.f32 0.0, %v3257
    %v3259 = vpop.f32.mrf.mxu0
    %3260 = vmatprep.mubr.f32.mxu0 0.0
    %3261 = vmatmul.mubr.f32.gmra.mxu0 %v3159
    %v3262 = vpop.f32.mrf.mxu0
    %v3263 = vadd.f32 0.0, %v3262
    %v3264 = vpop.f32.mrf.mxu0
    %3265 = vdwg.mxu0
    %s3266 = scalar_lea.vmem [#allocation12], 8
    %v3267 = vld [vmem:[%s3266] sm:$0xff]
    %v3269 = vsel %vm1862, %v3228, 0
    %v3272 = vsel %vm1862, %v3233, 0
    %v3275 = vsel %vm1862, %v3238, 0
    %v3278 = vsel %vm1862, %v3243, 0
    %v3281 = vsel %vm1862, %v3248, 0
    %v3284 = vsel %vm1862, %v3253, 0
    %v3287 = vsel %vm1862, %v3258, 0
    %v3290 = vsel %vm1862, %v3263, 0
    %3292 = vmatprep.subr.mxu0 0.0
    %3293 = vmatpush1.msra.mxu0 0.0
    %3294 = vmatprep.subr.mxu0 0.0
    %3295 = vmatpush1.msra.mxu0 0.0
    %3296 = vmatprep.subr.mxu0 0.0
    %3297 = vmatpush1.msra.mxu0 0.0
    %3298 = vmatprep.subr.mxu0 0.0
    %3299 = vmatpush1.msra.mxu0 0.0
    %3300 = vmatprep.subr.mxu0 0.0
    %3301 = vmatpush1.msra.mxu0 0.0
    %3302 = vmatprep.subr.mxu0 0.0
    %3303 = vmatpush1.msra.mxu0 0.0
    %3304 = vmatprep.subr.mxu0 0.0
    %3305 = vmatpush1.msra.mxu0 0.0
    %3306 = vmatprep.subr.mxu0 0.0
    %3307 = vmatpush1.msra.mxu0 0.0
    %3308 = vmatprep.subr.mxu0 0.0
    %3309 = vmatpush1.msra.mxu0 0.0
    %3310 = vmatprep.subr.mxu0 0.0
    %3311 = vmatpush1.msra.mxu0 0.0
    %3312 = vmatprep.subr.mxu0 0.0
    %3313 = vmatpush1.msra.mxu0 0.0
    %3314 = vmatprep.subr.mxu0 0.0
    %3315 = vmatpush1.msra.mxu0 0.0
    %3316 = vmatprep.subr.mxu0 0.0
    %3317 = vmatpush1.msra.mxu0 0.0
    %3318 = vmatprep.subr.mxu0 0.0
    %3319 = vmatpush1.msra.mxu0 0.0
    %3320 = vmatprep.subr.mxu0 0.0
    %3321 = vmatpush1.msra.mxu0 0.0
    %3322 = vmatprep.subr.mxu0 0.0
    %3323 = vmatpush1.msra.mxu0 %v3267
    %3324 = vmatprep.subr.mxu0 0.0
    %3325 = vmatpush2.msra.mxu0 0.0
    %3326 = vmatprep.subr.mxu0 0.0
    %3327 = vmatpush2.msra.mxu0 0.0
    %3328 = vmatprep.subr.mxu0 0.0
    %3329 = vmatpush2.msra.mxu0 0.0
    %3330 = vmatprep.subr.mxu0 0.0
    %3331 = vmatpush2.msra.mxu0 0.0
    %3332 = vmatprep.subr.mxu0 0.0
    %3333 = vmatpush2.msra.mxu0 0.0
    %3334 = vmatprep.subr.mxu0 0.0
    %3335 = vmatpush2.msra.mxu0 0.0
    %3336 = vmatprep.subr.mxu0 0.0
    %3337 = vmatpush2.msra.mxu0 0.0
    %3338 = vmatprep.subr.mxu0 0.0
    %3339 = vmatpush2.msra.mxu0 0.0
    %3340 = vmatprep.subr.mxu0 0.0
    %3341 = vmatpush2.msra.mxu0 0.0
    %3342 = vmatprep.subr.mxu0 0.0
    %3343 = vmatpush2.msra.mxu0 0.0
    %3344 = vmatprep.subr.mxu0 0.0
    %3345 = vmatpush2.msra.mxu0 0.0
    %3346 = vmatprep.subr.mxu0 0.0
    %3347 = vmatpush2.msra.mxu0 0.0
    %3348 = vmatprep.subr.mxu0 0.0
    %3349 = vmatpush2.msra.mxu0 0.0
    %3350 = vmatprep.subr.mxu0 0.0
    %3351 = vmatpush2.msra.mxu0 0.0
    %3352 = vmatprep.subr.mxu0 0.0
    %3353 = vmatpush2.msra.mxu0 0.0
    %3354 = vmatprep.subr.mxu0 0.0
    %3355 = vmatpush2.msra.mxu0 0.0
    %3356 = vmatprep.mubr.f32.mxu0 0.0
    %3357 = vmatmul.mubr.f32.gmra.mxu0 %v3269
    %v3358 = vpop.f32.mrf.mxu0
    %v3359 = vadd.f32 0.0, %v3358
    %v3360 = vpop.f32.mrf.mxu0
    %3361 = vmatprep.mubr.f32.mxu0 0.0
    %3362 = vmatmul.mubr.f32.gmra.mxu0 %v3272
    %v3363 = vpop.f32.mrf.mxu0
    %v3364 = vadd.f32 0.0, %v3363
    %v3365 = vpop.f32.mrf.mxu0
    %3366 = vmatprep.mubr.f32.mxu0 0.0
    %3367 = vmatmul.mubr.f32.gmra.mxu0 %v3275
    %v3368 = vpop.f32.mrf.mxu0
    %v3369 = vadd.f32 0.0, %v3368
    %v3370 = vpop.f32.mrf.mxu0
    %3371 = vmatprep.mubr.f32.mxu0 0.0
    %3372 = vmatmul.mubr.f32.gmra.mxu0 %v3278
    %v3373 = vpop.f32.mrf.mxu0
    %v3374 = vadd.f32 0.0, %v3373
    %v3375 = vpop.f32.mrf.mxu0
    %3376 = vmatprep.mubr.f32.mxu0 0.0
    %3377 = vmatmul.mubr.f32.gmra.mxu0 %v3281
    %v3378 = vpop.f32.mrf.mxu0
    %v3379 = vadd.f32 0.0, %v3378
    %v3380 = vpop.f32.mrf.mxu0
    %3381 = vmatprep.mubr.f32.mxu0 0.0
    %3382 = vmatmul.mubr.f32.gmra.mxu0 %v3284
    %v3383 = vpop.f32.mrf.mxu0
    %v3384 = vadd.f32 0.0, %v3383
    %v3385 = vpop.f32.mrf.mxu0
    %3386 = vmatprep.mubr.f32.mxu0 0.0
    %3387 = vmatmul.mubr.f32.gmra.mxu0 %v3287
    %v3388 = vpop.f32.mrf.mxu0
    %v3389 = vadd.f32 0.0, %v3388
    %v3390 = vpop.f32.mrf.mxu0
    %3391 = vmatprep.mubr.f32.mxu0 0.0
    %3392 = vmatmul.mubr.f32.gmra.mxu0 %v3290
    %v3393 = vpop.f32.mrf.mxu0
    %v3394 = vadd.f32 0.0, %v3393
    %v3395 = vpop.f32.mrf.mxu0
    %3396 = vdwg.mxu0
    %v3398 = vsel %vm1862, %v3089, 0
    %v3401 = vsel %vm1862, %v3094, 0
    %v3404 = vsel %vm1862, %v3099, 0
    %v3407 = vsel %vm1862, %v3104, 0
    %v3410 = vsel %vm1862, %v3109, 0
    %v3413 = vsel %vm1862, %v3114, 0
    %v3416 = vsel %vm1862, %v3119, 0
    %v3419 = vsel %vm1862, %v3124, 0
    %3421 = vmatprep.subr.mxu0 0.0
    %3422 = vmatpush1.msra.mxu0 0.0
    %3423 = vmatprep.subr.mxu0 0.0
    %3424 = vmatpush1.msra.mxu0 0.0
    %3425 = vmatprep.subr.mxu0 0.0
    %3426 = vmatpush1.msra.mxu0 0.0
    %3427 = vmatprep.subr.mxu0 0.0
    %3428 = vmatpush1.msra.mxu0 0.0
    %3429 = vmatprep.subr.mxu0 0.0
    %3430 = vmatpush1.msra.mxu0 0.0
    %3431 = vmatprep.subr.mxu0 0.0
    %3432 = vmatpush1.msra.mxu0 0.0
    %3433 = vmatprep.subr.mxu0 0.0
    %3434 = vmatpush1.msra.mxu0 0.0
    %3435 = vmatprep.subr.mxu0 0.0
    %3436 = vmatpush1.msra.mxu0 0.0
    %3437 = vmatprep.subr.mxu0 0.0
    %3438 = vmatpush1.msra.mxu0 0.0
    %3439 = vmatprep.subr.mxu0 0.0
    %3440 = vmatpush1.msra.mxu0 0.0
    %3441 = vmatprep.subr.mxu0 0.0
    %3442 = vmatpush1.msra.mxu0 0.0
    %3443 = vmatprep.subr.mxu0 0.0
    %3444 = vmatpush1.msra.mxu0 0.0
    %3445 = vmatprep.subr.mxu0 0.0
    %3446 = vmatpush1.msra.mxu0 0.0
    %3447 = vmatprep.subr.mxu0 0.0
    %3448 = vmatpush1.msra.mxu0 0.0
    %3449 = vmatprep.subr.mxu0 0.0
    %3450 = vmatpush1.msra.mxu0 0.0
    %3451 = vmatprep.subr.mxu0 0.0
    %3452 = vmatpush1.msra.mxu0 %v3127
    %3453 = vmatprep.subr.mxu0 0.0
    %3454 = vmatpush2.msra.mxu0 0.0
    %3455 = vmatprep.subr.mxu0 0.0
    %3456 = vmatpush2.msra.mxu0 0.0
    %3457 = vmatprep.subr.mxu0 0.0
    %3458 = vmatpush2.msra.mxu0 0.0
    %3459 = vmatprep.subr.mxu0 0.0
    %3460 = vmatpush2.msra.mxu0 0.0
    %3461 = vmatprep.subr.mxu0 0.0
    %3462 = vmatpush2.msra.mxu0 0.0
    %3463 = vmatprep.subr.mxu0 0.0
    %3464 = vmatpush2.msra.mxu0 0.0
    %3465 = vmatprep.subr.mxu0 0.0
    %3466 = vmatpush2.msra.mxu0 0.0
    %3467 = vmatprep.subr.mxu0 0.0
    %3468 = vmatpush2.msra.mxu0 0.0
    %3469 = vmatprep.subr.mxu0 0.0
    %3470 = vmatpush2.msra.mxu0 0.0
    %3471 = vmatprep.subr.mxu0 0.0
    %3472 = vmatpush2.msra.mxu0 0.0
    %3473 = vmatprep.subr.mxu0 0.0
    %3474 = vmatpush2.msra.mxu0 0.0
    %3475 = vmatprep.subr.mxu0 0.0
    %3476 = vmatpush2.msra.mxu0 0.0
    %3477 = vmatprep.subr.mxu0 0.0
    %3478 = vmatpush2.msra.mxu0 0.0
    %3479 = vmatprep.subr.mxu0 0.0
    %3480 = vmatpush2.msra.mxu0 0.0
    %3481 = vmatprep.subr.mxu0 0.0
    %3482 = vmatpush2.msra.mxu0 0.0
    %3483 = vmatprep.subr.mxu0 0.0
    %3484 = vmatpush2.msra.mxu0 0.0
    %3485 = vmatprep.mubr.f32.mxu0 0.0
    %3486 = vmatmul.mubr.f32.gmra.mxu0 %v3398
    %v3487 = vpop.f32.mrf.mxu0
    %v3488 = vadd.f32 %v3359, %v3487
    %v3489 = vpop.f32.mrf.mxu0
    %3490 = vmatprep.mubr.f32.mxu0 0.0
    %3491 = vmatmul.mubr.f32.gmra.mxu0 %v3401
    %v3492 = vpop.f32.mrf.mxu0
    %v3493 = vadd.f32 %v3364, %v3492
    %v3494 = vpop.f32.mrf.mxu0
    %3495 = vmatprep.mubr.f32.mxu0 0.0
    %3496 = vmatmul.mubr.f32.gmra.mxu0 %v3404
    %v3497 = vpop.f32.mrf.mxu0
    %v3498 = vadd.f32 %v3369, %v3497
    %v3499 = vpop.f32.mrf.mxu0
    %3500 = vmatprep.mubr.f32.mxu0 0.0
    %3501 = vmatmul.mubr.f32.gmra.mxu0 %v3407
    %v3502 = vpop.f32.mrf.mxu0
    %v3503 = vadd.f32 %v3374, %v3502
    %v3504 = vpop.f32.mrf.mxu0
    %3505 = vmatprep.mubr.f32.mxu0 0.0
    %3506 = vmatmul.mubr.f32.gmra.mxu0 %v3410
    %v3507 = vpop.f32.mrf.mxu0
    %v3508 = vadd.f32 %v3379, %v3507
    %v3509 = vpop.f32.mrf.mxu0
    %3510 = vmatprep.mubr.f32.mxu0 0.0
    %3511 = vmatmul.mubr.f32.gmra.mxu0 %v3413
    %v3512 = vpop.f32.mrf.mxu0
    %v3513 = vadd.f32 %v3384, %v3512
    %v3514 = vpop.f32.mrf.mxu0
    %3515 = vmatprep.mubr.f32.mxu0 0.0
    %3516 = vmatmul.mubr.f32.gmra.mxu0 %v3416
    %v3517 = vpop.f32.mrf.mxu0
    %v3518 = vadd.f32 %v3389, %v3517
    %v3519 = vpop.f32.mrf.mxu0
    %3520 = vmatprep.mubr.f32.mxu0 0.0
    %3521 = vmatmul.mubr.f32.gmra.mxu0 %v3419
    %v3522 = vpop.f32.mrf.mxu0
    %v3523 = vadd.f32 %v3394, %v3522
    %v3524 = vpop.f32.mrf.mxu0
    %3525 = vdwg.mxu0
    %s3526 = scalar_lea.vmem [#allocation10], 128
    %v3527 = vld [vmem:[%s3526] sm:$0xff]
    %v3528 = vld [vmem:[%s3526 + $0x8] sm:$0xff]
    %v3529 = vld [vmem:[%s3526 + $0x10] sm:$0xff]
    %v3530 = vld [vmem:[%s3526 + $0x18] sm:$0xff]
    %v3531 = vld [vmem:[%s3526 + $0x20] sm:$0xff]
    %v3532 = vld [vmem:[%s3526 + $0x28] sm:$0xff]
    %v3533 = vld [vmem:[%s3526 + $0x30] sm:$0xff]
    %v3534 = vld [vmem:[%s3526 + $0x38] sm:$0xff]
    %v3536 = vsel %vm1591, %v3527, 0
    %v3539 = vsel %vm1591, %v3528, 0
    %v3542 = vsel %vm1591, %v3529, 0
    %v3545 = vsel %vm1591, %v3530, 0
    %v3548 = vsel %vm1591, %v3531, 0
    %v3551 = vsel %vm1591, %v3532, 0
    %v3554 = vsel %vm1591, %v3533, 0
    %v3557 = vsel %vm1591, %v3534, 0
    %3559 = vmatprep.subr.mxu0 0.0
    %3560 = vmatpush1.msra.mxu0 0.0
    %3561 = vmatprep.subr.mxu0 0.0
    %3562 = vmatpush1.msra.mxu0 0.0
    %3563 = vmatprep.subr.mxu0 0.0
    %3564 = vmatpush1.msra.mxu0 0.0
    %3565 = vmatprep.subr.mxu0 0.0
    %3566 = vmatpush1.msra.mxu0 0.0
    %3567 = vmatprep.subr.mxu0 0.0
    %3568 = vmatpush1.msra.mxu0 0.0
    %3569 = vmatprep.subr.mxu0 0.0
    %3570 = vmatpush1.msra.mxu0 0.0
    %3571 = vmatprep.subr.mxu0 0.0
    %3572 = vmatpush1.msra.mxu0 0.0
    %3573 = vmatprep.subr.mxu0 0.0
    %3574 = vmatpush1.msra.mxu0 0.0
    %3575 = vmatprep.subr.mxu0 0.0
    %3576 = vmatpush1.msra.mxu0 %v2989
    %3577 = vmatprep.subr.mxu0 0.0
    %3578 = vmatpush1.msra.mxu0 %v2988
    %3579 = vmatprep.subr.mxu0 0.0
    %3580 = vmatpush1.msra.mxu0 %v2987
    %3581 = vmatprep.subr.mxu0 0.0
    %3582 = vmatpush1.msra.mxu0 %v2986
    %3583 = vmatprep.subr.mxu0 0.0
    %3584 = vmatpush1.msra.mxu0 %v2985
    %3585 = vmatprep.subr.mxu0 0.0
    %3586 = vmatpush1.msra.mxu0 %v2984
    %3587 = vmatprep.subr.mxu0 0.0
    %3588 = vmatpush1.msra.mxu0 %v2983
    %3589 = vmatprep.subr.mxu0 0.0
    %3590 = vmatpush1.msra.mxu0 %v2982
    %3591 = vmatprep.subr.mxu0 0.0
    %3592 = vmatpush2.msra.mxu0 0.0
    %3593 = vmatprep.subr.mxu0 0.0
    %3594 = vmatpush2.msra.mxu0 0.0
    %3595 = vmatprep.subr.mxu0 0.0
    %3596 = vmatpush2.msra.mxu0 0.0
    %3597 = vmatprep.subr.mxu0 0.0
    %3598 = vmatpush2.msra.mxu0 0.0
    %3599 = vmatprep.subr.mxu0 0.0
    %3600 = vmatpush2.msra.mxu0 0.0
    %3601 = vmatprep.subr.mxu0 0.0
    %3602 = vmatpush2.msra.mxu0 0.0
    %3603 = vmatprep.subr.mxu0 0.0
    %3604 = vmatpush2.msra.mxu0 0.0
    %3605 = vmatprep.subr.mxu0 0.0
    %3606 = vmatpush2.msra.mxu0 0.0
    %3607 = vmatprep.subr.mxu0 0.0
    %3608 = vmatpush2.msra.mxu0 0.0
    %3609 = vmatprep.subr.mxu0 0.0
    %3610 = vmatpush2.msra.mxu0 0.0
    %3611 = vmatprep.subr.mxu0 0.0
    %3612 = vmatpush2.msra.mxu0 0.0
    %3613 = vmatprep.subr.mxu0 0.0
    %3614 = vmatpush2.msra.mxu0 0.0
    %3615 = vmatprep.subr.mxu0 0.0
    %3616 = vmatpush2.msra.mxu0 0.0
    %3617 = vmatprep.subr.mxu0 0.0
    %3618 = vmatpush2.msra.mxu0 0.0
    %3619 = vmatprep.subr.mxu0 0.0
    %3620 = vmatpush2.msra.mxu0 0.0
    %3621 = vmatprep.subr.mxu0 0.0
    %3622 = vmatpush2.msra.mxu0 0.0
    %3623 = vmatprep.mubr.f32.mxu0 0.0
    %3624 = vmatmul.mubr.f32.gmra.mxu0 %v3536
    %v3625 = vpop.f32.mrf.mxu0
    %v3626 = vadd.f32 0.0, %v3625
    %v3627 = vpop.f32.mrf.mxu0
    %3628 = vmatprep.mubr.f32.mxu0 0.0
    %3629 = vmatmul.mubr.f32.gmra.mxu0 %v3539
    %v3630 = vpop.f32.mrf.mxu0
    %v3631 = vadd.f32 0.0, %v3630
    %v3632 = vpop.f32.mrf.mxu0
    %3633 = vmatprep.mubr.f32.mxu0 0.0
    %3634 = vmatmul.mubr.f32.gmra.mxu0 %v3542
    %v3635 = vpop.f32.mrf.mxu0
    %v3636 = vadd.f32 0.0, %v3635
    %v3637 = vpop.f32.mrf.mxu0
    %3638 = vmatprep.mubr.f32.mxu0 0.0
    %3639 = vmatmul.mubr.f32.gmra.mxu0 %v3545
    %v3640 = vpop.f32.mrf.mxu0
    %v3641 = vadd.f32 0.0, %v3640
    %v3642 = vpop.f32.mrf.mxu0
    %3643 = vmatprep.mubr.f32.mxu0 0.0
    %3644 = vmatmul.mubr.f32.gmra.mxu0 %v3548
    %v3645 = vpop.f32.mrf.mxu0
    %v3646 = vadd.f32 0.0, %v3645
    %v3647 = vpop.f32.mrf.mxu0
    %3648 = vmatprep.mubr.f32.mxu0 0.0
    %3649 = vmatmul.mubr.f32.gmra.mxu0 %v3551
    %v3650 = vpop.f32.mrf.mxu0
    %v3651 = vadd.f32 0.0, %v3650
    %v3652 = vpop.f32.mrf.mxu0
    %3653 = vmatprep.mubr.f32.mxu0 0.0
    %3654 = vmatmul.mubr.f32.gmra.mxu0 %v3554
    %v3655 = vpop.f32.mrf.mxu0
    %v3656 = vadd.f32 0.0, %v3655
    %v3657 = vpop.f32.mrf.mxu0
    %3658 = vmatprep.mubr.f32.mxu0 0.0
    %3659 = vmatmul.mubr.f32.gmra.mxu0 %v3557
    %v3660 = vpop.f32.mrf.mxu0
    %v3661 = vadd.f32 0.0, %v3660
    %v3662 = vpop.f32.mrf.mxu0
    %3663 = vdwg.mxu0
    %s3664 = scalar_lea.vmem [#allocation12], 16
    %v3665 = vld [vmem:[%s3664] sm:$0xff]
    %v3667 = vsel %vm1862, %v3626, 0
    %v3670 = vsel %vm1862, %v3631, 0
    %v3673 = vsel %vm1862, %v3636, 0
    %v3676 = vsel %vm1862, %v3641, 0
    %v3679 = vsel %vm1862, %v3646, 0
    %v3682 = vsel %vm1862, %v3651, 0
    %v3685 = vsel %vm1862, %v3656, 0
    %v3688 = vsel %vm1862, %v3661, 0
    %3690 = vmatprep.subr.mxu0 0.0
    %3691 = vmatpush1.msra.mxu0 0.0
    %3692 = vmatprep.subr.mxu0 0.0
    %3693 = vmatpush1.msra.mxu0 0.0
    %3694 = vmatprep.subr.mxu0 0.0
    %3695 = vmatpush1.msra.mxu0 0.0
    %3696 = vmatprep.subr.mxu0 0.0
    %3697 = vmatpush1.msra.mxu0 0.0
    %3698 = vmatprep.subr.mxu0 0.0
    %3699 = vmatpush1.msra.mxu0 0.0
    %3700 = vmatprep.subr.mxu0 0.0
    %3701 = vmatpush1.msra.mxu0 0.0
    %3702 = vmatprep.subr.mxu0 0.0
    %3703 = vmatpush1.msra.mxu0 0.0
    %3704 = vmatprep.subr.mxu0 0.0
    %3705 = vmatpush1.msra.mxu0 0.0
    %3706 = vmatprep.subr.mxu0 0.0
    %3707 = vmatpush1.msra.mxu0 0.0
    %3708 = vmatprep.subr.mxu0 0.0
    %3709 = vmatpush1.msra.mxu0 0.0
    %3710 = vmatprep.subr.mxu0 0.0
    %3711 = vmatpush1.msra.mxu0 0.0
    %3712 = vmatprep.subr.mxu0 0.0
    %3713 = vmatpush1.msra.mxu0 0.0
    %3714 = vmatprep.subr.mxu0 0.0
    %3715 = vmatpush1.msra.mxu0 0.0
    %3716 = vmatprep.subr.mxu0 0.0
    %3717 = vmatpush1.msra.mxu0 0.0
    %3718 = vmatprep.subr.mxu0 0.0
    %3719 = vmatpush1.msra.mxu0 0.0
    %3720 = vmatprep.subr.mxu0 0.0
    %3721 = vmatpush1.msra.mxu0 %v3665
    %3722 = vmatprep.subr.mxu0 0.0
    %3723 = vmatpush2.msra.mxu0 0.0
    %3724 = vmatprep.subr.mxu0 0.0
    %3725 = vmatpush2.msra.mxu0 0.0
    %3726 = vmatprep.subr.mxu0 0.0
    %3727 = vmatpush2.msra.mxu0 0.0
    %3728 = vmatprep.subr.mxu0 0.0
    %3729 = vmatpush2.msra.mxu0 0.0
    %3730 = vmatprep.subr.mxu0 0.0
    %3731 = vmatpush2.msra.mxu0 0.0
    %3732 = vmatprep.subr.mxu0 0.0
    %3733 = vmatpush2.msra.mxu0 0.0
    %3734 = vmatprep.subr.mxu0 0.0
    %3735 = vmatpush2.msra.mxu0 0.0
    %3736 = vmatprep.subr.mxu0 0.0
    %3737 = vmatpush2.msra.mxu0 0.0
    %3738 = vmatprep.subr.mxu0 0.0
    %3739 = vmatpush2.msra.mxu0 0.0
    %3740 = vmatprep.subr.mxu0 0.0
    %3741 = vmatpush2.msra.mxu0 0.0
    %3742 = vmatprep.subr.mxu0 0.0
    %3743 = vmatpush2.msra.mxu0 0.0
    %3744 = vmatprep.subr.mxu0 0.0
    %3745 = vmatpush2.msra.mxu0 0.0
    %3746 = vmatprep.subr.mxu0 0.0
    %3747 = vmatpush2.msra.mxu0 0.0
    %3748 = vmatprep.subr.mxu0 0.0
    %3749 = vmatpush2.msra.mxu0 0.0
    %3750 = vmatprep.subr.mxu0 0.0
    %3751 = vmatpush2.msra.mxu0 0.0
    %3752 = vmatprep.subr.mxu0 0.0
    %3753 = vmatpush2.msra.mxu0 0.0
    %3754 = vmatprep.mubr.f32.mxu0 0.0
    %3755 = vmatmul.mubr.f32.gmra.mxu0 %v3667
    %v3756 = vpop.f32.mrf.mxu0
    %v3757 = vadd.f32 0.0, %v3756
    %v3758 = vpop.f32.mrf.mxu0
    %3759 = vmatprep.mubr.f32.mxu0 0.0
    %3760 = vmatmul.mubr.f32.gmra.mxu0 %v3670
    %v3761 = vpop.f32.mrf.mxu0
    %v3762 = vadd.f32 0.0, %v3761
    %v3763 = vpop.f32.mrf.mxu0
    %3764 = vmatprep.mubr.f32.mxu0 0.0
    %3765 = vmatmul.mubr.f32.gmra.mxu0 %v3673
    %v3766 = vpop.f32.mrf.mxu0
    %v3767 = vadd.f32 0.0, %v3766
    %v3768 = vpop.f32.mrf.mxu0
    %3769 = vmatprep.mubr.f32.mxu0 0.0
    %3770 = vmatmul.mubr.f32.gmra.mxu0 %v3676
    %v3771 = vpop.f32.mrf.mxu0
    %v3772 = vadd.f32 0.0, %v3771
    %v3773 = vpop.f32.mrf.mxu0
    %3774 = vmatprep.mubr.f32.mxu0 0.0
    %3775 = vmatmul.mubr.f32.gmra.mxu0 %v3679
    %v3776 = vpop.f32.mrf.mxu0
    %v3777 = vadd.f32 0.0, %v3776
    %v3778 = vpop.f32.mrf.mxu0
    %3779 = vmatprep.mubr.f32.mxu0 0.0
    %3780 = vmatmul.mubr.f32.gmra.mxu0 %v3682
    %v3781 = vpop.f32.mrf.mxu0
    %v3782 = vadd.f32 0.0, %v3781
    %v3783 = vpop.f32.mrf.mxu0
    %3784 = vmatprep.mubr.f32.mxu0 0.0
    %3785 = vmatmul.mubr.f32.gmra.mxu0 %v3685
    %v3786 = vpop.f32.mrf.mxu0
    %v3787 = vadd.f32 0.0, %v3786
    %v3788 = vpop.f32.mrf.mxu0
    %3789 = vmatprep.mubr.f32.mxu0 0.0
    %3790 = vmatmul.mubr.f32.gmra.mxu0 %v3688
    %v3791 = vpop.f32.mrf.mxu0
    %v3792 = vadd.f32 0.0, %v3791
    %v3793 = vpop.f32.mrf.mxu0
    %3794 = vdwg.mxu0
    %v3795 = vadd.f32 %v3488, %v3757
    %v3796 = vadd.f32 %v3493, %v3762
    %v3797 = vadd.f32 %v3498, %v3767
    %v3798 = vadd.f32 %v3503, %v3772
    %v3799 = vadd.f32 %v3508, %v3777
    %v3800 = vadd.f32 %v3513, %v3782
    %v3801 = vadd.f32 %v3518, %v3787
    %v3802 = vadd.f32 %v3523, %v3792
    %s3803 = scalar_lea.vmem [#allocation10], 192
    %v3804 = vld [vmem:[%s3803] sm:$0xff]
    %v3805 = vld [vmem:[%s3803 + $0x8] sm:$0xff]
    %v3806 = vld [vmem:[%s3803 + $0x10] sm:$0xff]
    %v3807 = vld [vmem:[%s3803 + $0x18] sm:$0xff]
    %v3808 = vld [vmem:[%s3803 + $0x20] sm:$0xff]
    %v3809 = vld [vmem:[%s3803 + $0x28] sm:$0xff]
    %v3810 = vld [vmem:[%s3803 + $0x30] sm:$0xff]
    %v3811 = vld [vmem:[%s3803 + $0x38] sm:$0xff]
    %v3813 = vsel %vm1591, %v3804, 0
    %v3816 = vsel %vm1591, %v3805, 0
    %v3819 = vsel %vm1591, %v3806, 0
    %v3822 = vsel %vm1591, %v3807, 0
    %v3825 = vsel %vm1591, %v3808, 0
    %v3828 = vsel %vm1591, %v3809, 0
    %v3831 = vsel %vm1591, %v3810, 0
    %v3834 = vsel %vm1591, %v3811, 0
    %3836 = vmatprep.subr.mxu0 0.0
    %3837 = vmatpush1.msra.mxu0 0.0
    %3838 = vmatprep.subr.mxu0 0.0
    %3839 = vmatpush1.msra.mxu0 0.0
    %3840 = vmatprep.subr.mxu0 0.0
    %3841 = vmatpush1.msra.mxu0 0.0
    %3842 = vmatprep.subr.mxu0 0.0
    %3843 = vmatpush1.msra.mxu0 0.0
    %3844 = vmatprep.subr.mxu0 0.0
    %3845 = vmatpush1.msra.mxu0 0.0
    %3846 = vmatprep.subr.mxu0 0.0
    %3847 = vmatpush1.msra.mxu0 0.0
    %3848 = vmatprep.subr.mxu0 0.0
    %3849 = vmatpush1.msra.mxu0 0.0
    %3850 = vmatprep.subr.mxu0 0.0
    %3851 = vmatpush1.msra.mxu0 0.0
    %3852 = vmatprep.subr.mxu0 0.0
    %3853 = vmatpush1.msra.mxu0 %v2989
    %3854 = vmatprep.subr.mxu0 0.0
    %3855 = vmatpush1.msra.mxu0 %v2988
    %3856 = vmatprep.subr.mxu0 0.0
    %3857 = vmatpush1.msra.mxu0 %v2987
    %3858 = vmatprep.subr.mxu0 0.0
    %3859 = vmatpush1.msra.mxu0 %v2986
    %3860 = vmatprep.subr.mxu0 0.0
    %3861 = vmatpush1.msra.mxu0 %v2985
    %3862 = vmatprep.subr.mxu0 0.0
    %3863 = vmatpush1.msra.mxu0 %v2984
    %3864 = vmatprep.subr.mxu0 0.0
    %3865 = vmatpush1.msra.mxu0 %v2983
    %3866 = vmatprep.subr.mxu0 0.0
    %3867 = vmatpush1.msra.mxu0 %v2982
    %3868 = vmatprep.subr.mxu0 0.0
    %3869 = vmatpush2.msra.mxu0 0.0
    %3870 = vmatprep.subr.mxu0 0.0
    %3871 = vmatpush2.msra.mxu0 0.0
    %3872 = vmatprep.subr.mxu0 0.0
    %3873 = vmatpush2.msra.mxu0 0.0
    %3874 = vmatprep.subr.mxu0 0.0
    %3875 = vmatpush2.msra.mxu0 0.0
    %3876 = vmatprep.subr.mxu0 0.0
    %3877 = vmatpush2.msra.mxu0 0.0
    %3878 = vmatprep.subr.mxu0 0.0
    %3879 = vmatpush2.msra.mxu0 0.0
    %3880 = vmatprep.subr.mxu0 0.0
    %3881 = vmatpush2.msra.mxu0 0.0
    %3882 = vmatprep.subr.mxu0 0.0
    %3883 = vmatpush2.msra.mxu0 0.0
    %3884 = vmatprep.subr.mxu0 0.0
    %3885 = vmatpush2.msra.mxu0 0.0
    %3886 = vmatprep.subr.mxu0 0.0
    %3887 = vmatpush2.msra.mxu0 0.0
    %3888 = vmatprep.subr.mxu0 0.0
    %3889 = vmatpush2.msra.mxu0 0.0
    %3890 = vmatprep.subr.mxu0 0.0
    %3891 = vmatpush2.msra.mxu0 0.0
    %3892 = vmatprep.subr.mxu0 0.0
    %3893 = vmatpush2.msra.mxu0 0.0
    %3894 = vmatprep.subr.mxu0 0.0
    %3895 = vmatpush2.msra.mxu0 0.0
    %3896 = vmatprep.subr.mxu0 0.0
    %3897 = vmatpush2.msra.mxu0 0.0
    %3898 = vmatprep.subr.mxu0 0.0
    %3899 = vmatpush2.msra.mxu0 0.0
    %3900 = vmatprep.mubr.f32.mxu0 0.0
    %3901 = vmatmul.mubr.f32.gmra.mxu0 %v3813
    %v3902 = vpop.f32.mrf.mxu0
    %v3903 = vadd.f32 0.0, %v3902
    %v3904 = vpop.f32.mrf.mxu0
    %3905 = vmatprep.mubr.f32.mxu0 0.0
    %3906 = vmatmul.mubr.f32.gmra.mxu0 %v3816
    %v3907 = vpop.f32.mrf.mxu0
    %v3908 = vadd.f32 0.0, %v3907
    %v3909 = vpop.f32.mrf.mxu0
    %3910 = vmatprep.mubr.f32.mxu0 0.0
    %3911 = vmatmul.mubr.f32.gmra.mxu0 %v3819
    %v3912 = vpop.f32.mrf.mxu0
    %v3913 = vadd.f32 0.0, %v3912
    %v3914 = vpop.f32.mrf.mxu0
    %3915 = vmatprep.mubr.f32.mxu0 0.0
    %3916 = vmatmul.mubr.f32.gmra.mxu0 %v3822
    %v3917 = vpop.f32.mrf.mxu0
    %v3918 = vadd.f32 0.0, %v3917
    %v3919 = vpop.f32.mrf.mxu0
    %3920 = vmatprep.mubr.f32.mxu0 0.0
    %3921 = vmatmul.mubr.f32.gmra.mxu0 %v3825
    %v3922 = vpop.f32.mrf.mxu0
    %v3923 = vadd.f32 0.0, %v3922
    %v3924 = vpop.f32.mrf.mxu0
    %3925 = vmatprep.mubr.f32.mxu0 0.0
    %3926 = vmatmul.mubr.f32.gmra.mxu0 %v3828
    %v3927 = vpop.f32.mrf.mxu0
    %v3928 = vadd.f32 0.0, %v3927
    %v3929 = vpop.f32.mrf.mxu0
    %3930 = vmatprep.mubr.f32.mxu0 0.0
    %3931 = vmatmul.mubr.f32.gmra.mxu0 %v3831
    %v3932 = vpop.f32.mrf.mxu0
    %v3933 = vadd.f32 0.0, %v3932
    %v3934 = vpop.f32.mrf.mxu0
    %3935 = vmatprep.mubr.f32.mxu0 0.0
    %3936 = vmatmul.mubr.f32.gmra.mxu0 %v3834
    %v3937 = vpop.f32.mrf.mxu0
    %v3938 = vadd.f32 0.0, %v3937
    %v3939 = vpop.f32.mrf.mxu0
    %3940 = vdwg.mxu0
    %s3941 = scalar_lea.vmem [#allocation12], 24
    %v3942 = vld [vmem:[%s3941] sm:$0xff]
    %v3944 = vsel %vm1862, %v3903, 0
    %v3947 = vsel %vm1862, %v3908, 0
    %v3950 = vsel %vm1862, %v3913, 0
    %v3953 = vsel %vm1862, %v3918, 0
    %v3956 = vsel %vm1862, %v3923, 0
    %v3959 = vsel %vm1862, %v3928, 0
    %v3962 = vsel %vm1862, %v3933, 0
    %v3965 = vsel %vm1862, %v3938, 0
    %3967 = vmatprep.subr.mxu0 0.0
    %3968 = vmatpush1.msra.mxu0 0.0
    %3969 = vmatprep.subr.mxu0 0.0
    %3970 = vmatpush1.msra.mxu0 0.0
    %3971 = vmatprep.subr.mxu0 0.0
    %3972 = vmatpush1.msra.mxu0 0.0
    %3973 = vmatprep.subr.mxu0 0.0
    %3974 = vmatpush1.msra.mxu0 0.0
    %3975 = vmatprep.subr.mxu0 0.0
    %3976 = vmatpush1.msra.mxu0 0.0
    %3977 = vmatprep.subr.mxu0 0.0
    %3978 = vmatpush1.msra.mxu0 0.0
    %3979 = vmatprep.subr.mxu0 0.0
    %3980 = vmatpush1.msra.mxu0 0.0
    %3981 = vmatprep.subr.mxu0 0.0
    %3982 = vmatpush1.msra.mxu0 0.0
    %3983 = vmatprep.subr.mxu0 0.0
    %3984 = vmatpush1.msra.mxu0 0.0
    %3985 = vmatprep.subr.mxu0 0.0
    %3986 = vmatpush1.msra.mxu0 0.0
    %3987 = vmatprep.subr.mxu0 0.0
    %3988 = vmatpush1.msra.mxu0 0.0
    %3989 = vmatprep.subr.mxu0 0.0
    %3990 = vmatpush1.msra.mxu0 0.0
    %3991 = vmatprep.subr.mxu0 0.0
    %3992 = vmatpush1.msra.mxu0 0.0
    %3993 = vmatprep.subr.mxu0 0.0
    %3994 = vmatpush1.msra.mxu0 0.0
    %3995 = vmatprep.subr.mxu0 0.0
    %3996 = vmatpush1.msra.mxu0 0.0
    %3997 = vmatprep.subr.mxu0 0.0
    %3998 = vmatpush1.msra.mxu0 %v3942
    %3999 = vmatprep.subr.mxu0 0.0
    %4000 = vmatpush2.msra.mxu0 0.0
    %4001 = vmatprep.subr.mxu0 0.0
    %4002 = vmatpush2.msra.mxu0 0.0
    %4003 = vmatprep.subr.mxu0 0.0
    %4004 = vmatpush2.msra.mxu0 0.0
    %4005 = vmatprep.subr.mxu0 0.0
    %4006 = vmatpush2.msra.mxu0 0.0
    %4007 = vmatprep.subr.mxu0 0.0
    %4008 = vmatpush2.msra.mxu0 0.0
    %4009 = vmatprep.subr.mxu0 0.0
    %4010 = vmatpush2.msra.mxu0 0.0
    %4011 = vmatprep.subr.mxu0 0.0
    %4012 = vmatpush2.msra.mxu0 0.0
    %4013 = vmatprep.subr.mxu0 0.0
    %4014 = vmatpush2.msra.mxu0 0.0
    %4015 = vmatprep.subr.mxu0 0.0
    %4016 = vmatpush2.msra.mxu0 0.0
    %4017 = vmatprep.subr.mxu0 0.0
    %4018 = vmatpush2.msra.mxu0 0.0
    %4019 = vmatprep.subr.mxu0 0.0
    %4020 = vmatpush2.msra.mxu0 0.0
    %4021 = vmatprep.subr.mxu0 0.0
    %4022 = vmatpush2.msra.mxu0 0.0
    %4023 = vmatprep.subr.mxu0 0.0
    %4024 = vmatpush2.msra.mxu0 0.0
    %4025 = vmatprep.subr.mxu0 0.0
    %4026 = vmatpush2.msra.mxu0 0.0
    %4027 = vmatprep.subr.mxu0 0.0
    %4028 = vmatpush2.msra.mxu0 0.0
    %4029 = vmatprep.subr.mxu0 0.0
    %4030 = vmatpush2.msra.mxu0 0.0
    %4031 = vmatprep.mubr.f32.mxu0 0.0
    %4032 = vmatmul.mubr.f32.gmra.mxu0 %v3944
    %v4033 = vpop.f32.mrf.mxu0
    %v4034 = vadd.f32 0.0, %v4033
    %v4035 = vpop.f32.mrf.mxu0
    %4036 = vmatprep.mubr.f32.mxu0 0.0
    %4037 = vmatmul.mubr.f32.gmra.mxu0 %v3947
    %v4038 = vpop.f32.mrf.mxu0
    %v4039 = vadd.f32 0.0, %v4038
    %v4040 = vpop.f32.mrf.mxu0
    %4041 = vmatprep.mubr.f32.mxu0 0.0
    %4042 = vmatmul.mubr.f32.gmra.mxu0 %v3950
    %v4043 = vpop.f32.mrf.mxu0
    %v4044 = vadd.f32 0.0, %v4043
    %v4045 = vpop.f32.mrf.mxu0
    %4046 = vmatprep.mubr.f32.mxu0 0.0
    %4047 = vmatmul.mubr.f32.gmra.mxu0 %v3953
    %v4048 = vpop.f32.mrf.mxu0
    %v4049 = vadd.f32 0.0, %v4048
    %v4050 = vpop.f32.mrf.mxu0
    %4051 = vmatprep.mubr.f32.mxu0 0.0
    %4052 = vmatmul.mubr.f32.gmra.mxu0 %v3956
    %v4053 = vpop.f32.mrf.mxu0
    %v4054 = vadd.f32 0.0, %v4053
    %v4055 = vpop.f32.mrf.mxu0
    %4056 = vmatprep.mubr.f32.mxu0 0.0
    %4057 = vmatmul.mubr.f32.gmra.mxu0 %v3959
    %v4058 = vpop.f32.mrf.mxu0
    %v4059 = vadd.f32 0.0, %v4058
    %v4060 = vpop.f32.mrf.mxu0
    %4061 = vmatprep.mubr.f32.mxu0 0.0
    %4062 = vmatmul.mubr.f32.gmra.mxu0 %v3962
    %v4063 = vpop.f32.mrf.mxu0
    %v4064 = vadd.f32 0.0, %v4063
    %v4065 = vpop.f32.mrf.mxu0
    %4066 = vmatprep.mubr.f32.mxu0 0.0
    %4067 = vmatmul.mubr.f32.gmra.mxu0 %v3965
    %v4068 = vpop.f32.mrf.mxu0
    %v4069 = vadd.f32 0.0, %v4068
    %v4070 = vpop.f32.mrf.mxu0
    %4071 = vdwg.mxu0
    %v4072 = vadd.f32 %v3795, %v4034
    %v4073 = vadd.f32 %v3796, %v4039
    %v4074 = vadd.f32 %v3797, %v4044
    %v4075 = vadd.f32 %v3798, %v4049
    %v4076 = vadd.f32 %v3799, %v4054
    %v4077 = vadd.f32 %v3800, %v4059
    %v4078 = vadd.f32 %v3801, %v4064
    %v4079 = vadd.f32 %v3802, %v4069
    %s4080 = scalar_lea.vmem [#allocation10], 256
    %v4081 = vld [vmem:[%s4080] sm:$0xff]
    %v4082 = vld [vmem:[%s4080 + $0x8] sm:$0xff]
    %v4083 = vld [vmem:[%s4080 + $0x10] sm:$0xff]
    %v4084 = vld [vmem:[%s4080 + $0x18] sm:$0xff]
    %v4085 = vld [vmem:[%s4080 + $0x20] sm:$0xff]
    %v4086 = vld [vmem:[%s4080 + $0x28] sm:$0xff]
    %v4087 = vld [vmem:[%s4080 + $0x30] sm:$0xff]
    %v4088 = vld [vmem:[%s4080 + $0x38] sm:$0xff]
    %v4090 = vsel %vm1591, %v4081, 0
    %v4093 = vsel %vm1591, %v4082, 0
    %v4096 = vsel %vm1591, %v4083, 0
    %v4099 = vsel %vm1591, %v4084, 0
    %v4102 = vsel %vm1591, %v4085, 0
    %v4105 = vsel %vm1591, %v4086, 0
    %v4108 = vsel %vm1591, %v4087, 0
    %v4111 = vsel %vm1591, %v4088, 0
    %4113 = vmatprep.subr.mxu0 0.0
    %4114 = vmatpush1.msra.mxu0 0.0
    %4115 = vmatprep.subr.mxu0 0.0
    %4116 = vmatpush1.msra.mxu0 0.0
    %4117 = vmatprep.subr.mxu0 0.0
    %4118 = vmatpush1.msra.mxu0 0.0
    %4119 = vmatprep.subr.mxu0 0.0
    %4120 = vmatpush1.msra.mxu0 0.0
    %4121 = vmatprep.subr.mxu0 0.0
    %4122 = vmatpush1.msra.mxu0 0.0
    %4123 = vmatprep.subr.mxu0 0.0
    %4124 = vmatpush1.msra.mxu0 0.0
    %4125 = vmatprep.subr.mxu0 0.0
    %4126 = vmatpush1.msra.mxu0 0.0
    %4127 = vmatprep.subr.mxu0 0.0
    %4128 = vmatpush1.msra.mxu0 0.0
    %4129 = vmatprep.subr.mxu0 0.0
    %4130 = vmatpush1.msra.mxu0 %v2989
    %4131 = vmatprep.subr.mxu0 0.0
    %4132 = vmatpush1.msra.mxu0 %v2988
    %4133 = vmatprep.subr.mxu0 0.0
    %4134 = vmatpush1.msra.mxu0 %v2987
    %4135 = vmatprep.subr.mxu0 0.0
    %4136 = vmatpush1.msra.mxu0 %v2986
    %4137 = vmatprep.subr.mxu0 0.0
    %4138 = vmatpush1.msra.mxu0 %v2985
    %4139 = vmatprep.subr.mxu0 0.0
    %4140 = vmatpush1.msra.mxu0 %v2984
    %4141 = vmatprep.subr.mxu0 0.0
    %4142 = vmatpush1.msra.mxu0 %v2983
    %4143 = vmatprep.subr.mxu0 0.0
    %4144 = vmatpush1.msra.mxu0 %v2982
    %4145 = vmatprep.subr.mxu0 0.0
    %4146 = vmatpush2.msra.mxu0 0.0
    %4147 = vmatprep.subr.mxu0 0.0
    %4148 = vmatpush2.msra.mxu0 0.0
    %4149 = vmatprep.subr.mxu0 0.0
    %4150 = vmatpush2.msra.mxu0 0.0
    %4151 = vmatprep.subr.mxu0 0.0
    %4152 = vmatpush2.msra.mxu0 0.0
    %4153 = vmatprep.subr.mxu0 0.0
    %4154 = vmatpush2.msra.mxu0 0.0
    %4155 = vmatprep.subr.mxu0 0.0
    %4156 = vmatpush2.msra.mxu0 0.0
    %4157 = vmatprep.subr.mxu0 0.0
    %4158 = vmatpush2.msra.mxu0 0.0
    %4159 = vmatprep.subr.mxu0 0.0
    %4160 = vmatpush2.msra.mxu0 0.0
    %4161 = vmatprep.subr.mxu0 0.0
    %4162 = vmatpush2.msra.mxu0 0.0
    %4163 = vmatprep.subr.mxu0 0.0
    %4164 = vmatpush2.msra.mxu0 0.0
    %4165 = vmatprep.subr.mxu0 0.0
    %4166 = vmatpush2.msra.mxu0 0.0
    %4167 = vmatprep.subr.mxu0 0.0
    %4168 = vmatpush2.msra.mxu0 0.0
    %4169 = vmatprep.subr.mxu0 0.0
    %4170 = vmatpush2.msra.mxu0 0.0
    %4171 = vmatprep.subr.mxu0 0.0
    %4172 = vmatpush2.msra.mxu0 0.0
    %4173 = vmatprep.subr.mxu0 0.0
    %4174 = vmatpush2.msra.mxu0 0.0
    %4175 = vmatprep.subr.mxu0 0.0
    %4176 = vmatpush2.msra.mxu0 0.0
    %4177 = vmatprep.mubr.f32.mxu0 0.0
    %4178 = vmatmul.mubr.f32.gmra.mxu0 %v4090
    %v4179 = vpop.f32.mrf.mxu0
    %v4180 = vadd.f32 0.0, %v4179
    %v4181 = vpop.f32.mrf.mxu0
    %4182 = vmatprep.mubr.f32.mxu0 0.0
    %4183 = vmatmul.mubr.f32.gmra.mxu0 %v4093
    %v4184 = vpop.f32.mrf.mxu0
    %v4185 = vadd.f32 0.0, %v4184
    %v4186 = vpop.f32.mrf.mxu0
    %4187 = vmatprep.mubr.f32.mxu0 0.0
    %4188 = vmatmul.mubr.f32.gmra.mxu0 %v4096
    %v4189 = vpop.f32.mrf.mxu0
    %v4190 = vadd.f32 0.0, %v4189
    %v4191 = vpop.f32.mrf.mxu0
    %4192 = vmatprep.mubr.f32.mxu0 0.0
    %4193 = vmatmul.mubr.f32.gmra.mxu0 %v4099
    %v4194 = vpop.f32.mrf.mxu0
    %v4195 = vadd.f32 0.0, %v4194
    %v4196 = vpop.f32.mrf.mxu0
    %4197 = vmatprep.mubr.f32.mxu0 0.0
    %4198 = vmatmul.mubr.f32.gmra.mxu0 %v4102
    %v4199 = vpop.f32.mrf.mxu0
    %v4200 = vadd.f32 0.0, %v4199
    %v4201 = vpop.f32.mrf.mxu0
    %4202 = vmatprep.mubr.f32.mxu0 0.0
    %4203 = vmatmul.mubr.f32.gmra.mxu0 %v4105
    %v4204 = vpop.f32.mrf.mxu0
    %v4205 = vadd.f32 0.0, %v4204
    %v4206 = vpop.f32.mrf.mxu0
    %4207 = vmatprep.mubr.f32.mxu0 0.0
    %4208 = vmatmul.mubr.f32.gmra.mxu0 %v4108
    %v4209 = vpop.f32.mrf.mxu0
    %v4210 = vadd.f32 0.0, %v4209
    %v4211 = vpop.f32.mrf.mxu0
    %4212 = vmatprep.mubr.f32.mxu0 0.0
    %4213 = vmatmul.mubr.f32.gmra.mxu0 %v4111
    %v4214 = vpop.f32.mrf.mxu0
    %v4215 = vadd.f32 0.0, %v4214
    %v4216 = vpop.f32.mrf.mxu0
    %4217 = vdwg.mxu0
    %s4218 = scalar_lea.vmem [#allocation12], 32
    %v4219 = vld [vmem:[%s4218] sm:$0xff]
    %v4221 = vsel %vm1862, %v4180, 0
    %v4224 = vsel %vm1862, %v4185, 0
    %v4227 = vsel %vm1862, %v4190, 0
    %v4230 = vsel %vm1862, %v4195, 0
    %v4233 = vsel %vm1862, %v4200, 0
    %v4236 = vsel %vm1862, %v4205, 0
    %v4239 = vsel %vm1862, %v4210, 0
    %v4242 = vsel %vm1862, %v4215, 0
    %4244 = vmatprep.subr.mxu0 0.0
    %4245 = vmatpush1.msra.mxu0 0.0
    %4246 = vmatprep.subr.mxu0 0.0
    %4247 = vmatpush1.msra.mxu0 0.0
    %4248 = vmatprep.subr.mxu0 0.0
    %4249 = vmatpush1.msra.mxu0 0.0
    %4250 = vmatprep.subr.mxu0 0.0
    %4251 = vmatpush1.msra.mxu0 0.0
    %4252 = vmatprep.subr.mxu0 0.0
    %4253 = vmatpush1.msra.mxu0 0.0
    %4254 = vmatprep.subr.mxu0 0.0
    %4255 = vmatpush1.msra.mxu0 0.0
    %4256 = vmatprep.subr.mxu0 0.0
    %4257 = vmatpush1.msra.mxu0 0.0
    %4258 = vmatprep.subr.mxu0 0.0
    %4259 = vmatpush1.msra.mxu0 0.0
    %4260 = vmatprep.subr.mxu0 0.0
    %4261 = vmatpush1.msra.mxu0 0.0
    %4262 = vmatprep.subr.mxu0 0.0
    %4263 = vmatpush1.msra.mxu0 0.0
    %4264 = vmatprep.subr.mxu0 0.0
    %4265 = vmatpush1.msra.mxu0 0.0
    %4266 = vmatprep.subr.mxu0 0.0
    %4267 = vmatpush1.msra.mxu0 0.0
    %4268 = vmatprep.subr.mxu0 0.0
    %4269 = vmatpush1.msra.mxu0 0.0
    %4270 = vmatprep.subr.mxu0 0.0
    %4271 = vmatpush1.msra.mxu0 0.0
    %4272 = vmatprep.subr.mxu0 0.0
    %4273 = vmatpush1.msra.mxu0 0.0
    %4274 = vmatprep.subr.mxu0 0.0
    %4275 = vmatpush1.msra.mxu0 %v4219
    %4276 = vmatprep.subr.mxu0 0.0
    %4277 = vmatpush2.msra.mxu0 0.0
    %4278 = vmatprep.subr.mxu0 0.0
    %4279 = vmatpush2.msra.mxu0 0.0
    %4280 = vmatprep.subr.mxu0 0.0
    %4281 = vmatpush2.msra.mxu0 0.0
    %4282 = vmatprep.subr.mxu0 0.0
    %4283 = vmatpush2.msra.mxu0 0.0
    %4284 = vmatprep.subr.mxu0 0.0
    %4285 = vmatpush2.msra.mxu0 0.0
    %4286 = vmatprep.subr.mxu0 0.0
    %4287 = vmatpush2.msra.mxu0 0.0
    %4288 = vmatprep.subr.mxu0 0.0
    %4289 = vmatpush2.msra.mxu0 0.0
    %4290 = vmatprep.subr.mxu0 0.0
    %4291 = vmatpush2.msra.mxu0 0.0
    %4292 = vmatprep.subr.mxu0 0.0
    %4293 = vmatpush2.msra.mxu0 0.0
    %4294 = vmatprep.subr.mxu0 0.0
    %4295 = vmatpush2.msra.mxu0 0.0
    %4296 = vmatprep.subr.mxu0 0.0
    %4297 = vmatpush2.msra.mxu0 0.0
    %4298 = vmatprep.subr.mxu0 0.0
    %4299 = vmatpush2.msra.mxu0 0.0
    %4300 = vmatprep.subr.mxu0 0.0
    %4301 = vmatpush2.msra.mxu0 0.0
    %4302 = vmatprep.subr.mxu0 0.0
    %4303 = vmatpush2.msra.mxu0 0.0
    %4304 = vmatprep.subr.mxu0 0.0
    %4305 = vmatpush2.msra.mxu0 0.0
    %4306 = vmatprep.subr.mxu0 0.0
    %4307 = vmatpush2.msra.mxu0 0.0
    %4308 = vmatprep.mubr.f32.mxu0 0.0
    %4309 = vmatmul.mubr.f32.gmra.mxu0 %v4221
    %v4310 = vpop.f32.mrf.mxu0
    %v4311 = vadd.f32 0.0, %v4310
    %v4312 = vpop.f32.mrf.mxu0
    %4313 = vmatprep.mubr.f32.mxu0 0.0
    %4314 = vmatmul.mubr.f32.gmra.mxu0 %v4224
    %v4315 = vpop.f32.mrf.mxu0
    %v4316 = vadd.f32 0.0, %v4315
    %v4317 = vpop.f32.mrf.mxu0
    %4318 = vmatprep.mubr.f32.mxu0 0.0
    %4319 = vmatmul.mubr.f32.gmra.mxu0 %v4227
    %v4320 = vpop.f32.mrf.mxu0
    %v4321 = vadd.f32 0.0, %v4320
    %v4322 = vpop.f32.mrf.mxu0
    %4323 = vmatprep.mubr.f32.mxu0 0.0
    %4324 = vmatmul.mubr.f32.gmra.mxu0 %v4230
    %v4325 = vpop.f32.mrf.mxu0
    %v4326 = vadd.f32 0.0, %v4325
    %v4327 = vpop.f32.mrf.mxu0
    %4328 = vmatprep.mubr.f32.mxu0 0.0
    %4329 = vmatmul.mubr.f32.gmra.mxu0 %v4233
    %v4330 = vpop.f32.mrf.mxu0
    %v4331 = vadd.f32 0.0, %v4330
    %v4332 = vpop.f32.mrf.mxu0
    %4333 = vmatprep.mubr.f32.mxu0 0.0
    %4334 = vmatmul.mubr.f32.gmra.mxu0 %v4236
    %v4335 = vpop.f32.mrf.mxu0
    %v4336 = vadd.f32 0.0, %v4335
    %v4337 = vpop.f32.mrf.mxu0
    %4338 = vmatprep.mubr.f32.mxu0 0.0
    %4339 = vmatmul.mubr.f32.gmra.mxu0 %v4239
    %v4340 = vpop.f32.mrf.mxu0
    %v4341 = vadd.f32 0.0, %v4340
    %v4342 = vpop.f32.mrf.mxu0
    %4343 = vmatprep.mubr.f32.mxu0 0.0
    %4344 = vmatmul.mubr.f32.gmra.mxu0 %v4242
    %v4345 = vpop.f32.mrf.mxu0
    %v4346 = vadd.f32 0.0, %v4345
    %v4347 = vpop.f32.mrf.mxu0
    %4348 = vdwg.mxu0
    %v4349 = vadd.f32 %v4072, %v4311
    %v4350 = vadd.f32 %v4073, %v4316
    %v4351 = vadd.f32 %v4074, %v4321
    %v4352 = vadd.f32 %v4075, %v4326
    %v4353 = vadd.f32 %v4076, %v4331
    %v4354 = vadd.f32 %v4077, %v4336
    %v4355 = vadd.f32 %v4078, %v4341
    %v4356 = vadd.f32 %v4079, %v4346
    %v4357 = vadd.f32 %v4349, %v1575
    %v4358 = vadd.f32 %v4350, %v1576
    %v4359 = vadd.f32 %v4351, %v1577
    %v4360 = vadd.f32 %v4352, %v1578
    %v4361 = vadd.f32 %v4353, %v1579
    %v4362 = vadd.f32 %v4354, %v1580
    %v4363 = vadd.f32 %v4355, %v1581
    %v4364 = vadd.f32 %v4356, %v1582
    %v4365 = vld [vmem:[#allocation13] sm:$0x1]
    %v4367 = vlaneseq
    %v4368 = vshrl.u32 %v4367, 7
    %v4369 = vsub.s32 0, %v4368
    %v4370 = vrot.slane %v4365, %v4369
    %v4372 = vmul.f32 %v4357, %v4370
    %v4373 = vmul.f32 %v4358, %v4370
    %v4374 = vmul.f32 %v4359, %v4370
    %v4375 = vmul.f32 %v4360, %v4370
    %v4376 = vmul.f32 %v4361, %v4370
    %v4377 = vmul.f32 %v4362, %v4370
    %v4378 = vmul.f32 %v4363, %v4370
    %v4379 = vmul.f32 %v4364, %v4370
    %v4380 = vld [vmem:[#allocation15] sm:$0x1]
    %v4382 = vlaneseq
    %v4383 = vshrl.u32 %v4382, 7
    %v4384 = vsub.s32 0, %v4383
    %v4385 = vrot.slane %v4380, %v4384
    %v4387 = vadd.f32 %v4372, %v4385
    %v4388 = vadd.f32 %v4373, %v4385
    %v4389 = vadd.f32 %v4374, %v4385
    %v4390 = vadd.f32 %v4375, %v4385
    %v4391 = vadd.f32 %v4376, %v4385
    %v4392 = vadd.f32 %v4377, %v4385
    %v4393 = vadd.f32 %v4378, %v4385
    %v4394 = vadd.f32 %v4379, %v4385
    %v4395 = vmax.f32 %v4387, 0.0
    %v4396 = vmax.f32 %v4388, 0.0
    %v4397 = vmax.f32 %v4389, 0.0
    %v4398 = vmax.f32 %v4390, 0.0
    %v4399 = vmax.f32 %v4391, 0.0
    %v4400 = vmax.f32 %v4392, 0.0
    %v4401 = vmax.f32 %v4393, 0.0
    %v4402 = vmax.f32 %v4394, 0.0
    %v4403 = vld [vmem:[#allocation16] sm:$0xff]
    %v4404 = vld [vmem:[#allocation16 + $0x8] sm:$0xff]
    %v4405 = vld [vmem:[#allocation16 + $0x10] sm:$0xff]
    %v4406 = vld [vmem:[#allocation16 + $0x18] sm:$0xff]
    %v4408 = vsel %vm1591, %v4403, 0
    %v4411 = vsel %vm1591, %v4404, 0
    %v4414 = vsel %vm1591, %v4405, 0
    %v4417 = vsel %vm1591, %v4406, 0
    %4419 = vmatprep.subr.mxu0 0.0
    %4420 = vmatpush1.msra.mxu0 0.0
    %4421 = vmatprep.subr.mxu0 0.0
    %4422 = vmatpush1.msra.mxu0 0.0
    %4423 = vmatprep.subr.mxu0 0.0
    %4424 = vmatpush1.msra.mxu0 0.0
    %4425 = vmatprep.subr.mxu0 0.0
    %4426 = vmatpush1.msra.mxu0 0.0
    %4427 = vmatprep.subr.mxu0 0.0
    %4428 = vmatpush1.msra.mxu0 0.0
    %4429 = vmatprep.subr.mxu0 0.0
    %4430 = vmatpush1.msra.mxu0 0.0
    %4431 = vmatprep.subr.mxu0 0.0
    %4432 = vmatpush1.msra.mxu0 0.0
    %4433 = vmatprep.subr.mxu0 0.0
    %4434 = vmatpush1.msra.mxu0 0.0
    %4435 = vmatprep.subr.mxu0 0.0
    %4436 = vmatpush1.msra.mxu0 %v4364
    %4437 = vmatprep.subr.mxu0 0.0
    %4438 = vmatpush1.msra.mxu0 %v4363
    %4439 = vmatprep.subr.mxu0 0.0
    %4440 = vmatpush1.msra.mxu0 %v4362
    %4441 = vmatprep.subr.mxu0 0.0
    %4442 = vmatpush1.msra.mxu0 %v4361
    %4443 = vmatprep.subr.mxu0 0.0
    %4444 = vmatpush1.msra.mxu0 %v4360
    %4445 = vmatprep.subr.mxu0 0.0
    %4446 = vmatpush1.msra.mxu0 %v4359
    %4447 = vmatprep.subr.mxu0 0.0
    %4448 = vmatpush1.msra.mxu0 %v4358
    %4449 = vmatprep.subr.mxu0 0.0
    %4450 = vmatpush1.msra.mxu0 %v4357
    %4451 = vmatprep.subr.mxu0 0.0
    %4452 = vmatpush2.msra.mxu0 0.0
    %4453 = vmatprep.subr.mxu0 0.0
    %4454 = vmatpush2.msra.mxu0 0.0
    %4455 = vmatprep.subr.mxu0 0.0
    %4456 = vmatpush2.msra.mxu0 0.0
    %4457 = vmatprep.subr.mxu0 0.0
    %4458 = vmatpush2.msra.mxu0 0.0
    %4459 = vmatprep.subr.mxu0 0.0
    %4460 = vmatpush2.msra.mxu0 0.0
    %4461 = vmatprep.subr.mxu0 0.0
    %4462 = vmatpush2.msra.mxu0 0.0
    %4463 = vmatprep.subr.mxu0 0.0
    %4464 = vmatpush2.msra.mxu0 0.0
    %4465 = vmatprep.subr.mxu0 0.0
    %4466 = vmatpush2.msra.mxu0 0.0
    %4467 = vmatprep.subr.mxu0 0.0
    %4468 = vmatpush2.msra.mxu0 0.0
    %4469 = vmatprep.subr.mxu0 0.0
    %4470 = vmatpush2.msra.mxu0 0.0
    %4471 = vmatprep.subr.mxu0 0.0
    %4472 = vmatpush2.msra.mxu0 0.0
    %4473 = vmatprep.subr.mxu0 0.0
    %4474 = vmatpush2.msra.mxu0 0.0
    %4475 = vmatprep.subr.mxu0 0.0
    %4476 = vmatpush2.msra.mxu0 0.0
    %4477 = vmatprep.subr.mxu0 0.0
    %4478 = vmatpush2.msra.mxu0 0.0
    %4479 = vmatprep.subr.mxu0 0.0
    %4480 = vmatpush2.msra.mxu0 0.0
    %4481 = vmatprep.subr.mxu0 0.0
    %4482 = vmatpush2.msra.mxu0 0.0
    %4483 = vmatprep.mubr.f32.mxu0 0.0
    %4484 = vmatmul.mubr.f32.gmra.mxu0 %v4408
    %v4485 = vpop.f32.mrf.mxu0
    %v4486 = vadd.f32 0.0, %v4485
    %v4487 = vpop.f32.mrf.mxu0
    %4488 = vmatprep.mubr.f32.mxu0 0.0
    %4489 = vmatmul.mubr.f32.gmra.mxu0 %v4411
    %v4490 = vpop.f32.mrf.mxu0
    %v4491 = vadd.f32 0.0, %v4490
    %v4492 = vpop.f32.mrf.mxu0
    %4493 = vmatprep.mubr.f32.mxu0 0.0
    %4494 = vmatmul.mubr.f32.gmra.mxu0 %v4414
    %v4495 = vpop.f32.mrf.mxu0
    %v4496 = vadd.f32 0.0, %v4495
    %v4497 = vpop.f32.mrf.mxu0
    %4498 = vmatprep.mubr.f32.mxu0 0.0
    %4499 = vmatmul.mubr.f32.gmra.mxu0 %v4417
    %v4500 = vpop.f32.mrf.mxu0
    %v4501 = vadd.f32 0.0, %v4500
    %v4502 = vpop.f32.mrf.mxu0
    %4503 = vdwg.mxu0
    %s4504 = scalar_lea.vmem [#allocation16], 32
    %v4505 = vld [vmem:[%s4504] sm:$0xff]
    %v4506 = vld [vmem:[%s4504 + $0x8] sm:$0xff]
    %v4507 = vld [vmem:[%s4504 + $0x10] sm:$0xff]
    %v4508 = vld [vmem:[%s4504 + $0x18] sm:$0xff]
    %v4510 = vsel %vm1591, %v4505, 0
    %v4513 = vsel %vm1591, %v4506, 0
    %v4516 = vsel %vm1591, %v4507, 0
    %v4519 = vsel %vm1591, %v4508, 0
    %4521 = vmatprep.subr.mxu0 0.0
    %4522 = vmatpush1.msra.mxu0 0.0
    %4523 = vmatprep.subr.mxu0 0.0
    %4524 = vmatpush1.msra.mxu0 0.0
    %4525 = vmatprep.subr.mxu0 0.0
    %4526 = vmatpush1.msra.mxu0 0.0
    %4527 = vmatprep.subr.mxu0 0.0
    %4528 = vmatpush1.msra.mxu0 0.0
    %4529 = vmatprep.subr.mxu0 0.0
    %4530 = vmatpush1.msra.mxu0 0.0
    %4531 = vmatprep.subr.mxu0 0.0
    %4532 = vmatpush1.msra.mxu0 0.0
    %4533 = vmatprep.subr.mxu0 0.0
    %4534 = vmatpush1.msra.mxu0 0.0
    %4535 = vmatprep.subr.mxu0 0.0
    %4536 = vmatpush1.msra.mxu0 0.0
    %4537 = vmatprep.subr.mxu0 0.0
    %4538 = vmatpush1.msra.mxu0 %v4364
    %4539 = vmatprep.subr.mxu0 0.0
    %4540 = vmatpush1.msra.mxu0 %v4363
    %4541 = vmatprep.subr.mxu0 0.0
    %4542 = vmatpush1.msra.mxu0 %v4362
    %4543 = vmatprep.subr.mxu0 0.0
    %4544 = vmatpush1.msra.mxu0 %v4361
    %4545 = vmatprep.subr.mxu0 0.0
    %4546 = vmatpush1.msra.mxu0 %v4360
    %4547 = vmatprep.subr.mxu0 0.0
    %4548 = vmatpush1.msra.mxu0 %v4359
    %4549 = vmatprep.subr.mxu0 0.0
    %4550 = vmatpush1.msra.mxu0 %v4358
    %4551 = vmatprep.subr.mxu0 0.0
    %4552 = vmatpush1.msra.mxu0 %v4357
    %4553 = vmatprep.subr.mxu0 0.0
    %4554 = vmatpush2.msra.mxu0 0.0
    %4555 = vmatprep.subr.mxu0 0.0
    %4556 = vmatpush2.msra.mxu0 0.0
    %4557 = vmatprep.subr.mxu0 0.0
    %4558 = vmatpush2.msra.mxu0 0.0
    %4559 = vmatprep.subr.mxu0 0.0
    %4560 = vmatpush2.msra.mxu0 0.0
    %4561 = vmatprep.subr.mxu0 0.0
    %4562 = vmatpush2.msra.mxu0 0.0
    %4563 = vmatprep.subr.mxu0 0.0
    %4564 = vmatpush2.msra.mxu0 0.0
    %4565 = vmatprep.subr.mxu0 0.0
    %4566 = vmatpush2.msra.mxu0 0.0
    %4567 = vmatprep.subr.mxu0 0.0
    %4568 = vmatpush2.msra.mxu0 0.0
    %4569 = vmatprep.subr.mxu0 0.0
    %4570 = vmatpush2.msra.mxu0 0.0
    %4571 = vmatprep.subr.mxu0 0.0
    %4572 = vmatpush2.msra.mxu0 0.0
    %4573 = vmatprep.subr.mxu0 0.0
    %4574 = vmatpush2.msra.mxu0 0.0
    %4575 = vmatprep.subr.mxu0 0.0
    %4576 = vmatpush2.msra.mxu0 0.0
    %4577 = vmatprep.subr.mxu0 0.0
    %4578 = vmatpush2.msra.mxu0 0.0
    %4579 = vmatprep.subr.mxu0 0.0
    %4580 = vmatpush2.msra.mxu0 0.0
    %4581 = vmatprep.subr.mxu0 0.0
    %4582 = vmatpush2.msra.mxu0 0.0
    %4583 = vmatprep.subr.mxu0 0.0
    %4584 = vmatpush2.msra.mxu0 0.0
    %4585 = vmatprep.mubr.f32.mxu0 0.0
    %4586 = vmatmul.mubr.f32.gmra.mxu0 %v4510
    %v4587 = vpop.f32.mrf.mxu0
    %v4588 = vadd.f32 0.0, %v4587
    %v4589 = vpop.f32.mrf.mxu0
    %4590 = vmatprep.mubr.f32.mxu0 0.0
    %4591 = vmatmul.mubr.f32.gmra.mxu0 %v4513
    %v4592 = vpop.f32.mrf.mxu0
    %v4593 = vadd.f32 0.0, %v4592
    %v4594 = vpop.f32.mrf.mxu0
    %4595 = vmatprep.mubr.f32.mxu0 0.0
    %4596 = vmatmul.mubr.f32.gmra.mxu0 %v4516
    %v4597 = vpop.f32.mrf.mxu0
    %v4598 = vadd.f32 0.0, %v4597
    %v4599 = vpop.f32.mrf.mxu0
    %4600 = vmatprep.mubr.f32.mxu0 0.0
    %4601 = vmatmul.mubr.f32.gmra.mxu0 %v4519
    %v4602 = vpop.f32.mrf.mxu0
    %v4603 = vadd.f32 0.0, %v4602
    %v4604 = vpop.f32.mrf.mxu0
    %4605 = vdwg.mxu0
    %v4606 = vmax.f32 %v4486, %v4588
    %v4607 = vmax.f32 %v4491, %v4593
    %v4608 = vmax.f32 %v4496, %v4598
    %v4609 = vmax.f32 %v4501, %v4603
    %v4610 = vld [vmem:[%s14] sm:$0xff]
    %v4612 = vsel %vm1862, %v4606, 0
    %v4615 = vsel %vm1862, %v4607, 0
    %v4618 = vsel %vm1862, %v4608, 0
    %v4621 = vsel %vm1862, %v4609, 0
    %4623 = vmatprep.subr.mxu0 0.0
    %4624 = vmatpush1.msra.mxu0 0.0
    %4625 = vmatprep.subr.mxu0 0.0
    %4626 = vmatpush1.msra.mxu0 0.0
    %4627 = vmatprep.subr.mxu0 0.0
    %4628 = vmatpush1.msra.mxu0 0.0
    %4629 = vmatprep.subr.mxu0 0.0
    %4630 = vmatpush1.msra.mxu0 0.0
    %4631 = vmatprep.subr.mxu0 0.0
    %4632 = vmatpush1.msra.mxu0 0.0
    %4633 = vmatprep.subr.mxu0 0.0
    %4634 = vmatpush1.msra.mxu0 0.0
    %4635 = vmatprep.subr.mxu0 0.0
    %4636 = vmatpush1.msra.mxu0 0.0
    %4637 = vmatprep.subr.mxu0 0.0
    %4638 = vmatpush1.msra.mxu0 0.0
    %4639 = vmatprep.subr.mxu0 0.0
    %4640 = vmatpush1.msra.mxu0 0.0
    %4641 = vmatprep.subr.mxu0 0.0
    %4642 = vmatpush1.msra.mxu0 0.0
    %4643 = vmatprep.subr.mxu0 0.0
    %4644 = vmatpush1.msra.mxu0 0.0
    %4645 = vmatprep.subr.mxu0 0.0
    %4646 = vmatpush1.msra.mxu0 0.0
    %4647 = vmatprep.subr.mxu0 0.0
    %4648 = vmatpush1.msra.mxu0 0.0
    %4649 = vmatprep.subr.mxu0 0.0
    %4650 = vmatpush1.msra.mxu0 0.0
    %4651 = vmatprep.subr.mxu0 0.0
    %4652 = vmatpush1.msra.mxu0 0.0
    %4653 = vmatprep.subr.mxu0 0.0
    %4654 = vmatpush1.msra.mxu0 %v4610
    %4655 = vmatprep.subr.mxu0 0.0
    %4656 = vmatpush2.msra.mxu0 0.0
    %4657 = vmatprep.subr.mxu0 0.0
    %4658 = vmatpush2.msra.mxu0 0.0
    %4659 = vmatprep.subr.mxu0 0.0
    %4660 = vmatpush2.msra.mxu0 0.0
    %4661 = vmatprep.subr.mxu0 0.0
    %4662 = vmatpush2.msra.mxu0 0.0
    %4663 = vmatprep.subr.mxu0 0.0
    %4664 = vmatpush2.msra.mxu0 0.0
    %4665 = vmatprep.subr.mxu0 0.0
    %4666 = vmatpush2.msra.mxu0 0.0
    %4667 = vmatprep.subr.mxu0 0.0
    %4668 = vmatpush2.msra.mxu0 0.0
    %4669 = vmatprep.subr.mxu0 0.0
    %4670 = vmatpush2.msra.mxu0 0.0
    %4671 = vmatprep.subr.mxu0 0.0
    %4672 = vmatpush2.msra.mxu0 0.0
    %4673 = vmatprep.subr.mxu0 0.0
    %4674 = vmatpush2.msra.mxu0 0.0
    %4675 = vmatprep.subr.mxu0 0.0
    %4676 = vmatpush2.msra.mxu0 0.0
    %4677 = vmatprep.subr.mxu0 0.0
    %4678 = vmatpush2.msra.mxu0 0.0
    %4679 = vmatprep.subr.mxu0 0.0
    %4680 = vmatpush2.msra.mxu0 0.0
    %4681 = vmatprep.subr.mxu0 0.0
    %4682 = vmatpush2.msra.mxu0 0.0
    %4683 = vmatprep.subr.mxu0 0.0
    %4684 = vmatpush2.msra.mxu0 0.0
    %4685 = vmatprep.subr.mxu0 0.0
    %4686 = vmatpush2.msra.mxu0 0.0
    %4687 = vmatprep.mubr.f32.mxu0 0.0
    %4688 = vmatmul.mubr.f32.gmra.mxu0 %v4612
    %v4689 = vpop.f32.mrf.mxu0
    %v4690 = vadd.f32 0.0, %v4689
    %v4691 = vpop.f32.mrf.mxu0
    %4692 = vmatprep.mubr.f32.mxu0 0.0
    %4693 = vmatmul.mubr.f32.gmra.mxu0 %v4615
    %v4694 = vpop.f32.mrf.mxu0
    %v4695 = vadd.f32 0.0, %v4694
    %v4696 = vpop.f32.mrf.mxu0
    %4697 = vmatprep.mubr.f32.mxu0 0.0
    %4698 = vmatmul.mubr.f32.gmra.mxu0 %v4618
    %v4699 = vpop.f32.mrf.mxu0
    %v4700 = vadd.f32 0.0, %v4699
    %v4701 = vpop.f32.mrf.mxu0
    %4702 = vmatprep.mubr.f32.mxu0 0.0
    %4703 = vmatmul.mubr.f32.gmra.mxu0 %v4621
    %v4704 = vpop.f32.mrf.mxu0
    %v4705 = vadd.f32 0.0, %v4704
    %v4706 = vpop.f32.mrf.mxu0
    %4707 = vdwg.mxu0
    %v4708 = vld [vmem:[#allocation18] sm:$0xff]
    %v4709 = vld [vmem:[#allocation18 + $0x8] sm:$0xff]
    %v4710 = vld [vmem:[#allocation18 + $0x10] sm:$0xff]
    %v4711 = vld [vmem:[#allocation18 + $0x18] sm:$0xff]
    %v4712 = vld [vmem:[#allocation18 + $0x20] sm:$0xff]
    %v4713 = vld [vmem:[#allocation18 + $0x28] sm:$0xff]
    %v4714 = vld [vmem:[#allocation18 + $0x30] sm:$0xff]
    %v4715 = vld [vmem:[#allocation18 + $0x38] sm:$0xff]
    %v4717 = vsel %vm1591, %v4708, 0
    %v4720 = vsel %vm1591, %v4709, 0
    %v4723 = vsel %vm1591, %v4710, 0
    %v4726 = vsel %vm1591, %v4711, 0
    %v4729 = vsel %vm1591, %v4712, 0
    %v4732 = vsel %vm1591, %v4713, 0
    %v4735 = vsel %vm1591, %v4714, 0
    %v4738 = vsel %vm1591, %v4715, 0
    %4740 = vmatprep.subr.mxu0 0.0
    %4741 = vmatpush1.msra.mxu0 0.0
    %4742 = vmatprep.subr.mxu0 0.0
    %4743 = vmatpush1.msra.mxu0 0.0
    %4744 = vmatprep.subr.mxu0 0.0
    %4745 = vmatpush1.msra.mxu0 0.0
    %4746 = vmatprep.subr.mxu0 0.0
    %4747 = vmatpush1.msra.mxu0 0.0
    %4748 = vmatprep.subr.mxu0 0.0
    %4749 = vmatpush1.msra.mxu0 0.0
    %4750 = vmatprep.subr.mxu0 0.0
    %4751 = vmatpush1.msra.mxu0 0.0
    %4752 = vmatprep.subr.mxu0 0.0
    %4753 = vmatpush1.msra.mxu0 0.0
    %4754 = vmatprep.subr.mxu0 0.0
    %4755 = vmatpush1.msra.mxu0 0.0
    %4756 = vmatprep.subr.mxu0 0.0
    %4757 = vmatpush1.msra.mxu0 %v4402
    %4758 = vmatprep.subr.mxu0 0.0
    %4759 = vmatpush1.msra.mxu0 %v4401
    %4760 = vmatprep.subr.mxu0 0.0
    %4761 = vmatpush1.msra.mxu0 %v4400
    %4762 = vmatprep.subr.mxu0 0.0
    %4763 = vmatpush1.msra.mxu0 %v4399
    %4764 = vmatprep.subr.mxu0 0.0
    %4765 = vmatpush1.msra.mxu0 %v4398
    %4766 = vmatprep.subr.mxu0 0.0
    %4767 = vmatpush1.msra.mxu0 %v4397
    %4768 = vmatprep.subr.mxu0 0.0
    %4769 = vmatpush1.msra.mxu0 %v4396
    %4770 = vmatprep.subr.mxu0 0.0
    %4771 = vmatpush1.msra.mxu0 %v4395
    %4772 = vmatprep.subr.mxu0 0.0
    %4773 = vmatpush2.msra.mxu0 0.0
    %4774 = vmatprep.subr.mxu0 0.0
    %4775 = vmatpush2.msra.mxu0 0.0
    %4776 = vmatprep.subr.mxu0 0.0
    %4777 = vmatpush2.msra.mxu0 0.0
    %4778 = vmatprep.subr.mxu0 0.0
    %4779 = vmatpush2.msra.mxu0 0.0
    %4780 = vmatprep.subr.mxu0 0.0
    %4781 = vmatpush2.msra.mxu0 0.0
    %4782 = vmatprep.subr.mxu0 0.0
    %4783 = vmatpush2.msra.mxu0 0.0
    %4784 = vmatprep.subr.mxu0 0.0
    %4785 = vmatpush2.msra.mxu0 0.0
    %4786 = vmatprep.subr.mxu0 0.0
    %4787 = vmatpush2.msra.mxu0 0.0
    %4788 = vmatprep.subr.mxu0 0.0
    %4789 = vmatpush2.msra.mxu0 0.0
    %4790 = vmatprep.subr.mxu0 0.0
    %4791 = vmatpush2.msra.mxu0 0.0
    %4792 = vmatprep.subr.mxu0 0.0
    %4793 = vmatpush2.msra.mxu0 0.0
    %4794 = vmatprep.subr.mxu0 0.0
    %4795 = vmatpush2.msra.mxu0 0.0
    %4796 = vmatprep.subr.mxu0 0.0
    %4797 = vmatpush2.msra.mxu0 0.0
    %4798 = vmatprep.subr.mxu0 0.0
    %4799 = vmatpush2.msra.mxu0 0.0
    %4800 = vmatprep.subr.mxu0 0.0
    %4801 = vmatpush2.msra.mxu0 0.0
    %4802 = vmatprep.subr.mxu0 0.0
    %4803 = vmatpush2.msra.mxu0 0.0
    %4804 = vmatprep.mubr.f32.mxu0 0.0
    %4805 = vmatmul.mubr.f32.gmra.mxu0 %v4717
    %v4806 = vpop.f32.mrf.mxu0
    %v4807 = vadd.f32 0.0, %v4806
    %v4808 = vpop.f32.mrf.mxu0
    %4809 = vmatprep.mubr.f32.mxu0 0.0
    %4810 = vmatmul.mubr.f32.gmra.mxu0 %v4720
    %v4811 = vpop.f32.mrf.mxu0
    %v4812 = vadd.f32 0.0, %v4811
    %v4813 = vpop.f32.mrf.mxu0
    %4814 = vmatprep.mubr.f32.mxu0 0.0
    %4815 = vmatmul.mubr.f32.gmra.mxu0 %v4723
    %v4816 = vpop.f32.mrf.mxu0
    %v4817 = vadd.f32 0.0, %v4816
    %v4818 = vpop.f32.mrf.mxu0
    %4819 = vmatprep.mubr.f32.mxu0 0.0
    %4820 = vmatmul.mubr.f32.gmra.mxu0 %v4726
    %v4821 = vpop.f32.mrf.mxu0
    %v4822 = vadd.f32 0.0, %v4821
    %v4823 = vpop.f32.mrf.mxu0
    %4824 = vmatprep.mubr.f32.mxu0 0.0
    %4825 = vmatmul.mubr.f32.gmra.mxu0 %v4729
    %v4826 = vpop.f32.mrf.mxu0
    %v4827 = vadd.f32 0.0, %v4826
    %v4828 = vpop.f32.mrf.mxu0
    %4829 = vmatprep.mubr.f32.mxu0 0.0
    %4830 = vmatmul.mubr.f32.gmra.mxu0 %v4732
    %v4831 = vpop.f32.mrf.mxu0
    %v4832 = vadd.f32 0.0, %v4831
    %v4833 = vpop.f32.mrf.mxu0
    %4834 = vmatprep.mubr.f32.mxu0 0.0
    %4835 = vmatmul.mubr.f32.gmra.mxu0 %v4735
    %v4836 = vpop.f32.mrf.mxu0
    %v4837 = vadd.f32 0.0, %v4836
    %v4838 = vpop.f32.mrf.mxu0
    %4839 = vmatprep.mubr.f32.mxu0 0.0
    %4840 = vmatmul.mubr.f32.gmra.mxu0 %v4738
    %v4841 = vpop.f32.mrf.mxu0
    %v4842 = vadd.f32 0.0, %v4841
    %v4843 = vpop.f32.mrf.mxu0
    %4844 = vdwg.mxu0
    %v4845 = vld [vmem:[#allocation19] sm:$0xff]
    %s4846 = scalar_lea.vmem [#allocation18], 64
    %v4847 = vld [vmem:[%s4846] sm:$0xff]
    %v4848 = vld [vmem:[%s4846 + $0x8] sm:$0xff]
    %v4849 = vld [vmem:[%s4846 + $0x10] sm:$0xff]
    %v4850 = vld [vmem:[%s4846 + $0x18] sm:$0xff]
    %v4851 = vld [vmem:[%s4846 + $0x20] sm:$0xff]
    %v4852 = vld [vmem:[%s4846 + $0x28] sm:$0xff]
    %v4853 = vld [vmem:[%s4846 + $0x30] sm:$0xff]
    %v4854 = vld [vmem:[%s4846 + $0x38] sm:$0xff]
    %v4856 = vsel %vm1591, %v4847, 0
    %v4859 = vsel %vm1591, %v4848, 0
    %v4862 = vsel %vm1591, %v4849, 0
    %v4865 = vsel %vm1591, %v4850, 0
    %v4868 = vsel %vm1591, %v4851, 0
    %v4871 = vsel %vm1591, %v4852, 0
    %v4874 = vsel %vm1591, %v4853, 0
    %v4877 = vsel %vm1591, %v4854, 0
    %4879 = vmatprep.subr.mxu0 0.0
    %4880 = vmatpush1.msra.mxu0 0.0
    %4881 = vmatprep.subr.mxu0 0.0
    %4882 = vmatpush1.msra.mxu0 0.0
    %4883 = vmatprep.subr.mxu0 0.0
    %4884 = vmatpush1.msra.mxu0 0.0
    %4885 = vmatprep.subr.mxu0 0.0
    %4886 = vmatpush1.msra.mxu0 0.0
    %4887 = vmatprep.subr.mxu0 0.0
    %4888 = vmatpush1.msra.mxu0 0.0
    %4889 = vmatprep.subr.mxu0 0.0
    %4890 = vmatpush1.msra.mxu0 0.0
    %4891 = vmatprep.subr.mxu0 0.0
    %4892 = vmatpush1.msra.mxu0 0.0
    %4893 = vmatprep.subr.mxu0 0.0
    %4894 = vmatpush1.msra.mxu0 0.0
    %4895 = vmatprep.subr.mxu0 0.0
    %4896 = vmatpush1.msra.mxu0 %v4402
    %4897 = vmatprep.subr.mxu0 0.0
    %4898 = vmatpush1.msra.mxu0 %v4401
    %4899 = vmatprep.subr.mxu0 0.0
    %4900 = vmatpush1.msra.mxu0 %v4400
    %4901 = vmatprep.subr.mxu0 0.0
    %4902 = vmatpush1.msra.mxu0 %v4399
    %4903 = vmatprep.subr.mxu0 0.0
    %4904 = vmatpush1.msra.mxu0 %v4398
    %4905 = vmatprep.subr.mxu0 0.0
    %4906 = vmatpush1.msra.mxu0 %v4397
    %4907 = vmatprep.subr.mxu0 0.0
    %4908 = vmatpush1.msra.mxu0 %v4396
    %4909 = vmatprep.subr.mxu0 0.0
    %4910 = vmatpush1.msra.mxu0 %v4395
    %4911 = vmatprep.subr.mxu0 0.0
    %4912 = vmatpush2.msra.mxu0 0.0
    %4913 = vmatprep.subr.mxu0 0.0
    %4914 = vmatpush2.msra.mxu0 0.0
    %4915 = vmatprep.subr.mxu0 0.0
    %4916 = vmatpush2.msra.mxu0 0.0
    %4917 = vmatprep.subr.mxu0 0.0
    %4918 = vmatpush2.msra.mxu0 0.0
    %4919 = vmatprep.subr.mxu0 0.0
    %4920 = vmatpush2.msra.mxu0 0.0
    %4921 = vmatprep.subr.mxu0 0.0
    %4922 = vmatpush2.msra.mxu0 0.0
    %4923 = vmatprep.subr.mxu0 0.0
    %4924 = vmatpush2.msra.mxu0 0.0
    %4925 = vmatprep.subr.mxu0 0.0
    %4926 = vmatpush2.msra.mxu0 0.0
    %4927 = vmatprep.subr.mxu0 0.0
    %4928 = vmatpush2.msra.mxu0 0.0
    %4929 = vmatprep.subr.mxu0 0.0
    %4930 = vmatpush2.msra.mxu0 0.0
    %4931 = vmatprep.subr.mxu0 0.0
    %4932 = vmatpush2.msra.mxu0 0.0
    %4933 = vmatprep.subr.mxu0 0.0
    %4934 = vmatpush2.msra.mxu0 0.0
    %4935 = vmatprep.subr.mxu0 0.0
    %4936 = vmatpush2.msra.mxu0 0.0
    %4937 = vmatprep.subr.mxu0 0.0
    %4938 = vmatpush2.msra.mxu0 0.0
    %4939 = vmatprep.subr.mxu0 0.0
    %4940 = vmatpush2.msra.mxu0 0.0
    %4941 = vmatprep.subr.mxu0 0.0
    %4942 = vmatpush2.msra.mxu0 0.0
    %4943 = vmatprep.mubr.f32.mxu0 0.0
    %4944 = vmatmul.mubr.f32.gmra.mxu0 %v4856
    %v4945 = vpop.f32.mrf.mxu0
    %v4946 = vadd.f32 0.0, %v4945
    %v4947 = vpop.f32.mrf.mxu0
    %4948 = vmatprep.mubr.f32.mxu0 0.0
    %4949 = vmatmul.mubr.f32.gmra.mxu0 %v4859
    %v4950 = vpop.f32.mrf.mxu0
    %v4951 = vadd.f32 0.0, %v4950
    %v4952 = vpop.f32.mrf.mxu0
    %4953 = vmatprep.mubr.f32.mxu0 0.0
    %4954 = vmatmul.mubr.f32.gmra.mxu0 %v4862
    %v4955 = vpop.f32.mrf.mxu0
    %v4956 = vadd.f32 0.0, %v4955
    %v4957 = vpop.f32.mrf.mxu0
    %4958 = vmatprep.mubr.f32.mxu0 0.0
    %4959 = vmatmul.mubr.f32.gmra.mxu0 %v4865
    %v4960 = vpop.f32.mrf.mxu0
    %v4961 = vadd.f32 0.0, %v4960
    %v4962 = vpop.f32.mrf.mxu0
    %4963 = vmatprep.mubr.f32.mxu0 0.0
    %4964 = vmatmul.mubr.f32.gmra.mxu0 %v4868
    %v4965 = vpop.f32.mrf.mxu0
    %v4966 = vadd.f32 0.0, %v4965
    %v4967 = vpop.f32.mrf.mxu0
    %4968 = vmatprep.mubr.f32.mxu0 0.0
    %4969 = vmatmul.mubr.f32.gmra.mxu0 %v4871
    %v4970 = vpop.f32.mrf.mxu0
    %v4971 = vadd.f32 0.0, %v4970
    %v4972 = vpop.f32.mrf.mxu0
    %4973 = vmatprep.mubr.f32.mxu0 0.0
    %4974 = vmatmul.mubr.f32.gmra.mxu0 %v4874
    %v4975 = vpop.f32.mrf.mxu0
    %v4976 = vadd.f32 0.0, %v4975
    %v4977 = vpop.f32.mrf.mxu0
    %4978 = vmatprep.mubr.f32.mxu0 0.0
    %4979 = vmatmul.mubr.f32.gmra.mxu0 %v4877
    %v4980 = vpop.f32.mrf.mxu0
    %v4981 = vadd.f32 0.0, %v4980
    %v4982 = vpop.f32.mrf.mxu0
    %4983 = vdwg.mxu0
    %s4984 = scalar_lea.vmem [#allocation19], 8
    %v4985 = vld [vmem:[%s4984] sm:$0xff]
    %v4987 = vsel %vm1862, %v4946, 0
    %v4990 = vsel %vm1862, %v4951, 0
    %v4993 = vsel %vm1862, %v4956, 0
    %v4996 = vsel %vm1862, %v4961, 0
    %v4999 = vsel %vm1862, %v4966, 0
    %v5002 = vsel %vm1862, %v4971, 0
    %v5005 = vsel %vm1862, %v4976, 0
    %v5008 = vsel %vm1862, %v4981, 0
    %5010 = vmatprep.subr.mxu0 0.0
    %5011 = vmatpush1.msra.mxu0 0.0
    %5012 = vmatprep.subr.mxu0 0.0
    %5013 = vmatpush1.msra.mxu0 0.0
    %5014 = vmatprep.subr.mxu0 0.0
    %5015 = vmatpush1.msra.mxu0 0.0
    %5016 = vmatprep.subr.mxu0 0.0
    %5017 = vmatpush1.msra.mxu0 0.0
    %5018 = vmatprep.subr.mxu0 0.0
    %5019 = vmatpush1.msra.mxu0 0.0
    %5020 = vmatprep.subr.mxu0 0.0
    %5021 = vmatpush1.msra.mxu0 0.0
    %5022 = vmatprep.subr.mxu0 0.0
    %5023 = vmatpush1.msra.mxu0 0.0
    %5024 = vmatprep.subr.mxu0 0.0
    %5025 = vmatpush1.msra.mxu0 0.0
    %5026 = vmatprep.subr.mxu0 0.0
    %5027 = vmatpush1.msra.mxu0 0.0
    %5028 = vmatprep.subr.mxu0 0.0
    %5029 = vmatpush1.msra.mxu0 0.0
    %5030 = vmatprep.subr.mxu0 0.0
    %5031 = vmatpush1.msra.mxu0 0.0
    %5032 = vmatprep.subr.mxu0 0.0
    %5033 = vmatpush1.msra.mxu0 0.0
    %5034 = vmatprep.subr.mxu0 0.0
    %5035 = vmatpush1.msra.mxu0 0.0
    %5036 = vmatprep.subr.mxu0 0.0
    %5037 = vmatpush1.msra.mxu0 0.0
    %5038 = vmatprep.subr.mxu0 0.0
    %5039 = vmatpush1.msra.mxu0 0.0
    %5040 = vmatprep.subr.mxu0 0.0
    %5041 = vmatpush1.msra.mxu0 %v4985
    %5042 = vmatprep.subr.mxu0 0.0
    %5043 = vmatpush2.msra.mxu0 0.0
    %5044 = vmatprep.subr.mxu0 0.0
    %5045 = vmatpush2.msra.mxu0 0.0
    %5046 = vmatprep.subr.mxu0 0.0
    %5047 = vmatpush2.msra.mxu0 0.0
    %5048 = vmatprep.subr.mxu0 0.0
    %5049 = vmatpush2.msra.mxu0 0.0
    %5050 = vmatprep.subr.mxu0 0.0
    %5051 = vmatpush2.msra.mxu0 0.0
    %5052 = vmatprep.subr.mxu0 0.0
    %5053 = vmatpush2.msra.mxu0 0.0
    %5054 = vmatprep.subr.mxu0 0.0
    %5055 = vmatpush2.msra.mxu0 0.0
    %5056 = vmatprep.subr.mxu0 0.0
    %5057 = vmatpush2.msra.mxu0 0.0
    %5058 = vmatprep.subr.mxu0 0.0
    %5059 = vmatpush2.msra.mxu0 0.0
    %5060 = vmatprep.subr.mxu0 0.0
    %5061 = vmatpush2.msra.mxu0 0.0
    %5062 = vmatprep.subr.mxu0 0.0
    %5063 = vmatpush2.msra.mxu0 0.0
    %5064 = vmatprep.subr.mxu0 0.0
    %5065 = vmatpush2.msra.mxu0 0.0
    %5066 = vmatprep.subr.mxu0 0.0
    %5067 = vmatpush2.msra.mxu0 0.0
    %5068 = vmatprep.subr.mxu0 0.0
    %5069 = vmatpush2.msra.mxu0 0.0
    %5070 = vmatprep.subr.mxu0 0.0
    %5071 = vmatpush2.msra.mxu0 0.0
    %5072 = vmatprep.subr.mxu0 0.0
    %5073 = vmatpush2.msra.mxu0 0.0
    %5074 = vmatprep.mubr.f32.mxu0 0.0
    %5075 = vmatmul.mubr.f32.gmra.mxu0 %v4987
    %v5076 = vpop.f32.mrf.mxu0
    %v5077 = vadd.f32 0.0, %v5076
    %v5078 = vpop.f32.mrf.mxu0
    %5079 = vmatprep.mubr.f32.mxu0 0.0
    %5080 = vmatmul.mubr.f32.gmra.mxu0 %v4990
    %v5081 = vpop.f32.mrf.mxu0
    %v5082 = vadd.f32 0.0, %v5081
    %v5083 = vpop.f32.mrf.mxu0
    %5084 = vmatprep.mubr.f32.mxu0 0.0
    %5085 = vmatmul.mubr.f32.gmra.mxu0 %v4993
    %v5086 = vpop.f32.mrf.mxu0
    %v5087 = vadd.f32 0.0, %v5086
    %v5088 = vpop.f32.mrf.mxu0
    %5089 = vmatprep.mubr.f32.mxu0 0.0
    %5090 = vmatmul.mubr.f32.gmra.mxu0 %v4996
    %v5091 = vpop.f32.mrf.mxu0
    %v5092 = vadd.f32 0.0, %v5091
    %v5093 = vpop.f32.mrf.mxu0
    %5094 = vmatprep.mubr.f32.mxu0 0.0
    %5095 = vmatmul.mubr.f32.gmra.mxu0 %v4999
    %v5096 = vpop.f32.mrf.mxu0
    %v5097 = vadd.f32 0.0, %v5096
    %v5098 = vpop.f32.mrf.mxu0
    %5099 = vmatprep.mubr.f32.mxu0 0.0
    %5100 = vmatmul.mubr.f32.gmra.mxu0 %v5002
    %v5101 = vpop.f32.mrf.mxu0
    %v5102 = vadd.f32 0.0, %v5101
    %v5103 = vpop.f32.mrf.mxu0
    %5104 = vmatprep.mubr.f32.mxu0 0.0
    %5105 = vmatmul.mubr.f32.gmra.mxu0 %v5005
    %v5106 = vpop.f32.mrf.mxu0
    %v5107 = vadd.f32 0.0, %v5106
    %v5108 = vpop.f32.mrf.mxu0
    %5109 = vmatprep.mubr.f32.mxu0 0.0
    %5110 = vmatmul.mubr.f32.gmra.mxu0 %v5008
    %v5111 = vpop.f32.mrf.mxu0
    %v5112 = vadd.f32 0.0, %v5111
    %v5113 = vpop.f32.mrf.mxu0
    %5114 = vdwg.mxu0
    %v5116 = vsel %vm1862, %v4807, 0
    %v5119 = vsel %vm1862, %v4812, 0
    %v5122 = vsel %vm1862, %v4817, 0
    %v5125 = vsel %vm1862, %v4822, 0
    %v5128 = vsel %vm1862, %v4827, 0
    %v5131 = vsel %vm1862, %v4832, 0
    %v5134 = vsel %vm1862, %v4837, 0
    %v5137 = vsel %vm1862, %v4842, 0
    %5139 = vmatprep.subr.mxu0 0.0
    %5140 = vmatpush1.msra.mxu0 0.0
    %5141 = vmatprep.subr.mxu0 0.0
    %5142 = vmatpush1.msra.mxu0 0.0
    %5143 = vmatprep.subr.mxu0 0.0
    %5144 = vmatpush1.msra.mxu0 0.0
    %5145 = vmatprep.subr.mxu0 0.0
    %5146 = vmatpush1.msra.mxu0 0.0
    %5147 = vmatprep.subr.mxu0 0.0
    %5148 = vmatpush1.msra.mxu0 0.0
    %5149 = vmatprep.subr.mxu0 0.0
    %5150 = vmatpush1.msra.mxu0 0.0
    %5151 = vmatprep.subr.mxu0 0.0
    %5152 = vmatpush1.msra.mxu0 0.0
    %5153 = vmatprep.subr.mxu0 0.0
    %5154 = vmatpush1.msra.mxu0 0.0
    %5155 = vmatprep.subr.mxu0 0.0
    %5156 = vmatpush1.msra.mxu0 0.0
    %5157 = vmatprep.subr.mxu0 0.0
    %5158 = vmatpush1.msra.mxu0 0.0
    %5159 = vmatprep.subr.mxu0 0.0
    %5160 = vmatpush1.msra.mxu0 0.0
    %5161 = vmatprep.subr.mxu0 0.0
    %5162 = vmatpush1.msra.mxu0 0.0
    %5163 = vmatprep.subr.mxu0 0.0
    %5164 = vmatpush1.msra.mxu0 0.0
    %5165 = vmatprep.subr.mxu0 0.0
    %5166 = vmatpush1.msra.mxu0 0.0
    %5167 = vmatprep.subr.mxu0 0.0
    %5168 = vmatpush1.msra.mxu0 0.0
    %5169 = vmatprep.subr.mxu0 0.0
    %5170 = vmatpush1.msra.mxu0 %v4845
    %5171 = vmatprep.subr.mxu0 0.0
    %5172 = vmatpush2.msra.mxu0 0.0
    %5173 = vmatprep.subr.mxu0 0.0
    %5174 = vmatpush2.msra.mxu0 0.0
    %5175 = vmatprep.subr.mxu0 0.0
    %5176 = vmatpush2.msra.mxu0 0.0
    %5177 = vmatprep.subr.mxu0 0.0
    %5178 = vmatpush2.msra.mxu0 0.0
    %5179 = vmatprep.subr.mxu0 0.0
    %5180 = vmatpush2.msra.mxu0 0.0
    %5181 = vmatprep.subr.mxu0 0.0
    %5182 = vmatpush2.msra.mxu0 0.0
    %5183 = vmatprep.subr.mxu0 0.0
    %5184 = vmatpush2.msra.mxu0 0.0
    %5185 = vmatprep.subr.mxu0 0.0
    %5186 = vmatpush2.msra.mxu0 0.0
    %5187 = vmatprep.subr.mxu0 0.0
    %5188 = vmatpush2.msra.mxu0 0.0
    %5189 = vmatprep.subr.mxu0 0.0
    %5190 = vmatpush2.msra.mxu0 0.0
    %5191 = vmatprep.subr.mxu0 0.0
    %5192 = vmatpush2.msra.mxu0 0.0
    %5193 = vmatprep.subr.mxu0 0.0
    %5194 = vmatpush2.msra.mxu0 0.0
    %5195 = vmatprep.subr.mxu0 0.0
    %5196 = vmatpush2.msra.mxu0 0.0
    %5197 = vmatprep.subr.mxu0 0.0
    %5198 = vmatpush2.msra.mxu0 0.0
    %5199 = vmatprep.subr.mxu0 0.0
    %5200 = vmatpush2.msra.mxu0 0.0
    %5201 = vmatprep.subr.mxu0 0.0
    %5202 = vmatpush2.msra.mxu0 0.0
    %5203 = vmatprep.mubr.f32.mxu0 0.0
    %5204 = vmatmul.mubr.f32.gmra.mxu0 %v5116
    %v5205 = vpop.f32.mrf.mxu0
    %v5206 = vadd.f32 %v5077, %v5205
    %v5207 = vpop.f32.mrf.mxu0
    %5208 = vmatprep.mubr.f32.mxu0 0.0
    %5209 = vmatmul.mubr.f32.gmra.mxu0 %v5119
    %v5210 = vpop.f32.mrf.mxu0
    %v5211 = vadd.f32 %v5082, %v5210
    %v5212 = vpop.f32.mrf.mxu0
    %5213 = vmatprep.mubr.f32.mxu0 0.0
    %5214 = vmatmul.mubr.f32.gmra.mxu0 %v5122
    %v5215 = vpop.f32.mrf.mxu0
    %v5216 = vadd.f32 %v5087, %v5215
    %v5217 = vpop.f32.mrf.mxu0
    %5218 = vmatprep.mubr.f32.mxu0 0.0
    %5219 = vmatmul.mubr.f32.gmra.mxu0 %v5125
    %v5220 = vpop.f32.mrf.mxu0
    %v5221 = vadd.f32 %v5092, %v5220
    %v5222 = vpop.f32.mrf.mxu0
    %5223 = vmatprep.mubr.f32.mxu0 0.0
    %5224 = vmatmul.mubr.f32.gmra.mxu0 %v5128
    %v5225 = vpop.f32.mrf.mxu0
    %v5226 = vadd.f32 %v5097, %v5225
    %v5227 = vpop.f32.mrf.mxu0
    %5228 = vmatprep.mubr.f32.mxu0 0.0
    %5229 = vmatmul.mubr.f32.gmra.mxu0 %v5131
    %v5230 = vpop.f32.mrf.mxu0
    %v5231 = vadd.f32 %v5102, %v5230
    %v5232 = vpop.f32.mrf.mxu0
    %5233 = vmatprep.mubr.f32.mxu0 0.0
    %5234 = vmatmul.mubr.f32.gmra.mxu0 %v5134
    %v5235 = vpop.f32.mrf.mxu0
    %v5236 = vadd.f32 %v5107, %v5235
    %v5237 = vpop.f32.mrf.mxu0
    %5238 = vmatprep.mubr.f32.mxu0 0.0
    %5239 = vmatmul.mubr.f32.gmra.mxu0 %v5137
    %v5240 = vpop.f32.mrf.mxu0
    %v5241 = vadd.f32 %v5112, %v5240
    %v5242 = vpop.f32.mrf.mxu0
    %5243 = vdwg.mxu0
    %s5244 = scalar_lea.vmem [#allocation18], 128
    %v5245 = vld [vmem:[%s5244] sm:$0xff]
    %v5246 = vld [vmem:[%s5244 + $0x8] sm:$0xff]
    %v5247 = vld [vmem:[%s5244 + $0x10] sm:$0xff]
    %v5248 = vld [vmem:[%s5244 + $0x18] sm:$0xff]
    %v5249 = vld [vmem:[%s5244 + $0x20] sm:$0xff]
    %v5250 = vld [vmem:[%s5244 + $0x28] sm:$0xff]
    %v5251 = vld [vmem:[%s5244 + $0x30] sm:$0xff]
    %v5252 = vld [vmem:[%s5244 + $0x38] sm:$0xff]
    %v5254 = vsel %vm1591, %v5245, 0
    %v5257 = vsel %vm1591, %v5246, 0
    %v5260 = vsel %vm1591, %v5247, 0
    %v5263 = vsel %vm1591, %v5248, 0
    %v5266 = vsel %vm1591, %v5249, 0
    %v5269 = vsel %vm1591, %v5250, 0
    %v5272 = vsel %vm1591, %v5251, 0
    %v5275 = vsel %vm1591, %v5252, 0
    %5277 = vmatprep.subr.mxu0 0.0
    %5278 = vmatpush1.msra.mxu0 0.0
    %5279 = vmatprep.subr.mxu0 0.0
    %5280 = vmatpush1.msra.mxu0 0.0
    %5281 = vmatprep.subr.mxu0 0.0
    %5282 = vmatpush1.msra.mxu0 0.0
    %5283 = vmatprep.subr.mxu0 0.0
    %5284 = vmatpush1.msra.mxu0 0.0
    %5285 = vmatprep.subr.mxu0 0.0
    %5286 = vmatpush1.msra.mxu0 0.0
    %5287 = vmatprep.subr.mxu0 0.0
    %5288 = vmatpush1.msra.mxu0 0.0
    %5289 = vmatprep.subr.mxu0 0.0
    %5290 = vmatpush1.msra.mxu0 0.0
    %5291 = vmatprep.subr.mxu0 0.0
    %5292 = vmatpush1.msra.mxu0 0.0
    %5293 = vmatprep.subr.mxu0 0.0
    %5294 = vmatpush1.msra.mxu0 %v4402
    %5295 = vmatprep.subr.mxu0 0.0
    %5296 = vmatpush1.msra.mxu0 %v4401
    %5297 = vmatprep.subr.mxu0 0.0
    %5298 = vmatpush1.msra.mxu0 %v4400
    %5299 = vmatprep.subr.mxu0 0.0
    %5300 = vmatpush1.msra.mxu0 %v4399
    %5301 = vmatprep.subr.mxu0 0.0
    %5302 = vmatpush1.msra.mxu0 %v4398
    %5303 = vmatprep.subr.mxu0 0.0
    %5304 = vmatpush1.msra.mxu0 %v4397
    %5305 = vmatprep.subr.mxu0 0.0
    %5306 = vmatpush1.msra.mxu0 %v4396
    %5307 = vmatprep.subr.mxu0 0.0
    %5308 = vmatpush1.msra.mxu0 %v4395
    %5309 = vmatprep.subr.mxu0 0.0
    %5310 = vmatpush2.msra.mxu0 0.0
    %5311 = vmatprep.subr.mxu0 0.0
    %5312 = vmatpush2.msra.mxu0 0.0
    %5313 = vmatprep.subr.mxu0 0.0
    %5314 = vmatpush2.msra.mxu0 0.0
    %5315 = vmatprep.subr.mxu0 0.0
    %5316 = vmatpush2.msra.mxu0 0.0
    %5317 = vmatprep.subr.mxu0 0.0
    %5318 = vmatpush2.msra.mxu0 0.0
    %5319 = vmatprep.subr.mxu0 0.0
    %5320 = vmatpush2.msra.mxu0 0.0
    %5321 = vmatprep.subr.mxu0 0.0
    %5322 = vmatpush2.msra.mxu0 0.0
    %5323 = vmatprep.subr.mxu0 0.0
    %5324 = vmatpush2.msra.mxu0 0.0
    %5325 = vmatprep.subr.mxu0 0.0
    %5326 = vmatpush2.msra.mxu0 0.0
    %5327 = vmatprep.subr.mxu0 0.0
    %5328 = vmatpush2.msra.mxu0 0.0
    %5329 = vmatprep.subr.mxu0 0.0
    %5330 = vmatpush2.msra.mxu0 0.0
    %5331 = vmatprep.subr.mxu0 0.0
    %5332 = vmatpush2.msra.mxu0 0.0
    %5333 = vmatprep.subr.mxu0 0.0
    %5334 = vmatpush2.msra.mxu0 0.0
    %5335 = vmatprep.subr.mxu0 0.0
    %5336 = vmatpush2.msra.mxu0 0.0
    %5337 = vmatprep.subr.mxu0 0.0
    %5338 = vmatpush2.msra.mxu0 0.0
    %5339 = vmatprep.subr.mxu0 0.0
    %5340 = vmatpush2.msra.mxu0 0.0
    %5341 = vmatprep.mubr.f32.mxu0 0.0
    %5342 = vmatmul.mubr.f32.gmra.mxu0 %v5254
    %v5343 = vpop.f32.mrf.mxu0
    %v5344 = vadd.f32 0.0, %v5343
    %v5345 = vpop.f32.mrf.mxu0
    %5346 = vmatprep.mubr.f32.mxu0 0.0
    %5347 = vmatmul.mubr.f32.gmra.mxu0 %v5257
    %v5348 = vpop.f32.mrf.mxu0
    %v5349 = vadd.f32 0.0, %v5348
    %v5350 = vpop.f32.mrf.mxu0
    %5351 = vmatprep.mubr.f32.mxu0 0.0
    %5352 = vmatmul.mubr.f32.gmra.mxu0 %v5260
    %v5353 = vpop.f32.mrf.mxu0
    %v5354 = vadd.f32 0.0, %v5353
    %v5355 = vpop.f32.mrf.mxu0
    %5356 = vmatprep.mubr.f32.mxu0 0.0
    %5357 = vmatmul.mubr.f32.gmra.mxu0 %v5263
    %v5358 = vpop.f32.mrf.mxu0
    %v5359 = vadd.f32 0.0, %v5358
    %v5360 = vpop.f32.mrf.mxu0
    %5361 = vmatprep.mubr.f32.mxu0 0.0
    %5362 = vmatmul.mubr.f32.gmra.mxu0 %v5266
    %v5363 = vpop.f32.mrf.mxu0
    %v5364 = vadd.f32 0.0, %v5363
    %v5365 = vpop.f32.mrf.mxu0
    %5366 = vmatprep.mubr.f32.mxu0 0.0
    %5367 = vmatmul.mubr.f32.gmra.mxu0 %v5269
    %v5368 = vpop.f32.mrf.mxu0
    %v5369 = vadd.f32 0.0, %v5368
    %v5370 = vpop.f32.mrf.mxu0
    %5371 = vmatprep.mubr.f32.mxu0 0.0
    %5372 = vmatmul.mubr.f32.gmra.mxu0 %v5272
    %v5373 = vpop.f32.mrf.mxu0
    %v5374 = vadd.f32 0.0, %v5373
    %v5375 = vpop.f32.mrf.mxu0
    %5376 = vmatprep.mubr.f32.mxu0 0.0
    %5377 = vmatmul.mubr.f32.gmra.mxu0 %v5275
    %v5378 = vpop.f32.mrf.mxu0
    %v5379 = vadd.f32 0.0, %v5378
    %v5380 = vpop.f32.mrf.mxu0
    %5381 = vdwg.mxu0
    %s5382 = scalar_lea.vmem [#allocation19], 16
    %v5383 = vld [vmem:[%s5382] sm:$0xff]
    %v5385 = vsel %vm1862, %v5344, 0
    %v5388 = vsel %vm1862, %v5349, 0
    %v5391 = vsel %vm1862, %v5354, 0
    %v5394 = vsel %vm1862, %v5359, 0
    %v5397 = vsel %vm1862, %v5364, 0
    %v5400 = vsel %vm1862, %v5369, 0
    %v5403 = vsel %vm1862, %v5374, 0
    %v5406 = vsel %vm1862, %v5379, 0
    %5408 = vmatprep.subr.mxu0 0.0
    %5409 = vmatpush1.msra.mxu0 0.0
    %5410 = vmatprep.subr.mxu0 0.0
    %5411 = vmatpush1.msra.mxu0 0.0
    %5412 = vmatprep.subr.mxu0 0.0
    %5413 = vmatpush1.msra.mxu0 0.0
    %5414 = vmatprep.subr.mxu0 0.0
    %5415 = vmatpush1.msra.mxu0 0.0
    %5416 = vmatprep.subr.mxu0 0.0
    %5417 = vmatpush1.msra.mxu0 0.0
    %5418 = vmatprep.subr.mxu0 0.0
    %5419 = vmatpush1.msra.mxu0 0.0
    %5420 = vmatprep.subr.mxu0 0.0
    %5421 = vmatpush1.msra.mxu0 0.0
    %5422 = vmatprep.subr.mxu0 0.0
    %5423 = vmatpush1.msra.mxu0 0.0
    %5424 = vmatprep.subr.mxu0 0.0
    %5425 = vmatpush1.msra.mxu0 0.0
    %5426 = vmatprep.subr.mxu0 0.0
    %5427 = vmatpush1.msra.mxu0 0.0
    %5428 = vmatprep.subr.mxu0 0.0
    %5429 = vmatpush1.msra.mxu0 0.0
    %5430 = vmatprep.subr.mxu0 0.0
    %5431 = vmatpush1.msra.mxu0 0.0
    %5432 = vmatprep.subr.mxu0 0.0
    %5433 = vmatpush1.msra.mxu0 0.0
    %5434 = vmatprep.subr.mxu0 0.0
    %5435 = vmatpush1.msra.mxu0 0.0
    %5436 = vmatprep.subr.mxu0 0.0
    %5437 = vmatpush1.msra.mxu0 0.0
    %5438 = vmatprep.subr.mxu0 0.0
    %5439 = vmatpush1.msra.mxu0 %v5383
    %5440 = vmatprep.subr.mxu0 0.0
    %5441 = vmatpush2.msra.mxu0 0.0
    %5442 = vmatprep.subr.mxu0 0.0
    %5443 = vmatpush2.msra.mxu0 0.0
    %5444 = vmatprep.subr.mxu0 0.0
    %5445 = vmatpush2.msra.mxu0 0.0
    %5446 = vmatprep.subr.mxu0 0.0
    %5447 = vmatpush2.msra.mxu0 0.0
    %5448 = vmatprep.subr.mxu0 0.0
    %5449 = vmatpush2.msra.mxu0 0.0
    %5450 = vmatprep.subr.mxu0 0.0
    %5451 = vmatpush2.msra.mxu0 0.0
    %5452 = vmatprep.subr.mxu0 0.0
    %5453 = vmatpush2.msra.mxu0 0.0
    %5454 = vmatprep.subr.mxu0 0.0
    %5455 = vmatpush2.msra.mxu0 0.0
    %5456 = vmatprep.subr.mxu0 0.0
    %5457 = vmatpush2.msra.mxu0 0.0
    %5458 = vmatprep.subr.mxu0 0.0
    %5459 = vmatpush2.msra.mxu0 0.0
    %5460 = vmatprep.subr.mxu0 0.0
    %5461 = vmatpush2.msra.mxu0 0.0
    %5462 = vmatprep.subr.mxu0 0.0
    %5463 = vmatpush2.msra.mxu0 0.0
    %5464 = vmatprep.subr.mxu0 0.0
    %5465 = vmatpush2.msra.mxu0 0.0
    %5466 = vmatprep.subr.mxu0 0.0
    %5467 = vmatpush2.msra.mxu0 0.0
    %5468 = vmatprep.subr.mxu0 0.0
    %5469 = vmatpush2.msra.mxu0 0.0
    %5470 = vmatprep.subr.mxu0 0.0
    %5471 = vmatpush2.msra.mxu0 0.0
    %5472 = vmatprep.mubr.f32.mxu0 0.0
    %5473 = vmatmul.mubr.f32.gmra.mxu0 %v5385
    %v5474 = vpop.f32.mrf.mxu0
    %v5475 = vadd.f32 0.0, %v5474
    %v5476 = vpop.f32.mrf.mxu0
    %5477 = vmatprep.mubr.f32.mxu0 0.0
    %5478 = vmatmul.mubr.f32.gmra.mxu0 %v5388
    %v5479 = vpop.f32.mrf.mxu0
    %v5480 = vadd.f32 0.0, %v5479
    %v5481 = vpop.f32.mrf.mxu0
    %5482 = vmatprep.mubr.f32.mxu0 0.0
    %5483 = vmatmul.mubr.f32.gmra.mxu0 %v5391
    %v5484 = vpop.f32.mrf.mxu0
    %v5485 = vadd.f32 0.0, %v5484
    %v5486 = vpop.f32.mrf.mxu0
    %5487 = vmatprep.mubr.f32.mxu0 0.0
    %5488 = vmatmul.mubr.f32.gmra.mxu0 %v5394
    %v5489 = vpop.f32.mrf.mxu0
    %v5490 = vadd.f32 0.0, %v5489
    %v5491 = vpop.f32.mrf.mxu0
    %5492 = vmatprep.mubr.f32.mxu0 0.0
    %5493 = vmatmul.mubr.f32.gmra.mxu0 %v5397
    %v5494 = vpop.f32.mrf.mxu0
    %v5495 = vadd.f32 0.0, %v5494
    %v5496 = vpop.f32.mrf.mxu0
    %5497 = vmatprep.mubr.f32.mxu0 0.0
    %5498 = vmatmul.mubr.f32.gmra.mxu0 %v5400
    %v5499 = vpop.f32.mrf.mxu0
    %v5500 = vadd.f32 0.0, %v5499
    %v5501 = vpop.f32.mrf.mxu0
    %5502 = vmatprep.mubr.f32.mxu0 0.0
    %5503 = vmatmul.mubr.f32.gmra.mxu0 %v5403
    %v5504 = vpop.f32.mrf.mxu0
    %v5505 = vadd.f32 0.0, %v5504
    %v5506 = vpop.f32.mrf.mxu0
    %5507 = vmatprep.mubr.f32.mxu0 0.0
    %5508 = vmatmul.mubr.f32.gmra.mxu0 %v5406
    %v5509 = vpop.f32.mrf.mxu0
    %v5510 = vadd.f32 0.0, %v5509
    %v5511 = vpop.f32.mrf.mxu0
    %5512 = vdwg.mxu0
    %v5513 = vadd.f32 %v5206, %v5475
    %v5514 = vadd.f32 %v5211, %v5480
    %v5515 = vadd.f32 %v5216, %v5485
    %v5516 = vadd.f32 %v5221, %v5490
    %v5517 = vadd.f32 %v5226, %v5495
    %v5518 = vadd.f32 %v5231, %v5500
    %v5519 = vadd.f32 %v5236, %v5505
    %v5520 = vadd.f32 %v5241, %v5510
    %s5521 = scalar_lea.vmem [#allocation18], 192
    %v5522 = vld [vmem:[%s5521] sm:$0xff]
    %v5523 = vld [vmem:[%s5521 + $0x8] sm:$0xff]
    %v5524 = vld [vmem:[%s5521 + $0x10] sm:$0xff]
    %v5525 = vld [vmem:[%s5521 + $0x18] sm:$0xff]
    %v5526 = vld [vmem:[%s5521 + $0x20] sm:$0xff]
    %v5527 = vld [vmem:[%s5521 + $0x28] sm:$0xff]
    %v5528 = vld [vmem:[%s5521 + $0x30] sm:$0xff]
    %v5529 = vld [vmem:[%s5521 + $0x38] sm:$0xff]
    %v5531 = vsel %vm1591, %v5522, 0
    %v5534 = vsel %vm1591, %v5523, 0
    %v5537 = vsel %vm1591, %v5524, 0
    %v5540 = vsel %vm1591, %v5525, 0
    %v5543 = vsel %vm1591, %v5526, 0
    %v5546 = vsel %vm1591, %v5527, 0
    %v5549 = vsel %vm1591, %v5528, 0
    %v5552 = vsel %vm1591, %v5529, 0
    %5554 = vmatprep.subr.mxu0 0.0
    %5555 = vmatpush1.msra.mxu0 0.0
    %5556 = vmatprep.subr.mxu0 0.0
    %5557 = vmatpush1.msra.mxu0 0.0
    %5558 = vmatprep.subr.mxu0 0.0
    %5559 = vmatpush1.msra.mxu0 0.0
    %5560 = vmatprep.subr.mxu0 0.0
    %5561 = vmatpush1.msra.mxu0 0.0
    %5562 = vmatprep.subr.mxu0 0.0
    %5563 = vmatpush1.msra.mxu0 0.0
    %5564 = vmatprep.subr.mxu0 0.0
    %5565 = vmatpush1.msra.mxu0 0.0
    %5566 = vmatprep.subr.mxu0 0.0
    %5567 = vmatpush1.msra.mxu0 0.0
    %5568 = vmatprep.subr.mxu0 0.0
    %5569 = vmatpush1.msra.mxu0 0.0
    %5570 = vmatprep.subr.mxu0 0.0
    %5571 = vmatpush1.msra.mxu0 %v4402
    %5572 = vmatprep.subr.mxu0 0.0
    %5573 = vmatpush1.msra.mxu0 %v4401
    %5574 = vmatprep.subr.mxu0 0.0
    %5575 = vmatpush1.msra.mxu0 %v4400
    %5576 = vmatprep.subr.mxu0 0.0
    %5577 = vmatpush1.msra.mxu0 %v4399
    %5578 = vmatprep.subr.mxu0 0.0
    %5579 = vmatpush1.msra.mxu0 %v4398
    %5580 = vmatprep.subr.mxu0 0.0
    %5581 = vmatpush1.msra.mxu0 %v4397
    %5582 = vmatprep.subr.mxu0 0.0
    %5583 = vmatpush1.msra.mxu0 %v4396
    %5584 = vmatprep.subr.mxu0 0.0
    %5585 = vmatpush1.msra.mxu0 %v4395
    %5586 = vmatprep.subr.mxu0 0.0
    %5587 = vmatpush2.msra.mxu0 0.0
    %5588 = vmatprep.subr.mxu0 0.0
    %5589 = vmatpush2.msra.mxu0 0.0
    %5590 = vmatprep.subr.mxu0 0.0
    %5591 = vmatpush2.msra.mxu0 0.0
    %5592 = vmatprep.subr.mxu0 0.0
    %5593 = vmatpush2.msra.mxu0 0.0
    %5594 = vmatprep.subr.mxu0 0.0
    %5595 = vmatpush2.msra.mxu0 0.0
    %5596 = vmatprep.subr.mxu0 0.0
    %5597 = vmatpush2.msra.mxu0 0.0
    %5598 = vmatprep.subr.mxu0 0.0
    %5599 = vmatpush2.msra.mxu0 0.0
    %5600 = vmatprep.subr.mxu0 0.0
    %5601 = vmatpush2.msra.mxu0 0.0
    %5602 = vmatprep.subr.mxu0 0.0
    %5603 = vmatpush2.msra.mxu0 0.0
    %5604 = vmatprep.subr.mxu0 0.0
    %5605 = vmatpush2.msra.mxu0 0.0
    %5606 = vmatprep.subr.mxu0 0.0
    %5607 = vmatpush2.msra.mxu0 0.0
    %5608 = vmatprep.subr.mxu0 0.0
    %5609 = vmatpush2.msra.mxu0 0.0
    %5610 = vmatprep.subr.mxu0 0.0
    %5611 = vmatpush2.msra.mxu0 0.0
    %5612 = vmatprep.subr.mxu0 0.0
    %5613 = vmatpush2.msra.mxu0 0.0
    %5614 = vmatprep.subr.mxu0 0.0
    %5615 = vmatpush2.msra.mxu0 0.0
    %5616 = vmatprep.subr.mxu0 0.0
    %5617 = vmatpush2.msra.mxu0 0.0
    %5618 = vmatprep.mubr.f32.mxu0 0.0
    %5619 = vmatmul.mubr.f32.gmra.mxu0 %v5531
    %v5620 = vpop.f32.mrf.mxu0
    %v5621 = vadd.f32 0.0, %v5620
    %v5622 = vpop.f32.mrf.mxu0
    %5623 = vmatprep.mubr.f32.mxu0 0.0
    %5624 = vmatmul.mubr.f32.gmra.mxu0 %v5534
    %v5625 = vpop.f32.mrf.mxu0
    %v5626 = vadd.f32 0.0, %v5625
    %v5627 = vpop.f32.mrf.mxu0
    %5628 = vmatprep.mubr.f32.mxu0 0.0
    %5629 = vmatmul.mubr.f32.gmra.mxu0 %v5537
    %v5630 = vpop.f32.mrf.mxu0
    %v5631 = vadd.f32 0.0, %v5630
    %v5632 = vpop.f32.mrf.mxu0
    %5633 = vmatprep.mubr.f32.mxu0 0.0
    %5634 = vmatmul.mubr.f32.gmra.mxu0 %v5540
    %v5635 = vpop.f32.mrf.mxu0
    %v5636 = vadd.f32 0.0, %v5635
    %v5637 = vpop.f32.mrf.mxu0
    %5638 = vmatprep.mubr.f32.mxu0 0.0
    %5639 = vmatmul.mubr.f32.gmra.mxu0 %v5543
    %v5640 = vpop.f32.mrf.mxu0
    %v5641 = vadd.f32 0.0, %v5640
    %v5642 = vpop.f32.mrf.mxu0
    %5643 = vmatprep.mubr.f32.mxu0 0.0
    %5644 = vmatmul.mubr.f32.gmra.mxu0 %v5546
    %v5645 = vpop.f32.mrf.mxu0
    %v5646 = vadd.f32 0.0, %v5645
    %v5647 = vpop.f32.mrf.mxu0
    %5648 = vmatprep.mubr.f32.mxu0 0.0
    %5649 = vmatmul.mubr.f32.gmra.mxu0 %v5549
    %v5650 = vpop.f32.mrf.mxu0
    %v5651 = vadd.f32 0.0, %v5650
    %v5652 = vpop.f32.mrf.mxu0
    %5653 = vmatprep.mubr.f32.mxu0 0.0
    %5654 = vmatmul.mubr.f32.gmra.mxu0 %v5552
    %v5655 = vpop.f32.mrf.mxu0
    %v5656 = vadd.f32 0.0, %v5655
    %v5657 = vpop.f32.mrf.mxu0
    %5658 = vdwg.mxu0
    %s5659 = scalar_lea.vmem [#allocation19], 24
    %v5660 = vld [vmem:[%s5659] sm:$0xff]
    %v5662 = vsel %vm1862, %v5621, 0
    %v5665 = vsel %vm1862, %v5626, 0
    %v5668 = vsel %vm1862, %v5631, 0
    %v5671 = vsel %vm1862, %v5636, 0
    %v5674 = vsel %vm1862, %v5641, 0
    %v5677 = vsel %vm1862, %v5646, 0
    %v5680 = vsel %vm1862, %v5651, 0
    %v5683 = vsel %vm1862, %v5656, 0
    %5685 = vmatprep.subr.mxu0 0.0
    %5686 = vmatpush1.msra.mxu0 0.0
    %5687 = vmatprep.subr.mxu0 0.0
    %5688 = vmatpush1.msra.mxu0 0.0
    %5689 = vmatprep.subr.mxu0 0.0
    %5690 = vmatpush1.msra.mxu0 0.0
    %5691 = vmatprep.subr.mxu0 0.0
    %5692 = vmatpush1.msra.mxu0 0.0
    %5693 = vmatprep.subr.mxu0 0.0
    %5694 = vmatpush1.msra.mxu0 0.0
    %5695 = vmatprep.subr.mxu0 0.0
    %5696 = vmatpush1.msra.mxu0 0.0
    %5697 = vmatprep.subr.mxu0 0.0
    %5698 = vmatpush1.msra.mxu0 0.0
    %5699 = vmatprep.subr.mxu0 0.0
    %5700 = vmatpush1.msra.mxu0 0.0
    %5701 = vmatprep.subr.mxu0 0.0
    %5702 = vmatpush1.msra.mxu0 0.0
    %5703 = vmatprep.subr.mxu0 0.0
    %5704 = vmatpush1.msra.mxu0 0.0
    %5705 = vmatprep.subr.mxu0 0.0
    %5706 = vmatpush1.msra.mxu0 0.0
    %5707 = vmatprep.subr.mxu0 0.0
    %5708 = vmatpush1.msra.mxu0 0.0
    %5709 = vmatprep.subr.mxu0 0.0
    %5710 = vmatpush1.msra.mxu0 0.0
    %5711 = vmatprep.subr.mxu0 0.0
    %5712 = vmatpush1.msra.mxu0 0.0
    %5713 = vmatprep.subr.mxu0 0.0
    %5714 = vmatpush1.msra.mxu0 0.0
    %5715 = vmatprep.subr.mxu0 0.0
    %5716 = vmatpush1.msra.mxu0 %v5660
    %5717 = vmatprep.subr.mxu0 0.0
    %5718 = vmatpush2.msra.mxu0 0.0
    %5719 = vmatprep.subr.mxu0 0.0
    %5720 = vmatpush2.msra.mxu0 0.0
    %5721 = vmatprep.subr.mxu0 0.0
    %5722 = vmatpush2.msra.mxu0 0.0
    %5723 = vmatprep.subr.mxu0 0.0
    %5724 = vmatpush2.msra.mxu0 0.0
    %5725 = vmatprep.subr.mxu0 0.0
    %5726 = vmatpush2.msra.mxu0 0.0
    %5727 = vmatprep.subr.mxu0 0.0
    %5728 = vmatpush2.msra.mxu0 0.0
    %5729 = vmatprep.subr.mxu0 0.0
    %5730 = vmatpush2.msra.mxu0 0.0
    %5731 = vmatprep.subr.mxu0 0.0
    %5732 = vmatpush2.msra.mxu0 0.0
    %5733 = vmatprep.subr.mxu0 0.0
    %5734 = vmatpush2.msra.mxu0 0.0
    %5735 = vmatprep.subr.mxu0 0.0
    %5736 = vmatpush2.msra.mxu0 0.0
    %5737 = vmatprep.subr.mxu0 0.0
    %5738 = vmatpush2.msra.mxu0 0.0
    %5739 = vmatprep.subr.mxu0 0.0
    %5740 = vmatpush2.msra.mxu0 0.0
    %5741 = vmatprep.subr.mxu0 0.0
    %5742 = vmatpush2.msra.mxu0 0.0
    %5743 = vmatprep.subr.mxu0 0.0
    %5744 = vmatpush2.msra.mxu0 0.0
    %5745 = vmatprep.subr.mxu0 0.0
    %5746 = vmatpush2.msra.mxu0 0.0
    %5747 = vmatprep.subr.mxu0 0.0
    %5748 = vmatpush2.msra.mxu0 0.0
    %5749 = vmatprep.mubr.f32.mxu0 0.0
    %5750 = vmatmul.mubr.f32.gmra.mxu0 %v5662
    %v5751 = vpop.f32.mrf.mxu0
    %v5752 = vadd.f32 0.0, %v5751
    %v5753 = vpop.f32.mrf.mxu0
    %5754 = vmatprep.mubr.f32.mxu0 0.0
    %5755 = vmatmul.mubr.f32.gmra.mxu0 %v5665
    %v5756 = vpop.f32.mrf.mxu0
    %v5757 = vadd.f32 0.0, %v5756
    %v5758 = vpop.f32.mrf.mxu0
    %5759 = vmatprep.mubr.f32.mxu0 0.0
    %5760 = vmatmul.mubr.f32.gmra.mxu0 %v5668
    %v5761 = vpop.f32.mrf.mxu0
    %v5762 = vadd.f32 0.0, %v5761
    %v5763 = vpop.f32.mrf.mxu0
    %5764 = vmatprep.mubr.f32.mxu0 0.0
    %5765 = vmatmul.mubr.f32.gmra.mxu0 %v5671
    %v5766 = vpop.f32.mrf.mxu0
    %v5767 = vadd.f32 0.0, %v5766
    %v5768 = vpop.f32.mrf.mxu0
    %5769 = vmatprep.mubr.f32.mxu0 0.0
    %5770 = vmatmul.mubr.f32.gmra.mxu0 %v5674
    %v5771 = vpop.f32.mrf.mxu0
    %v5772 = vadd.f32 0.0, %v5771
    %v5773 = vpop.f32.mrf.mxu0
    %5774 = vmatprep.mubr.f32.mxu0 0.0
    %5775 = vmatmul.mubr.f32.gmra.mxu0 %v5677
    %v5776 = vpop.f32.mrf.mxu0
    %v5777 = vadd.f32 0.0, %v5776
    %v5778 = vpop.f32.mrf.mxu0
    %5779 = vmatprep.mubr.f32.mxu0 0.0
    %5780 = vmatmul.mubr.f32.gmra.mxu0 %v5680
    %v5781 = vpop.f32.mrf.mxu0
    %v5782 = vadd.f32 0.0, %v5781
    %v5783 = vpop.f32.mrf.mxu0
    %5784 = vmatprep.mubr.f32.mxu0 0.0
    %5785 = vmatmul.mubr.f32.gmra.mxu0 %v5683
    %v5786 = vpop.f32.mrf.mxu0
    %v5787 = vadd.f32 0.0, %v5786
    %v5788 = vpop.f32.mrf.mxu0
    %5789 = vdwg.mxu0
    %v5790 = vadd.f32 %v5513, %v5752
    %v5791 = vadd.f32 %v5514, %v5757
    %v5792 = vadd.f32 %v5515, %v5762
    %v5793 = vadd.f32 %v5516, %v5767
    %v5794 = vadd.f32 %v5517, %v5772
    %v5795 = vadd.f32 %v5518, %v5777
    %v5796 = vadd.f32 %v5519, %v5782
    %v5797 = vadd.f32 %v5520, %v5787
    %s5798 = scalar_lea.vmem [#allocation18], 256
    %v5799 = vld [vmem:[%s5798] sm:$0xff]
    %v5800 = vld [vmem:[%s5798 + $0x8] sm:$0xff]
    %v5801 = vld [vmem:[%s5798 + $0x10] sm:$0xff]
    %v5802 = vld [vmem:[%s5798 + $0x18] sm:$0xff]
    %v5803 = vld [vmem:[%s5798 + $0x20] sm:$0xff]
    %v5804 = vld [vmem:[%s5798 + $0x28] sm:$0xff]
    %v5805 = vld [vmem:[%s5798 + $0x30] sm:$0xff]
    %v5806 = vld [vmem:[%s5798 + $0x38] sm:$0xff]
    %v5808 = vsel %vm1591, %v5799, 0
    %v5811 = vsel %vm1591, %v5800, 0
    %v5814 = vsel %vm1591, %v5801, 0
    %v5817 = vsel %vm1591, %v5802, 0
    %v5820 = vsel %vm1591, %v5803, 0
    %v5823 = vsel %vm1591, %v5804, 0
    %v5826 = vsel %vm1591, %v5805, 0
    %v5829 = vsel %vm1591, %v5806, 0
    %5831 = vmatprep.subr.mxu0 0.0
    %5832 = vmatpush1.msra.mxu0 0.0
    %5833 = vmatprep.subr.mxu0 0.0
    %5834 = vmatpush1.msra.mxu0 0.0
    %5835 = vmatprep.subr.mxu0 0.0
    %5836 = vmatpush1.msra.mxu0 0.0
    %5837 = vmatprep.subr.mxu0 0.0
    %5838 = vmatpush1.msra.mxu0 0.0
    %5839 = vmatprep.subr.mxu0 0.0
    %5840 = vmatpush1.msra.mxu0 0.0
    %5841 = vmatprep.subr.mxu0 0.0
    %5842 = vmatpush1.msra.mxu0 0.0
    %5843 = vmatprep.subr.mxu0 0.0
    %5844 = vmatpush1.msra.mxu0 0.0
    %5845 = vmatprep.subr.mxu0 0.0
    %5846 = vmatpush1.msra.mxu0 0.0
    %5847 = vmatprep.subr.mxu0 0.0
    %5848 = vmatpush1.msra.mxu0 %v4402
    %5849 = vmatprep.subr.mxu0 0.0
    %5850 = vmatpush1.msra.mxu0 %v4401
    %5851 = vmatprep.subr.mxu0 0.0
    %5852 = vmatpush1.msra.mxu0 %v4400
    %5853 = vmatprep.subr.mxu0 0.0
    %5854 = vmatpush1.msra.mxu0 %v4399
    %5855 = vmatprep.subr.mxu0 0.0
    %5856 = vmatpush1.msra.mxu0 %v4398
    %5857 = vmatprep.subr.mxu0 0.0
    %5858 = vmatpush1.msra.mxu0 %v4397
    %5859 = vmatprep.subr.mxu0 0.0
    %5860 = vmatpush1.msra.mxu0 %v4396
    %5861 = vmatprep.subr.mxu0 0.0
    %5862 = vmatpush1.msra.mxu0 %v4395
    %5863 = vmatprep.subr.mxu0 0.0
    %5864 = vmatpush2.msra.mxu0 0.0
    %5865 = vmatprep.subr.mxu0 0.0
    %5866 = vmatpush2.msra.mxu0 0.0
    %5867 = vmatprep.subr.mxu0 0.0
    %5868 = vmatpush2.msra.mxu0 0.0
    %5869 = vmatprep.subr.mxu0 0.0
    %5870 = vmatpush2.msra.mxu0 0.0
    %5871 = vmatprep.subr.mxu0 0.0
    %5872 = vmatpush2.msra.mxu0 0.0
    %5873 = vmatprep.subr.mxu0 0.0
    %5874 = vmatpush2.msra.mxu0 0.0
    %5875 = vmatprep.subr.mxu0 0.0
    %5876 = vmatpush2.msra.mxu0 0.0
    %5877 = vmatprep.subr.mxu0 0.0
    %5878 = vmatpush2.msra.mxu0 0.0
    %5879 = vmatprep.subr.mxu0 0.0
    %5880 = vmatpush2.msra.mxu0 0.0
    %5881 = vmatprep.subr.mxu0 0.0
    %5882 = vmatpush2.msra.mxu0 0.0
    %5883 = vmatprep.subr.mxu0 0.0
    %5884 = vmatpush2.msra.mxu0 0.0
    %5885 = vmatprep.subr.mxu0 0.0
    %5886 = vmatpush2.msra.mxu0 0.0
    %5887 = vmatprep.subr.mxu0 0.0
    %5888 = vmatpush2.msra.mxu0 0.0
    %5889 = vmatprep.subr.mxu0 0.0
    %5890 = vmatpush2.msra.mxu0 0.0
    %5891 = vmatprep.subr.mxu0 0.0
    %5892 = vmatpush2.msra.mxu0 0.0
    %5893 = vmatprep.subr.mxu0 0.0
    %5894 = vmatpush2.msra.mxu0 0.0
    %5895 = vmatprep.mubr.f32.mxu0 0.0
    %5896 = vmatmul.mubr.f32.gmra.mxu0 %v5808
    %v5897 = vpop.f32.mrf.mxu0
    %v5898 = vadd.f32 0.0, %v5897
    %v5899 = vpop.f32.mrf.mxu0
    %5900 = vmatprep.mubr.f32.mxu0 0.0
    %5901 = vmatmul.mubr.f32.gmra.mxu0 %v5811
    %v5902 = vpop.f32.mrf.mxu0
    %v5903 = vadd.f32 0.0, %v5902
    %v5904 = vpop.f32.mrf.mxu0
    %5905 = vmatprep.mubr.f32.mxu0 0.0
    %5906 = vmatmul.mubr.f32.gmra.mxu0 %v5814
    %v5907 = vpop.f32.mrf.mxu0
    %v5908 = vadd.f32 0.0, %v5907
    %v5909 = vpop.f32.mrf.mxu0
    %5910 = vmatprep.mubr.f32.mxu0 0.0
    %5911 = vmatmul.mubr.f32.gmra.mxu0 %v5817
    %v5912 = vpop.f32.mrf.mxu0
    %v5913 = vadd.f32 0.0, %v5912
    %v5914 = vpop.f32.mrf.mxu0
    %5915 = vmatprep.mubr.f32.mxu0 0.0
    %5916 = vmatmul.mubr.f32.gmra.mxu0 %v5820
    %v5917 = vpop.f32.mrf.mxu0
    %v5918 = vadd.f32 0.0, %v5917
    %v5919 = vpop.f32.mrf.mxu0
    %5920 = vmatprep.mubr.f32.mxu0 0.0
    %5921 = vmatmul.mubr.f32.gmra.mxu0 %v5823
    %v5922 = vpop.f32.mrf.mxu0
    %v5923 = vadd.f32 0.0, %v5922
    %v5924 = vpop.f32.mrf.mxu0
    %5925 = vmatprep.mubr.f32.mxu0 0.0
    %5926 = vmatmul.mubr.f32.gmra.mxu0 %v5826
    %v5927 = vpop.f32.mrf.mxu0
    %v5928 = vadd.f32 0.0, %v5927
    %v5929 = vpop.f32.mrf.mxu0
    %5930 = vmatprep.mubr.f32.mxu0 0.0
    %5931 = vmatmul.mubr.f32.gmra.mxu0 %v5829
    %v5932 = vpop.f32.mrf.mxu0
    %v5933 = vadd.f32 0.0, %v5932
    %v5934 = vpop.f32.mrf.mxu0
    %5935 = vdwg.mxu0
    %s5936 = scalar_lea.vmem [#allocation19], 32
    %v5937 = vld [vmem:[%s5936] sm:$0xff]
    %v5939 = vsel %vm1862, %v5898, 0
    %v5942 = vsel %vm1862, %v5903, 0
    %v5945 = vsel %vm1862, %v5908, 0
    %v5948 = vsel %vm1862, %v5913, 0
    %v5951 = vsel %vm1862, %v5918, 0
    %v5954 = vsel %vm1862, %v5923, 0
    %v5957 = vsel %vm1862, %v5928, 0
    %v5960 = vsel %vm1862, %v5933, 0
    %5962 = vmatprep.subr.mxu0 0.0
    %5963 = vmatpush1.msra.mxu0 0.0
    %5964 = vmatprep.subr.mxu0 0.0
    %5965 = vmatpush1.msra.mxu0 0.0
    %5966 = vmatprep.subr.mxu0 0.0
    %5967 = vmatpush1.msra.mxu0 0.0
    %5968 = vmatprep.subr.mxu0 0.0
    %5969 = vmatpush1.msra.mxu0 0.0
    %5970 = vmatprep.subr.mxu0 0.0
    %5971 = vmatpush1.msra.mxu0 0.0
    %5972 = vmatprep.subr.mxu0 0.0
    %5973 = vmatpush1.msra.mxu0 0.0
    %5974 = vmatprep.subr.mxu0 0.0
    %5975 = vmatpush1.msra.mxu0 0.0
    %5976 = vmatprep.subr.mxu0 0.0
    %5977 = vmatpush1.msra.mxu0 0.0
    %5978 = vmatprep.subr.mxu0 0.0
    %5979 = vmatpush1.msra.mxu0 0.0
    %5980 = vmatprep.subr.mxu0 0.0
    %5981 = vmatpush1.msra.mxu0 0.0
    %5982 = vmatprep.subr.mxu0 0.0
    %5983 = vmatpush1.msra.mxu0 0.0
    %5984 = vmatprep.subr.mxu0 0.0
    %5985 = vmatpush1.msra.mxu0 0.0
    %5986 = vmatprep.subr.mxu0 0.0
    %5987 = vmatpush1.msra.mxu0 0.0
    %5988 = vmatprep.subr.mxu0 0.0
    %5989 = vmatpush1.msra.mxu0 0.0
    %5990 = vmatprep.subr.mxu0 0.0
    %5991 = vmatpush1.msra.mxu0 0.0
    %5992 = vmatprep.subr.mxu0 0.0
    %5993 = vmatpush1.msra.mxu0 %v5937
    %5994 = vmatprep.subr.mxu0 0.0
    %5995 = vmatpush2.msra.mxu0 0.0
    %5996 = vmatprep.subr.mxu0 0.0
    %5997 = vmatpush2.msra.mxu0 0.0
    %5998 = vmatprep.subr.mxu0 0.0
    %5999 = vmatpush2.msra.mxu0 0.0
    %6000 = vmatprep.subr.mxu0 0.0
    %6001 = vmatpush2.msra.mxu0 0.0
    %6002 = vmatprep.subr.mxu0 0.0
    %6003 = vmatpush2.msra.mxu0 0.0
    %6004 = vmatprep.subr.mxu0 0.0
    %6005 = vmatpush2.msra.mxu0 0.0
    %6006 = vmatprep.subr.mxu0 0.0
    %6007 = vmatpush2.msra.mxu0 0.0
    %6008 = vmatprep.subr.mxu0 0.0
    %6009 = vmatpush2.msra.mxu0 0.0
    %6010 = vmatprep.subr.mxu0 0.0
    %6011 = vmatpush2.msra.mxu0 0.0
    %6012 = vmatprep.subr.mxu0 0.0
    %6013 = vmatpush2.msra.mxu0 0.0
    %6014 = vmatprep.subr.mxu0 0.0
    %6015 = vmatpush2.msra.mxu0 0.0
    %6016 = vmatprep.subr.mxu0 0.0
    %6017 = vmatpush2.msra.mxu0 0.0
    %6018 = vmatprep.subr.mxu0 0.0
    %6019 = vmatpush2.msra.mxu0 0.0
    %6020 = vmatprep.subr.mxu0 0.0
    %6021 = vmatpush2.msra.mxu0 0.0
    %6022 = vmatprep.subr.mxu0 0.0
    %6023 = vmatpush2.msra.mxu0 0.0
    %6024 = vmatprep.subr.mxu0 0.0
    %6025 = vmatpush2.msra.mxu0 0.0
    %6026 = vmatprep.mubr.f32.mxu0 0.0
    %6027 = vmatmul.mubr.f32.gmra.mxu0 %v5939
    %v6028 = vpop.f32.mrf.mxu0
    %v6029 = vadd.f32 0.0, %v6028
    %v6030 = vpop.f32.mrf.mxu0
    %6031 = vmatprep.mubr.f32.mxu0 0.0
    %6032 = vmatmul.mubr.f32.gmra.mxu0 %v5942
    %v6033 = vpop.f32.mrf.mxu0
    %v6034 = vadd.f32 0.0, %v6033
    %v6035 = vpop.f32.mrf.mxu0
    %6036 = vmatprep.mubr.f32.mxu0 0.0
    %6037 = vmatmul.mubr.f32.gmra.mxu0 %v5945
    %v6038 = vpop.f32.mrf.mxu0
    %v6039 = vadd.f32 0.0, %v6038
    %v6040 = vpop.f32.mrf.mxu0
    %6041 = vmatprep.mubr.f32.mxu0 0.0
    %6042 = vmatmul.mubr.f32.gmra.mxu0 %v5948
    %v6043 = vpop.f32.mrf.mxu0
    %v6044 = vadd.f32 0.0, %v6043
    %v6045 = vpop.f32.mrf.mxu0
    %6046 = vmatprep.mubr.f32.mxu0 0.0
    %6047 = vmatmul.mubr.f32.gmra.mxu0 %v5951
    %v6048 = vpop.f32.mrf.mxu0
    %v6049 = vadd.f32 0.0, %v6048
    %v6050 = vpop.f32.mrf.mxu0
    %6051 = vmatprep.mubr.f32.mxu0 0.0
    %6052 = vmatmul.mubr.f32.gmra.mxu0 %v5954
    %v6053 = vpop.f32.mrf.mxu0
    %v6054 = vadd.f32 0.0, %v6053
    %v6055 = vpop.f32.mrf.mxu0
    %6056 = vmatprep.mubr.f32.mxu0 0.0
    %6057 = vmatmul.mubr.f32.gmra.mxu0 %v5957
    %v6058 = vpop.f32.mrf.mxu0
    %v6059 = vadd.f32 0.0, %v6058
    %v6060 = vpop.f32.mrf.mxu0
    %6061 = vmatprep.mubr.f32.mxu0 0.0
    %6062 = vmatmul.mubr.f32.gmra.mxu0 %v5960
    %v6063 = vpop.f32.mrf.mxu0
    %v6064 = vadd.f32 0.0, %v6063
    %v6065 = vpop.f32.mrf.mxu0
    %6066 = vdwg.mxu0
    %v6067 = vadd.f32 %v5790, %v6029
    %v6068 = vadd.f32 %v5791, %v6034
    %v6069 = vadd.f32 %v5792, %v6039
    %v6070 = vadd.f32 %v5793, %v6044
    %v6071 = vadd.f32 %v5794, %v6049
    %v6072 = vadd.f32 %v5795, %v6054
    %v6073 = vadd.f32 %v5796, %v6059
    %v6074 = vadd.f32 %v5797, %v6064
    %v6075 = vld [vmem:[#allocation21] sm:$0x1]
    %v6077 = vlaneseq
    %v6078 = vshrl.u32 %v6077, 7
    %v6079 = vsub.s32 0, %v6078
    %v6080 = vrot.slane %v6075, %v6079
    %v6082 = vmul.f32 %v6067, %v6080
    %v6083 = vmul.f32 %v6068, %v6080
    %v6084 = vmul.f32 %v6069, %v6080
    %v6085 = vmul.f32 %v6070, %v6080
    %v6086 = vmul.f32 %v6071, %v6080
    %v6087 = vmul.f32 %v6072, %v6080
    %v6088 = vmul.f32 %v6073, %v6080
    %v6089 = vmul.f32 %v6074, %v6080
    %v6090 = vld [vmem:[#allocation22] sm:$0x1]
    %v6092 = vlaneseq
    %v6093 = vshrl.u32 %v6092, 7
    %v6094 = vsub.s32 0, %v6093
    %v6095 = vrot.slane %v6090, %v6094
    %v6097 = vadd.f32 %v6082, %v6095
    %v6098 = vadd.f32 %v6083, %v6095
    %v6099 = vadd.f32 %v6084, %v6095
    %v6100 = vadd.f32 %v6085, %v6095
    %v6101 = vadd.f32 %v6086, %v6095
    %v6102 = vadd.f32 %v6087, %v6095
    %v6103 = vadd.f32 %v6088, %v6095
    %v6104 = vadd.f32 %v6089, %v6095
    %v6105 = vmax.f32 %v6097, 0.0
    %v6106 = vmax.f32 %v6098, 0.0
    %v6107 = vmax.f32 %v6099, 0.0
    %v6108 = vmax.f32 %v6100, 0.0
    %v6109 = vmax.f32 %v6101, 0.0
    %v6110 = vmax.f32 %v6102, 0.0
    %v6111 = vmax.f32 %v6103, 0.0
    %v6112 = vmax.f32 %v6104, 0.0
    %v6113 = vld [vmem:[%s19] sm:$0xff]
    %v6114 = vld [vmem:[%s19 + $0x8] sm:$0xff]
    %v6115 = vld [vmem:[%s19 + $0x10] sm:$0xff]
    %v6116 = vld [vmem:[%s19 + $0x18] sm:$0xff]
    %v6118 = vsel %vm1591, %v6113, 0
    %v6121 = vsel %vm1591, %v6114, 0
    %v6124 = vsel %vm1591, %v6115, 0
    %v6127 = vsel %vm1591, %v6116, 0
    %6129 = vmatprep.subr.mxu0 0.0
    %6130 = vmatpush1.msra.mxu0 0.0
    %6131 = vmatprep.subr.mxu0 0.0
    %6132 = vmatpush1.msra.mxu0 0.0
    %6133 = vmatprep.subr.mxu0 0.0
    %6134 = vmatpush1.msra.mxu0 0.0
    %6135 = vmatprep.subr.mxu0 0.0
    %6136 = vmatpush1.msra.mxu0 0.0
    %6137 = vmatprep.subr.mxu0 0.0
    %6138 = vmatpush1.msra.mxu0 0.0
    %6139 = vmatprep.subr.mxu0 0.0
    %6140 = vmatpush1.msra.mxu0 0.0
    %6141 = vmatprep.subr.mxu0 0.0
    %6142 = vmatpush1.msra.mxu0 0.0
    %6143 = vmatprep.subr.mxu0 0.0
    %6144 = vmatpush1.msra.mxu0 0.0
    %6145 = vmatprep.subr.mxu0 0.0
    %6146 = vmatpush1.msra.mxu0 %v6112
    %6147 = vmatprep.subr.mxu0 0.0
    %6148 = vmatpush1.msra.mxu0 %v6111
    %6149 = vmatprep.subr.mxu0 0.0
    %6150 = vmatpush1.msra.mxu0 %v6110
    %6151 = vmatprep.subr.mxu0 0.0
    %6152 = vmatpush1.msra.mxu0 %v6109
    %6153 = vmatprep.subr.mxu0 0.0
    %6154 = vmatpush1.msra.mxu0 %v6108
    %6155 = vmatprep.subr.mxu0 0.0
    %6156 = vmatpush1.msra.mxu0 %v6107
    %6157 = vmatprep.subr.mxu0 0.0
    %6158 = vmatpush1.msra.mxu0 %v6106
    %6159 = vmatprep.subr.mxu0 0.0
    %6160 = vmatpush1.msra.mxu0 %v6105
    %6161 = vmatprep.subr.mxu0 0.0
    %6162 = vmatpush2.msra.mxu0 0.0
    %6163 = vmatprep.subr.mxu0 0.0
    %6164 = vmatpush2.msra.mxu0 0.0
    %6165 = vmatprep.subr.mxu0 0.0
    %6166 = vmatpush2.msra.mxu0 0.0
    %6167 = vmatprep.subr.mxu0 0.0
    %6168 = vmatpush2.msra.mxu0 0.0
    %6169 = vmatprep.subr.mxu0 0.0
    %6170 = vmatpush2.msra.mxu0 0.0
    %6171 = vmatprep.subr.mxu0 0.0
    %6172 = vmatpush2.msra.mxu0 0.0
    %6173 = vmatprep.subr.mxu0 0.0
    %6174 = vmatpush2.msra.mxu0 0.0
    %6175 = vmatprep.subr.mxu0 0.0
    %6176 = vmatpush2.msra.mxu0 0.0
    %6177 = vmatprep.subr.mxu0 0.0
    %6178 = vmatpush2.msra.mxu0 0.0
    %6179 = vmatprep.subr.mxu0 0.0
    %6180 = vmatpush2.msra.mxu0 0.0
    %6181 = vmatprep.subr.mxu0 0.0
    %6182 = vmatpush2.msra.mxu0 0.0
    %6183 = vmatprep.subr.mxu0 0.0
    %6184 = vmatpush2.msra.mxu0 0.0
    %6185 = vmatprep.subr.mxu0 0.0
    %6186 = vmatpush2.msra.mxu0 0.0
    %6187 = vmatprep.subr.mxu0 0.0
    %6188 = vmatpush2.msra.mxu0 0.0
    %6189 = vmatprep.subr.mxu0 0.0
    %6190 = vmatpush2.msra.mxu0 0.0
    %6191 = vmatprep.subr.mxu0 0.0
    %6192 = vmatpush2.msra.mxu0 0.0
    %6193 = vmatprep.mubr.f32.mxu0 0.0
    %6194 = vmatmul.mubr.f32.gmra.mxu0 %v6118
    %v6195 = vpop.f32.mrf.mxu0
    %v6196 = vadd.f32 0.0, %v6195
    %v6197 = vpop.f32.mrf.mxu0
    %6198 = vmatprep.mubr.f32.mxu0 0.0
    %6199 = vmatmul.mubr.f32.gmra.mxu0 %v6121
    %v6200 = vpop.f32.mrf.mxu0
    %v6201 = vadd.f32 0.0, %v6200
    %v6202 = vpop.f32.mrf.mxu0
    %6203 = vmatprep.mubr.f32.mxu0 0.0
    %6204 = vmatmul.mubr.f32.gmra.mxu0 %v6124
    %v6205 = vpop.f32.mrf.mxu0
    %v6206 = vadd.f32 0.0, %v6205
    %v6207 = vpop.f32.mrf.mxu0
    %6208 = vmatprep.mubr.f32.mxu0 0.0
    %6209 = vmatmul.mubr.f32.gmra.mxu0 %v6127
    %v6210 = vpop.f32.mrf.mxu0
    %v6211 = vadd.f32 0.0, %v6210
    %v6212 = vpop.f32.mrf.mxu0
    %6213 = vdwg.mxu0
    %v6214 = vld [vmem:[#allocation24] sm:$0xff]
    %v6215 = vld [vmem:[#allocation24 + $0x8] sm:$0xff]
    %s6216 = scalar_lea.vmem %s19, 32
    %v6217 = vld [vmem:[%s6216] sm:$0xff]
    %v6218 = vld [vmem:[%s6216 + $0x8] sm:$0xff]
    %v6219 = vld [vmem:[%s6216 + $0x10] sm:$0xff]
    %v6220 = vld [vmem:[%s6216 + $0x18] sm:$0xff]
    %v6222 = vsel %vm1591, %v6217, 0
    %v6225 = vsel %vm1591, %v6218, 0
    %v6228 = vsel %vm1591, %v6219, 0
    %v6231 = vsel %vm1591, %v6220, 0
    %6233 = vmatprep.subr.mxu0 0.0
    %6234 = vmatpush1.msra.mxu0 0.0
    %6235 = vmatprep.subr.mxu0 0.0
    %6236 = vmatpush1.msra.mxu0 0.0
    %6237 = vmatprep.subr.mxu0 0.0
    %6238 = vmatpush1.msra.mxu0 0.0
    %6239 = vmatprep.subr.mxu0 0.0
    %6240 = vmatpush1.msra.mxu0 0.0
    %6241 = vmatprep.subr.mxu0 0.0
    %6242 = vmatpush1.msra.mxu0 0.0
    %6243 = vmatprep.subr.mxu0 0.0
    %6244 = vmatpush1.msra.mxu0 0.0
    %6245 = vmatprep.subr.mxu0 0.0
    %6246 = vmatpush1.msra.mxu0 0.0
    %6247 = vmatprep.subr.mxu0 0.0
    %6248 = vmatpush1.msra.mxu0 0.0
    %6249 = vmatprep.subr.mxu0 0.0
    %6250 = vmatpush1.msra.mxu0 %v6112
    %6251 = vmatprep.subr.mxu0 0.0
    %6252 = vmatpush1.msra.mxu0 %v6111
    %6253 = vmatprep.subr.mxu0 0.0
    %6254 = vmatpush1.msra.mxu0 %v6110
    %6255 = vmatprep.subr.mxu0 0.0
    %6256 = vmatpush1.msra.mxu0 %v6109
    %6257 = vmatprep.subr.mxu0 0.0
    %6258 = vmatpush1.msra.mxu0 %v6108
    %6259 = vmatprep.subr.mxu0 0.0
    %6260 = vmatpush1.msra.mxu0 %v6107
    %6261 = vmatprep.subr.mxu0 0.0
    %6262 = vmatpush1.msra.mxu0 %v6106
    %6263 = vmatprep.subr.mxu0 0.0
    %6264 = vmatpush1.msra.mxu0 %v6105
    %6265 = vmatprep.subr.mxu0 0.0
    %6266 = vmatpush2.msra.mxu0 0.0
    %6267 = vmatprep.subr.mxu0 0.0
    %6268 = vmatpush2.msra.mxu0 0.0
    %6269 = vmatprep.subr.mxu0 0.0
    %6270 = vmatpush2.msra.mxu0 0.0
    %6271 = vmatprep.subr.mxu0 0.0
    %6272 = vmatpush2.msra.mxu0 0.0
    %6273 = vmatprep.subr.mxu0 0.0
    %6274 = vmatpush2.msra.mxu0 0.0
    %6275 = vmatprep.subr.mxu0 0.0
    %6276 = vmatpush2.msra.mxu0 0.0
    %6277 = vmatprep.subr.mxu0 0.0
    %6278 = vmatpush2.msra.mxu0 0.0
    %6279 = vmatprep.subr.mxu0 0.0
    %6280 = vmatpush2.msra.mxu0 0.0
    %6281 = vmatprep.subr.mxu0 0.0
    %6282 = vmatpush2.msra.mxu0 0.0
    %6283 = vmatprep.subr.mxu0 0.0
    %6284 = vmatpush2.msra.mxu0 0.0
    %6285 = vmatprep.subr.mxu0 0.0
    %6286 = vmatpush2.msra.mxu0 0.0
    %6287 = vmatprep.subr.mxu0 0.0
    %6288 = vmatpush2.msra.mxu0 0.0
    %6289 = vmatprep.subr.mxu0 0.0
    %6290 = vmatpush2.msra.mxu0 0.0
    %6291 = vmatprep.subr.mxu0 0.0
    %6292 = vmatpush2.msra.mxu0 0.0
    %6293 = vmatprep.subr.mxu0 0.0
    %6294 = vmatpush2.msra.mxu0 0.0
    %6295 = vmatprep.subr.mxu0 0.0
    %6296 = vmatpush2.msra.mxu0 0.0
    %6297 = vmatprep.mubr.f32.mxu0 0.0
    %6298 = vmatmul.mubr.f32.gmra.mxu0 %v6222
    %v6299 = vpop.f32.mrf.mxu0
    %v6300 = vadd.f32 0.0, %v6299
    %v6301 = vpop.f32.mrf.mxu0
    %6302 = vmatprep.mubr.f32.mxu0 0.0
    %6303 = vmatmul.mubr.f32.gmra.mxu0 %v6225
    %v6304 = vpop.f32.mrf.mxu0
    %v6305 = vadd.f32 0.0, %v6304
    %v6306 = vpop.f32.mrf.mxu0
    %6307 = vmatprep.mubr.f32.mxu0 0.0
    %6308 = vmatmul.mubr.f32.gmra.mxu0 %v6228
    %v6309 = vpop.f32.mrf.mxu0
    %v6310 = vadd.f32 0.0, %v6309
    %v6311 = vpop.f32.mrf.mxu0
    %6312 = vmatprep.mubr.f32.mxu0 0.0
    %6313 = vmatmul.mubr.f32.gmra.mxu0 %v6231
    %v6314 = vpop.f32.mrf.mxu0
    %v6315 = vadd.f32 0.0, %v6314
    %v6316 = vpop.f32.mrf.mxu0
    %6317 = vdwg.mxu0
    %s6318 = scalar_lea.vmem [#allocation24], 16
    %v6319 = vld [vmem:[%s6318] sm:$0xff]
    %v6320 = vld [vmem:[%s6318 + $0x8] sm:$0xff]
    %vm6321 = vcmask 130048
    %v6323 = vsel %vm6321, %v6300, 0
    %v6326 = vsel %vm6321, %v6305, 0
    %v6329 = vsel %vm6321, %v6310, 0
    %v6332 = vsel %vm6321, %v6315, 0
    %6334 = vmatprep.subr.mxu0 0.0
    %6335 = vmatpush1.msra.mxu0 0.0
    %6336 = vmatprep.subr.mxu0 0.0
    %6337 = vmatpush1.msra.mxu0 0.0
    %6338 = vmatprep.subr.mxu0 0.0
    %6339 = vmatpush1.msra.mxu0 0.0
    %6340 = vmatprep.subr.mxu0 0.0
    %6341 = vmatpush1.msra.mxu0 0.0
    %6342 = vmatprep.subr.mxu0 0.0
    %6343 = vmatpush1.msra.mxu0 0.0
    %6344 = vmatprep.subr.mxu0 0.0
    %6345 = vmatpush1.msra.mxu0 0.0
    %6346 = vmatprep.subr.mxu0 0.0
    %6347 = vmatpush1.msra.mxu0 0.0
    %6348 = vmatprep.subr.mxu0 0.0
    %6349 = vmatpush1.msra.mxu0 0.0
    %6350 = vmatprep.subr.mxu0 0.0
    %6351 = vmatpush1.msra.mxu0 0.0
    %6352 = vmatprep.subr.mxu0 0.0
    %6353 = vmatpush1.msra.mxu0 0.0
    %6354 = vmatprep.subr.mxu0 0.0
    %6355 = vmatpush1.msra.mxu0 0.0
    %6356 = vmatprep.subr.mxu0 0.0
    %6357 = vmatpush1.msra.mxu0 0.0
    %6358 = vmatprep.subr.mxu0 0.0
    %6359 = vmatpush1.msra.mxu0 0.0
    %6360 = vmatprep.subr.mxu0 0.0
    %6361 = vmatpush1.msra.mxu0 0.0
    %6362 = vmatprep.subr.mxu0 0.0
    %6363 = vmatpush1.msra.mxu0 %v6320
    %6364 = vmatprep.subr.mxu0 0.0
    %6365 = vmatpush1.msra.mxu0 %v6319
    %6366 = vmatprep.subr.mxu0 0.0
    %6367 = vmatpush2.msra.mxu0 0.0
    %6368 = vmatprep.subr.mxu0 0.0
    %6369 = vmatpush2.msra.mxu0 0.0
    %6370 = vmatprep.subr.mxu0 0.0
    %6371 = vmatpush2.msra.mxu0 0.0
    %6372 = vmatprep.subr.mxu0 0.0
    %6373 = vmatpush2.msra.mxu0 0.0
    %6374 = vmatprep.subr.mxu0 0.0
    %6375 = vmatpush2.msra.mxu0 0.0
    %6376 = vmatprep.subr.mxu0 0.0
    %6377 = vmatpush2.msra.mxu0 0.0
    %6378 = vmatprep.subr.mxu0 0.0
    %6379 = vmatpush2.msra.mxu0 0.0
    %6380 = vmatprep.subr.mxu0 0.0
    %6381 = vmatpush2.msra.mxu0 0.0
    %6382 = vmatprep.subr.mxu0 0.0
    %6383 = vmatpush2.msra.mxu0 0.0
    %6384 = vmatprep.subr.mxu0 0.0
    %6385 = vmatpush2.msra.mxu0 0.0
    %6386 = vmatprep.subr.mxu0 0.0
    %6387 = vmatpush2.msra.mxu0 0.0
    %6388 = vmatprep.subr.mxu0 0.0
    %6389 = vmatpush2.msra.mxu0 0.0
    %6390 = vmatprep.subr.mxu0 0.0
    %6391 = vmatpush2.msra.mxu0 0.0
    %6392 = vmatprep.subr.mxu0 0.0
    %6393 = vmatpush2.msra.mxu0 0.0
    %6394 = vmatprep.subr.mxu0 0.0
    %6395 = vmatpush2.msra.mxu0 0.0
    %6396 = vmatprep.subr.mxu0 0.0
    %6397 = vmatpush2.msra.mxu0 0.0
    %6398 = vmatprep.mubr.f32.mxu0 0.0
    %6399 = vmatmul.mubr.f32.gmra.mxu0 %v6323
    %v6400 = vpop.f32.mrf.mxu0
    %v6401 = vadd.f32 0.0, %v6400
    %v6402 = vpop.f32.mrf.mxu0
    %6403 = vmatprep.mubr.f32.mxu0 0.0
    %6404 = vmatmul.mubr.f32.gmra.mxu0 %v6326
    %v6405 = vpop.f32.mrf.mxu0
    %v6406 = vadd.f32 0.0, %v6405
    %v6407 = vpop.f32.mrf.mxu0
    %6408 = vmatprep.mubr.f32.mxu0 0.0
    %6409 = vmatmul.mubr.f32.gmra.mxu0 %v6329
    %v6410 = vpop.f32.mrf.mxu0
    %v6411 = vadd.f32 0.0, %v6410
    %v6412 = vpop.f32.mrf.mxu0
    %6413 = vmatprep.mubr.f32.mxu0 0.0
    %6414 = vmatmul.mubr.f32.gmra.mxu0 %v6332
    %v6415 = vpop.f32.mrf.mxu0
    %v6416 = vadd.f32 0.0, %v6415
    %v6417 = vpop.f32.mrf.mxu0
    %6418 = vdwg.mxu0
    %v6420 = vsel %vm6321, %v6196, 0
    %v6423 = vsel %vm6321, %v6201, 0
    %v6426 = vsel %vm6321, %v6206, 0
    %v6429 = vsel %vm6321, %v6211, 0
    %6431 = vmatprep.subr.mxu0 0.0
    %6432 = vmatpush1.msra.mxu0 0.0
    %6433 = vmatprep.subr.mxu0 0.0
    %6434 = vmatpush1.msra.mxu0 0.0
    %6435 = vmatprep.subr.mxu0 0.0
    %6436 = vmatpush1.msra.mxu0 0.0
    %6437 = vmatprep.subr.mxu0 0.0
    %6438 = vmatpush1.msra.mxu0 0.0
    %6439 = vmatprep.subr.mxu0 0.0
    %6440 = vmatpush1.msra.mxu0 0.0
    %6441 = vmatprep.subr.mxu0 0.0
    %6442 = vmatpush1.msra.mxu0 0.0
    %6443 = vmatprep.subr.mxu0 0.0
    %6444 = vmatpush1.msra.mxu0 0.0
    %6445 = vmatprep.subr.mxu0 0.0
    %6446 = vmatpush1.msra.mxu0 0.0
    %6447 = vmatprep.subr.mxu0 0.0
    %6448 = vmatpush1.msra.mxu0 0.0
    %6449 = vmatprep.subr.mxu0 0.0
    %6450 = vmatpush1.msra.mxu0 0.0
    %6451 = vmatprep.subr.mxu0 0.0
    %6452 = vmatpush1.msra.mxu0 0.0
    %6453 = vmatprep.subr.mxu0 0.0
    %6454 = vmatpush1.msra.mxu0 0.0
    %6455 = vmatprep.subr.mxu0 0.0
    %6456 = vmatpush1.msra.mxu0 0.0
    %6457 = vmatprep.subr.mxu0 0.0
    %6458 = vmatpush1.msra.mxu0 0.0
    %6459 = vmatprep.subr.mxu0 0.0
    %6460 = vmatpush1.msra.mxu0 %v6215
    %6461 = vmatprep.subr.mxu0 0.0
    %6462 = vmatpush1.msra.mxu0 %v6214
    %6463 = vmatprep.subr.mxu0 0.0
    %6464 = vmatpush2.msra.mxu0 0.0
    %6465 = vmatprep.subr.mxu0 0.0
    %6466 = vmatpush2.msra.mxu0 0.0
    %6467 = vmatprep.subr.mxu0 0.0
    %6468 = vmatpush2.msra.mxu0 0.0
    %6469 = vmatprep.subr.mxu0 0.0
    %6470 = vmatpush2.msra.mxu0 0.0
    %6471 = vmatprep.subr.mxu0 0.0
    %6472 = vmatpush2.msra.mxu0 0.0
    %6473 = vmatprep.subr.mxu0 0.0
    %6474 = vmatpush2.msra.mxu0 0.0
    %6475 = vmatprep.subr.mxu0 0.0
    %6476 = vmatpush2.msra.mxu0 0.0
    %6477 = vmatprep.subr.mxu0 0.0
    %6478 = vmatpush2.msra.mxu0 0.0
    %6479 = vmatprep.subr.mxu0 0.0
    %6480 = vmatpush2.msra.mxu0 0.0
    %6481 = vmatprep.subr.mxu0 0.0
    %6482 = vmatpush2.msra.mxu0 0.0
    %6483 = vmatprep.subr.mxu0 0.0
    %6484 = vmatpush2.msra.mxu0 0.0
    %6485 = vmatprep.subr.mxu0 0.0
    %6486 = vmatpush2.msra.mxu0 0.0
    %6487 = vmatprep.subr.mxu0 0.0
    %6488 = vmatpush2.msra.mxu0 0.0
    %6489 = vmatprep.subr.mxu0 0.0
    %6490 = vmatpush2.msra.mxu0 0.0
    %6491 = vmatprep.subr.mxu0 0.0
    %6492 = vmatpush2.msra.mxu0 0.0
    %6493 = vmatprep.subr.mxu0 0.0
    %6494 = vmatpush2.msra.mxu0 0.0
    %6495 = vmatprep.mubr.f32.mxu0 0.0
    %6496 = vmatmul.mubr.f32.gmra.mxu0 %v6420
    %v6497 = vpop.f32.mrf.mxu0
    %v6498 = vadd.f32 %v6401, %v6497
    %v6499 = vpop.f32.mrf.mxu0
    %6500 = vmatprep.mubr.f32.mxu0 0.0
    %6501 = vmatmul.mubr.f32.gmra.mxu0 %v6423
    %v6502 = vpop.f32.mrf.mxu0
    %v6503 = vadd.f32 %v6406, %v6502
    %v6504 = vpop.f32.mrf.mxu0
    %6505 = vmatprep.mubr.f32.mxu0 0.0
    %6506 = vmatmul.mubr.f32.gmra.mxu0 %v6426
    %v6507 = vpop.f32.mrf.mxu0
    %v6508 = vadd.f32 %v6411, %v6507
    %v6509 = vpop.f32.mrf.mxu0
    %6510 = vmatprep.mubr.f32.mxu0 0.0
    %6511 = vmatmul.mubr.f32.gmra.mxu0 %v6429
    %v6512 = vpop.f32.mrf.mxu0
    %v6513 = vadd.f32 %v6416, %v6512
    %v6514 = vpop.f32.mrf.mxu0
    %6515 = vdwg.mxu0
    %s6516 = scalar_lea.vmem %s19, 64
    %v6517 = vld [vmem:[%s6516] sm:$0xff]
    %v6518 = vld [vmem:[%s6516 + $0x8] sm:$0xff]
    %v6519 = vld [vmem:[%s6516 + $0x10] sm:$0xff]
    %v6520 = vld [vmem:[%s6516 + $0x18] sm:$0xff]
    %v6522 = vsel %vm1591, %v6517, 0
    %v6525 = vsel %vm1591, %v6518, 0
    %v6528 = vsel %vm1591, %v6519, 0
    %v6531 = vsel %vm1591, %v6520, 0
    %6533 = vmatprep.subr.mxu0 0.0
    %6534 = vmatpush1.msra.mxu0 0.0
    %6535 = vmatprep.subr.mxu0 0.0
    %6536 = vmatpush1.msra.mxu0 0.0
    %6537 = vmatprep.subr.mxu0 0.0
    %6538 = vmatpush1.msra.mxu0 0.0
    %6539 = vmatprep.subr.mxu0 0.0
    %6540 = vmatpush1.msra.mxu0 0.0
    %6541 = vmatprep.subr.mxu0 0.0
    %6542 = vmatpush1.msra.mxu0 0.0
    %6543 = vmatprep.subr.mxu0 0.0
    %6544 = vmatpush1.msra.mxu0 0.0
    %6545 = vmatprep.subr.mxu0 0.0
    %6546 = vmatpush1.msra.mxu0 0.0
    %6547 = vmatprep.subr.mxu0 0.0
    %6548 = vmatpush1.msra.mxu0 0.0
    %6549 = vmatprep.subr.mxu0 0.0
    %6550 = vmatpush1.msra.mxu0 %v6112
    %6551 = vmatprep.subr.mxu0 0.0
    %6552 = vmatpush1.msra.mxu0 %v6111
    %6553 = vmatprep.subr.mxu0 0.0
    %6554 = vmatpush1.msra.mxu0 %v6110
    %6555 = vmatprep.subr.mxu0 0.0
    %6556 = vmatpush1.msra.mxu0 %v6109
    %6557 = vmatprep.subr.mxu0 0.0
    %6558 = vmatpush1.msra.mxu0 %v6108
    %6559 = vmatprep.subr.mxu0 0.0
    %6560 = vmatpush1.msra.mxu0 %v6107
    %6561 = vmatprep.subr.mxu0 0.0
    %6562 = vmatpush1.msra.mxu0 %v6106
    %6563 = vmatprep.subr.mxu0 0.0
    %6564 = vmatpush1.msra.mxu0 %v6105
    %6565 = vmatprep.subr.mxu0 0.0
    %6566 = vmatpush2.msra.mxu0 0.0
    %6567 = vmatprep.subr.mxu0 0.0
    %6568 = vmatpush2.msra.mxu0 0.0
    %6569 = vmatprep.subr.mxu0 0.0
    %6570 = vmatpush2.msra.mxu0 0.0
    %6571 = vmatprep.subr.mxu0 0.0
    %6572 = vmatpush2.msra.mxu0 0.0
    %6573 = vmatprep.subr.mxu0 0.0
    %6574 = vmatpush2.msra.mxu0 0.0
    %6575 = vmatprep.subr.mxu0 0.0
    %6576 = vmatpush2.msra.mxu0 0.0
    %6577 = vmatprep.subr.mxu0 0.0
    %6578 = vmatpush2.msra.mxu0 0.0
    %6579 = vmatprep.subr.mxu0 0.0
    %6580 = vmatpush2.msra.mxu0 0.0
    %6581 = vmatprep.subr.mxu0 0.0
    %6582 = vmatpush2.msra.mxu0 0.0
    %6583 = vmatprep.subr.mxu0 0.0
    %6584 = vmatpush2.msra.mxu0 0.0
    %6585 = vmatprep.subr.mxu0 0.0
    %6586 = vmatpush2.msra.mxu0 0.0
    %6587 = vmatprep.subr.mxu0 0.0
    %6588 = vmatpush2.msra.mxu0 0.0
    %6589 = vmatprep.subr.mxu0 0.0
    %6590 = vmatpush2.msra.mxu0 0.0
    %6591 = vmatprep.subr.mxu0 0.0
    %6592 = vmatpush2.msra.mxu0 0.0
    %6593 = vmatprep.subr.mxu0 0.0
    %6594 = vmatpush2.msra.mxu0 0.0
    %6595 = vmatprep.subr.mxu0 0.0
    %6596 = vmatpush2.msra.mxu0 0.0
    %6597 = vmatprep.mubr.f32.mxu0 0.0
    %6598 = vmatmul.mubr.f32.gmra.mxu0 %v6522
    %v6599 = vpop.f32.mrf.mxu0
    %v6600 = vadd.f32 0.0, %v6599
    %v6601 = vpop.f32.mrf.mxu0
    %6602 = vmatprep.mubr.f32.mxu0 0.0
    %6603 = vmatmul.mubr.f32.gmra.mxu0 %v6525
    %v6604 = vpop.f32.mrf.mxu0
    %v6605 = vadd.f32 0.0, %v6604
    %v6606 = vpop.f32.mrf.mxu0
    %6607 = vmatprep.mubr.f32.mxu0 0.0
    %6608 = vmatmul.mubr.f32.gmra.mxu0 %v6528
    %v6609 = vpop.f32.mrf.mxu0
    %v6610 = vadd.f32 0.0, %v6609
    %v6611 = vpop.f32.mrf.mxu0
    %6612 = vmatprep.mubr.f32.mxu0 0.0
    %6613 = vmatmul.mubr.f32.gmra.mxu0 %v6531
    %v6614 = vpop.f32.mrf.mxu0
    %v6615 = vadd.f32 0.0, %v6614
    %v6616 = vpop.f32.mrf.mxu0
    %6617 = vdwg.mxu0
    %s6618 = scalar_lea.vmem [#allocation24], 32
    %v6619 = vld [vmem:[%s6618] sm:$0xff]
    %v6620 = vld [vmem:[%s6618 + $0x8] sm:$0xff]
    %v6622 = vsel %vm6321, %v6600, 0
    %v6625 = vsel %vm6321, %v6605, 0
    %v6628 = vsel %vm6321, %v6610, 0
    %v6631 = vsel %vm6321, %v6615, 0
    %6633 = vmatprep.subr.mxu0 0.0
    %6634 = vmatpush1.msra.mxu0 0.0
    %6635 = vmatprep.subr.mxu0 0.0
    %6636 = vmatpush1.msra.mxu0 0.0
    %6637 = vmatprep.subr.mxu0 0.0
    %6638 = vmatpush1.msra.mxu0 0.0
    %6639 = vmatprep.subr.mxu0 0.0
    %6640 = vmatpush1.msra.mxu0 0.0
    %6641 = vmatprep.subr.mxu0 0.0
    %6642 = vmatpush1.msra.mxu0 0.0
    %6643 = vmatprep.subr.mxu0 0.0
    %6644 = vmatpush1.msra.mxu0 0.0
    %6645 = vmatprep.subr.mxu0 0.0
    %6646 = vmatpush1.msra.mxu0 0.0
    %6647 = vmatprep.subr.mxu0 0.0
    %6648 = vmatpush1.msra.mxu0 0.0
    %6649 = vmatprep.subr.mxu0 0.0
    %6650 = vmatpush1.msra.mxu0 0.0
    %6651 = vmatprep.subr.mxu0 0.0
    %6652 = vmatpush1.msra.mxu0 0.0
    %6653 = vmatprep.subr.mxu0 0.0
    %6654 = vmatpush1.msra.mxu0 0.0
    %6655 = vmatprep.subr.mxu0 0.0
    %6656 = vmatpush1.msra.mxu0 0.0
    %6657 = vmatprep.subr.mxu0 0.0
    %6658 = vmatpush1.msra.mxu0 0.0
    %6659 = vmatprep.subr.mxu0 0.0
    %6660 = vmatpush1.msra.mxu0 0.0
    %6661 = vmatprep.subr.mxu0 0.0
    %6662 = vmatpush1.msra.mxu0 %v6620
    %6663 = vmatprep.subr.mxu0 0.0
    %6664 = vmatpush1.msra.mxu0 %v6619
    %6665 = vmatprep.subr.mxu0 0.0
    %6666 = vmatpush2.msra.mxu0 0.0
    %6667 = vmatprep.subr.mxu0 0.0
    %6668 = vmatpush2.msra.mxu0 0.0
    %6669 = vmatprep.subr.mxu0 0.0
    %6670 = vmatpush2.msra.mxu0 0.0
    %6671 = vmatprep.subr.mxu0 0.0
    %6672 = vmatpush2.msra.mxu0 0.0
    %6673 = vmatprep.subr.mxu0 0.0
    %6674 = vmatpush2.msra.mxu0 0.0
    %6675 = vmatprep.subr.mxu0 0.0
    %6676 = vmatpush2.msra.mxu0 0.0
    %6677 = vmatprep.subr.mxu0 0.0
    %6678 = vmatpush2.msra.mxu0 0.0
    %6679 = vmatprep.subr.mxu0 0.0
    %6680 = vmatpush2.msra.mxu0 0.0
    %6681 = vmatprep.subr.mxu0 0.0
    %6682 = vmatpush2.msra.mxu0 0.0
    %6683 = vmatprep.subr.mxu0 0.0
    %6684 = vmatpush2.msra.mxu0 0.0
    %6685 = vmatprep.subr.mxu0 0.0
    %6686 = vmatpush2.msra.mxu0 0.0
    %6687 = vmatprep.subr.mxu0 0.0
    %6688 = vmatpush2.msra.mxu0 0.0
    %6689 = vmatprep.subr.mxu0 0.0
    %6690 = vmatpush2.msra.mxu0 0.0
    %6691 = vmatprep.subr.mxu0 0.0
    %6692 = vmatpush2.msra.mxu0 0.0
    %6693 = vmatprep.subr.mxu0 0.0
    %6694 = vmatpush2.msra.mxu0 0.0
    %6695 = vmatprep.subr.mxu0 0.0
    %6696 = vmatpush2.msra.mxu0 0.0
    %6697 = vmatprep.mubr.f32.mxu0 0.0
    %6698 = vmatmul.mubr.f32.gmra.mxu0 %v6622
    %v6699 = vpop.f32.mrf.mxu0
    %v6700 = vadd.f32 0.0, %v6699
    %v6701 = vpop.f32.mrf.mxu0
    %6702 = vmatprep.mubr.f32.mxu0 0.0
    %6703 = vmatmul.mubr.f32.gmra.mxu0 %v6625
    %v6704 = vpop.f32.mrf.mxu0
    %v6705 = vadd.f32 0.0, %v6704
    %v6706 = vpop.f32.mrf.mxu0
    %6707 = vmatprep.mubr.f32.mxu0 0.0
    %6708 = vmatmul.mubr.f32.gmra.mxu0 %v6628
    %v6709 = vpop.f32.mrf.mxu0
    %v6710 = vadd.f32 0.0, %v6709
    %v6711 = vpop.f32.mrf.mxu0
    %6712 = vmatprep.mubr.f32.mxu0 0.0
    %6713 = vmatmul.mubr.f32.gmra.mxu0 %v6631
    %v6714 = vpop.f32.mrf.mxu0
    %v6715 = vadd.f32 0.0, %v6714
    %v6716 = vpop.f32.mrf.mxu0
    %6717 = vdwg.mxu0
    %v6718 = vadd.f32 %v6498, %v6700
    %v6719 = vadd.f32 %v6503, %v6705
    %v6720 = vadd.f32 %v6508, %v6710
    %v6721 = vadd.f32 %v6513, %v6715
    %s6722 = scalar_lea.vmem %s19, 96
    %v6723 = vld [vmem:[%s6722] sm:$0xff]
    %v6724 = vld [vmem:[%s6722 + $0x8] sm:$0xff]
    %v6725 = vld [vmem:[%s6722 + $0x10] sm:$0xff]
    %v6726 = vld [vmem:[%s6722 + $0x18] sm:$0xff]
    %v6728 = vsel %vm1591, %v6723, 0
    %v6731 = vsel %vm1591, %v6724, 0
    %v6734 = vsel %vm1591, %v6725, 0
    %v6737 = vsel %vm1591, %v6726, 0
    %6739 = vmatprep.subr.mxu0 0.0
    %6740 = vmatpush1.msra.mxu0 0.0
    %6741 = vmatprep.subr.mxu0 0.0
    %6742 = vmatpush1.msra.mxu0 0.0
    %6743 = vmatprep.subr.mxu0 0.0
    %6744 = vmatpush1.msra.mxu0 0.0
    %6745 = vmatprep.subr.mxu0 0.0
    %6746 = vmatpush1.msra.mxu0 0.0
    %6747 = vmatprep.subr.mxu0 0.0
    %6748 = vmatpush1.msra.mxu0 0.0
    %6749 = vmatprep.subr.mxu0 0.0
    %6750 = vmatpush1.msra.mxu0 0.0
    %6751 = vmatprep.subr.mxu0 0.0
    %6752 = vmatpush1.msra.mxu0 0.0
    %6753 = vmatprep.subr.mxu0 0.0
    %6754 = vmatpush1.msra.mxu0 0.0
    %6755 = vmatprep.subr.mxu0 0.0
    %6756 = vmatpush1.msra.mxu0 %v6112
    %6757 = vmatprep.subr.mxu0 0.0
    %6758 = vmatpush1.msra.mxu0 %v6111
    %6759 = vmatprep.subr.mxu0 0.0
    %6760 = vmatpush1.msra.mxu0 %v6110
    %6761 = vmatprep.subr.mxu0 0.0
    %6762 = vmatpush1.msra.mxu0 %v6109
    %6763 = vmatprep.subr.mxu0 0.0
    %6764 = vmatpush1.msra.mxu0 %v6108
    %6765 = vmatprep.subr.mxu0 0.0
    %6766 = vmatpush1.msra.mxu0 %v6107
    %6767 = vmatprep.subr.mxu0 0.0
    %6768 = vmatpush1.msra.mxu0 %v6106
    %6769 = vmatprep.subr.mxu0 0.0
    %6770 = vmatpush1.msra.mxu0 %v6105
    %6771 = vmatprep.subr.mxu0 0.0
    %6772 = vmatpush2.msra.mxu0 0.0
    %6773 = vmatprep.subr.mxu0 0.0
    %6774 = vmatpush2.msra.mxu0 0.0
    %6775 = vmatprep.subr.mxu0 0.0
    %6776 = vmatpush2.msra.mxu0 0.0
    %6777 = vmatprep.subr.mxu0 0.0
    %6778 = vmatpush2.msra.mxu0 0.0
    %6779 = vmatprep.subr.mxu0 0.0
    %6780 = vmatpush2.msra.mxu0 0.0
    %6781 = vmatprep.subr.mxu0 0.0
    %6782 = vmatpush2.msra.mxu0 0.0
    %6783 = vmatprep.subr.mxu0 0.0
    %6784 = vmatpush2.msra.mxu0 0.0
    %6785 = vmatprep.subr.mxu0 0.0
    %6786 = vmatpush2.msra.mxu0 0.0
    %6787 = vmatprep.subr.mxu0 0.0
    %6788 = vmatpush2.msra.mxu0 0.0
    %6789 = vmatprep.subr.mxu0 0.0
    %6790 = vmatpush2.msra.mxu0 0.0
    %6791 = vmatprep.subr.mxu0 0.0
    %6792 = vmatpush2.msra.mxu0 0.0
    %6793 = vmatprep.subr.mxu0 0.0
    %6794 = vmatpush2.msra.mxu0 0.0
    %6795 = vmatprep.subr.mxu0 0.0
    %6796 = vmatpush2.msra.mxu0 0.0
    %6797 = vmatprep.subr.mxu0 0.0
    %6798 = vmatpush2.msra.mxu0 0.0
    %6799 = vmatprep.subr.mxu0 0.0
    %6800 = vmatpush2.msra.mxu0 0.0
    %6801 = vmatprep.subr.mxu0 0.0
    %6802 = vmatpush2.msra.mxu0 0.0
    %6803 = vmatprep.mubr.f32.mxu0 0.0
    %6804 = vmatmul.mubr.f32.gmra.mxu0 %v6728
    %v6805 = vpop.f32.mrf.mxu0
    %v6806 = vadd.f32 0.0, %v6805
    %v6807 = vpop.f32.mrf.mxu0
    %6808 = vmatprep.mubr.f32.mxu0 0.0
    %6809 = vmatmul.mubr.f32.gmra.mxu0 %v6731
    %v6810 = vpop.f32.mrf.mxu0
    %v6811 = vadd.f32 0.0, %v6810
    %v6812 = vpop.f32.mrf.mxu0
    %6813 = vmatprep.mubr.f32.mxu0 0.0
    %6814 = vmatmul.mubr.f32.gmra.mxu0 %v6734
    %v6815 = vpop.f32.mrf.mxu0
    %v6816 = vadd.f32 0.0, %v6815
    %v6817 = vpop.f32.mrf.mxu0
    %6818 = vmatprep.mubr.f32.mxu0 0.0
    %6819 = vmatmul.mubr.f32.gmra.mxu0 %v6737
    %v6820 = vpop.f32.mrf.mxu0
    %v6821 = vadd.f32 0.0, %v6820
    %v6822 = vpop.f32.mrf.mxu0
    %6823 = vdwg.mxu0
    %s6824 = scalar_lea.vmem [#allocation24], 48
    %v6825 = vld [vmem:[%s6824] sm:$0xff]
    %v6826 = vld [vmem:[%s6824 + $0x8] sm:$0xff]
    %v6828 = vsel %vm6321, %v6806, 0
    %v6831 = vsel %vm6321, %v6811, 0
    %v6834 = vsel %vm6321, %v6816, 0
    %v6837 = vsel %vm6321, %v6821, 0
    %6839 = vmatprep.subr.mxu0 0.0
    %6840 = vmatpush1.msra.mxu0 0.0
    %6841 = vmatprep.subr.mxu0 0.0
    %6842 = vmatpush1.msra.mxu0 0.0
    %6843 = vmatprep.subr.mxu0 0.0
    %6844 = vmatpush1.msra.mxu0 0.0
    %6845 = vmatprep.subr.mxu0 0.0
    %6846 = vmatpush1.msra.mxu0 0.0
    %6847 = vmatprep.subr.mxu0 0.0
    %6848 = vmatpush1.msra.mxu0 0.0
    %6849 = vmatprep.subr.mxu0 0.0
    %6850 = vmatpush1.msra.mxu0 0.0
    %6851 = vmatprep.subr.mxu0 0.0
    %6852 = vmatpush1.msra.mxu0 0.0
    %6853 = vmatprep.subr.mxu0 0.0
    %6854 = vmatpush1.msra.mxu0 0.0
    %6855 = vmatprep.subr.mxu0 0.0
    %6856 = vmatpush1.msra.mxu0 0.0
    %6857 = vmatprep.subr.mxu0 0.0
    %6858 = vmatpush1.msra.mxu0 0.0
    %6859 = vmatprep.subr.mxu0 0.0
    %6860 = vmatpush1.msra.mxu0 0.0
    %6861 = vmatprep.subr.mxu0 0.0
    %6862 = vmatpush1.msra.mxu0 0.0
    %6863 = vmatprep.subr.mxu0 0.0
    %6864 = vmatpush1.msra.mxu0 0.0
    %6865 = vmatprep.subr.mxu0 0.0
    %6866 = vmatpush1.msra.mxu0 0.0
    %6867 = vmatprep.subr.mxu0 0.0
    %6868 = vmatpush1.msra.mxu0 %v6826
    %6869 = vmatprep.subr.mxu0 0.0
    %6870 = vmatpush1.msra.mxu0 %v6825
    %6871 = vmatprep.subr.mxu0 0.0
    %6872 = vmatpush2.msra.mxu0 0.0
    %6873 = vmatprep.subr.mxu0 0.0
    %6874 = vmatpush2.msra.mxu0 0.0
    %6875 = vmatprep.subr.mxu0 0.0
    %6876 = vmatpush2.msra.mxu0 0.0
    %6877 = vmatprep.subr.mxu0 0.0
    %6878 = vmatpush2.msra.mxu0 0.0
    %6879 = vmatprep.subr.mxu0 0.0
    %6880 = vmatpush2.msra.mxu0 0.0
    %6881 = vmatprep.subr.mxu0 0.0
    %6882 = vmatpush2.msra.mxu0 0.0
    %6883 = vmatprep.subr.mxu0 0.0
    %6884 = vmatpush2.msra.mxu0 0.0
    %6885 = vmatprep.subr.mxu0 0.0
    %6886 = vmatpush2.msra.mxu0 0.0
    %6887 = vmatprep.subr.mxu0 0.0
    %6888 = vmatpush2.msra.mxu0 0.0
    %6889 = vmatprep.subr.mxu0 0.0
    %6890 = vmatpush2.msra.mxu0 0.0
    %6891 = vmatprep.subr.mxu0 0.0
    %6892 = vmatpush2.msra.mxu0 0.0
    %6893 = vmatprep.subr.mxu0 0.0
    %6894 = vmatpush2.msra.mxu0 0.0
    %6895 = vmatprep.subr.mxu0 0.0
    %6896 = vmatpush2.msra.mxu0 0.0
    %6897 = vmatprep.subr.mxu0 0.0
    %6898 = vmatpush2.msra.mxu0 0.0
    %6899 = vmatprep.subr.mxu0 0.0
    %6900 = vmatpush2.msra.mxu0 0.0
    %6901 = vmatprep.subr.mxu0 0.0
    %6902 = vmatpush2.msra.mxu0 0.0
    %6903 = vmatprep.mubr.f32.mxu0 0.0
    %6904 = vmatmul.mubr.f32.gmra.mxu0 %v6828
    %v6905 = vpop.f32.mrf.mxu0
    %v6906 = vadd.f32 0.0, %v6905
    %v6907 = vpop.f32.mrf.mxu0
    %6908 = vmatprep.mubr.f32.mxu0 0.0
    %6909 = vmatmul.mubr.f32.gmra.mxu0 %v6831
    %v6910 = vpop.f32.mrf.mxu0
    %v6911 = vadd.f32 0.0, %v6910
    %v6912 = vpop.f32.mrf.mxu0
    %6913 = vmatprep.mubr.f32.mxu0 0.0
    %6914 = vmatmul.mubr.f32.gmra.mxu0 %v6834
    %v6915 = vpop.f32.mrf.mxu0
    %v6916 = vadd.f32 0.0, %v6915
    %v6917 = vpop.f32.mrf.mxu0
    %6918 = vmatprep.mubr.f32.mxu0 0.0
    %6919 = vmatmul.mubr.f32.gmra.mxu0 %v6837
    %v6920 = vpop.f32.mrf.mxu0
    %v6921 = vadd.f32 0.0, %v6920
    %v6922 = vpop.f32.mrf.mxu0
    %6923 = vdwg.mxu0
    %v6924 = vadd.f32 %v6718, %v6906
    %v6925 = vadd.f32 %v6719, %v6911
    %v6926 = vadd.f32 %v6720, %v6916
    %v6927 = vadd.f32 %v6721, %v6921
    %s6928 = scalar_lea.vmem %s19, 128
    %v6929 = vld [vmem:[%s6928] sm:$0xff]
    %v6930 = vld [vmem:[%s6928 + $0x8] sm:$0xff]
    %v6931 = vld [vmem:[%s6928 + $0x10] sm:$0xff]
    %v6932 = vld [vmem:[%s6928 + $0x18] sm:$0xff]
    %v6934 = vsel %vm1591, %v6929, 0
    %v6937 = vsel %vm1591, %v6930, 0
    %v6940 = vsel %vm1591, %v6931, 0
    %v6943 = vsel %vm1591, %v6932, 0
    %6945 = vmatprep.subr.mxu0 0.0
    %6946 = vmatpush1.msra.mxu0 0.0
    %6947 = vmatprep.subr.mxu0 0.0
    %6948 = vmatpush1.msra.mxu0 0.0
    %6949 = vmatprep.subr.mxu0 0.0
    %6950 = vmatpush1.msra.mxu0 0.0
    %6951 = vmatprep.subr.mxu0 0.0
    %6952 = vmatpush1.msra.mxu0 0.0
    %6953 = vmatprep.subr.mxu0 0.0
    %6954 = vmatpush1.msra.mxu0 0.0
    %6955 = vmatprep.subr.mxu0 0.0
    %6956 = vmatpush1.msra.mxu0 0.0
    %6957 = vmatprep.subr.mxu0 0.0
    %6958 = vmatpush1.msra.mxu0 0.0
    %6959 = vmatprep.subr.mxu0 0.0
    %6960 = vmatpush1.msra.mxu0 0.0
    %6961 = vmatprep.subr.mxu0 0.0
    %6962 = vmatpush1.msra.mxu0 %v6112
    %6963 = vmatprep.subr.mxu0 0.0
    %6964 = vmatpush1.msra.mxu0 %v6111
    %6965 = vmatprep.subr.mxu0 0.0
    %6966 = vmatpush1.msra.mxu0 %v6110
    %6967 = vmatprep.subr.mxu0 0.0
    %6968 = vmatpush1.msra.mxu0 %v6109
    %6969 = vmatprep.subr.mxu0 0.0
    %6970 = vmatpush1.msra.mxu0 %v6108
    %6971 = vmatprep.subr.mxu0 0.0
    %6972 = vmatpush1.msra.mxu0 %v6107
    %6973 = vmatprep.subr.mxu0 0.0
    %6974 = vmatpush1.msra.mxu0 %v6106
    %6975 = vmatprep.subr.mxu0 0.0
    %6976 = vmatpush1.msra.mxu0 %v6105
    %6977 = vmatprep.subr.mxu0 0.0
    %6978 = vmatpush2.msra.mxu0 0.0
    %6979 = vmatprep.subr.mxu0 0.0
    %6980 = vmatpush2.msra.mxu0 0.0
    %6981 = vmatprep.subr.mxu0 0.0
    %6982 = vmatpush2.msra.mxu0 0.0
    %6983 = vmatprep.subr.mxu0 0.0
    %6984 = vmatpush2.msra.mxu0 0.0
    %6985 = vmatprep.subr.mxu0 0.0
    %6986 = vmatpush2.msra.mxu0 0.0
    %6987 = vmatprep.subr.mxu0 0.0
    %6988 = vmatpush2.msra.mxu0 0.0
    %6989 = vmatprep.subr.mxu0 0.0
    %6990 = vmatpush2.msra.mxu0 0.0
    %6991 = vmatprep.subr.mxu0 0.0
    %6992 = vmatpush2.msra.mxu0 0.0
    %6993 = vmatprep.subr.mxu0 0.0
    %6994 = vmatpush2.msra.mxu0 0.0
    %6995 = vmatprep.subr.mxu0 0.0
    %6996 = vmatpush2.msra.mxu0 0.0
    %6997 = vmatprep.subr.mxu0 0.0
    %6998 = vmatpush2.msra.mxu0 0.0
    %6999 = vmatprep.subr.mxu0 0.0
    %7000 = vmatpush2.msra.mxu0 0.0
    %7001 = vmatprep.subr.mxu0 0.0
    %7002 = vmatpush2.msra.mxu0 0.0
    %7003 = vmatprep.subr.mxu0 0.0
    %7004 = vmatpush2.msra.mxu0 0.0
    %7005 = vmatprep.subr.mxu0 0.0
    %7006 = vmatpush2.msra.mxu0 0.0
    %7007 = vmatprep.subr.mxu0 0.0
    %7008 = vmatpush2.msra.mxu0 0.0
    %7009 = vmatprep.mubr.f32.mxu0 0.0
    %7010 = vmatmul.mubr.f32.gmra.mxu0 %v6934
    %v7011 = vpop.f32.mrf.mxu0
    %v7012 = vadd.f32 0.0, %v7011
    %v7013 = vpop.f32.mrf.mxu0
    %7014 = vmatprep.mubr.f32.mxu0 0.0
    %7015 = vmatmul.mubr.f32.gmra.mxu0 %v6937
    %v7016 = vpop.f32.mrf.mxu0
    %v7017 = vadd.f32 0.0, %v7016
    %v7018 = vpop.f32.mrf.mxu0
    %7019 = vmatprep.mubr.f32.mxu0 0.0
    %7020 = vmatmul.mubr.f32.gmra.mxu0 %v6940
    %v7021 = vpop.f32.mrf.mxu0
    %v7022 = vadd.f32 0.0, %v7021
    %v7023 = vpop.f32.mrf.mxu0
    %7024 = vmatprep.mubr.f32.mxu0 0.0
    %7025 = vmatmul.mubr.f32.gmra.mxu0 %v6943
    %v7026 = vpop.f32.mrf.mxu0
    %v7027 = vadd.f32 0.0, %v7026
    %v7028 = vpop.f32.mrf.mxu0
    %7029 = vdwg.mxu0
    %s7030 = scalar_lea.vmem [#allocation24], 64
    %v7031 = vld [vmem:[%s7030] sm:$0xff]
    %v7032 = vld [vmem:[%s7030 + $0x8] sm:$0xff]
    %v7034 = vsel %vm6321, %v7012, 0
    %v7037 = vsel %vm6321, %v7017, 0
    %v7040 = vsel %vm6321, %v7022, 0
    %v7043 = vsel %vm6321, %v7027, 0
    %7045 = vmatprep.subr.mxu0 0.0
    %7046 = vmatpush1.msra.mxu0 0.0
    %7047 = vmatprep.subr.mxu0 0.0
    %7048 = vmatpush1.msra.mxu0 0.0
    %7049 = vmatprep.subr.mxu0 0.0
    %7050 = vmatpush1.msra.mxu0 0.0
    %7051 = vmatprep.subr.mxu0 0.0
    %7052 = vmatpush1.msra.mxu0 0.0
    %7053 = vmatprep.subr.mxu0 0.0
    %7054 = vmatpush1.msra.mxu0 0.0
    %7055 = vmatprep.subr.mxu0 0.0
    %7056 = vmatpush1.msra.mxu0 0.0
    %7057 = vmatprep.subr.mxu0 0.0
    %7058 = vmatpush1.msra.mxu0 0.0
    %7059 = vmatprep.subr.mxu0 0.0
    %7060 = vmatpush1.msra.mxu0 0.0
    %7061 = vmatprep.subr.mxu0 0.0
    %7062 = vmatpush1.msra.mxu0 0.0
    %7063 = vmatprep.subr.mxu0 0.0
    %7064 = vmatpush1.msra.mxu0 0.0
    %7065 = vmatprep.subr.mxu0 0.0
    %7066 = vmatpush1.msra.mxu0 0.0
    %7067 = vmatprep.subr.mxu0 0.0
    %7068 = vmatpush1.msra.mxu0 0.0
    %7069 = vmatprep.subr.mxu0 0.0
    %7070 = vmatpush1.msra.mxu0 0.0
    %7071 = vmatprep.subr.mxu0 0.0
    %7072 = vmatpush1.msra.mxu0 0.0
    %7073 = vmatprep.subr.mxu0 0.0
    %7074 = vmatpush1.msra.mxu0 %v7032
    %7075 = vmatprep.subr.mxu0 0.0
    %7076 = vmatpush1.msra.mxu0 %v7031
    %7077 = vmatprep.subr.mxu0 0.0
    %7078 = vmatpush2.msra.mxu0 0.0
    %7079 = vmatprep.subr.mxu0 0.0
    %7080 = vmatpush2.msra.mxu0 0.0
    %7081 = vmatprep.subr.mxu0 0.0
    %7082 = vmatpush2.msra.mxu0 0.0
    %7083 = vmatprep.subr.mxu0 0.0
    %7084 = vmatpush2.msra.mxu0 0.0
    %7085 = vmatprep.subr.mxu0 0.0
    %7086 = vmatpush2.msra.mxu0 0.0
    %7087 = vmatprep.subr.mxu0 0.0
    %7088 = vmatpush2.msra.mxu0 0.0
    %7089 = vmatprep.subr.mxu0 0.0
    %7090 = vmatpush2.msra.mxu0 0.0
    %7091 = vmatprep.subr.mxu0 0.0
    %7092 = vmatpush2.msra.mxu0 0.0
    %7093 = vmatprep.subr.mxu0 0.0
    %7094 = vmatpush2.msra.mxu0 0.0
    %7095 = vmatprep.subr.mxu0 0.0
    %7096 = vmatpush2.msra.mxu0 0.0
    %7097 = vmatprep.subr.mxu0 0.0
    %7098 = vmatpush2.msra.mxu0 0.0
    %7099 = vmatprep.subr.mxu0 0.0
    %7100 = vmatpush2.msra.mxu0 0.0
    %7101 = vmatprep.subr.mxu0 0.0
    %7102 = vmatpush2.msra.mxu0 0.0
    %7103 = vmatprep.subr.mxu0 0.0
    %7104 = vmatpush2.msra.mxu0 0.0
    %7105 = vmatprep.subr.mxu0 0.0
    %7106 = vmatpush2.msra.mxu0 0.0
    %7107 = vmatprep.subr.mxu0 0.0
    %7108 = vmatpush2.msra.mxu0 0.0
    %7109 = vmatprep.mubr.f32.mxu0 0.0
    %7110 = vmatmul.mubr.f32.gmra.mxu0 %v7034
    %v7111 = vpop.f32.mrf.mxu0
    %v7112 = vadd.f32 0.0, %v7111
    %v7113 = vpop.f32.mrf.mxu0
    %7114 = vmatprep.mubr.f32.mxu0 0.0
    %7115 = vmatmul.mubr.f32.gmra.mxu0 %v7037
    %v7116 = vpop.f32.mrf.mxu0
    %v7117 = vadd.f32 0.0, %v7116
    %v7118 = vpop.f32.mrf.mxu0
    %7119 = vmatprep.mubr.f32.mxu0 0.0
    %7120 = vmatmul.mubr.f32.gmra.mxu0 %v7040
    %v7121 = vpop.f32.mrf.mxu0
    %v7122 = vadd.f32 0.0, %v7121
    %v7123 = vpop.f32.mrf.mxu0
    %7124 = vmatprep.mubr.f32.mxu0 0.0
    %7125 = vmatmul.mubr.f32.gmra.mxu0 %v7043
    %v7126 = vpop.f32.mrf.mxu0
    %v7127 = vadd.f32 0.0, %v7126
    %v7128 = vpop.f32.mrf.mxu0
    %7129 = vdwg.mxu0
    %v7130 = vadd.f32 %v6924, %v7112
    %v7131 = vadd.f32 %v6925, %v7117
    %v7132 = vadd.f32 %v6926, %v7122
    %v7133 = vadd.f32 %v6927, %v7127
    %v7134 = vadd.f32 %v7130, %v4690
    %v7135 = vadd.f32 %v7131, %v4695
    %v7136 = vadd.f32 %v7132, %v4700
    %v7137 = vadd.f32 %v7133, %v4705
    %v7138 = vld [vmem:[%s21] sm:$0x1]
    %v7140 = vlaneseq
    %v7141 = vshrl.u32 %v7140, 7
    %v7142 = vsub.s32 0, %v7141
    %v7143 = vrot.slane %v7138, %v7142
    %v7145 = vmul.f32 %v7134, %v7143
    %v7146 = vmul.f32 %v7135, %v7143
    %v7147 = vmul.f32 %v7136, %v7143
    %v7148 = vmul.f32 %v7137, %v7143
    %v7149 = vld [vmem:[%s22] sm:$0x1]
    %v7151 = vlaneseq
    %v7152 = vshrl.u32 %v7151, 7
    %v7153 = vsub.s32 0, %v7152
    %v7154 = vrot.slane %v7149, %v7153
    %v7156 = vadd.f32 %v7145, %v7154
    %v7157 = vadd.f32 %v7146, %v7154
    %v7158 = vadd.f32 %v7147, %v7154
    %v7159 = vadd.f32 %v7148, %v7154
    %v7160 = vmax.f32 %v7156, 0.0
    %v7161 = vmax.f32 %v7157, 0.0
    %v7162 = vmax.f32 %v7158, 0.0
    %v7163 = vmax.f32 %v7159, 0.0
    %7164 = vst.msk [vmem:[%s23] sm:$0xff] %vm6321, %v7160
    %7165 = vst.msk [vmem:[%s23 + $0x8] sm:$0xff] %vm6321, %v7161
    %7166 = vst.msk [vmem:[%s23 + $0x10] sm:$0xff] %vm6321, %v7162
    %7167 = vst.msk [vmem:[%s23 + $0x18] sm:$0xff] %vm6321, %v7163
    // Predicated region
    $region154: #{fwd.2} parent=1 // pred_check
      _
    $region155: #{fwd.2} parent=1 // pred_check_branch
      %7169 = sbr.rel (0) target = $region157
    $region156: #{fwd.2} parent=1 // pred_region
      _
    $region157: #{fwd.2} parent=1 // pred_fallthru
      _
    // Predicated region
    $region158: #{fwd.2} parent=1 // pred_check
      _
    $region159: #{fwd.2} parent=1 // pred_check_branch
      %7171 = sbr.rel (0) target = $region161
    $region160: #{fwd.2} parent=1 // pred_region
      _
    $region161: #{fwd.2} parent=1 // pred_fallthru
      _
    %7172 = vsyncpa [#allocation3], 1
    %7173 = vsyncpa [#allocation5], 1
    %7174 = vsyncpa [#allocation8], 1
    %7175 = vsyncpa [#allocation11], 1
    %7176 = vsyncpa [#allocation14], 1
    %7177 = vsyncpa [#allocation17], 1
    %7178 = vsyncpa [#allocation20], 1
    %7179 = vsyncpa [#allocation23], 1

</llo_original>
